<compile_context>
chip_gen: v7x
topology: tpu7x:2x2x1
jax: 0.10.0
libtpu: 0.0.40
codegen_flags: <defaults>
</compile_context>

<pallas_src>
import functools

import jax
import jax.numpy as jnp
from jax.experimental import pallas as pl
from jax.experimental.pallas import tpu as pltpu

LANE = 128
BN_EPS = 1e-5
VMEM_LIMIT = 32 * 1024 * 1024   # explicit scoped-VMEM budget (safe on v5e/v6e/v7x)


def _rup(n, m=LANE):
    return ((n + m - 1) // m) * m


def _pad_axis(a, axis, target):
    if a.shape[axis] == target:
        return a
    pad = [(0, 0)] * a.ndim
    pad[axis] = (0, target - a.shape[axis])
    return jnp.pad(a, pad)


# ----------------------------------------------------------------------------
# In-kernel helpers
# ----------------------------------------------------------------------------
def _upsample2x(x):
    """Nearest-neighbour 2x upsample of an (h, w, c) VMEM value (no HBM traffic)."""
    h, w, c = x.shape
    x = jnp.broadcast_to(x[:, None, :, :], (h, 2, w, c)).reshape(2 * h, w, c)
    x = jnp.broadcast_to(x[:, :, None, :], (2 * h, w, 2, c)).reshape(2 * h, 2 * w, c)
    return x


def _conv3x3_kstacked(xp_ref, w_ref, b_ref, H, W, Cin):
    """3x3 conv as ONE deep GEMM: (H*W, 9*Cin) @ (9*Cin, Cout), f32 accumulation."""
    lhs = jnp.concatenate(
        [xp_ref[pl.ds(di, H), pl.ds(dj, W), :]
         for di in range(3) for dj in range(3)],
        axis=-1).reshape(H * W, 9 * Cin)
    return jnp.dot(lhs, w_ref[...], preferred_element_type=jnp.float32) + b_ref[...]


# ----------------------------------------------------------------------------
# Kernels
# ----------------------------------------------------------------------------
def _linear_kernel(x_ref, w_ref, b_ref, o_ref):
    # x: (B, Kp) bf16, w: (Kp, Dp) bf16 (pre-transposed, lane-dense), b: (1, Dp) f32
    o_ref[...] = (jnp.dot(x_ref[...], w_ref[...],
                          preferred_element_type=jnp.float32) + b_ref[...])


def _conv1_skip_kernel(x_ref, w1_ref, b1_ref, wsk_ref, bsk_ref,
                       y1_ref, skip_ref, s_ref, ss_ref, xp_ref):
    # x: (1, h, w, Cin) bf16 (pre-upsample block input)
    # w1: (9*Cin, Chid) bf16 K-stacked, wsk: (Cin, Cout) bf16
    # outputs: y1 (1,2h,2w,Chid) bf16, skip (1,h,w,Cout) f32, per-sample BN1 partials
    h, w, Cin = x_ref.shape[1], x_ref.shape[2], x_ref.shape[3]
    H, W = 2 * h, 2 * w
    Chid = y1_ref.shape[3]
    Cout = skip_ref.shape[3]

    x = x_ref[0]                                            # (h, w, Cin) bf16

    # 1x1 skip conv on the quarter-size pre-upsample input.
    skip = jnp.dot(x.reshape(h * w, Cin), wsk_ref[...],
                   preferred_element_type=jnp.float32) + bsk_ref[...]
    skip_ref[...] = skip.reshape(1, h, w, Cout)

    # nearest 2x upsample + zero halo, entirely in VMEM scratch.
    xu = _upsample2x(x)                                     # (H, W, Cin) bf16
    xp_ref[...] = jnp.zeros(xp_ref.shape, xp_ref.dtype)
    xp_ref[pl.ds(1, H), pl.ds(1, W), :] = xu

    y = _conv3x3_kstacked(xp_ref, w1_ref, b1_ref, H, W, Cin)   # (H*W, Chid) f32

    y1_ref[...] = y.reshape(1, H, W, Chid).astype(y1_ref.dtype)
    # BN1 batch-stat partials (computed in f32 before the bf16 store).
    s_ref[...] = jnp.sum(y, axis=0, keepdims=True).reshape(1, 1, Chid)
    ss_ref[...] = jnp.sum(y * y, axis=0, keepdims=True).reshape(1, 1, Chid)


def _bn1_conv2_kernel(y1_ref, s1_ref, ss1_ref, g1_ref, be1_ref, w2_ref, b2_ref,
                      y2_ref, s2_ref, ss2_ref, zp_ref, *, count):
    # BN1 (train-mode batch stats) + ReLU fused into conv2's input path.
    H, W, Chid = y1_ref.shape[1], y1_ref.shape[2], y1_ref.shape[3]
    Cout = y2_ref.shape[3]

    s1 = jnp.sum(s1_ref[...], axis=0)                       # (1, Chid) reduce partials
    ss1 = jnp.sum(ss1_ref[...], axis=0)
    inv = 1.0 / count
    mean = s1 * inv
    var = jnp.maximum(ss1 * inv - mean * mean, 0.0)          # clamp cancellation
    scale = g1_ref[...] * jax.lax.rsqrt(var + BN_EPS)        # EUP
    shift = be1_ref[...] - mean * scale

    z = jnp.maximum(y1_ref[0] * scale.reshape(1, 1, Chid)
                    + shift.reshape(1, 1, Chid), 0.0).astype(jnp.bfloat16)

    # zero halo in VMEM scratch (conv padding=1), no HBM pad pass.
    zp_ref[...] = jnp.zeros(zp_ref.shape, zp_ref.dtype)
    zp_ref[pl.ds(1, H), pl.ds(1, W), :] = z

    y = _conv3x3_kstacked(zp_ref, w2_ref, b2_ref, H, W, Chid)   # (H*W, Cout) f32

    y2_ref[...] = y.reshape(1, H, W, Cout).astype(y2_ref.dtype)
    s2_ref[...] = jnp.sum(y, axis=0, keepdims=True).reshape(1, 1, Cout)
    ss2_ref[...] = jnp.sum(y * y, axis=0, keepdims=True).reshape(1, 1, Cout)


def _bn2_skip_relu_kernel(y2_ref, s2_ref, ss2_ref, g2_ref, be2_ref, skip_ref,
                          o_ref, *, count):
    # out = relu(BN2(y2) + upsample2x(skip_small)); skip upsample done in VMEM.
    H, W, C = y2_ref.shape[1], y2_ref.shape[2], y2_ref.shape[3]

    s = jnp.sum(s2_ref[...], axis=0)
    ss = jnp.sum(ss2_ref[...], axis=0)
    inv = 1.0 / count
    mean = s * inv
    var = jnp.maximum(ss * inv - mean * mean, 0.0)
    scale = g2_ref[...] * jax.lax.rsqrt(var + BN_EPS)
    shift = be2_ref[...] - mean * scale

    sk = _upsample2x(skip_ref[0])                            # (H, W, C) f32
    z = y2_ref[0] * scale.reshape(1, 1, C) + shift.reshape(1, 1, C) + sk
    o_ref[...] = jnp.maximum(z, 0.0).reshape(1, H, W, C).astype(o_ref.dtype)


# ----------------------------------------------------------------------------
# pallas_call wrappers
# ----------------------------------------------------------------------------
def linear_pallas(x, w, b):
    B, _ = x.shape
    D = w.shape[1]
    return pl.pallas_call(
        _linear_kernel,
        out_shape=jax.ShapeDtypeStruct((B, D), jnp.float32),
        in_specs=[pl.BlockSpec(memory_space=pltpu.MemorySpace.VMEM)] * 3,
        out_specs=pl.BlockSpec(memory_space=pltpu.MemorySpace.VMEM),
        compiler_params=pltpu.CompilerParams(vmem_limit_bytes=VMEM_LIMIT),
        cost_estimate=pl.CostEstimate(
            flops=2 * B * w.shape[0] * D, transcendentals=0,
            bytes_accessed=2 * (x.size + w.size) + 4 * (B * D + D)),
    )(x, w, b)


def conv1_skip_pallas(x, w1, b1, wsk, bsk):
    N, h, w, Cin = x.shape
    Chid = w1.shape[1]
    Cout = wsk.shape[1]
    H, W = 2 * h, 2 * w
    return pl.pallas_call(
        _conv1_skip_kernel,
        grid=(N,),
        in_specs=[
            pl.BlockSpec((1, h, w, Cin), lambda n: (n, 0, 0, 0)),
            pl.BlockSpec((9 * Cin, Chid), lambda n: (0, 0)),
            pl.BlockSpec((1, Chid), lambda n: (0, 0)),
            pl.BlockSpec((Cin, Cout), lambda n: (0, 0)),
            pl.BlockSpec((1, Cout), lambda n: (0, 0)),
        ],
        out_specs=(
            pl.BlockSpec((1, H, W, Chid), lambda n: (n, 0, 0, 0)),
            pl.BlockSpec((1, h, w, Cout), lambda n: (n, 0, 0, 0)),
            pl.BlockSpec((1, 1, Chid), lambda n: (n, 0, 0)),
            pl.BlockSpec((1, 1, Chid), lambda n: (n, 0, 0)),
        ),
        out_shape=(
            jax.ShapeDtypeStruct((N, H, W, Chid), jnp.bfloat16),
            jax.ShapeDtypeStruct((N, h, w, Cout), jnp.float32),
            jax.ShapeDtypeStruct((N, 1, Chid), jnp.float32),
            jax.ShapeDtypeStruct((N, 1, Chid), jnp.float32),
        ),
        scratch_shapes=[pltpu.VMEM((H + 2, W + 2, Cin), jnp.bfloat16)],
        compiler_params=pltpu.CompilerParams(
            dimension_semantics=("parallel",),
            vmem_limit_bytes=VMEM_LIMIT),
        cost_estimate=pl.CostEstimate(
            flops=2 * N * (H * W * 9 * Cin * Chid + h * w * Cin * Cout),
            transcendentals=0,
            bytes_accessed=2 * (x.size + w1.size + wsk.size + N * H * W * Chid)
            + 4 * (N * h * w * Cout + 2 * N * Chid)),
    )(x, w1, b1, wsk, bsk)


def bn1_conv2_pallas(y1, s1, ss1, g1, be1, w2, b2):
    N, H, W, Chid = y1.shape
    Cout = w2.shape[1]
    kern = functools.partial(_bn1_conv2_kernel, count=float(N * H * W))
    return pl.pallas_call(
        kern,
        grid=(N,),
        in_specs=[
            pl.BlockSpec((1, H, W, Chid), lambda n: (n, 0, 0, 0)),
            pl.BlockSpec((N, 1, Chid), lambda n: (0, 0, 0)),
            pl.BlockSpec((N, 1, Chid), lambda n: (0, 0, 0)),
            pl.BlockSpec((1, Chid), lambda n: (0, 0)),
            pl.BlockSpec((1, Chid), lambda n: (0, 0)),
            pl.BlockSpec((9 * Chid, Cout), lambda n: (0, 0)),
            pl.BlockSpec((1, Cout), lambda n: (0, 0)),
        ],
        out_specs=(
            pl.BlockSpec((1, H, W, Cout), lambda n: (n, 0, 0, 0)),
            pl.BlockSpec((1, 1, Cout), lambda n: (n, 0, 0)),
            pl.BlockSpec((1, 1, Cout), lambda n: (n, 0, 0)),
        ),
        out_shape=(
            jax.ShapeDtypeStruct((N, H, W, Cout), jnp.bfloat16),
            jax.ShapeDtypeStruct((N, 1, Cout), jnp.float32),
            jax.ShapeDtypeStruct((N, 1, Cout), jnp.float32),
        ),
        scratch_shapes=[pltpu.VMEM((H + 2, W + 2, Chid), jnp.bfloat16)],
        compiler_params=pltpu.CompilerParams(
            dimension_semantics=("parallel",),
            vmem_limit_bytes=VMEM_LIMIT),
        cost_estimate=pl.CostEstimate(
            flops=2 * N * H * W * 9 * Chid * Cout, transcendentals=Chid,
            bytes_accessed=2 * (y1.size + w2.size + N * H * W * Cout)
            + 4 * (4 * N * Chid + 2 * N * Cout)),
    )(y1, s1, ss1, g1, be1, w2, b2)


def bn2_skip_relu_pallas(y2, s2, ss2, g2, be2, skip):
    N, H, W, C = y2.shape
    h, w = skip.shape[1], skip.shape[2]
    kern = functools.partial(_bn2_skip_relu_kernel, count=float(N * H * W))
    return pl.pallas_call(
        kern,
        grid=(N,),
        in_specs=[
            pl.BlockSpec((1, H, W, C), lambda n: (n, 0, 0, 0)),
            pl.BlockSpec((N, 1, C), lambda n: (0, 0, 0)),
            pl.BlockSpec((N, 1, C), lambda n: (0, 0, 0)),
            pl.BlockSpec((1, C), lambda n: (0, 0)),
            pl.BlockSpec((1, C), lambda n: (0, 0)),
            pl.BlockSpec((1, h, w, C), lambda n: (n, 0, 0, 0)),
        ],
        out_specs=pl.BlockSpec((1, H, W, C), lambda n: (n, 0, 0, 0)),
        out_shape=jax.ShapeDtypeStruct((N, H, W, C), jnp.bfloat16),
        compiler_params=pltpu.CompilerParams(
            dimension_semantics=("parallel",),
            vmem_limit_bytes=VMEM_LIMIT),
        cost_estimate=pl.CostEstimate(
            flops=4 * N * H * W * C, transcendentals=C,
            bytes_accessed=2 * (y2.size + N * H * W * C) + 4 * skip.size),
    )(y2, s2, ss2, g2, be2, skip)


# ----------------------------------------------------------------------------
# Wrapper: layout glue + block / decoder composition
# ----------------------------------------------------------------------------
def nearest_resize_nchw(x, size):
    N, C, H, W = x.shape
    if H == size and W == size:
        return x
    hi = (jnp.arange(size) * H) // size
    wi = (jnp.arange(size) * W) // size
    return x[:, :, hi, :][:, :, :, wi]


def decoder_block_forward(h, blk):
    # h: (N, hh, ww, Cin_pad) bf16 NHWC (pre-upsample)
    y1, skip, s1, ss1 = conv1_skip_pallas(h, blk['w1'], blk['b1'],
                                          blk['wsk'], blk['bsk'])
    y2, s2, ss2 = bn1_conv2_pallas(y1, s1, ss1, blk['g1'], blk['be1'],
                                   blk['w2'], blk['b2'])
    return bn2_skip_relu_pallas(y2, s2, ss2, blk['g2'], blk['be2'], skip)


def decoder_forward(z, params, *, in_channels, out_channels, size):
    B = z.shape[0]
    zp = _pad_axis(z, 1, params['lin_w'].shape[0]).astype(jnp.bfloat16)
    hlin = linear_pallas(zp, params['lin_w'], params['lin_b'])     # (B, Dp) f32
    h = hlin[:, :4 * in_channels].reshape(B, in_channels, 2, 2)    # torch .view
    h = jnp.transpose(h, (0, 2, 3, 1))                             # NCHW -> NHWC
    h = _pad_axis(h, 3, _rup(in_channels)).astype(jnp.bfloat16)
    for blk in params['blocks']:
        h = decoder_block_forward(h, blk)
    out = jnp.transpose(h[..., :out_channels], (0, 3, 1, 2)).astype(jnp.float32)
    # TODO(synk): final nearest Interpolate(size) is pure gather data movement (XLA).
    return nearest_resize_nchw(out, size)


# ----------------------------------------------------------------------------
# Parameter preparation (torch layout -> padded / K-stacked kernel layout)
# Invariant: gamma / beta / bias are ZERO-padded in the 128-lane channel pad so
# padded lanes stay exactly zero through every block.
# ----------------------------------------------------------------------------
def _prep_conv3x3(w, b):                 # w: (O, I, 3, 3)
    O, I = w.shape[0], w.shape[1]
    Ip, Op = _rup(I), _rup(O)
    wt = jnp.transpose(w, (2, 3, 1, 0)).reshape(9, I, O)     # tap-major (di, dj)
    wt = _pad_axis(_pad_axis(wt, 1, Ip), 2, Op)
    wt = wt.reshape(9 * Ip, Op).astype(jnp.bfloat16)         # K-stacked slab
    bp = _pad_axis(b.reshape(1, O), 1, Op).astype(jnp.float32)
    return wt, bp


def _prep_conv1x1(w, b):                 # w: (O, I, 1, 1)
    O, I = w.shape[0], w.shape[1]
    Ip, Op = _rup(I), _rup(O)
    wt = jnp.transpose(w[:, :, 0, 0], (1, 0))
    wt = _pad_axis(_pad_axis(wt, 0, Ip), 1, Op).astype(jnp.bfloat16)
    bp = _pad_axis(b.reshape(1, O), 1, Op).astype(jnp.float32)
    return wt, bp


def _prep_bn(g, b):
    C = g.shape[0]
    Cp = _rup(C)
    return (_pad_axis(g.reshape(1, C), 1, Cp).astype(jnp.float32),
            _pad_axis(b.reshape(1, C), 1, Cp).astype(jnp.float32))


def prep_decoder_params(raw):
    lin_w = raw['lin_w']                 # (Dout, Din) torch layout
    Dout, Din = lin_w.shape
    Lp, Dp = _rup(Din), _rup(Dout)
    params = {
        'lin_w': _pad_axis(_pad_axis(lin_w.T, 0, Lp), 1, Dp).astype(jnp.bfloat16),
        'lin_b': _pad_axis(raw['lin_b'].reshape(1, -1), 1, Dp).astype(jnp.float32),
        'blocks': [],
    }
    for b in raw['blocks']:
        w1, b1 = _prep_conv3x3(b['w1'], b['b1'])
        w2, b2 = _prep_conv3x3(b['w2'], b['b2'])
        wsk, bsk = _prep_conv1x1(b['wsk'], b['bsk'])
        g1, be1 = _prep_bn(b['g1'], b['be1'])
        g2, be2 = _prep_bn(b['g2'], b['be2'])
        params['blocks'].append(dict(w1=w1, b1=b1, g1=g1, be1=be1,
                                     w2=w2, b2=b2, g2=g2, be2=be2,
                                     wsk=wsk, bsk=bsk))
    return params


def make_raw_params(key, latent, in_channels, hidden, out_channels, num_blocks):
    chain = []
    c = in_channels
    for _ in range(num_blocks - 1):
        o = max(32, c // 2)
        chain.append((c, o))
        c = o
    chain.append((c, out_channels))

    nbk = 10
    keys = jax.random.split(key, 2 + num_blocks * nbk)
    lin_w = jax.random.normal(keys[0], (4 * in_channels, latent), jnp.float32) / jnp.sqrt(float(latent))
    lin_b = jax.random.normal(keys[1], (4 * in_channels,), jnp.float32) * 0.05
    blocks = []
    idx = 2
    for (cin, cout) in chain:
        kk = keys[idx: idx + nbk]
        idx += nbk
        blocks.append(dict(
            w1=jax.random.normal(kk[0], (hidden, cin, 3, 3), jnp.float32) / jnp.sqrt(9.0 * cin),
            b1=jax.random.normal(kk[1], (hidden,), jnp.float32) * 0.05,
            g1=1.0 + 0.1 * jax.random.normal(kk[2], (hidden,), jnp.float32),
            be1=0.1 * jax.random.normal(kk[3], (hidden,), jnp.float32),
            w2=jax.random.normal(kk[4], (cout, hidden, 3, 3), jnp.float32) / jnp.sqrt(9.0 * hidden),
            b2=jax.random.normal(kk[5], (cout,), jnp.float32) * 0.05,
            g2=1.0 + 0.1 * jax.random.normal(kk[6], (cout,), jnp.float32),
            be2=0.1 * jax.random.normal(kk[7], (cout,), jnp.float32),
            wsk=jax.random.normal(kk[8], (cout, cin, 1, 1), jnp.float32) / jnp.sqrt(float(cin)),
            bsk=jax.random.normal(kk[9], (cout,), jnp.float32) * 0.05,
        ))
    return dict(lin_w=lin_w, lin_b=lin_b, blocks=blocks)


# ----------------------------------------------------------------------------
# Pure-JAX reference (module semantics, f32)
# ----------------------------------------------------------------------------
def _ref_conv(x, w, b, pad):
    y = jax.lax.conv_general_dilated(
        x, w, (1, 1), ((pad, pad), (pad, pad)),
        dimension_numbers=("NCHW", "OIHW", "NCHW"))
    return y + b.reshape(1, -1, 1, 1)


def _ref_bn_train(y, g, b):
    mean = jnp.mean(y, axis=(0, 2, 3), keepdims=True)
    var = jnp.var(y, axis=(0, 2, 3), keepdims=True)         # biased, like PyTorch train
    return ((y - mean) / jnp.sqrt(var + BN_EPS)
            * g.reshape(1, -1, 1, 1) + b.reshape(1, -1, 1, 1))


def _ref_block(x, p):
    xu = jnp.repeat(jnp.repeat(x, 2, axis=2), 2, axis=3)
    y = _ref_conv(xu, p['w1'], p['b1'], 1)
    y = jnp.maximum(_ref_bn_train(y, p['g1'], p['be1']), 0.0)
    y = _ref_conv(y, p['w2'], p['b2'], 1)
    y = _ref_bn_train(y, p['g2'], p['be2'])
    sk = _ref_conv(xu, p['wsk'], p['bsk'], 0)
    return jnp.maximum(y + sk, 0.0)


def ref_decoder(z, raw, in_channels, size):
    h = z @ raw['lin_w'].T + raw['lin_b']
    h = h.reshape(z.shape[0], in_channels, 2, 2)
    for p in raw['blocks']:
        h = _ref_block(h, p)
    return nearest_resize_nchw(h, size)


# ----------------------------------------------------------------------------
if __name__ == "__main__":
    # Small Decoder config (respects `size >= 2 ** (num_blocks + 1)`).
    B, LATENT, IN_CH, HIDDEN, OUT_CH, NUM_BLOCKS, SIZE = 2, 16, 64, 32, 3, 2, 8

    key = jax.random.PRNGKey(0)
    k_x, k_p = jax.random.split(key)
    x = jax.random.normal(k_x, (B, LATENT), jnp.float32)

    raw = make_raw_params(k_p, LATENT, IN_CH, HIDDEN, OUT_CH, NUM_BLOCKS)
    params = prep_decoder_params(raw)

    fwd = jax.jit(functools.partial(decoder_forward, in_channels=IN_CH,
                                    out_channels=OUT_CH, size=SIZE))
    y = fwd(x, params)
    jax.block_until_ready(y)

    y_ref = ref_decoder(x, raw, IN_CH, SIZE)
    assert y.shape == y_ref.shape, (y.shape, y_ref.shape)
    err = float(jnp.max(jnp.abs(y - y_ref)))
    # bf16 MXU operands + bf16 intermediates (f32 accumulation / BN stats) vs f32 ref.
    assert jnp.allclose(y, y_ref, atol=1e-1, rtol=1e-1), err
    print("KERNEL_OK")
</pallas_src>

<mosaic_0001>
module attributes {stable_mosaic.version = 11 : i64} {
  func.func @_linear_kernel(%arg0: memref<2x128xbf16, #tpu.memory_space<vmem>>, %arg1: memref<128x256xbf16, #tpu.memory_space<vmem>>, %arg2: memref<1x256xf32, #tpu.memory_space<vmem>>, %arg3: memref<2x256xf32, #tpu.memory_space<vmem>>) attributes {dimension_semantics = [], scalar_prefetch = 0 : i64, scratch_operands = 0 : i64, tpu.core_type = #tpu.core_type<tc>} {
    %c0 = arith.constant 0 : index
    %c0_0 = arith.constant 0 : index
    %0 = vector.load %arg0[%c0, %c0_0] : memref<2x128xbf16, #tpu.memory_space<vmem>>, vector<2x128xbf16>
    %c0_1 = arith.constant 0 : index
    %c0_2 = arith.constant 0 : index
    %1 = vector.load %arg1[%c0_1, %c0_2] : memref<128x256xbf16, #tpu.memory_space<vmem>>, vector<128x256xbf16>
    %cst = arith.constant dense<0.000000e+00> : vector<2x256xf32>
    %2 = tpu.matmul %0, %1, %cst {dimension_numbers = #tpu.dot_dimension_numbers<[1], [0], [0], [1], [0, 0, 1, 1], [], []>} : vector<2x128xbf16>, vector<128x256xbf16>, vector<2x256xf32> -> vector<2x256xf32>
    %c0_3 = arith.constant 0 : index
    %c0_4 = arith.constant 0 : index
    %3 = vector.load %arg2[%c0_3, %c0_4] : memref<1x256xf32, #tpu.memory_space<vmem>>, vector<1x256xf32>
    %4 = vector.broadcast %3 : vector<1x256xf32> to vector<2x256xf32>
    %5 = arith.addf %2, %4 : vector<2x256xf32>
    %c0_5 = arith.constant 0 : index
    %c0_6 = arith.constant 0 : index
    %6 = vector.load %arg3[%c0_5, %c0_6] : memref<2x256xf32, #tpu.memory_space<vmem>>, vector<2x256xf32>
    tpu.vector_store %arg3[%c0_5, %c0_6], %5 {strides = array<i32>} : memref<2x256xf32, #tpu.memory_space<vmem>>, vector<2x256xf32>,
    return
  }
}

module attributes {stable_mosaic.version = 11 : i64} {
  func.func @_conv1_skip_kernel(%arg0: i32, %arg1: memref<1x2x2x128xbf16, #tpu.memory_space<vmem>>, %arg2: memref<1152x128xbf16, #tpu.memory_space<vmem>>, %arg3: memref<1x128xf32, #tpu.memory_space<vmem>>, %arg4: memref<128x128xbf16, #tpu.memory_space<vmem>>, %arg5: memref<1x128xf32, #tpu.memory_space<vmem>>, %arg6: memref<1x4x4x128xbf16, #tpu.memory_space<vmem>>, %arg7: memref<1x2x2x128xf32, #tpu.memory_space<vmem>>, %arg8: memref<1x1x128xf32, #tpu.memory_space<vmem>>, %arg9: memref<1x1x128xf32, #tpu.memory_space<vmem>>, %arg10: memref<6x6x128xbf16, #tpu.memory_space<vmem>>) attributes {dimension_semantics = [#tpu.dimension_semantics<parallel>], iteration_bounds = array<i64: 2>, scalar_prefetch = 0 : i64, scratch_operands = 1 : i64, tpu.core_type = #tpu.core_type<tc>, window_params = [{transform_indices = @transform_0, window_bounds = array<i64: 1, 2, 2, 128>}, {pipeline_mode = #tpu.pipeline_mode<synchronous>, transform_indices = @transform_1, window_bounds = array<i64: 1152, 128>}, {pipeline_mode = #tpu.pipeline_mode<synchronous>, transform_indices = @transform_2, window_bounds = array<i64: 1, 128>}, {pipeline_mode = #tpu.pipeline_mode<synchronous>, transform_indices = @transform_3, window_bounds = array<i64: 128, 128>}, {pipeline_mode = #tpu.pipeline_mode<synchronous>, transform_indices = @transform_4, window_bounds = array<i64: 1, 128>}, {transform_indices = @transform_5, window_bounds = array<i64: 1, 4, 4, 128>}, {transform_indices = @transform_6, window_bounds = array<i64: 1, 2, 2, 128>}, {transform_indices = @transform_7, window_bounds = array<i64: 1, 1, 128>}, {transform_indices = @transform_8, window_bounds = array<i64: 1, 1, 128>}]} {
    %c0 = arith.constant 0 : index
    %c0_0 = arith.constant 0 : index
    %c0_1 = arith.constant 0 : index
    %c0_2 = arith.constant 0 : index
    %0 = vector.load %arg1[%c0, %c0_0, %c0_1, %c0_2] : memref<1x2x2x128xbf16, #tpu.memory_space<vmem>>, vector<1x2x2x128xbf16>
    %1 = vector.shape_cast %0 : vector<1x2x2x128xbf16> to vector<2x2x128xbf16>
    %2 = vector.shape_cast %1 : vector<2x2x128xbf16> to vector<4x128xbf16>
    %c0_3 = arith.constant 0 : index
    %c0_4 = arith.constant 0 : index
    %3 = vector.load %arg4[%c0_3, %c0_4] : memref<128x128xbf16, #tpu.memory_space<vmem>>, vector<128x128xbf16>
    %cst = arith.constant dense<0.000000e+00> : vector<4x128xf32>
    %4 = tpu.matmul %2, %3, %cst {dimension_numbers = #tpu.dot_dimension_numbers<[1], [0], [0], [1], [0, 0, 1, 1], [], []>} : vector<4x128xbf16>, vector<128x128xbf16>, vector<4x128xf32> -> vector<4x128xf32>
    %c0_5 = arith.constant 0 : index
    %c0_6 = arith.constant 0 : index
    %5 = vector.load %arg5[%c0_5, %c0_6] : memref<1x128xf32, #tpu.memory_space<vmem>>, vector<1x128xf32>
    %6 = vector.broadcast %5 : vector<1x128xf32> to vector<4x128xf32>
    %7 = arith.addf %4, %6 : vector<4x128xf32>
    %8 = vector.shape_cast %7 : vector<4x128xf32> to vector<1x2x2x128xf32>
    %c0_7 = arith.constant 0 : index
    %c0_8 = arith.constant 0 : index
    %c0_9 = arith.constant 0 : index
    %c0_10 = arith.constant 0 : index
    %9 = vector.load %arg7[%c0_7, %c0_8, %c0_9, %c0_10] : memref<1x2x2x128xf32, #tpu.memory_space<vmem>>, vector<1x2x2x128xf32>
    tpu.vector_store %arg7[%c0_7, %c0_8, %c0_9, %c0_10], %8 {strides = array<i32>} : memref<1x2x2x128xf32, #tpu.memory_space<vmem>>, vector<1x2x2x128xf32>,
    %10 = vector.shape_cast %1 : vector<2x2x128xbf16> to vector<2x1x2x128xbf16>
    %11 = vector.shape_cast %10 : vector<2x1x2x128xbf16> to vector<2x1x2x128xbf16>
    %12 = vector.broadcast %11 : vector<2x1x2x128xbf16> to vector<2x2x2x128xbf16>
    %13 = vector.shape_cast %12 : vector<2x2x2x128xbf16> to vector<4x2x128xbf16>
    %14 = vector.shape_cast %13 : vector<4x2x128xbf16> to vector<4x2x1x128xbf16>
    %15 = vector.shape_cast %14 : vector<4x2x1x128xbf16> to vector<4x2x1x128xbf16>
    %16 = vector.broadcast %15 : vector<4x2x1x128xbf16> to vector<4x2x2x128xbf16>
    %17 = vector.shape_cast %16 : vector<4x2x2x128xbf16> to vector<4x4x128xbf16>
    %cst_11 = arith.constant 0.000000e+00 : bf16
    %18 = vector.broadcast %cst_11 : bf16 to vector<6x6x128xbf16>
    %c0_12 = arith.constant 0 : index
    %c0_13 = arith.constant 0 : index
    %c0_14 = arith.constant 0 : index
    %19 = vector.load %arg10[%c0_12, %c0_13, %c0_14] : memref<6x6x128xbf16, #tpu.memory_space<vmem>>, vector<6x6x128xbf16>
    tpu.vector_store %arg10[%c0_12, %c0_13, %c0_14], %18 {strides = array<i32>} : memref<6x6x128xbf16, #tpu.memory_space<vmem>>, vector<6x6x128xbf16>,
    %c1 = arith.constant 1 : index
    %c1_15 = arith.constant 1 : index
    %c0_16 = arith.constant 0 : index
    %20 = vector.load %arg10[%c1, %c1_15, %c0_16] : memref<6x6x128xbf16, #tpu.memory_space<vmem>>, vector<4x4x128xbf16>
    tpu.vector_store %arg10[%c1, %c1_15, %c0_16], %17 {strides = array<i32>} : memref<6x6x128xbf16, #tpu.memory_space<vmem>>, vector<4x4x128xbf16>,
    %c0_17 = arith.constant 0 : index
    %c0_18 = arith.constant 0 : index
    %c0_19 = arith.constant 0 : index
    %21 = vector.load %arg10[%c0_17, %c0_18, %c0_19] : memref<6x6x128xbf16, #tpu.memory_space<vmem>>, vector<4x4x128xbf16>
    %c0_20 = arith.constant 0 : index
    %c1_21 = arith.constant 1 : index
    %c0_22 = arith.constant 0 : index
    %22 = vector.load %arg10[%c0_20, %c1_21, %c0_22] : memref<6x6x128xbf16, #tpu.memory_space<vmem>>, vector<4x4x128xbf16>
    %c0_23 = arith.constant 0 : index
    %c2 = arith.constant 2 : index
    %c0_24 = arith.constant 0 : index
    %23 = vector.load %arg10[%c0_23, %c2, %c0_24] : memref<6x6x128xbf16, #tpu.memory_space<vmem>>, vector<4x4x128xbf16>
    %c1_25 = arith.constant 1 : index
    %c0_26 = arith.constant 0 : index
    %c0_27 = arith.constant 0 : index
    %24 = vector.load %arg10[%c1_25, %c0_26, %c0_27] : memref<6x6x128xbf16, #tpu.memory_space<vmem>>, vector<4x4x128xbf16>
    %c1_28 = arith.constant 1 : index
    %c1_29 = arith.constant 1 : index
    %c0_30 = arith.constant 0 : index
    %25 = vector.load %arg10[%c1_28, %c1_29, %c0_30] : memref<6x6x128xbf16, #tpu.memory_space<vmem>>, vector<4x4x128xbf16>
    %c1_31 = arith.constant 1 : index
    %c2_32 = arith.constant 2 : index
    %c0_33 = arith.constant 0 : index
    %26 = vector.load %arg10[%c1_31, %c2_32, %c0_33] : memref<6x6x128xbf16, #tpu.memory_space<vmem>>, vector<4x4x128xbf16>
    %c2_34 = arith.constant 2 : index
    %c0_35 = arith.constant 0 : index
    %c0_36 = arith.constant 0 : index
    %27 = vector.load %arg10[%c2_34, %c0_35, %c0_36] : memref<6x6x128xbf16, #tpu.memory_space<vmem>>, vector<4x4x128xbf16>
    %c2_37 = arith.constant 2 : index
    %c1_38 = arith.constant 1 : index
    %c0_39 = arith.constant 0 : index
    %28 = vector.load %arg10[%c2_37, %c1_38, %c0_39] : memref<6x6x128xbf16, #tpu.memory_space<vmem>>, vector<4x4x128xbf16>
    %c2_40 = arith.constant 2 : index
    %c2_41 = arith.constant 2 : index
    %c0_42 = arith.constant 0 : index
    %29 = vector.load %arg10[%c2_40, %c2_41, %c0_42] : memref<6x6x128xbf16, #tpu.memory_space<vmem>>, vector<4x4x128xbf16>
    %30 = tpu.concatenate %21, %22, %23, %24, %25, %26, %27, %28, %29 in 2 : vector<4x4x128xbf16>, vector<4x4x128xbf16>, vector<4x4x128xbf16>, vector<4x4x128xbf16>, vector<4x4x128xbf16>, vector<4x4x128xbf16>, vector<4x4x128xbf16>, vector<4x4x128xbf16>, vector<4x4x128xbf16> -> vector<4x4x1152xbf16>
    %31 = vector.shape_cast %30 : vector<4x4x1152xbf16> to vector<16x1152xbf16>
    %c0_43 = arith.constant 0 : index
    %c0_44 = arith.constant 0 : index
    %32 = vector.load %arg2[%c0_43, %c0_44] : memref<1152x128xbf16, #tpu.memory_space<vmem>>, vector<1152x128xbf16>
    %cst_45 = arith.constant dense<0.000000e+00> : vector<16x128xf32>
    %33 = tpu.matmul %31, %32, %cst_45 {dimension_numbers = #tpu.dot_dimension_numbers<[1], [0], [0], [1], [0, 0, 1, 1], [], []>} : vector<16x1152xbf16>, vector<1152x128xbf16>, vector<16x128xf32> -> vector<16x128xf32>
    %c0_46 = arith.constant 0 : index
    %c0_47 = arith.constant 0 : index
    %34 = vector.load %arg3[%c0_46, %c0_47] : memref<1x128xf32, #tpu.memory_space<vmem>>, vector<1x128xf32>
    %35 = vector.broadcast %34 : vector<1x128xf32> to vector<16x128xf32>
    %36 = arith.addf %33, %35 : vector<16x128xf32>
    %37 = vector.shape_cast %36 : vector<16x128xf32> to vector<1x4x4x128xf32>
    %38 = arith.truncf %37 : vector<1x4x4x128xf32> to vector<1x4x4x128xbf16>
    %c0_48 = arith.constant 0 : index
    %c0_49 = arith.constant 0 : index
    %c0_50 = arith.constant 0 : index
    %c0_51 = arith.constant 0 : index
    %39 = vector.load %arg6[%c0_48, %c0_49, %c0_50, %c0_51] : memref<1x4x4x128xbf16, #tpu.memory_space<vmem>>, vector<1x4x4x128xbf16>
    tpu.vector_store %arg6[%c0_48, %c0_49, %c0_50, %c0_51], %38 {strides = array<i32>} : memref<1x4x4x128xbf16, #tpu.memory_space<vmem>>, vector<1x4x4x128xbf16>,
    %cst_52 = arith.constant dense<0.000000e+00> : vector<128xf32>
    %40 = vector.multi_reduction <add>, %36, %cst_52 [0] : vector<16x128xf32> to vector<128xf32>
    %41 = vector.shape_cast %40 : vector<128xf32> to vector<1x128xf32>
    %42 = vector.shape_cast %41 : vector<1x128xf32> to vector<1x1x128xf32>
    %c0_53 = arith.constant 0 : index
    %c0_54 = arith.constant 0 : index
    %c0_55 = arith.constant 0 : index
    %43 = vector.load %arg8[%c0_53, %c0_54, %c0_55] : memref<1x1x128xf32, #tpu.memory_space<vmem>>, vector<1x1x128xf32>
    tpu.vector_store %arg8[%c0_53, %c0_54, %c0_55], %42 {strides = array<i32>} : memref<1x1x128xf32, #tpu.memory_space<vmem>>, vector<1x1x128xf32>,
    %44 = arith.mulf %36, %36 : vector<16x128xf32>
    %cst_56 = arith.constant dense<0.000000e+00> : vector<128xf32>
    %45 = vector.multi_reduction <add>, %44, %cst_56 [0] : vector<16x128xf32> to vector<128xf32>
    %46 = vector.shape_cast %45 : vector<128xf32> to vector<1x128xf32>
    %47 = vector.shape_cast %46 : vector<1x128xf32> to vector<1x1x128xf32>
    %c0_57 = arith.constant 0 : index
    %c0_58 = arith.constant 0 : index
    %c0_59 = arith.constant 0 : index
    %48 = vector.load %arg9[%c0_57, %c0_58, %c0_59] : memref<1x1x128xf32, #tpu.memory_space<vmem>>, vector<1x1x128xf32>
    tpu.vector_store %arg9[%c0_57, %c0_58, %c0_59], %47 {strides = array<i32>} : memref<1x1x128xf32, #tpu.memory_space<vmem>>, vector<1x1x128xf32>,
    return
  }
  func.func @transform_0(%arg0: i32) -> (i32, i32, i32, i32) {
    %c0_i32 = arith.constant 0 : i32
    %c0_i32_0 = arith.constant 0 : i32
    %c0_i32_1 = arith.constant 0 : i32
    %c0_i32_2 = arith.constant 0 : i32
    return %arg0, %c0_i32, %c0_i32_0, %c0_i32_1 : i32, i32, i32, i32
  }
  func.func @transform_1(%arg0: i32) -> (i32, i32) {
    %c0_i32 = arith.constant 0 : i32
    %c0_i32_0 = arith.constant 0 : i32
    %c0_i32_1 = arith.constant 0 : i32
    return %c0_i32, %c0_i32_0 : i32, i32
  }
  func.func @transform_2(%arg0: i32) -> (i32, i32) {
    %c0_i32 = arith.constant 0 : i32
    %c0_i32_0 = arith.constant 0 : i32
    %c0_i32_1 = arith.constant 0 : i32
    return %c0_i32, %c0_i32_0 : i32, i32
  }
  func.func @transform_3(%arg0: i32) -> (i32, i32) {
    %c0_i32 = arith.constant 0 : i32
    %c0_i32_0 = arith.constant 0 : i32
    %c0_i32_1 = arith.constant 0 : i32
    return %c0_i32, %c0_i32_0 : i32, i32
  }
  func.func @transform_4(%arg0: i32) -> (i32, i32) {
    %c0_i32 = arith.constant 0 : i32
    %c0_i32_0 = arith.constant 0 : i32
    %c0_i32_1 = arith.constant 0 : i32
    return %c0_i32, %c0_i32_0 : i32, i32
  }
  func.func @transform_5(%arg0: i32) -> (i32, i32, i32, i32) {
    %c0_i32 = arith.constant 0 : i32
    %c0_i32_0 = arith.constant 0 : i32
    %c0_i32_1 = arith.constant 0 : i32
    %c0_i32_2 = arith.constant 0 : i32
    return %arg0, %c0_i32, %c0_i32_0, %c0_i32_1 : i32, i32, i32, i32
  }
  func.func @transform_6(%arg0: i32) -> (i32, i32, i32, i32) {
    %c0_i32 = arith.constant 0 : i32
    %c0_i32_0 = arith.constant 0 : i32
    %c0_i32_1 = arith.constant 0 : i32
    %c0_i32_2 = arith.constant 0 : i32
    return %arg0, %c0_i32, %c0_i32_0, %c0_i32_1 : i32, i32, i32, i32
  }
  func.func @transform_7(%arg0: i32) -> (i32, i32, i32) {
    %c0_i32 = arith.constant 0 : i32
    %c0_i32_0 = arith.constant 0 : i32
    %c0_i32_1 = arith.constant 0 : i32
    return %arg0, %c0_i32, %c0_i32_0 : i32, i32, i32
  }
  func.func @transform_8(%arg0: i32) -> (i32, i32, i32) {
    %c0_i32 = arith.constant 0 : i32
    %c0_i32_0 = arith.constant 0 : i32
    %c0_i32_1 = arith.constant 0 : i32
    return %arg0, %c0_i32, %c0_i32_0 : i32, i32, i32
  }
}

module attributes {stable_mosaic.version = 11 : i64} {
  func.func @_bn1_conv2_kernel(%arg0: i32, %arg1: memref<1x4x4x128xbf16, #tpu.memory_space<vmem>>, %arg2: memref<2x1x128xf32, #tpu.memory_space<vmem>>, %arg3: memref<2x1x128xf32, #tpu.memory_space<vmem>>, %arg4: memref<1x128xf32, #tpu.memory_space<vmem>>, %arg5: memref<1x128xf32, #tpu.memory_space<vmem>>, %arg6: memref<1152x128xbf16, #tpu.memory_space<vmem>>, %arg7: memref<1x128xf32, #tpu.memory_space<vmem>>, %arg8: memref<1x4x4x128xbf16, #tpu.memory_space<vmem>>, %arg9: memref<1x1x128xf32, #tpu.memory_space<vmem>>, %arg10: memref<1x1x128xf32, #tpu.memory_space<vmem>>, %arg11: memref<6x6x128xbf16, #tpu.memory_space<vmem>>) attributes {dimension_semantics = [#tpu.dimension_semantics<parallel>], iteration_bounds = array<i64: 2>, scalar_prefetch = 0 : i64, scratch_operands = 1 : i64, tpu.core_type = #tpu.core_type<tc>, window_params = [{transform_indices = @transform_0, window_bounds = array<i64: 1, 4, 4, 128>}, {pipeline_mode = #tpu.pipeline_mode<synchronous>, transform_indices = @transform_1, window_bounds = array<i64: 2, 1, 128>}, {pipeline_mode = #tpu.pipeline_mode<synchronous>, transform_indices = @transform_2, window_bounds = array<i64: 2, 1, 128>}, {pipeline_mode = #tpu.pipeline_mode<synchronous>, transform_indices = @transform_3, window_bounds = array<i64: 1, 128>}, {pipeline_mode = #tpu.pipeline_mode<synchronous>, transform_indices = @transform_4, window_bounds = array<i64: 1, 128>}, {pipeline_mode = #tpu.pipeline_mode<synchronous>, transform_indices = @transform_5, window_bounds = array<i64: 1152, 128>}, {pipeline_mode = #tpu.pipeline_mode<synchronous>, transform_indices = @transform_6, window_bounds = array<i64: 1, 128>}, {transform_indices = @transform_7, window_bounds = array<i64: 1, 4, 4, 128>}, {transform_indices = @transform_8, window_bounds = array<i64: 1, 1, 128>}, {transform_indices = @transform_9, window_bounds = array<i64: 1, 1, 128>}]} {
    %c0 = arith.constant 0 : index
    %c0_0 = arith.constant 0 : index
    %c0_1 = arith.constant 0 : index
    %0 = vector.load %arg2[%c0, %c0_0, %c0_1] : memref<2x1x128xf32, #tpu.memory_space<vmem>>, vector<2x1x128xf32>
    %cst = arith.constant dense<0.000000e+00> : vector<1x128xf32>
    %1 = vector.multi_reduction <add>, %0, %cst [0] : vector<2x1x128xf32> to vector<1x128xf32>
    %c0_2 = arith.constant 0 : index
    %c0_3 = arith.constant 0 : index
    %c0_4 = arith.constant 0 : index
    %2 = vector.load %arg3[%c0_2, %c0_3, %c0_4] : memref<2x1x128xf32, #tpu.memory_space<vmem>>, vector<2x1x128xf32>
    %cst_5 = arith.constant dense<0.000000e+00> : vector<1x128xf32>
    %3 = vector.multi_reduction <add>, %2, %cst_5 [0] : vector<2x1x128xf32> to vector<1x128xf32>
    %cst_6 = arith.constant 3.125000e-02 : f32
    %4 = vector.broadcast %cst_6 : f32 to vector<1x128xf32>
    %5 = arith.mulf %1, %4 : vector<1x128xf32>
    %cst_7 = arith.constant 3.125000e-02 : f32
    %6 = vector.broadcast %cst_7 : f32 to vector<1x128xf32>
    %7 = arith.mulf %3, %6 : vector<1x128xf32>
    %8 = arith.mulf %5, %5 : vector<1x128xf32>
    %9 = arith.subf %7, %8 : vector<1x128xf32>
    %cst_8 = arith.constant 0.000000e+00 : f32
    %10 = vector.broadcast %cst_8 : f32 to vector<1x128xf32>
    %11 = arith.maximumf %9, %10 : vector<1x128xf32>
    %c0_9 = arith.constant 0 : index
    %c0_10 = arith.constant 0 : index
    %12 = vector.load %arg4[%c0_9, %c0_10] : memref<1x128xf32, #tpu.memory_space<vmem>>, vector<1x128xf32>
    %cst_11 = arith.constant 9.99999974E-6 : f32
    %13 = vector.broadcast %cst_11 : f32 to vector<1x128xf32>
    %14 = arith.addf %11, %13 : vector<1x128xf32>
    %15 = math.rsqrt %14 : vector<1x128xf32>
    %16 = arith.mulf %12, %15 : vector<1x128xf32>
    %c0_12 = arith.constant 0 : index
    %c0_13 = arith.constant 0 : index
    %17 = vector.load %arg5[%c0_12, %c0_13] : memref<1x128xf32, #tpu.memory_space<vmem>>, vector<1x128xf32>
    %18 = arith.mulf %5, %16 : vector<1x128xf32>
    %19 = arith.subf %17, %18 : vector<1x128xf32>
    %c0_14 = arith.constant 0 : index
    %c0_15 = arith.constant 0 : index
    %c0_16 = arith.constant 0 : index
    %c0_17 = arith.constant 0 : index
    %20 = vector.load %arg1[%c0_14, %c0_15, %c0_16, %c0_17] : memref<1x4x4x128xbf16, #tpu.memory_space<vmem>>, vector<1x4x4x128xbf16>
    %21 = vector.shape_cast %20 : vector<1x4x4x128xbf16> to vector<4x4x128xbf16>
    %22 = vector.shape_cast %16 : vector<1x128xf32> to vector<1x1x128xf32>
    %23 = arith.extf %21 : vector<4x4x128xbf16> to vector<4x4x128xf32>
    %24 = vector.broadcast %22 : vector<1x1x128xf32> to vector<4x4x128xf32>
    %25 = arith.mulf %23, %24 : vector<4x4x128xf32>
    %26 = vector.shape_cast %19 : vector<1x128xf32> to vector<1x1x128xf32>
    %27 = vector.broadcast %26 : vector<1x1x128xf32> to vector<4x4x128xf32>
    %28 = arith.addf %25, %27 : vector<4x4x128xf32>
    %cst_18 = arith.constant 0.000000e+00 : f32
    %29 = vector.broadcast %cst_18 : f32 to vector<4x4x128xf32>
    %30 = arith.maximumf %28, %29 : vector<4x4x128xf32>
    %31 = arith.truncf %30 : vector<4x4x128xf32> to vector<4x4x128xbf16>
    %cst_19 = arith.constant 0.000000e+00 : bf16
    %32 = vector.broadcast %cst_19 : bf16 to vector<6x6x128xbf16>
    %c0_20 = arith.constant 0 : index
    %c0_21 = arith.constant 0 : index
    %c0_22 = arith.constant 0 : index
    %33 = vector.load %arg11[%c0_20, %c0_21, %c0_22] : memref<6x6x128xbf16, #tpu.memory_space<vmem>>, vector<6x6x128xbf16>
    tpu.vector_store %arg11[%c0_20, %c0_21, %c0_22], %32 {strides = array<i32>} : memref<6x6x128xbf16, #tpu.memory_space<vmem>>, vector<6x6x128xbf16>,
    %c1 = arith.constant 1 : index
    %c1_23 = arith.constant 1 : index
    %c0_24 = arith.constant 0 : index
    %34 = vector.load %arg11[%c1, %c1_23, %c0_24] : memref<6x6x128xbf16, #tpu.memory_space<vmem>>, vector<4x4x128xbf16>
    tpu.vector_store %arg11[%c1, %c1_23, %c0_24], %31 {strides = array<i32>} : memref<6x6x128xbf16, #tpu.memory_space<vmem>>, vector<4x4x128xbf16>,
    %c0_25 = arith.constant 0 : index
    %c0_26 = arith.constant 0 : index
    %c0_27 = arith.constant 0 : index
    %35 = vector.load %arg11[%c0_25, %c0_26, %c0_27] : memref<6x6x128xbf16, #tpu.memory_space<vmem>>, vector<4x4x128xbf16>
    %c0_28 = arith.constant 0 : index
    %c1_29 = arith.constant 1 : index
    %c0_30 = arith.constant 0 : index
    %36 = vector.load %arg11[%c0_28, %c1_29, %c0_30] : memref<6x6x128xbf16, #tpu.memory_space<vmem>>, vector<4x4x128xbf16>
    %c0_31 = arith.constant 0 : index
    %c2 = arith.constant 2 : index
    %c0_32 = arith.constant 0 : index
    %37 = vector.load %arg11[%c0_31, %c2, %c0_32] : memref<6x6x128xbf16, #tpu.memory_space<vmem>>, vector<4x4x128xbf16>
    %c1_33 = arith.constant 1 : index
    %c0_34 = arith.constant 0 : index
    %c0_35 = arith.constant 0 : index
    %38 = vector.load %arg11[%c1_33, %c0_34, %c0_35] : memref<6x6x128xbf16, #tpu.memory_space<vmem>>, vector<4x4x128xbf16>
    %c1_36 = arith.constant 1 : index
    %c1_37 = arith.constant 1 : index
    %c0_38 = arith.constant 0 : index
    %39 = vector.load %arg11[%c1_36, %c1_37, %c0_38] : memref<6x6x128xbf16, #tpu.memory_space<vmem>>, vector<4x4x128xbf16>
    %c1_39 = arith.constant 1 : index
    %c2_40 = arith.constant 2 : index
    %c0_41 = arith.constant 0 : index
    %40 = vector.load %arg11[%c1_39, %c2_40, %c0_41] : memref<6x6x128xbf16, #tpu.memory_space<vmem>>, vector<4x4x128xbf16>
    %c2_42 = arith.constant 2 : index
    %c0_43 = arith.constant 0 : index
    %c0_44 = arith.constant 0 : index
    %41 = vector.load %arg11[%c2_42, %c0_43, %c0_44] : memref<6x6x128xbf16, #tpu.memory_space<vmem>>, vector<4x4x128xbf16>
    %c2_45 = arith.constant 2 : index
    %c1_46 = arith.constant 1 : index
    %c0_47 = arith.constant 0 : index
    %42 = vector.load %arg11[%c2_45, %c1_46, %c0_47] : memref<6x6x128xbf16, #tpu.memory_space<vmem>>, vector<4x4x128xbf16>
    %c2_48 = arith.constant 2 : index
    %c2_49 = arith.constant 2 : index
    %c0_50 = arith.constant 0 : index
    %43 = vector.load %arg11[%c2_48, %c2_49, %c0_50] : memref<6x6x128xbf16, #tpu.memory_space<vmem>>, vector<4x4x128xbf16>
    %44 = tpu.concatenate %35, %36, %37, %38, %39, %40, %41, %42, %43 in 2 : vector<4x4x128xbf16>, vector<4x4x128xbf16>, vector<4x4x128xbf16>, vector<4x4x128xbf16>, vector<4x4x128xbf16>, vector<4x4x128xbf16>, vector<4x4x128xbf16>, vector<4x4x128xbf16>, vector<4x4x128xbf16> -> vector<4x4x1152xbf16>
    %45 = vector.shape_cast %44 : vector<4x4x1152xbf16> to vector<16x1152xbf16>
    %c0_51 = arith.constant 0 : index
    %c0_52 = arith.constant 0 : index
    %46 = vector.load %arg6[%c0_51, %c0_52] : memref<1152x128xbf16, #tpu.memory_space<vmem>>, vector<1152x128xbf16>
    %cst_53 = arith.constant dense<0.000000e+00> : vector<16x128xf32>
    %47 = tpu.matmul %45, %46, %cst_53 {dimension_numbers = #tpu.dot_dimension_numbers<[1], [0], [0], [1], [0, 0, 1, 1], [], []>} : vector<16x1152xbf16>, vector<1152x128xbf16>, vector<16x128xf32> -> vector<16x128xf32>
    %c0_54 = arith.constant 0 : index
    %c0_55 = arith.constant 0 : index
    %48 = vector.load %arg7[%c0_54, %c0_55] : memref<1x128xf32, #tpu.memory_space<vmem>>, vector<1x128xf32>
    %49 = vector.broadcast %48 : vector<1x128xf32> to vector<16x128xf32>
    %50 = arith.addf %47, %49 : vector<16x128xf32>
    %51 = vector.shape_cast %50 : vector<16x128xf32> to vector<1x4x4x128xf32>
    %52 = arith.truncf %51 : vector<1x4x4x128xf32> to vector<1x4x4x128xbf16>
    %c0_56 = arith.constant 0 : index
    %c0_57 = arith.constant 0 : index
    %c0_58 = arith.constant 0 : index
    %c0_59 = arith.constant 0 : index
    %53 = vector.load %arg8[%c0_56, %c0_57, %c0_58, %c0_59] : memref<1x4x4x128xbf16, #tpu.memory_space<vmem>>, vector<1x4x4x128xbf16>
    tpu.vector_store %arg8[%c0_56, %c0_57, %c0_58, %c0_59], %52 {strides = array<i32>} : memref<1x4x4x128xbf16, #tpu.memory_space<vmem>>, vector<1x4x4x128xbf16>,
    %cst_60 = arith.constant dense<0.000000e+00> : vector<128xf32>
    %54 = vector.multi_reduction <add>, %50, %cst_60 [0] : vector<16x128xf32> to vector<128xf32>
    %55 = vector.shape_cast %54 : vector<128xf32> to vector<1x128xf32>
    %56 = vector.shape_cast %55 : vector<1x128xf32> to vector<1x1x128xf32>
    %c0_61 = arith.constant 0 : index
    %c0_62 = arith.constant 0 : index
    %c0_63 = arith.constant 0 : index
    %57 = vector.load %arg9[%c0_61, %c0_62, %c0_63] : memref<1x1x128xf32, #tpu.memory_space<vmem>>, vector<1x1x128xf32>
    tpu.vector_store %arg9[%c0_61, %c0_62, %c0_63], %56 {strides = array<i32>} : memref<1x1x128xf32, #tpu.memory_space<vmem>>, vector<1x1x128xf32>,
    %58 = arith.mulf %50, %50 : vector<16x128xf32>
    %cst_64 = arith.constant dense<0.000000e+00> : vector<128xf32>
    %59 = vector.multi_reduction <add>, %58, %cst_64 [0] : vector<16x128xf32> to vector<128xf32>
    %60 = vector.shape_cast %59 : vector<128xf32> to vector<1x128xf32>
    %61 = vector.shape_cast %60 : vector<1x128xf32> to vector<1x1x128xf32>
    %c0_65 = arith.constant 0 : index
    %c0_66 = arith.constant 0 : index
    %c0_67 = arith.constant 0 : index
    %62 = vector.load %arg10[%c0_65, %c0_66, %c0_67] : memref<1x1x128xf32, #tpu.memory_space<vmem>>, vector<1x1x128xf32>
    tpu.vector_store %arg10[%c0_65, %c0_66, %c0_67], %61 {strides = array<i32>} : memref<1x1x128xf32, #tpu.memory_space<vmem>>, vector<1x1x128xf32>,
    return
  }
  func.func @transform_0(%arg0: i32) -> (i32, i32, i32, i32) {
    %c0_i32 = arith.constant 0 : i32
    %c0_i32_0 = arith.constant 0 : i32
    %c0_i32_1 = arith.constant 0 : i32
    %c0_i32_2 = arith.constant 0 : i32
    return %arg0, %c0_i32, %c0_i32_0, %c0_i32_1 : i32, i32, i32, i32
  }
  func.func @transform_1(%arg0: i32) -> (i32, i32, i32) {
    %c0_i32 = arith.constant 0 : i32
    %c0_i32_0 = arith.constant 0 : i32
    %c0_i32_1 = arith.constant 0 : i32
    %c0_i32_2 = arith.constant 0 : i32
    return %c0_i32, %c0_i32_0, %c0_i32_1 : i32, i32, i32
  }
  func.func @transform_2(%arg0: i32) -> (i32, i32, i32) {
    %c0_i32 = arith.constant 0 : i32
    %c0_i32_0 = arith.constant 0 : i32
    %c0_i32_1 = arith.constant 0 : i32
    %c0_i32_2 = arith.constant 0 : i32
    return %c0_i32, %c0_i32_0, %c0_i32_1 : i32, i32, i32
  }
  func.func @transform_3(%arg0: i32) -> (i32, i32) {
    %c0_i32 = arith.constant 0 : i32
    %c0_i32_0 = arith.constant 0 : i32
    %c0_i32_1 = arith.constant 0 : i32
    return %c0_i32, %c0_i32_0 : i32, i32
  }
  func.func @transform_4(%arg0: i32) -> (i32, i32) {
    %c0_i32 = arith.constant 0 : i32
    %c0_i32_0 = arith.constant 0 : i32
    %c0_i32_1 = arith.constant 0 : i32
    return %c0_i32, %c0_i32_0 : i32, i32
  }
  func.func @transform_5(%arg0: i32) -> (i32, i32) {
    %c0_i32 = arith.constant 0 : i32
    %c0_i32_0 = arith.constant 0 : i32
    %c0_i32_1 = arith.constant 0 : i32
    return %c0_i32, %c0_i32_0 : i32, i32
  }
  func.func @transform_6(%arg0: i32) -> (i32, i32) {
    %c0_i32 = arith.constant 0 : i32
    %c0_i32_0 = arith.constant 0 : i32
    %c0_i32_1 = arith.constant 0 : i32
    return %c0_i32, %c0_i32_0 : i32, i32
  }
  func.func @transform_7(%arg0: i32) -> (i32, i32, i32, i32) {
    %c0_i32 = arith.constant 0 : i32
    %c0_i32_0 = arith.constant 0 : i32
    %c0_i32_1 = arith.constant 0 : i32
    %c0_i32_2 = arith.constant 0 : i32
    return %arg0, %c0_i32, %c0_i32_0, %c0_i32_1 : i32, i32, i32, i32
  }
  func.func @transform_8(%arg0: i32) -> (i32, i32, i32) {
    %c0_i32 = arith.constant 0 : i32
    %c0_i32_0 = arith.constant 0 : i32
    %c0_i32_1 = arith.constant 0 : i32
    return %arg0, %c0_i32, %c0_i32_0 : i32, i32, i32
  }
  func.func @transform_9(%arg0: i32) -> (i32, i32, i32) {
    %c0_i32 = arith.constant 0 : i32
    %c0_i32_0 = arith.constant 0 : i32
    %c0_i32_1 = arith.constant 0 : i32
    return %arg0, %c0_i32, %c0_i32_0 : i32, i32, i32
  }
}

module attributes {stable_mosaic.version = 11 : i64} {
  func.func @_bn2_skip_relu_kernel(%arg0: i32, %arg1: memref<1x4x4x128xbf16, #tpu.memory_space<vmem>>, %arg2: memref<2x1x128xf32, #tpu.memory_space<vmem>>, %arg3: memref<2x1x128xf32, #tpu.memory_space<vmem>>, %arg4: memref<1x128xf32, #tpu.memory_space<vmem>>, %arg5: memref<1x128xf32, #tpu.memory_space<vmem>>, %arg6: memref<1x2x2x128xf32, #tpu.memory_space<vmem>>, %arg7: memref<1x4x4x128xbf16, #tpu.memory_space<vmem>>) attributes {dimension_semantics = [#tpu.dimension_semantics<parallel>], iteration_bounds = array<i64: 2>, scalar_prefetch = 0 : i64, scratch_operands = 0 : i64, tpu.core_type = #tpu.core_type<tc>, window_params = [{transform_indices = @transform_0, window_bounds = array<i64: 1, 4, 4, 128>}, {pipeline_mode = #tpu.pipeline_mode<synchronous>, transform_indices = @transform_1, window_bounds = array<i64: 2, 1, 128>}, {pipeline_mode = #tpu.pipeline_mode<synchronous>, transform_indices = @transform_2, window_bounds = array<i64: 2, 1, 128>}, {pipeline_mode = #tpu.pipeline_mode<synchronous>, transform_indices = @transform_3, window_bounds = array<i64: 1, 128>}, {pipeline_mode = #tpu.pipeline_mode<synchronous>, transform_indices = @transform_4, window_bounds = array<i64: 1, 128>}, {transform_indices = @transform_5, window_bounds = array<i64: 1, 2, 2, 128>}, {transform_indices = @transform_6, window_bounds = array<i64: 1, 4, 4, 128>}]} {
    %c0 = arith.constant 0 : index
    %c0_0 = arith.constant 0 : index
    %c0_1 = arith.constant 0 : index
    %0 = vector.load %arg2[%c0, %c0_0, %c0_1] : memref<2x1x128xf32, #tpu.memory_space<vmem>>, vector<2x1x128xf32>
    %cst = arith.constant dense<0.000000e+00> : vector<1x128xf32>
    %1 = vector.multi_reduction <add>, %0, %cst [0] : vector<2x1x128xf32> to vector<1x128xf32>
    %c0_2 = arith.constant 0 : index
    %c0_3 = arith.constant 0 : index
    %c0_4 = arith.constant 0 : index
    %2 = vector.load %arg3[%c0_2, %c0_3, %c0_4] : memref<2x1x128xf32, #tpu.memory_space<vmem>>, vector<2x1x128xf32>
    %cst_5 = arith.constant dense<0.000000e+00> : vector<1x128xf32>
    %3 = vector.multi_reduction <add>, %2, %cst_5 [0] : vector<2x1x128xf32> to vector<1x128xf32>
    %cst_6 = arith.constant 3.125000e-02 : f32
    %4 = vector.broadcast %cst_6 : f32 to vector<1x128xf32>
    %5 = arith.mulf %1, %4 : vector<1x128xf32>
    %cst_7 = arith.constant 3.125000e-02 : f32
    %6 = vector.broadcast %cst_7 : f32 to vector<1x128xf32>
    %7 = arith.mulf %3, %6 : vector<1x128xf32>
    %8 = arith.mulf %5, %5 : vector<1x128xf32>
    %9 = arith.subf %7, %8 : vector<1x128xf32>
    %cst_8 = arith.constant 0.000000e+00 : f32
    %10 = vector.broadcast %cst_8 : f32 to vector<1x128xf32>
    %11 = arith.maximumf %9, %10 : vector<1x128xf32>
    %c0_9 = arith.constant 0 : index
    %c0_10 = arith.constant 0 : index
    %12 = vector.load %arg4[%c0_9, %c0_10] : memref<1x128xf32, #tpu.memory_space<vmem>>, vector<1x128xf32>
    %cst_11 = arith.constant 9.99999974E-6 : f32
    %13 = vector.broadcast %cst_11 : f32 to vector<1x128xf32>
    %14 = arith.addf %11, %13 : vector<1x128xf32>
    %15 = math.rsqrt %14 : vector<1x128xf32>
    %16 = arith.mulf %12, %15 : vector<1x128xf32>
    %c0_12 = arith.constant 0 : index
    %c0_13 = arith.constant 0 : index
    %17 = vector.load %arg5[%c0_12, %c0_13] : memref<1x128xf32, #tpu.memory_space<vmem>>, vector<1x128xf32>
    %18 = arith.mulf %5, %16 : vector<1x128xf32>
    %19 = arith.subf %17, %18 : vector<1x128xf32>
    %c0_14 = arith.constant 0 : index
    %c0_15 = arith.constant 0 : index
    %c0_16 = arith.constant 0 : index
    %c0_17 = arith.constant 0 : index
    %20 = vector.load %arg6[%c0_14, %c0_15, %c0_16, %c0_17] : memref<1x2x2x128xf32, #tpu.memory_space<vmem>>, vector<1x2x2x128xf32>
    %21 = vector.shape_cast %20 : vector<1x2x2x128xf32> to vector<2x2x128xf32>
    %22 = vector.shape_cast %21 : vector<2x2x128xf32> to vector<2x1x2x128xf32>
    %23 = vector.shape_cast %22 : vector<2x1x2x128xf32> to vector<2x1x2x128xf32>
    %24 = vector.broadcast %23 : vector<2x1x2x128xf32> to vector<2x2x2x128xf32>
    %25 = vector.shape_cast %24 : vector<2x2x2x128xf32> to vector<4x2x128xf32>
    %26 = vector.shape_cast %25 : vector<4x2x128xf32> to vector<4x2x1x128xf32>
    %27 = vector.shape_cast %26 : vector<4x2x1x128xf32> to vector<4x2x1x128xf32>
    %28 = vector.broadcast %27 : vector<4x2x1x128xf32> to vector<4x2x2x128xf32>
    %29 = vector.shape_cast %28 : vector<4x2x2x128xf32> to vector<4x4x128xf32>
    %c0_18 = arith.constant 0 : index
    %c0_19 = arith.constant 0 : index
    %c0_20 = arith.constant 0 : index
    %c0_21 = arith.constant 0 : index
    %30 = vector.load %arg1[%c0_18, %c0_19, %c0_20, %c0_21] : memref<1x4x4x128xbf16, #tpu.memory_space<vmem>>, vector<1x4x4x128xbf16>
    %31 = vector.shape_cast %30 : vector<1x4x4x128xbf16> to vector<4x4x128xbf16>
    %32 = vector.shape_cast %16 : vector<1x128xf32> to vector<1x1x128xf32>
    %33 = arith.extf %31 : vector<4x4x128xbf16> to vector<4x4x128xf32>
    %34 = vector.broadcast %32 : vector<1x1x128xf32> to vector<4x4x128xf32>
    %35 = arith.mulf %33, %34 : vector<4x4x128xf32>
    %36 = vector.shape_cast %19 : vector<1x128xf32> to vector<1x1x128xf32>
    %37 = vector.broadcast %36 : vector<1x1x128xf32> to vector<4x4x128xf32>
    %38 = arith.addf %35, %37 : vector<4x4x128xf32>
    %39 = arith.addf %38, %29 : vector<4x4x128xf32>
    %cst_22 = arith.constant 0.000000e+00 : f32
    %40 = vector.broadcast %cst_22 : f32 to vector<4x4x128xf32>
    %41 = arith.maximumf %39, %40 : vector<4x4x128xf32>
    %42 = vector.shape_cast %41 : vector<4x4x128xf32> to vector<1x4x4x128xf32>
    %43 = arith.truncf %42 : vector<1x4x4x128xf32> to vector<1x4x4x128xbf16>
    %c0_23 = arith.constant 0 : index
    %c0_24 = arith.constant 0 : index
    %c0_25 = arith.constant 0 : index
    %c0_26 = arith.constant 0 : index
    %44 = vector.load %arg7[%c0_23, %c0_24, %c0_25, %c0_26] : memref<1x4x4x128xbf16, #tpu.memory_space<vmem>>, vector<1x4x4x128xbf16>
    tpu.vector_store %arg7[%c0_23, %c0_24, %c0_25, %c0_26], %43 {strides = array<i32>} : memref<1x4x4x128xbf16, #tpu.memory_space<vmem>>, vector<1x4x4x128xbf16>,
    return
  }
  func.func @transform_0(%arg0: i32) -> (i32, i32, i32, i32) {
    %c0_i32 = arith.constant 0 : i32
    %c0_i32_0 = arith.constant 0 : i32
    %c0_i32_1 = arith.constant 0 : i32
    %c0_i32_2 = arith.constant 0 : i32
    return %arg0, %c0_i32, %c0_i32_0, %c0_i32_1 : i32, i32, i32, i32
  }
  func.func @transform_1(%arg0: i32) -> (i32, i32, i32) {
    %c0_i32 = arith.constant 0 : i32
    %c0_i32_0 = arith.constant 0 : i32
    %c0_i32_1 = arith.constant 0 : i32
    %c0_i32_2 = arith.constant 0 : i32
    return %c0_i32, %c0_i32_0, %c0_i32_1 : i32, i32, i32
  }
  func.func @transform_2(%arg0: i32) -> (i32, i32, i32) {
    %c0_i32 = arith.constant 0 : i32
    %c0_i32_0 = arith.constant 0 : i32
    %c0_i32_1 = arith.constant 0 : i32
    %c0_i32_2 = arith.constant 0 : i32
    return %c0_i32, %c0_i32_0, %c0_i32_1 : i32, i32, i32
  }
  func.func @transform_3(%arg0: i32) -> (i32, i32) {
    %c0_i32 = arith.constant 0 : i32
    %c0_i32_0 = arith.constant 0 : i32
    %c0_i32_1 = arith.constant 0 : i32
    return %c0_i32, %c0_i32_0 : i32, i32
  }
  func.func @transform_4(%arg0: i32) -> (i32, i32) {
    %c0_i32 = arith.constant 0 : i32
    %c0_i32_0 = arith.constant 0 : i32
    %c0_i32_1 = arith.constant 0 : i32
    return %c0_i32, %c0_i32_0 : i32, i32
  }
  func.func @transform_5(%arg0: i32) -> (i32, i32, i32, i32) {
    %c0_i32 = arith.constant 0 : i32
    %c0_i32_0 = arith.constant 0 : i32
    %c0_i32_1 = arith.constant 0 : i32
    %c0_i32_2 = arith.constant 0 : i32
    return %arg0, %c0_i32, %c0_i32_0, %c0_i32_1 : i32, i32, i32, i32
  }
  func.func @transform_6(%arg0: i32) -> (i32, i32, i32, i32) {
    %c0_i32 = arith.constant 0 : i32
    %c0_i32_0 = arith.constant 0 : i32
    %c0_i32_1 = arith.constant 0 : i32
    %c0_i32_2 = arith.constant 0 : i32
    return %arg0, %c0_i32, %c0_i32_0, %c0_i32_1 : i32, i32, i32, i32
  }
}

module attributes {stable_mosaic.version = 11 : i64} {
  func.func @_conv1_skip_kernel(%arg0: i32, %arg1: memref<1x4x4x128xbf16, #tpu.memory_space<vmem>>, %arg2: memref<1152x128xbf16, #tpu.memory_space<vmem>>, %arg3: memref<1x128xf32, #tpu.memory_space<vmem>>, %arg4: memref<128x128xbf16, #tpu.memory_space<vmem>>, %arg5: memref<1x128xf32, #tpu.memory_space<vmem>>, %arg6: memref<1x8x8x128xbf16, #tpu.memory_space<vmem>>, %arg7: memref<1x4x4x128xf32, #tpu.memory_space<vmem>>, %arg8: memref<1x1x128xf32, #tpu.memory_space<vmem>>, %arg9: memref<1x1x128xf32, #tpu.memory_space<vmem>>, %arg10: memref<10x10x128xbf16, #tpu.memory_space<vmem>>) attributes {dimension_semantics = [#tpu.dimension_semantics<parallel>], iteration_bounds = array<i64: 2>, scalar_prefetch = 0 : i64, scratch_operands = 1 : i64, tpu.core_type = #tpu.core_type<tc>, window_params = [{transform_indices = @transform_0, window_bounds = array<i64: 1, 4, 4, 128>}, {pipeline_mode = #tpu.pipeline_mode<synchronous>, transform_indices = @transform_1, window_bounds = array<i64: 1152, 128>}, {pipeline_mode = #tpu.pipeline_mode<synchronous>, transform_indices = @transform_2, window_bounds = array<i64: 1, 128>}, {pipeline_mode = #tpu.pipeline_mode<synchronous>, transform_indices = @transform_3, window_bounds = array<i64: 128, 128>}, {pipeline_mode = #tpu.pipeline_mode<synchronous>, transform_indices = @transform_4, window_bounds = array<i64: 1, 128>}, {transform_indices = @transform_5, window_bounds = array<i64: 1, 8, 8, 128>}, {transform_indices = @transform_6, window_bounds = array<i64: 1, 4, 4, 128>}, {transform_indices = @transform_7, window_bounds = array<i64: 1, 1, 128>}, {transform_indices = @transform_8, window_bounds = array<i64: 1, 1, 128>}]} {
    %c0 = arith.constant 0 : index
    %c0_0 = arith.constant 0 : index
    %c0_1 = arith.constant 0 : index
    %c0_2 = arith.constant 0 : index
    %0 = vector.load %arg1[%c0, %c0_0, %c0_1, %c0_2] : memref<1x4x4x128xbf16, #tpu.memory_space<vmem>>, vector<1x4x4x128xbf16>
    %1 = vector.shape_cast %0 : vector<1x4x4x128xbf16> to vector<4x4x128xbf16>
    %2 = vector.shape_cast %1 : vector<4x4x128xbf16> to vector<16x128xbf16>
    %c0_3 = arith.constant 0 : index
    %c0_4 = arith.constant 0 : index
    %3 = vector.load %arg4[%c0_3, %c0_4] : memref<128x128xbf16, #tpu.memory_space<vmem>>, vector<128x128xbf16>
    %cst = arith.constant dense<0.000000e+00> : vector<16x128xf32>
    %4 = tpu.matmul %2, %3, %cst {dimension_numbers = #tpu.dot_dimension_numbers<[1], [0], [0], [1], [0, 0, 1, 1], [], []>} : vector<16x128xbf16>, vector<128x128xbf16>, vector<16x128xf32> -> vector<16x128xf32>
    %c0_5 = arith.constant 0 : index
    %c0_6 = arith.constant 0 : index
    %5 = vector.load %arg5[%c0_5, %c0_6] : memref<1x128xf32, #tpu.memory_space<vmem>>, vector<1x128xf32>
    %6 = vector.broadcast %5 : vector<1x128xf32> to vector<16x128xf32>
    %7 = arith.addf %4, %6 : vector<16x128xf32>
    %8 = vector.shape_cast %7 : vector<16x128xf32> to vector<1x4x4x128xf32>
    %c0_7 = arith.constant 0 : index
    %c0_8 = arith.constant 0 : index
    %c0_9 = arith.constant 0 : index
    %c0_10 = arith.constant 0 : index
    %9 = vector.load %arg7[%c0_7, %c0_8, %c0_9, %c0_10] : memref<1x4x4x128xf32, #tpu.memory_space<vmem>>, vector<1x4x4x128xf32>
    tpu.vector_store %arg7[%c0_7, %c0_8, %c0_9, %c0_10], %8 {strides = array<i32>} : memref<1x4x4x128xf32, #tpu.memory_space<vmem>>, vector<1x4x4x128xf32>,
    %10 = vector.shape_cast %1 : vector<4x4x128xbf16> to vector<4x1x4x128xbf16>
    %11 = vector.shape_cast %10 : vector<4x1x4x128xbf16> to vector<4x1x4x128xbf16>
    %12 = vector.broadcast %11 : vector<4x1x4x128xbf16> to vector<4x2x4x128xbf16>
    %13 = vector.shape_cast %12 : vector<4x2x4x128xbf16> to vector<8x4x128xbf16>
    %14 = vector.shape_cast %13 : vector<8x4x128xbf16> to vector<8x4x1x128xbf16>
    %15 = vector.shape_cast %14 : vector<8x4x1x128xbf16> to vector<8x4x1x128xbf16>
    %16 = vector.broadcast %15 : vector<8x4x1x128xbf16> to vector<8x4x2x128xbf16>
    %17 = vector.shape_cast %16 : vector<8x4x2x128xbf16> to vector<8x8x128xbf16>
    %cst_11 = arith.constant 0.000000e+00 : bf16
    %18 = vector.broadcast %cst_11 : bf16 to vector<10x10x128xbf16>
    %c0_12 = arith.constant 0 : index
    %c0_13 = arith.constant 0 : index
    %c0_14 = arith.constant 0 : index
    %19 = vector.load %arg10[%c0_12, %c0_13, %c0_14] : memref<10x10x128xbf16, #tpu.memory_space<vmem>>, vector<10x10x128xbf16>
    tpu.vector_store %arg10[%c0_12, %c0_13, %c0_14], %18 {strides = array<i32>} : memref<10x10x128xbf16, #tpu.memory_space<vmem>>, vector<10x10x128xbf16>,
    %c1 = arith.constant 1 : index
    %c1_15 = arith.constant 1 : index
    %c0_16 = arith.constant 0 : index
    %20 = vector.load %arg10[%c1, %c1_15, %c0_16] : memref<10x10x128xbf16, #tpu.memory_space<vmem>>, vector<8x8x128xbf16>
    tpu.vector_store %arg10[%c1, %c1_15, %c0_16], %17 {strides = array<i32>} : memref<10x10x128xbf16, #tpu.memory_space<vmem>>, vector<8x8x128xbf16>,
    %c0_17 = arith.constant 0 : index
    %c0_18 = arith.constant 0 : index
    %c0_19 = arith.constant 0 : index
    %21 = vector.load %arg10[%c0_17, %c0_18, %c0_19] : memref<10x10x128xbf16, #tpu.memory_space<vmem>>, vector<8x8x128xbf16>
    %c0_20 = arith.constant 0 : index
    %c1_21 = arith.constant 1 : index
    %c0_22 = arith.constant 0 : index
    %22 = vector.load %arg10[%c0_20, %c1_21, %c0_22] : memref<10x10x128xbf16, #tpu.memory_space<vmem>>, vector<8x8x128xbf16>
    %c0_23 = arith.constant 0 : index
    %c2 = arith.constant 2 : index
    %c0_24 = arith.constant 0 : index
    %23 = vector.load %arg10[%c0_23, %c2, %c0_24] : memref<10x10x128xbf16, #tpu.memory_space<vmem>>, vector<8x8x128xbf16>
    %c1_25 = arith.constant 1 : index
    %c0_26 = arith.constant 0 : index
    %c0_27 = arith.constant 0 : index
    %24 = vector.load %arg10[%c1_25, %c0_26, %c0_27] : memref<10x10x128xbf16, #tpu.memory_space<vmem>>, vector<8x8x128xbf16>
    %c1_28 = arith.constant 1 : index
    %c1_29 = arith.constant 1 : index
    %c0_30 = arith.constant 0 : index
    %25 = vector.load %arg10[%c1_28, %c1_29, %c0_30] : memref<10x10x128xbf16, #tpu.memory_space<vmem>>, vector<8x8x128xbf16>
    %c1_31 = arith.constant 1 : index
    %c2_32 = arith.constant 2 : index
    %c0_33 = arith.constant 0 : index
    %26 = vector.load %arg10[%c1_31, %c2_32, %c0_33] : memref<10x10x128xbf16, #tpu.memory_space<vmem>>, vector<8x8x128xbf16>
    %c2_34 = arith.constant 2 : index
    %c0_35 = arith.constant 0 : index
    %c0_36 = arith.constant 0 : index
    %27 = vector.load %arg10[%c2_34, %c0_35, %c0_36] : memref<10x10x128xbf16, #tpu.memory_space<vmem>>, vector<8x8x128xbf16>
    %c2_37 = arith.constant 2 : index
    %c1_38 = arith.constant 1 : index
    %c0_39 = arith.constant 0 : index
    %28 = vector.load %arg10[%c2_37, %c1_38, %c0_39] : memref<10x10x128xbf16, #tpu.memory_space<vmem>>, vector<8x8x128xbf16>
    %c2_40 = arith.constant 2 : index
    %c2_41 = arith.constant 2 : index
    %c0_42 = arith.constant 0 : index
    %29 = vector.load %arg10[%c2_40, %c2_41, %c0_42] : memref<10x10x128xbf16, #tpu.memory_space<vmem>>, vector<8x8x128xbf16>
    %30 = tpu.concatenate %21, %22, %23, %24, %25, %26, %27, %28, %29 in 2 : vector<8x8x128xbf16>, vector<8x8x128xbf16>, vector<8x8x128xbf16>, vector<8x8x128xbf16>, vector<8x8x128xbf16>, vector<8x8x128xbf16>, vector<8x8x128xbf16>, vector<8x8x128xbf16>, vector<8x8x128xbf16> -> vector<8x8x1152xbf16>
    %31 = vector.shape_cast %30 : vector<8x8x1152xbf16> to vector<64x1152xbf16>
    %c0_43 = arith.constant 0 : index
    %c0_44 = arith.constant 0 : index
    %32 = vector.load %arg2[%c0_43, %c0_44] : memref<1152x128xbf16, #tpu.memory_space<vmem>>, vector<1152x128xbf16>
    %cst_45 = arith.constant dense<0.000000e+00> : vector<64x128xf32>
    %33 = tpu.matmul %31, %32, %cst_45 {dimension_numbers = #tpu.dot_dimension_numbers<[1], [0], [0], [1], [0, 0, 1, 1], [], []>} : vector<64x1152xbf16>, vector<1152x128xbf16>, vector<64x128xf32> -> vector<64x128xf32>
    %c0_46 = arith.constant 0 : index
    %c0_47 = arith.constant 0 : index
    %34 = vector.load %arg3[%c0_46, %c0_47] : memref<1x128xf32, #tpu.memory_space<vmem>>, vector<1x128xf32>
    %35 = vector.broadcast %34 : vector<1x128xf32> to vector<64x128xf32>
    %36 = arith.addf %33, %35 : vector<64x128xf32>
    %37 = vector.shape_cast %36 : vector<64x128xf32> to vector<1x8x8x128xf32>
    %38 = arith.truncf %37 : vector<1x8x8x128xf32> to vector<1x8x8x128xbf16>
    %c0_48 = arith.constant 0 : index
    %c0_49 = arith.constant 0 : index
    %c0_50 = arith.constant 0 : index
    %c0_51 = arith.constant 0 : index
    %39 = vector.load %arg6[%c0_48, %c0_49, %c0_50, %c0_51] : memref<1x8x8x128xbf16, #tpu.memory_space<vmem>>, vector<1x8x8x128xbf16>
    tpu.vector_store %arg6[%c0_48, %c0_49, %c0_50, %c0_51], %38 {strides = array<i32>} : memref<1x8x8x128xbf16, #tpu.memory_space<vmem>>, vector<1x8x8x128xbf16>,
    %cst_52 = arith.constant dense<0.000000e+00> : vector<128xf32>
    %40 = vector.multi_reduction <add>, %36, %cst_52 [0] : vector<64x128xf32> to vector<128xf32>
    %41 = vector.shape_cast %40 : vector<128xf32> to vector<1x128xf32>
    %42 = vector.shape_cast %41 : vector<1x128xf32> to vector<1x1x128xf32>
    %c0_53 = arith.constant 0 : index
    %c0_54 = arith.constant 0 : index
    %c0_55 = arith.constant 0 : index
    %43 = vector.load %arg8[%c0_53, %c0_54, %c0_55] : memref<1x1x128xf32, #tpu.memory_space<vmem>>, vector<1x1x128xf32>
    tpu.vector_store %arg8[%c0_53, %c0_54, %c0_55], %42 {strides = array<i32>} : memref<1x1x128xf32, #tpu.memory_space<vmem>>, vector<1x1x128xf32>,
    %44 = arith.mulf %36, %36 : vector<64x128xf32>
    %cst_56 = arith.constant dense<0.000000e+00> : vector<128xf32>
    %45 = vector.multi_reduction <add>, %44, %cst_56 [0] : vector<64x128xf32> to vector<128xf32>
    %46 = vector.shape_cast %45 : vector<128xf32> to vector<1x128xf32>
    %47 = vector.shape_cast %46 : vector<1x128xf32> to vector<1x1x128xf32>
    %c0_57 = arith.constant 0 : index
    %c0_58 = arith.constant 0 : index
    %c0_59 = arith.constant 0 : index
    %48 = vector.load %arg9[%c0_57, %c0_58, %c0_59] : memref<1x1x128xf32, #tpu.memory_space<vmem>>, vector<1x1x128xf32>
    tpu.vector_store %arg9[%c0_57, %c0_58, %c0_59], %47 {strides = array<i32>} : memref<1x1x128xf32, #tpu.memory_space<vmem>>, vector<1x1x128xf32>,
    return
  }
  func.func @transform_0(%arg0: i32) -> (i32, i32, i32, i32) {
    %c0_i32 = arith.constant 0 : i32
    %c0_i32_0 = arith.constant 0 : i32
    %c0_i32_1 = arith.constant 0 : i32
    %c0_i32_2 = arith.constant 0 : i32
    return %arg0, %c0_i32, %c0_i32_0, %c0_i32_1 : i32, i32, i32, i32
  }
  func.func @transform_1(%arg0: i32) -> (i32, i32) {
    %c0_i32 = arith.constant 0 : i32
    %c0_i32_0 = arith.constant 0 : i32
    %c0_i32_1 = arith.constant 0 : i32
    return %c0_i32, %c0_i32_0 : i32, i32
  }
  func.func @transform_2(%arg0: i32) -> (i32, i32) {
    %c0_i32 = arith.constant 0 : i32
    %c0_i32_0 = arith.constant 0 : i32
    %c0_i32_1 = arith.constant 0 : i32
    return %c0_i32, %c0_i32_0 : i32, i32
  }
  func.func @transform_3(%arg0: i32) -> (i32, i32) {
    %c0_i32 = arith.constant 0 : i32
    %c0_i32_0 = arith.constant 0 : i32
    %c0_i32_1 = arith.constant 0 : i32
    return %c0_i32, %c0_i32_0 : i32, i32
  }
  func.func @transform_4(%arg0: i32) -> (i32, i32) {
    %c0_i32 = arith.constant 0 : i32
    %c0_i32_0 = arith.constant 0 : i32
    %c0_i32_1 = arith.constant 0 : i32
    return %c0_i32, %c0_i32_0 : i32, i32
  }
  func.func @transform_5(%arg0: i32) -> (i32, i32, i32, i32) {
    %c0_i32 = arith.constant 0 : i32
    %c0_i32_0 = arith.constant 0 : i32
    %c0_i32_1 = arith.constant 0 : i32
    %c0_i32_2 = arith.constant 0 : i32
    return %arg0, %c0_i32, %c0_i32_0, %c0_i32_1 : i32, i32, i32, i32
  }
  func.func @transform_6(%arg0: i32) -> (i32, i32, i32, i32) {
    %c0_i32 = arith.constant 0 : i32
    %c0_i32_0 = arith.constant 0 : i32
    %c0_i32_1 = arith.constant 0 : i32
    %c0_i32_2 = arith.constant 0 : i32
    return %arg0, %c0_i32, %c0_i32_0, %c0_i32_1 : i32, i32, i32, i32
  }
  func.func @transform_7(%arg0: i32) -> (i32, i32, i32) {
    %c0_i32 = arith.constant 0 : i32
    %c0_i32_0 = arith.constant 0 : i32
    %c0_i32_1 = arith.constant 0 : i32
    return %arg0, %c0_i32, %c0_i32_0 : i32, i32, i32
  }
  func.func @transform_8(%arg0: i32) -> (i32, i32, i32) {
    %c0_i32 = arith.constant 0 : i32
    %c0_i32_0 = arith.constant 0 : i32
    %c0_i32_1 = arith.constant 0 : i32
    return %arg0, %c0_i32, %c0_i32_0 : i32, i32, i32
  }
}

module attributes {stable_mosaic.version = 11 : i64} {
  func.func @_bn1_conv2_kernel(%arg0: i32, %arg1: memref<1x8x8x128xbf16, #tpu.memory_space<vmem>>, %arg2: memref<2x1x128xf32, #tpu.memory_space<vmem>>, %arg3: memref<2x1x128xf32, #tpu.memory_space<vmem>>, %arg4: memref<1x128xf32, #tpu.memory_space<vmem>>, %arg5: memref<1x128xf32, #tpu.memory_space<vmem>>, %arg6: memref<1152x128xbf16, #tpu.memory_space<vmem>>, %arg7: memref<1x128xf32, #tpu.memory_space<vmem>>, %arg8: memref<1x8x8x128xbf16, #tpu.memory_space<vmem>>, %arg9: memref<1x1x128xf32, #tpu.memory_space<vmem>>, %arg10: memref<1x1x128xf32, #tpu.memory_space<vmem>>, %arg11: memref<10x10x128xbf16, #tpu.memory_space<vmem>>) attributes {dimension_semantics = [#tpu.dimension_semantics<parallel>], iteration_bounds = array<i64: 2>, scalar_prefetch = 0 : i64, scratch_operands = 1 : i64, tpu.core_type = #tpu.core_type<tc>, window_params = [{transform_indices = @transform_0, window_bounds = array<i64: 1, 8, 8, 128>}, {pipeline_mode = #tpu.pipeline_mode<synchronous>, transform_indices = @transform_1, window_bounds = array<i64: 2, 1, 128>}, {pipeline_mode = #tpu.pipeline_mode<synchronous>, transform_indices = @transform_2, window_bounds = array<i64: 2, 1, 128>}, {pipeline_mode = #tpu.pipeline_mode<synchronous>, transform_indices = @transform_3, window_bounds = array<i64: 1, 128>}, {pipeline_mode = #tpu.pipeline_mode<synchronous>, transform_indices = @transform_4, window_bounds = array<i64: 1, 128>}, {pipeline_mode = #tpu.pipeline_mode<synchronous>, transform_indices = @transform_5, window_bounds = array<i64: 1152, 128>}, {pipeline_mode = #tpu.pipeline_mode<synchronous>, transform_indices = @transform_6, window_bounds = array<i64: 1, 128>}, {transform_indices = @transform_7, window_bounds = array<i64: 1, 8, 8, 128>}, {transform_indices = @transform_8, window_bounds = array<i64: 1, 1, 128>}, {transform_indices = @transform_9, window_bounds = array<i64: 1, 1, 128>}]} {
    %c0 = arith.constant 0 : index
    %c0_0 = arith.constant 0 : index
    %c0_1 = arith.constant 0 : index
    %0 = vector.load %arg2[%c0, %c0_0, %c0_1] : memref<2x1x128xf32, #tpu.memory_space<vmem>>, vector<2x1x128xf32>
    %cst = arith.constant dense<0.000000e+00> : vector<1x128xf32>
    %1 = vector.multi_reduction <add>, %0, %cst [0] : vector<2x1x128xf32> to vector<1x128xf32>
    %c0_2 = arith.constant 0 : index
    %c0_3 = arith.constant 0 : index
    %c0_4 = arith.constant 0 : index
    %2 = vector.load %arg3[%c0_2, %c0_3, %c0_4] : memref<2x1x128xf32, #tpu.memory_space<vmem>>, vector<2x1x128xf32>
    %cst_5 = arith.constant dense<0.000000e+00> : vector<1x128xf32>
    %3 = vector.multi_reduction <add>, %2, %cst_5 [0] : vector<2x1x128xf32> to vector<1x128xf32>
    %cst_6 = arith.constant 7.812500e-03 : f32
    %4 = vector.broadcast %cst_6 : f32 to vector<1x128xf32>
    %5 = arith.mulf %1, %4 : vector<1x128xf32>
    %cst_7 = arith.constant 7.812500e-03 : f32
    %6 = vector.broadcast %cst_7 : f32 to vector<1x128xf32>
    %7 = arith.mulf %3, %6 : vector<1x128xf32>
    %8 = arith.mulf %5, %5 : vector<1x128xf32>
    %9 = arith.subf %7, %8 : vector<1x128xf32>
    %cst_8 = arith.constant 0.000000e+00 : f32
    %10 = vector.broadcast %cst_8 : f32 to vector<1x128xf32>
    %11 = arith.maximumf %9, %10 : vector<1x128xf32>
    %c0_9 = arith.constant 0 : index
    %c0_10 = arith.constant 0 : index
    %12 = vector.load %arg4[%c0_9, %c0_10] : memref<1x128xf32, #tpu.memory_space<vmem>>, vector<1x128xf32>
    %cst_11 = arith.constant 9.99999974E-6 : f32
    %13 = vector.broadcast %cst_11 : f32 to vector<1x128xf32>
    %14 = arith.addf %11, %13 : vector<1x128xf32>
    %15 = math.rsqrt %14 : vector<1x128xf32>
    %16 = arith.mulf %12, %15 : vector<1x128xf32>
    %c0_12 = arith.constant 0 : index
    %c0_13 = arith.constant 0 : index
    %17 = vector.load %arg5[%c0_12, %c0_13] : memref<1x128xf32, #tpu.memory_space<vmem>>, vector<1x128xf32>
    %18 = arith.mulf %5, %16 : vector<1x128xf32>
    %19 = arith.subf %17, %18 : vector<1x128xf32>
    %c0_14 = arith.constant 0 : index
    %c0_15 = arith.constant 0 : index
    %c0_16 = arith.constant 0 : index
    %c0_17 = arith.constant 0 : index
    %20 = vector.load %arg1[%c0_14, %c0_15, %c0_16, %c0_17] : memref<1x8x8x128xbf16, #tpu.memory_space<vmem>>, vector<1x8x8x128xbf16>
    %21 = vector.shape_cast %20 : vector<1x8x8x128xbf16> to vector<8x8x128xbf16>
    %22 = vector.shape_cast %16 : vector<1x128xf32> to vector<1x1x128xf32>
    %23 = arith.extf %21 : vector<8x8x128xbf16> to vector<8x8x128xf32>
    %24 = vector.broadcast %22 : vector<1x1x128xf32> to vector<8x8x128xf32>
    %25 = arith.mulf %23, %24 : vector<8x8x128xf32>
    %26 = vector.shape_cast %19 : vector<1x128xf32> to vector<1x1x128xf32>
    %27 = vector.broadcast %26 : vector<1x1x128xf32> to vector<8x8x128xf32>
    %28 = arith.addf %25, %27 : vector<8x8x128xf32>
    %cst_18 = arith.constant 0.000000e+00 : f32
    %29 = vector.broadcast %cst_18 : f32 to vector<8x8x128xf32>
    %30 = arith.maximumf %28, %29 : vector<8x8x128xf32>
    %31 = arith.truncf %30 : vector<8x8x128xf32> to vector<8x8x128xbf16>
    %cst_19 = arith.constant 0.000000e+00 : bf16
    %32 = vector.broadcast %cst_19 : bf16 to vector<10x10x128xbf16>
    %c0_20 = arith.constant 0 : index
    %c0_21 = arith.constant 0 : index
    %c0_22 = arith.constant 0 : index
    %33 = vector.load %arg11[%c0_20, %c0_21, %c0_22] : memref<10x10x128xbf16, #tpu.memory_space<vmem>>, vector<10x10x128xbf16>
    tpu.vector_store %arg11[%c0_20, %c0_21, %c0_22], %32 {strides = array<i32>} : memref<10x10x128xbf16, #tpu.memory_space<vmem>>, vector<10x10x128xbf16>,
    %c1 = arith.constant 1 : index
    %c1_23 = arith.constant 1 : index
    %c0_24 = arith.constant 0 : index
    %34 = vector.load %arg11[%c1, %c1_23, %c0_24] : memref<10x10x128xbf16, #tpu.memory_space<vmem>>, vector<8x8x128xbf16>
    tpu.vector_store %arg11[%c1, %c1_23, %c0_24], %31 {strides = array<i32>} : memref<10x10x128xbf16, #tpu.memory_space<vmem>>, vector<8x8x128xbf16>,
    %c0_25 = arith.constant 0 : index
    %c0_26 = arith.constant 0 : index
    %c0_27 = arith.constant 0 : index
    %35 = vector.load %arg11[%c0_25, %c0_26, %c0_27] : memref<10x10x128xbf16, #tpu.memory_space<vmem>>, vector<8x8x128xbf16>
    %c0_28 = arith.constant 0 : index
    %c1_29 = arith.constant 1 : index
    %c0_30 = arith.constant 0 : index
    %36 = vector.load %arg11[%c0_28, %c1_29, %c0_30] : memref<10x10x128xbf16, #tpu.memory_space<vmem>>, vector<8x8x128xbf16>
    %c0_31 = arith.constant 0 : index
    %c2 = arith.constant 2 : index
    %c0_32 = arith.constant 0 : index
    %37 = vector.load %arg11[%c0_31, %c2, %c0_32] : memref<10x10x128xbf16, #tpu.memory_space<vmem>>, vector<8x8x128xbf16>
    %c1_33 = arith.constant 1 : index
    %c0_34 = arith.constant 0 : index
    %c0_35 = arith.constant 0 : index
    %38 = vector.load %arg11[%c1_33, %c0_34, %c0_35] : memref<10x10x128xbf16, #tpu.memory_space<vmem>>, vector<8x8x128xbf16>
    %c1_36 = arith.constant 1 : index
    %c1_37 = arith.constant 1 : index
    %c0_38 = arith.constant 0 : index
    %39 = vector.load %arg11[%c1_36, %c1_37, %c0_38] : memref<10x10x128xbf16, #tpu.memory_space<vmem>>, vector<8x8x128xbf16>
    %c1_39 = arith.constant 1 : index
    %c2_40 = arith.constant 2 : index
    %c0_41 = arith.constant 0 : index
    %40 = vector.load %arg11[%c1_39, %c2_40, %c0_41] : memref<10x10x128xbf16, #tpu.memory_space<vmem>>, vector<8x8x128xbf16>
    %c2_42 = arith.constant 2 : index
    %c0_43 = arith.constant 0 : index
    %c0_44 = arith.constant 0 : index
    %41 = vector.load %arg11[%c2_42, %c0_43, %c0_44] : memref<10x10x128xbf16, #tpu.memory_space<vmem>>, vector<8x8x128xbf16>
    %c2_45 = arith.constant 2 : index
    %c1_46 = arith.constant 1 : index
    %c0_47 = arith.constant 0 : index
    %42 = vector.load %arg11[%c2_45, %c1_46, %c0_47] : memref<10x10x128xbf16, #tpu.memory_space<vmem>>, vector<8x8x128xbf16>
    %c2_48 = arith.constant 2 : index
    %c2_49 = arith.constant 2 : index
    %c0_50 = arith.constant 0 : index
    %43 = vector.load %arg11[%c2_48, %c2_49, %c0_50] : memref<10x10x128xbf16, #tpu.memory_space<vmem>>, vector<8x8x128xbf16>
    %44 = tpu.concatenate %35, %36, %37, %38, %39, %40, %41, %42, %43 in 2 : vector<8x8x128xbf16>, vector<8x8x128xbf16>, vector<8x8x128xbf16>, vector<8x8x128xbf16>, vector<8x8x128xbf16>, vector<8x8x128xbf16>, vector<8x8x128xbf16>, vector<8x8x128xbf16>, vector<8x8x128xbf16> -> vector<8x8x1152xbf16>
    %45 = vector.shape_cast %44 : vector<8x8x1152xbf16> to vector<64x1152xbf16>
    %c0_51 = arith.constant 0 : index
    %c0_52 = arith.constant 0 : index
    %46 = vector.load %arg6[%c0_51, %c0_52] : memref<1152x128xbf16, #tpu.memory_space<vmem>>, vector<1152x128xbf16>
    %cst_53 = arith.constant dense<0.000000e+00> : vector<64x128xf32>
    %47 = tpu.matmul %45, %46, %cst_53 {dimension_numbers = #tpu.dot_dimension_numbers<[1], [0], [0], [1], [0, 0, 1, 1], [], []>} : vector<64x1152xbf16>, vector<1152x128xbf16>, vector<64x128xf32> -> vector<64x128xf32>
    %c0_54 = arith.constant 0 : index
    %c0_55 = arith.constant 0 : index
    %48 = vector.load %arg7[%c0_54, %c0_55] : memref<1x128xf32, #tpu.memory_space<vmem>>, vector<1x128xf32>
    %49 = vector.broadcast %48 : vector<1x128xf32> to vector<64x128xf32>
    %50 = arith.addf %47, %49 : vector<64x128xf32>
    %51 = vector.shape_cast %50 : vector<64x128xf32> to vector<1x8x8x128xf32>
    %52 = arith.truncf %51 : vector<1x8x8x128xf32> to vector<1x8x8x128xbf16>
    %c0_56 = arith.constant 0 : index
    %c0_57 = arith.constant 0 : index
    %c0_58 = arith.constant 0 : index
    %c0_59 = arith.constant 0 : index
    %53 = vector.load %arg8[%c0_56, %c0_57, %c0_58, %c0_59] : memref<1x8x8x128xbf16, #tpu.memory_space<vmem>>, vector<1x8x8x128xbf16>
    tpu.vector_store %arg8[%c0_56, %c0_57, %c0_58, %c0_59], %52 {strides = array<i32>} : memref<1x8x8x128xbf16, #tpu.memory_space<vmem>>, vector<1x8x8x128xbf16>,
    %cst_60 = arith.constant dense<0.000000e+00> : vector<128xf32>
    %54 = vector.multi_reduction <add>, %50, %cst_60 [0] : vector<64x128xf32> to vector<128xf32>
    %55 = vector.shape_cast %54 : vector<128xf32> to vector<1x128xf32>
    %56 = vector.shape_cast %55 : vector<1x128xf32> to vector<1x1x128xf32>
    %c0_61 = arith.constant 0 : index
    %c0_62 = arith.constant 0 : index
    %c0_63 = arith.constant 0 : index
    %57 = vector.load %arg9[%c0_61, %c0_62, %c0_63] : memref<1x1x128xf32, #tpu.memory_space<vmem>>, vector<1x1x128xf32>
    tpu.vector_store %arg9[%c0_61, %c0_62, %c0_63], %56 {strides = array<i32>} : memref<1x1x128xf32, #tpu.memory_space<vmem>>, vector<1x1x128xf32>,
    %58 = arith.mulf %50, %50 : vector<64x128xf32>
    %cst_64 = arith.constant dense<0.000000e+00> : vector<128xf32>
    %59 = vector.multi_reduction <add>, %58, %cst_64 [0] : vector<64x128xf32> to vector<128xf32>
    %60 = vector.shape_cast %59 : vector<128xf32> to vector<1x128xf32>
    %61 = vector.shape_cast %60 : vector<1x128xf32> to vector<1x1x128xf32>
    %c0_65 = arith.constant 0 : index
    %c0_66 = arith.constant 0 : index
    %c0_67 = arith.constant 0 : index
    %62 = vector.load %arg10[%c0_65, %c0_66, %c0_67] : memref<1x1x128xf32, #tpu.memory_space<vmem>>, vector<1x1x128xf32>
    tpu.vector_store %arg10[%c0_65, %c0_66, %c0_67], %61 {strides = array<i32>} : memref<1x1x128xf32, #tpu.memory_space<vmem>>, vector<1x1x128xf32>,
    return
  }
  func.func @transform_0(%arg0: i32) -> (i32, i32, i32, i32) {
    %c0_i32 = arith.constant 0 : i32
    %c0_i32_0 = arith.constant 0 : i32
    %c0_i32_1 = arith.constant 0 : i32
    %c0_i32_2 = arith.constant 0 : i32
    return %arg0, %c0_i32, %c0_i32_0, %c0_i32_1 : i32, i32, i32, i32
  }
  func.func @transform_1(%arg0: i32) -> (i32, i32, i32) {
    %c0_i32 = arith.constant 0 : i32
    %c0_i32_0 = arith.constant 0 : i32
    %c0_i32_1 = arith.constant 0 : i32
    %c0_i32_2 = arith.constant 0 : i32
    return %c0_i32, %c0_i32_0, %c0_i32_1 : i32, i32, i32
  }
  func.func @transform_2(%arg0: i32) -> (i32, i32, i32) {
    %c0_i32 = arith.constant 0 : i32
    %c0_i32_0 = arith.constant 0 : i32
    %c0_i32_1 = arith.constant 0 : i32
    %c0_i32_2 = arith.constant 0 : i32
    return %c0_i32, %c0_i32_0, %c0_i32_1 : i32, i32, i32
  }
  func.func @transform_3(%arg0: i32) -> (i32, i32) {
    %c0_i32 = arith.constant 0 : i32
    %c0_i32_0 = arith.constant 0 : i32
    %c0_i32_1 = arith.constant 0 : i32
    return %c0_i32, %c0_i32_0 : i32, i32
  }
  func.func @transform_4(%arg0: i32) -> (i32, i32) {
    %c0_i32 = arith.constant 0 : i32
    %c0_i32_0 = arith.constant 0 : i32
    %c0_i32_1 = arith.constant 0 : i32
    return %c0_i32, %c0_i32_0 : i32, i32
  }
  func.func @transform_5(%arg0: i32) -> (i32, i32) {
    %c0_i32 = arith.constant 0 : i32
    %c0_i32_0 = arith.constant 0 : i32
    %c0_i32_1 = arith.constant 0 : i32
    return %c0_i32, %c0_i32_0 : i32, i32
  }
  func.func @transform_6(%arg0: i32) -> (i32, i32) {
    %c0_i32 = arith.constant 0 : i32
    %c0_i32_0 = arith.constant 0 : i32
    %c0_i32_1 = arith.constant 0 : i32
    return %c0_i32, %c0_i32_0 : i32, i32
  }
  func.func @transform_7(%arg0: i32) -> (i32, i32, i32, i32) {
    %c0_i32 = arith.constant 0 : i32
    %c0_i32_0 = arith.constant 0 : i32
    %c0_i32_1 = arith.constant 0 : i32
    %c0_i32_2 = arith.constant 0 : i32
    return %arg0, %c0_i32, %c0_i32_0, %c0_i32_1 : i32, i32, i32, i32
  }
  func.func @transform_8(%arg0: i32) -> (i32, i32, i32) {
    %c0_i32 = arith.constant 0 : i32
    %c0_i32_0 = arith.constant 0 : i32
    %c0_i32_1 = arith.constant 0 : i32
    return %arg0, %c0_i32, %c0_i32_0 : i32, i32, i32
  }
  func.func @transform_9(%arg0: i32) -> (i32, i32, i32) {
    %c0_i32 = arith.constant 0 : i32
    %c0_i32_0 = arith.constant 0 : i32
    %c0_i32_1 = arith.constant 0 : i32
    return %arg0, %c0_i32, %c0_i32_0 : i32, i32, i32
  }
}

module attributes {stable_mosaic.version = 11 : i64} {
  func.func @_bn2_skip_relu_kernel(%arg0: i32, %arg1: memref<1x8x8x128xbf16, #tpu.memory_space<vmem>>, %arg2: memref<2x1x128xf32, #tpu.memory_space<vmem>>, %arg3: memref<2x1x128xf32, #tpu.memory_space<vmem>>, %arg4: memref<1x128xf32, #tpu.memory_space<vmem>>, %arg5: memref<1x128xf32, #tpu.memory_space<vmem>>, %arg6: memref<1x4x4x128xf32, #tpu.memory_space<vmem>>, %arg7: memref<1x8x8x128xbf16, #tpu.memory_space<vmem>>) attributes {dimension_semantics = [#tpu.dimension_semantics<parallel>], iteration_bounds = array<i64: 2>, scalar_prefetch = 0 : i64, scratch_operands = 0 : i64, tpu.core_type = #tpu.core_type<tc>, window_params = [{transform_indices = @transform_0, window_bounds = array<i64: 1, 8, 8, 128>}, {pipeline_mode = #tpu.pipeline_mode<synchronous>, transform_indices = @transform_1, window_bounds = array<i64: 2, 1, 128>}, {pipeline_mode = #tpu.pipeline_mode<synchronous>, transform_indices = @transform_2, window_bounds = array<i64: 2, 1, 128>}, {pipeline_mode = #tpu.pipeline_mode<synchronous>, transform_indices = @transform_3, window_bounds = array<i64: 1, 128>}, {pipeline_mode = #tpu.pipeline_mode<synchronous>, transform_indices = @transform_4, window_bounds = array<i64: 1, 128>}, {transform_indices = @transform_5, window_bounds = array<i64: 1, 4, 4, 128>}, {transform_indices = @transform_6, window_bounds = array<i64: 1, 8, 8, 128>}]} {
    %c0 = arith.constant 0 : index
    %c0_0 = arith.constant 0 : index
    %c0_1 = arith.constant 0 : index
    %0 = vector.load %arg2[%c0, %c0_0, %c0_1] : memref<2x1x128xf32, #tpu.memory_space<vmem>>, vector<2x1x128xf32>
    %cst = arith.constant dense<0.000000e+00> : vector<1x128xf32>
    %1 = vector.multi_reduction <add>, %0, %cst [0] : vector<2x1x128xf32> to vector<1x128xf32>
    %c0_2 = arith.constant 0 : index
    %c0_3 = arith.constant 0 : index
    %c0_4 = arith.constant 0 : index
    %2 = vector.load %arg3[%c0_2, %c0_3, %c0_4] : memref<2x1x128xf32, #tpu.memory_space<vmem>>, vector<2x1x128xf32>
    %cst_5 = arith.constant dense<0.000000e+00> : vector<1x128xf32>
    %3 = vector.multi_reduction <add>, %2, %cst_5 [0] : vector<2x1x128xf32> to vector<1x128xf32>
    %cst_6 = arith.constant 7.812500e-03 : f32
    %4 = vector.broadcast %cst_6 : f32 to vector<1x128xf32>
    %5 = arith.mulf %1, %4 : vector<1x128xf32>
    %cst_7 = arith.constant 7.812500e-03 : f32
    %6 = vector.broadcast %cst_7 : f32 to vector<1x128xf32>
    %7 = arith.mulf %3, %6 : vector<1x128xf32>
    %8 = arith.mulf %5, %5 : vector<1x128xf32>
    %9 = arith.subf %7, %8 : vector<1x128xf32>
    %cst_8 = arith.constant 0.000000e+00 : f32
    %10 = vector.broadcast %cst_8 : f32 to vector<1x128xf32>
    %11 = arith.maximumf %9, %10 : vector<1x128xf32>
    %c0_9 = arith.constant 0 : index
    %c0_10 = arith.constant 0 : index
    %12 = vector.load %arg4[%c0_9, %c0_10] : memref<1x128xf32, #tpu.memory_space<vmem>>, vector<1x128xf32>
    %cst_11 = arith.constant 9.99999974E-6 : f32
    %13 = vector.broadcast %cst_11 : f32 to vector<1x128xf32>
    %14 = arith.addf %11, %13 : vector<1x128xf32>
    %15 = math.rsqrt %14 : vector<1x128xf32>
    %16 = arith.mulf %12, %15 : vector<1x128xf32>
    %c0_12 = arith.constant 0 : index
    %c0_13 = arith.constant 0 : index
    %17 = vector.load %arg5[%c0_12, %c0_13] : memref<1x128xf32, #tpu.memory_space<vmem>>, vector<1x128xf32>
    %18 = arith.mulf %5, %16 : vector<1x128xf32>
    %19 = arith.subf %17, %18 : vector<1x128xf32>
    %c0_14 = arith.constant 0 : index
    %c0_15 = arith.constant 0 : index
    %c0_16 = arith.constant 0 : index
    %c0_17 = arith.constant 0 : index
    %20 = vector.load %arg6[%c0_14, %c0_15, %c0_16, %c0_17] : memref<1x4x4x128xf32, #tpu.memory_space<vmem>>, vector<1x4x4x128xf32>
    %21 = vector.shape_cast %20 : vector<1x4x4x128xf32> to vector<4x4x128xf32>
    %22 = vector.shape_cast %21 : vector<4x4x128xf32> to vector<4x1x4x128xf32>
    %23 = vector.shape_cast %22 : vector<4x1x4x128xf32> to vector<4x1x4x128xf32>
    %24 = vector.broadcast %23 : vector<4x1x4x128xf32> to vector<4x2x4x128xf32>
    %25 = vector.shape_cast %24 : vector<4x2x4x128xf32> to vector<8x4x128xf32>
    %26 = vector.shape_cast %25 : vector<8x4x128xf32> to vector<8x4x1x128xf32>
    %27 = vector.shape_cast %26 : vector<8x4x1x128xf32> to vector<8x4x1x128xf32>
    %28 = vector.broadcast %27 : vector<8x4x1x128xf32> to vector<8x4x2x128xf32>
    %29 = vector.shape_cast %28 : vector<8x4x2x128xf32> to vector<8x8x128xf32>
    %c0_18 = arith.constant 0 : index
    %c0_19 = arith.constant 0 : index
    %c0_20 = arith.constant 0 : index
    %c0_21 = arith.constant 0 : index
    %30 = vector.load %arg1[%c0_18, %c0_19, %c0_20, %c0_21] : memref<1x8x8x128xbf16, #tpu.memory_space<vmem>>, vector<1x8x8x128xbf16>
    %31 = vector.shape_cast %30 : vector<1x8x8x128xbf16> to vector<8x8x128xbf16>
    %32 = vector.shape_cast %16 : vector<1x128xf32> to vector<1x1x128xf32>
    %33 = arith.extf %31 : vector<8x8x128xbf16> to vector<8x8x128xf32>
    %34 = vector.broadcast %32 : vector<1x1x128xf32> to vector<8x8x128xf32>
    %35 = arith.mulf %33, %34 : vector<8x8x128xf32>
    %36 = vector.shape_cast %19 : vector<1x128xf32> to vector<1x1x128xf32>
    %37 = vector.broadcast %36 : vector<1x1x128xf32> to vector<8x8x128xf32>
    %38 = arith.addf %35, %37 : vector<8x8x128xf32>
    %39 = arith.addf %38, %29 : vector<8x8x128xf32>
    %cst_22 = arith.constant 0.000000e+00 : f32
    %40 = vector.broadcast %cst_22 : f32 to vector<8x8x128xf32>
    %41 = arith.maximumf %39, %40 : vector<8x8x128xf32>
    %42 = vector.shape_cast %41 : vector<8x8x128xf32> to vector<1x8x8x128xf32>
    %43 = arith.truncf %42 : vector<1x8x8x128xf32> to vector<1x8x8x128xbf16>
    %c0_23 = arith.constant 0 : index
    %c0_24 = arith.constant 0 : index
    %c0_25 = arith.constant 0 : index
    %c0_26 = arith.constant 0 : index
    %44 = vector.load %arg7[%c0_23, %c0_24, %c0_25, %c0_26] : memref<1x8x8x128xbf16, #tpu.memory_space<vmem>>, vector<1x8x8x128xbf16>
    tpu.vector_store %arg7[%c0_23, %c0_24, %c0_25, %c0_26], %43 {strides = array<i32>} : memref<1x8x8x128xbf16, #tpu.memory_space<vmem>>, vector<1x8x8x128xbf16>,
    return
  }
  func.func @transform_0(%arg0: i32) -> (i32, i32, i32, i32) {
    %c0_i32 = arith.constant 0 : i32
    %c0_i32_0 = arith.constant 0 : i32
    %c0_i32_1 = arith.constant 0 : i32
    %c0_i32_2 = arith.constant 0 : i32
    return %arg0, %c0_i32, %c0_i32_0, %c0_i32_1 : i32, i32, i32, i32
  }
  func.func @transform_1(%arg0: i32) -> (i32, i32, i32) {
    %c0_i32 = arith.constant 0 : i32
    %c0_i32_0 = arith.constant 0 : i32
    %c0_i32_1 = arith.constant 0 : i32
    %c0_i32_2 = arith.constant 0 : i32
    return %c0_i32, %c0_i32_0, %c0_i32_1 : i32, i32, i32
  }
  func.func @transform_2(%arg0: i32) -> (i32, i32, i32) {
    %c0_i32 = arith.constant 0 : i32
    %c0_i32_0 = arith.constant 0 : i32
    %c0_i32_1 = arith.constant 0 : i32
    %c0_i32_2 = arith.constant 0 : i32
    return %c0_i32, %c0_i32_0, %c0_i32_1 : i32, i32, i32
  }
  func.func @transform_3(%arg0: i32) -> (i32, i32) {
    %c0_i32 = arith.constant 0 : i32
    %c0_i32_0 = arith.constant 0 : i32
    %c0_i32_1 = arith.constant 0 : i32
    return %c0_i32, %c0_i32_0 : i32, i32
  }
  func.func @transform_4(%arg0: i32) -> (i32, i32) {
    %c0_i32 = arith.constant 0 : i32
    %c0_i32_0 = arith.constant 0 : i32
    %c0_i32_1 = arith.constant 0 : i32
    return %c0_i32, %c0_i32_0 : i32, i32
  }
  func.func @transform_5(%arg0: i32) -> (i32, i32, i32, i32) {
    %c0_i32 = arith.constant 0 : i32
    %c0_i32_0 = arith.constant 0 : i32
    %c0_i32_1 = arith.constant 0 : i32
    %c0_i32_2 = arith.constant 0 : i32
    return %arg0, %c0_i32, %c0_i32_0, %c0_i32_1 : i32, i32, i32, i32
  }
  func.func @transform_6(%arg0: i32) -> (i32, i32, i32, i32) {
    %c0_i32 = arith.constant 0 : i32
    %c0_i32_0 = arith.constant 0 : i32
    %c0_i32_1 = arith.constant 0 : i32
    %c0_i32_2 = arith.constant 0 : i32
    return %arg0, %c0_i32, %c0_i32_0, %c0_i32_1 : i32, i32, i32, i32
  }
}

</mosaic_0001>

<llo_original>
// kernel: decoder_forward.7
$region0: #{decoder_forward.7}
  #allocation0 [shape = 'u32[]', space=smem, size = 0x4, offset = 0x4, fixed_abs, tag = 'smem constant byte address 0x4 - core index']
  #allocation1 [shape = 'u32[144,128]{1,0:T(1,128)}', space=vmem, size = 0x12000, scoped, tag = 'internal scratch']
  %s0 = inlined_call_operand.vmem [shape: bf16[2,128], index: 0, kind: input, shape index: {}]
  %s1 = inlined_call_operand.hbm [shape: bf16[128,256], index: 1, kind: input, shape index: {}]
  %s2 = inlined_call_operand.vmem [shape: f32[1,256], index: 2, kind: input, shape index: {}]
  %s3 = inlined_call_operand.vmem [shape: f32[2,256], index: 3, kind: output, shape index: {}]
  %s4 = sld [smem:[#allocation0]]
  $region26: #{decoder_forward.7} parent=0
    _
  %s6 = ssub.s32 1, %s4
  %s7 = scalar_select 0, %s6, %s4
  $region1: #{decoder_forward.7} parent=0
    #allocation2 [shape = 'u8[65536]{0}', space=vmem, size = 0x10000, scoped, tag = 'input window, operand 1, single buffered']
    #allocation3 [shape = 's32[1]{0}', space=sflag, size = 0x4, scoped, tag = 'scoped memory for decoder_forward.7']
    %8 = vsyncpa [#allocation3], 0
    // Predicated region
    $region2: #{decoder_forward.7} parent=1 // pred_check
      _
    $region3: #{decoder_forward.7} parent=1 // pred_check_branch
      %10 = sbr.rel (0) target = $region5
    $region4: #{decoder_forward.7} parent=1 // pred_region
      _
    $region5: #{decoder_forward.7} parent=1 // pred_fallthru
      _
    // Predicated region
    $region6: #{decoder_forward.7} parent=1 // pred_check
      _
    $region7: #{decoder_forward.7} parent=1 // pred_check_branch
      %12 = sbr.rel (0) target = $region9
    $region8: #{decoder_forward.7} parent=1 // pred_region
      %s14 = ssub.s32 2048, 2048
      %15 = vsyncadd [#allocation3], %s14
      %s16 = sshll.u32 [#allocation2], 4
      %s17 = int_to_ptr.vmem [resolvable:$true] %s16
      %22 = dma.hbm_to_vmem [thread:$0]  %s1, 2048, %s17, [#allocation3], 128, 128, 8
    $region9: #{decoder_forward.7} parent=1 // pred_fallthru
      _
    // Predicated region
    $region10: #{decoder_forward.7} parent=1 // pred_check
      _
    $region11: #{decoder_forward.7} parent=1 // pred_check_branch
      %24 = sbr.rel (0) target = $region13
    $region12: #{decoder_forward.7} parent=1 // pred_region
      _
    $region13: #{decoder_forward.7} parent=1 // pred_fallthru
      _
    // Predicated region
    $region14: #{decoder_forward.7} parent=1 // pred_check
      _
    $region15: #{decoder_forward.7} parent=1 // pred_check_branch
      %26 = sbr.rel (0) target = $region17
    $region16: #{decoder_forward.7} parent=1 // pred_region
      %27 = dma.done [#allocation3], 2048
    $region17: #{decoder_forward.7} parent=1 // pred_fallthru
      _
    %v29 = vld [vmem:[%s0] sm:$0x1]
    %v30 = vld [vmem:[#allocation2] sm:$0xff]
    %v31 = vld [vmem:[#allocation2 + $0x8] sm:$0xff]
    %v32 = vld [vmem:[#allocation2 + $0x10] sm:$0xff]
    %v33 = vld [vmem:[#allocation2 + $0x18] sm:$0xff]
    %v34 = vld [vmem:[#allocation2 + $0x20] sm:$0xff]
    %v35 = vld [vmem:[#allocation2 + $0x28] sm:$0xff]
    %v36 = vld [vmem:[#allocation2 + $0x30] sm:$0xff]
    %v37 = vld [vmem:[#allocation2 + $0x38] sm:$0xff]
    %v38 = vld [vmem:[#allocation2 + $0x40] sm:$0xff]
    %v39 = vld [vmem:[#allocation2 + $0x48] sm:$0xff]
    %v40 = vld [vmem:[#allocation2 + $0x50] sm:$0xff]
    %v41 = vld [vmem:[#allocation2 + $0x58] sm:$0xff]
    %v42 = vld [vmem:[#allocation2 + $0x60] sm:$0xff]
    %v43 = vld [vmem:[#allocation2 + $0x68] sm:$0xff]
    %v44 = vld [vmem:[#allocation2 + $0x70] sm:$0xff]
    %v45 = vld [vmem:[#allocation2 + $0x78] sm:$0xff]
    %v46 = vld [vmem:[%s2] sm:$0x3]
    %v48 = vlaneseq
    %v49 = vshrl.u32 %v48, 7
    %v50 = vsub.s32 0, %v49
    %v51 = vrot.slane %v46, %v50
    %v52 = vlaneseq
    %v53 = vshrl.u32 %v52, 7
    %v54 = vsub.s32 1, %v53
    %v55 = vrot.slane %v46, %v54
    %v74 = vunpack.c.l.b16 %v30
    %v75 = vunpack.c.h.b16 %v30
    %v76 = vunpack.c.l.b16 %v31
    %v77 = vunpack.c.h.b16 %v31
    %v78 = vunpack.c.l.b16 %v32
    %v79 = vunpack.c.h.b16 %v32
    %v80 = vunpack.c.l.b16 %v33
    %v81 = vunpack.c.h.b16 %v33
    %v82 = vunpack.c.l.b16 %v34
    %v83 = vunpack.c.h.b16 %v34
    %v84 = vunpack.c.l.b16 %v35
    %v85 = vunpack.c.h.b16 %v35
    %v86 = vunpack.c.l.b16 %v36
    %v87 = vunpack.c.h.b16 %v36
    %v88 = vunpack.c.l.b16 %v37
    %v89 = vunpack.c.h.b16 %v37
    %v90 = vunpack.c.l.b16 %v38
    %v91 = vunpack.c.h.b16 %v38
    %v92 = vunpack.c.l.b16 %v39
    %v93 = vunpack.c.h.b16 %v39
    %v94 = vunpack.c.l.b16 %v40
    %v95 = vunpack.c.h.b16 %v40
    %v96 = vunpack.c.l.b16 %v41
    %v97 = vunpack.c.h.b16 %v41
    %v98 = vunpack.c.l.b16 %v42
    %v99 = vunpack.c.h.b16 %v42
    %v100 = vunpack.c.l.b16 %v43
    %v101 = vunpack.c.h.b16 %v43
    %v102 = vunpack.c.l.b16 %v44
    %v103 = vunpack.c.h.b16 %v44
    %v104 = vunpack.c.l.b16 %v45
    %v105 = vunpack.c.h.b16 %v45
    %v106 = vpack.c.b16 %v76, %v74
    %v107 = vpack.c.b16 %v77, %v75
    %v108 = vpack.c.b16 %v80, %v78
    %v109 = vpack.c.b16 %v81, %v79
    %v110 = vpack.c.b16 %v84, %v82
    %v111 = vpack.c.b16 %v85, %v83
    %v112 = vpack.c.b16 %v88, %v86
    %v113 = vpack.c.b16 %v89, %v87
    %v114 = vpack.c.b16 %v92, %v90
    %v115 = vpack.c.b16 %v93, %v91
    %v116 = vpack.c.b16 %v96, %v94
    %v117 = vpack.c.b16 %v97, %v95
    %v118 = vpack.c.b16 %v100, %v98
    %v119 = vpack.c.b16 %v101, %v99
    %v120 = vpack.c.b16 %v104, %v102
    %v121 = vpack.c.b16 %v105, %v103
    %138 = vmatprep.subr.bf16.mxu0 %v107
    %139 = vmatpush1.bf16.msra.mxu0 %v106
    %140 = vmatprep.subr.bf16.mxu0 %v109
    %141 = vmatpush1.bf16.msra.mxu0 %v108
    %142 = vmatprep.subr.bf16.mxu0 %v111
    %143 = vmatpush1.bf16.msra.mxu0 %v110
    %144 = vmatprep.subr.bf16.mxu0 %v113
    %145 = vmatpush1.bf16.msra.mxu0 %v112
    %146 = vmatprep.subr.bf16.mxu0 %v115
    %147 = vmatpush1.bf16.msra.mxu0 %v114
    %148 = vmatprep.subr.bf16.mxu0 %v117
    %149 = vmatpush1.bf16.msra.mxu0 %v116
    %150 = vmatprep.subr.bf16.mxu0 %v119
    %151 = vmatpush1.bf16.msra.mxu0 %v118
    %152 = vmatprep.subr.bf16.mxu0 %v121
    %153 = vmatpush1.bf16.msra.mxu0 %v120
    %154 = vmatprep.subr.bf16.mxu0 0
    %155 = vmatpush1.bf16.msra.mxu0 0
    %156 = vmatprep.subr.bf16.mxu0 0
    %157 = vmatpush1.bf16.msra.mxu0 0
    %158 = vmatprep.subr.bf16.mxu0 0
    %159 = vmatpush1.bf16.msra.mxu0 0
    %160 = vmatprep.subr.bf16.mxu0 0
    %161 = vmatpush1.bf16.msra.mxu0 0
    %162 = vmatprep.subr.bf16.mxu0 0
    %163 = vmatpush1.bf16.msra.mxu0 0
    %164 = vmatprep.subr.bf16.mxu0 0
    %165 = vmatpush1.bf16.msra.mxu0 0
    %166 = vmatprep.subr.bf16.mxu0 0
    %167 = vmatpush1.bf16.msra.mxu0 0
    %168 = vmatprep.subr.bf16.mxu0 0
    %169 = vmatpush1.bf16.msra.mxu0 0
    %170 = vmatprep.mubr.bf16.mxu0 0
    %171 = vmatmul.mubr.bf16.gmra.mrb[0].mxu0 %v29
    %v172 = vpop.f32.mrb[0].mxu0
    %v173 = vadd.f32 %v51, %v172
    %v174 = vpop.f32.mrb[0].mxu0
    %v175 = vadd.f32 %v55, %v174
    %v176 = vpop.f32.mrb[0].mxu0
    %v177 = vpop.f32.mrb[0].mxu0
    %178 = vdwg.mxu0
    %v181 = vcombine.low %v173, %v175
    %v183 = vunpack.c.l.s4 1983009808
    %v184 = vunpack.c.0.s8 %v183
    %v185 = vlaneseq
    %v186 = vshrl.u32 %v185, 7
    %v187 = vsub.s32 %v184, %v186
    %v188 = vrot.slane %v181, %v187
    %190 = vst [vmem:[%s3] sm:$0xf] %v188
    // Predicated region
    $region18: #{decoder_forward.7} parent=1 // pred_check
      _
    $region19: #{decoder_forward.7} parent=1 // pred_check_branch
      %192 = sbr.rel (0) target = $region21
    $region20: #{decoder_forward.7} parent=1 // pred_region
      _
    $region21: #{decoder_forward.7} parent=1 // pred_fallthru
      _
    // Predicated region
    $region22: #{decoder_forward.7} parent=1 // pred_check
      _
    $region23: #{decoder_forward.7} parent=1 // pred_check_branch
      %194 = sbr.rel (0) target = $region25
    $region24: #{decoder_forward.7} parent=1 // pred_region
      _
    $region25: #{decoder_forward.7} parent=1 // pred_fallthru
      _
    %195 = vsyncpa [#allocation3], 1

// kernel: decoder_forward.10
$region0: #{decoder_forward.10}
  #allocation0 [shape = 'u32[]', space=smem, size = 0x4, offset = 0x4, fixed_abs, tag = 'smem constant byte address 0x4 - core index']
  #allocation1 [shape = 'u32[144,128]{1,0:T(1,128)}', space=vmem, size = 0x12000, scoped, tag = 'internal scratch']
  %s0 = inlined_call_operand.vmem [shape: bf16[2,4,4,128], index: 0, kind: input, shape index: {}]
  %s1 = inlined_call_operand.vmem [shape: f32[2,1,128], index: 1, kind: input, shape index: {}]
  %s2 = inlined_call_operand.vmem [shape: f32[2,1,128], index: 2, kind: input, shape index: {}]
  %s3 = inlined_call_operand.vmem [shape: f32[1,128], index: 3, kind: input, shape index: {}]
  %s4 = inlined_call_operand.vmem [shape: f32[1,128], index: 4, kind: input, shape index: {}]
  %s5 = inlined_call_operand.vmem [shape: f32[2,2,2,128], index: 5, kind: input, shape index: {}]
  %s6 = inlined_call_operand.vmem [shape: bf16[2,4,4,128], index: 6, kind: output, shape index: {}]
  %s7 = sld [smem:[#allocation0]]
  $region57: #{decoder_forward.10} parent=0
    _
  %s9 = ssub.s32 1, %s7
  %s10 = scalar_select 0, %s9, %s7
  loop: start=0, step=1, limit=4
  $region2: #{decoder_forward.10} parent=0 // loop_pre_header
    _
  $region3: #{decoder_forward.10} parent=0 // loop_header
    %s12 = sphi 0, %s16
    %p13 = scmp.ge.s32.totalorder %s12, 4
    %s22 = sphi 0, %s24
    %s25 = sphi 0, %s22
    %s26 = sphi 0, %s25
    %s42 = sphi 0, %s26
    %s46 = sphi 0, %s46
    %s48 = sphi 0, %s46
    %s49 = sphi 0, %s48
    %s63 = sphi 0, %s49
    %s67 = sphi 0, %s67
    %s69 = sphi 0, %s67
    %s70 = sphi 0, %s69
    %s84 = sphi 0, %s70
    %s88 = sphi 0, %s88
    %s90 = sphi 0, %s88
    %s91 = sphi 0, %s90
    %s105 = sphi 0, %s91
    %s109 = sphi 0, %s109
    %s111 = sphi 0, %s109
    %s112 = sphi 0, %s111
    %s126 = sphi 0, %s112
    %s132 = sphi 0, %s134
    %s135 = sphi 0, %s132
    %s136 = sphi 0, %s135
    %s152 = sphi 0, %s136
    %s158 = sphi 0, %s160
    %s161 = sphi 0, %s158
    %s162 = sphi 0, %s161
    %s178 = sphi 0, %s162
  $region4: #{decoder_forward.10} parent=0 // loop_header_branch
    %15 = sbr.rel (%p13) target = $region8
  $region5: #{decoder_forward.10} parent=0 // loop_body
    %s17 = ssub.s32 %s12, 1
    %s18 = ssub.s32 %s12, 2
    %s19 = sadd.s32 %s12, 1
    %s20 = ssub.s32 %s12, %s19
    %p21 = scmp.eq.s32.totalorder %s20, 0
    %s23 = sadd.s32 %s22, 1
    %s24 = scalar_select %p21, %s22, %s23
    %p27 = pneg %p21
    %p28 = scmp.eq.s32.totalorder %s12, 1
    %p29 = por %p27, %p28
    %p30 = scmp.ne.s32.totalorder %s22, %s25
    %p31 = scmp.eq.s32.totalorder %s12, 0
    %p32 = por %p30, %p31
    %p33 = scmp.ne.s32.totalorder %s22, %s25
    %p34 = scmp.eq.s32.totalorder %s17, 1
    %p35 = por %p33, %p34
    %p36 = scmp.ne.s32.totalorder %s25, %s26
    %p37 = scmp.eq.s32.totalorder %s17, 0
    %p38 = por %p36, %p37
    %p39 = scmp.ne.s32.totalorder %s25, %s26
    %p40 = scmp.eq.s32.totalorder %s18, 1
    %p41 = por %p39, %p40
    %p43 = scmp.ne.s32.totalorder %s26, %s42
    %p44 = scmp.eq.s32.totalorder %s18, 0
    %p45 = por %p43, %p44
    %s47 = sadd.s32 %s46, 1
    %p50 = scmp.eq.s32.totalorder %s12, 1
    %p51 = scmp.ne.s32.totalorder %s46, %s48
    %p52 = scmp.eq.s32.totalorder %s12, 0
    %p53 = por %p51, %p52
    %p54 = scmp.ne.s32.totalorder %s46, %s48
    %p55 = scmp.eq.s32.totalorder %s17, 1
    %p56 = por %p54, %p55
    %p57 = scmp.ne.s32.totalorder %s48, %s49
    %p58 = scmp.eq.s32.totalorder %s17, 0
    %p59 = por %p57, %p58
    %p60 = scmp.ne.s32.totalorder %s48, %s49
    %p61 = scmp.eq.s32.totalorder %s18, 1
    %p62 = por %p60, %p61
    %p64 = scmp.ne.s32.totalorder %s49, %s63
    %p65 = scmp.eq.s32.totalorder %s18, 0
    %p66 = por %p64, %p65
    %s68 = sadd.s32 %s67, 1
    %p71 = scmp.eq.s32.totalorder %s12, 1
    %p72 = scmp.ne.s32.totalorder %s67, %s69
    %p73 = scmp.eq.s32.totalorder %s12, 0
    %p74 = por %p72, %p73
    %p75 = scmp.ne.s32.totalorder %s67, %s69
    %p76 = scmp.eq.s32.totalorder %s17, 1
    %p77 = por %p75, %p76
    %p78 = scmp.ne.s32.totalorder %s69, %s70
    %p79 = scmp.eq.s32.totalorder %s17, 0
    %p80 = por %p78, %p79
    %p81 = scmp.ne.s32.totalorder %s69, %s70
    %p82 = scmp.eq.s32.totalorder %s18, 1
    %p83 = por %p81, %p82
    %p85 = scmp.ne.s32.totalorder %s70, %s84
    %p86 = scmp.eq.s32.totalorder %s18, 0
    %p87 = por %p85, %p86
    %s89 = sadd.s32 %s88, 1
    %p92 = scmp.eq.s32.totalorder %s12, 1
    %p93 = scmp.ne.s32.totalorder %s88, %s90
    %p94 = scmp.eq.s32.totalorder %s12, 0
    %p95 = por %p93, %p94
    %p96 = scmp.ne.s32.totalorder %s88, %s90
    %p97 = scmp.eq.s32.totalorder %s17, 1
    %p98 = por %p96, %p97
    %p99 = scmp.ne.s32.totalorder %s90, %s91
    %p100 = scmp.eq.s32.totalorder %s17, 0
    %p101 = por %p99, %p100
    %p102 = scmp.ne.s32.totalorder %s90, %s91
    %p103 = scmp.eq.s32.totalorder %s18, 1
    %p104 = por %p102, %p103
    %p106 = scmp.ne.s32.totalorder %s91, %s105
    %p107 = scmp.eq.s32.totalorder %s18, 0
    %p108 = por %p106, %p107
    %s110 = sadd.s32 %s109, 1
    %p113 = scmp.eq.s32.totalorder %s12, 1
    %p114 = scmp.ne.s32.totalorder %s109, %s111
    %p115 = scmp.eq.s32.totalorder %s12, 0
    %p116 = por %p114, %p115
    %p117 = scmp.ne.s32.totalorder %s109, %s111
    %p118 = scmp.eq.s32.totalorder %s17, 1
    %p119 = por %p117, %p118
    %p120 = scmp.ne.s32.totalorder %s111, %s112
    %p121 = scmp.eq.s32.totalorder %s17, 0
    %p122 = por %p120, %p121
    %p123 = scmp.ne.s32.totalorder %s111, %s112
    %p124 = scmp.eq.s32.totalorder %s18, 1
    %p125 = por %p123, %p124
    %p127 = scmp.ne.s32.totalorder %s112, %s126
    %p128 = scmp.eq.s32.totalorder %s18, 0
    %p129 = por %p127, %p128
    %s130 = ssub.s32 %s12, %s19
    %p131 = scmp.eq.s32.totalorder %s130, 0
    %s133 = sadd.s32 %s132, 1
    %s134 = scalar_select %p131, %s132, %s133
    %p137 = pneg %p131
    %p138 = scmp.eq.s32.totalorder %s12, 1
    %p139 = por %p137, %p138
    %p140 = scmp.ne.s32.totalorder %s132, %s135
    %p141 = scmp.eq.s32.totalorder %s12, 0
    %p142 = por %p140, %p141
    %p143 = scmp.ne.s32.totalorder %s132, %s135
    %p144 = scmp.eq.s32.totalorder %s17, 1
    %p145 = por %p143, %p144
    %p146 = scmp.ne.s32.totalorder %s135, %s136
    %p147 = scmp.eq.s32.totalorder %s17, 0
    %p148 = por %p146, %p147
    %p149 = scmp.ne.s32.totalorder %s135, %s136
    %p150 = scmp.eq.s32.totalorder %s18, 1
    %p151 = por %p149, %p150
    %p153 = scmp.ne.s32.totalorder %s136, %s152
    %p154 = scmp.eq.s32.totalorder %s18, 0
    %p155 = por %p153, %p154
    %s156 = ssub.s32 %s12, %s19
    %p157 = scmp.eq.s32.totalorder %s156, 0
    %s159 = sadd.s32 %s158, 1
    %s160 = scalar_select %p157, %s158, %s159
    %p163 = pneg %p157
    %p164 = scmp.eq.s32.totalorder %s12, 1
    %p165 = por %p163, %p164
    %p166 = scmp.ne.s32.totalorder %s158, %s161
    %p167 = scmp.eq.s32.totalorder %s12, 0
    %p168 = por %p166, %p167
    %p169 = scmp.ne.s32.totalorder %s158, %s161
    %p170 = scmp.eq.s32.totalorder %s17, 1
    %p171 = por %p169, %p170
    %p172 = scmp.ne.s32.totalorder %s161, %s162
    %p173 = scmp.eq.s32.totalorder %s17, 0
    %p174 = por %p172, %p173
    %p175 = scmp.ne.s32.totalorder %s161, %s162
    %p176 = scmp.eq.s32.totalorder %s18, 1
    %p177 = por %p175, %p176
    %p179 = scmp.ne.s32.totalorder %s162, %s178
    %p180 = scmp.eq.s32.totalorder %s18, 0
    %p181 = por %p179, %p180
    %p182 = scmp.le.s32.totalorder 1, %s12
    %p183 = scmp.lt.s32.totalorder %s12, 3
    %p184 = pnand %p182, %p183
    %p185 = pneg %p184
    // Predicated region
    $region9: #{decoder_forward.10} parent=5 // pred_check
      _
    $region10: #{decoder_forward.10} parent=5 // pred_check_branch
      %187 = sbr.rel (%p184) target = $region12
    $region11: #{decoder_forward.10} parent=5 // pred_region
      %s188 = ssub.s32 %s12, 1
      // Predicated region
      $region13: #{decoder_forward.10} parent=11 // pred_check
        %p189 = pneg %p59
      $region14: #{decoder_forward.10} parent=11 // pred_check_branch
        %191 = sbr.rel (%p189) target = $region16
      $region15: #{decoder_forward.10} parent=11 // pred_region
        _
      $region16: #{decoder_forward.10} parent=11 // pred_fallthru
        _
      // Predicated region
      $region17: #{decoder_forward.10} parent=11 // pred_check
        %p192 = pneg %p80
      $region18: #{decoder_forward.10} parent=11 // pred_check_branch
        %194 = sbr.rel (%p192) target = $region20
      $region19: #{decoder_forward.10} parent=11 // pred_region
        _
      $region20: #{decoder_forward.10} parent=11 // pred_fallthru
        _
      // Predicated region
      $region21: #{decoder_forward.10} parent=11 // pred_check
        %p195 = pneg %p101
      $region22: #{decoder_forward.10} parent=11 // pred_check_branch
        %197 = sbr.rel (%p195) target = $region24
      $region23: #{decoder_forward.10} parent=11 // pred_region
        _
      $region24: #{decoder_forward.10} parent=11 // pred_fallthru
        _
      // Predicated region
      $region25: #{decoder_forward.10} parent=11 // pred_check
        %p198 = pneg %p122
      $region26: #{decoder_forward.10} parent=11 // pred_check_branch
        %200 = sbr.rel (%p198) target = $region28
      $region27: #{decoder_forward.10} parent=11 // pred_region
        _
      $region28: #{decoder_forward.10} parent=11 // pred_fallthru
        _
    $region12: #{decoder_forward.10} parent=5 // pred_fallthru
      _
    %p201 = scmp.lt.s32.totalorder %s12, 2
    // Predicated region
    $region29: #{decoder_forward.10} parent=5 // pred_check
      %p202 = pneg %p201
    $region30: #{decoder_forward.10} parent=5 // pred_check_branch
      %204 = sbr.rel (%p202) target = $region32
    $region31: #{decoder_forward.10} parent=5 // pred_region
      // Predicated region
      $region33: #{decoder_forward.10} parent=31 // pred_check
        %p205 = pneg %p32
      $region34: #{decoder_forward.10} parent=31 // pred_check_branch
        %207 = sbr.rel (%p205) target = $region36
      $region35: #{decoder_forward.10} parent=31 // pred_region
        %p208 = scmp.lt.s32.totalorder %s12, 1
        %s209 = scalar_select %p208, %s12, 1
        %s210 = smul.addr %s209, 4
        %s211 = smul.addr %s210, 2
        %s212 = scalar_lea.vmem %s0, %s211
      $region36: #{decoder_forward.10} parent=31 // pred_fallthru
        _
      // Predicated region
      $region37: #{decoder_forward.10} parent=31 // pred_check
        %p213 = pneg %p142
      $region38: #{decoder_forward.10} parent=31 // pred_check_branch
        %215 = sbr.rel (%p213) target = $region40
      $region39: #{decoder_forward.10} parent=31 // pred_region
        %p216 = scmp.lt.s32.totalorder %s12, 1
        %s217 = scalar_select %p216, %s12, 1
        %s218 = smul.addr %s217, 2
        %s219 = smul.addr %s218, 2
        %s220 = scalar_lea.vmem %s5, %s219
      $region40: #{decoder_forward.10} parent=31 // pred_fallthru
        _
    $region32: #{decoder_forward.10} parent=5 // pred_fallthru
      _
    %p221 = scmp.le.s32.totalorder 1, %s12
    %p222 = scmp.lt.s32.totalorder %s12, 3
    %p223 = pnand %p221, %p222
    %p224 = pneg %p223
    // Predicated region
    $region41: #{decoder_forward.10} parent=5 // pred_check
      _
    $region42: #{decoder_forward.10} parent=5 // pred_check_branch
      %226 = sbr.rel (%p223) target = $region44
    $region43: #{decoder_forward.10} parent=5 // pred_region
      %s227 = ssub.s32 %s12, 1
      %p228 = scmp.lt.s32.totalorder %s17, 1
      %s229 = scalar_select %p228, %s17, 1
      %s230 = smul.addr %s229, 4
      %s231 = smul.addr %s230, 2
      %s232 = scalar_lea.vmem %s0, %s231
      %p233 = pneg %p38
      %p234 = pneg %p35
      %p235 = pneg %p59
      %p236 = pneg %p56
      %p237 = pneg %p80
      %p238 = pneg %p77
      %p239 = pneg %p101
      %p240 = pneg %p98
      %p241 = pneg %p122
      %p242 = pneg %p119
      %p243 = scmp.lt.s32.totalorder %s17, 1
      %s244 = scalar_select %p243, %s17, 1
      %s245 = smul.addr %s244, 2
      %s246 = smul.addr %s245, 2
      %s247 = scalar_lea.vmem %s5, %s246
      %p248 = pneg %p148
      %p249 = pneg %p145
      %p250 = pneg %p174
      %p251 = pneg %p171
      %p252 = scmp.lt.s32.totalorder %s17, 1
      %s253 = scalar_select %p252, %s17, 1
      %s254 = smul.addr %s253, 4
      %s255 = smul.addr %s254, 2
      %s256 = scalar_lea.vmem %s6, %s255
      %p257 = scmp.lt.s32.totalorder %s17, 1
      %s258 = scalar_select %p257, %s17, 1
      %s259 = smul.addr %s258, 4
      %s260 = smul.addr %s259, 2
      %s261 = scalar_lea.vmem %s0, %s260
      %p262 = scmp.lt.s32.totalorder %s17, 1
      %s263 = scalar_select %p262, %s17, 1
      %s264 = smul.addr %s263, 2
      %s265 = smul.addr %s264, 2
      %s266 = scalar_lea.vmem %s5, %s265
      %p267 = scmp.lt.s32.totalorder %s17, 1
      %s268 = scalar_select %p267, %s17, 1
      %s269 = smul.addr %s268, 4
      %s270 = smul.addr %s269, 2
      %s271 = scalar_lea.vmem %s6, %s270
      %v272 = vld [vmem:[%s1] sm:$0x1]
      %v273 = vld [vmem:[%s1 + $0x1] sm:$0x1]
      %vm274 = vcmask 1040384
      %v275 = vsel %vm274, %v272, 0.0
      %v276 = vsel %vm274, %v273, 0.0
      %v277 = vadd.f32 %v275, %v276
      %v278 = vld [vmem:[%s2] sm:$0x1]
      %v279 = vld [vmem:[%s2 + $0x1] sm:$0x1]
      %v280 = vsel %vm274, %v278, 0.0
      %v281 = vsel %vm274, %v279, 0.0
      %v282 = vadd.f32 %v280, %v281
      %v283 = vmul.f32 %v277, 0.03125
      %v284 = vmul.f32 %v282, 0.03125
      %v285 = vmul.f32 %v283, %v283
      %v286 = vsub.f32 %v284, %v285
      %v287 = vmax.f32 %v286, 0.0
      %v288 = vld [vmem:[%s3] sm:$0x1]
      %v289 = vadd.f32 %v287, 1e-05
      %v290 = vrsqrt.pop %v289
      %v291 = vmul.f32 %v288, %v290
      %v292 = vld [vmem:[%s4] sm:$0x1]
      %v293 = vmul.f32 %v283, %v291
      %v294 = vsub.f32 %v292, %v293
      %v295 = vld [vmem:[%s266] sm:$0x3]
      %v296 = vld [vmem:[%s266 + $0x2] sm:$0x3]
      %v300 = vunpack.c.l.s4 1966171168
      %v301 = vunpack.c.0.s8 %v300
      %v302 = vlaneseq
      %v303 = vshrl.u32 %v302, 7
      %v304 = vsub.s32 %v301, %v303
      %v305 = vrot.slane %v295, %v304
      %v306 = vcombine.high %v305, %v305
      %v308 = vunpack.c.l.s4 1966171168
      %v309 = vunpack.c.0.s8 %v308
      %v310 = vlaneseq
      %v311 = vshrl.u32 %v310, 7
      %v312 = vsub.s32 %v309, %v311
      %v313 = vrot.slane %v305, %v312
      %v315 = vunpack.c.l.s4 1966171168
      %v316 = vunpack.c.0.s8 %v315
      %v317 = vlaneseq
      %v318 = vshrl.u32 %v317, 7
      %v319 = vsub.s32 %v316, %v318
      %v320 = vrot.slane %v306, %v319
      %v322 = vunpack.c.l.s4 1966171168
      %v323 = vunpack.c.0.s8 %v322
      %v324 = vlaneseq
      %v325 = vshrl.u32 %v324, 7
      %v326 = vsub.s32 %v323, %v325
      %v327 = vrot.slane %v296, %v326
      %v328 = vcombine.high %v327, %v327
      %v330 = vunpack.c.l.s4 1966171168
      %v331 = vunpack.c.0.s8 %v330
      %v332 = vlaneseq
      %v333 = vshrl.u32 %v332, 7
      %v334 = vsub.s32 %v331, %v333
      %v335 = vrot.slane %v327, %v334
      %v337 = vunpack.c.l.s4 1966171168
      %v338 = vunpack.c.0.s8 %v337
      %v339 = vlaneseq
      %v340 = vshrl.u32 %v339, 7
      %v341 = vsub.s32 %v338, %v340
      %v342 = vrot.slane %v328, %v341
      %v343 = vlaneseq
      %v344 = vshrl.u32 %v343, 7
      %v345 = vsub.s32 0, %v344
      %v346 = vrot.slane %v313, %v345
      %v347 = vlaneseq
      %v348 = vshrl.u32 %v347, 7
      %v349 = vsub.s32 0, %v348
      %v350 = vrot.slane %v320, %v349
      %v351 = vlaneseq
      %v352 = vshrl.u32 %v351, 7
      %v353 = vsub.s32 0, %v352
      %v354 = vrot.slane %v335, %v353
      %v355 = vlaneseq
      %v356 = vshrl.u32 %v355, 7
      %v357 = vsub.s32 0, %v356
      %v358 = vrot.slane %v342, %v357
      %v359 = vld [vmem:[%s261] sm:$0x3]
      %v360 = vld [vmem:[%s261 + $0x2] sm:$0x3]
      %v361 = vld [vmem:[%s261 + $0x4] sm:$0x3]
      %v362 = vld [vmem:[%s261 + $0x6] sm:$0x3]
      %v363 = vunpack.c.l.bf16 %v359
      %v364 = vunpack.c.l.bf16 %v360
      %v365 = vunpack.c.l.bf16 %v361
      %v366 = vunpack.c.l.bf16 %v362
      %v368 = vlaneseq
      %v369 = vshrl.u32 %v368, 7
      %v370 = vsub.s32 0, %v369
      %v371 = vrot.slane %v291, %v370
      %v373 = vmul.f32 %v363, %v371
      %v374 = vmul.f32 %v364, %v371
      %v375 = vmul.f32 %v365, %v371
      %v376 = vmul.f32 %v366, %v371
      %v378 = vlaneseq
      %v379 = vshrl.u32 %v378, 7
      %v380 = vsub.s32 0, %v379
      %v381 = vrot.slane %v294, %v380
      %v383 = vadd.f32 %v373, %v381
      %v384 = vadd.f32 %v374, %v381
      %v385 = vadd.f32 %v375, %v381
      %v386 = vadd.f32 %v376, %v381
      %v387 = vcombine.low %v346, %v350
      %v389 = vunpack.c.l.s4 1983009808
      %v390 = vunpack.c.0.s8 %v389
      %v391 = vlaneseq
      %v392 = vshrl.u32 %v391, 7
      %v393 = vsub.s32 %v390, %v392
      %v394 = vrot.slane %v387, %v393
      %v395 = vcombine.low %v354, %v358
      %v397 = vunpack.c.l.s4 1983009808
      %v398 = vunpack.c.0.s8 %v397
      %v399 = vlaneseq
      %v400 = vshrl.u32 %v399, 7
      %v401 = vsub.s32 %v398, %v400
      %v402 = vrot.slane %v395, %v401
      %v405 = vadd.f32 %v383, %v394
      %v406 = vadd.f32 %v384, %v394
      %v407 = vadd.f32 %v385, %v402
      %v408 = vadd.f32 %v386, %v402
      %v409 = vmax.f32 %v405, 0.0
      %v410 = vmax.f32 %v406, 0.0
      %v411 = vmax.f32 %v407, 0.0
      %v412 = vmax.f32 %v408, 0.0
      %v413 = vpack.c.bf16 %v409, %v409
      %v414 = vpack.c.bf16 %v410, %v410
      %v415 = vpack.c.bf16 %v411, %v411
      %v416 = vpack.c.bf16 %v412, %v412
      %417 = vst [vmem:[%s271] sm:$0x3] %v413
      %418 = vst [vmem:[%s271 + $0x2] sm:$0x3] %v414
      %419 = vst [vmem:[%s271 + $0x4] sm:$0x3] %v415
      %420 = vst [vmem:[%s271 + $0x6] sm:$0x3] %v416
      %p421 = scmp.lt.s32.totalorder %s17, 1
      %s422 = scalar_select %p421, %s17, 1
      %s423 = smul.addr %s422, 4
      %s424 = smul.addr %s423, 2
      %s425 = scalar_lea.vmem %s6, %s424
      // Predicated region
      $region45: #{decoder_forward.10} parent=43 // pred_check
        %p426 = pneg %p171
      $region46: #{decoder_forward.10} parent=43 // pred_check_branch
        %428 = sbr.rel (%p426) target = $region48
      $region47: #{decoder_forward.10} parent=43 // pred_region
        _
      $region48: #{decoder_forward.10} parent=43 // pred_fallthru
        _
    $region44: #{decoder_forward.10} parent=5 // pred_fallthru
      _
    %p429 = scmp.le.s32.totalorder 2, %s12
    // Predicated region
    $region49: #{decoder_forward.10} parent=5 // pred_check
      %p430 = pneg %p429
    $region50: #{decoder_forward.10} parent=5 // pred_check_branch
      %432 = sbr.rel (%p430) target = $region52
    $region51: #{decoder_forward.10} parent=5 // pred_region
      %s433 = ssub.s32 %s12, 2
      // Predicated region
      $region53: #{decoder_forward.10} parent=51 // pred_check
        %p434 = pneg %p177
      $region54: #{decoder_forward.10} parent=51 // pred_check_branch
        %436 = sbr.rel (%p434) target = $region56
      $region55: #{decoder_forward.10} parent=51 // pred_region
        %p437 = scmp.lt.s32.totalorder %s18, 1
        %s438 = scalar_select %p437, %s18, 1
        %s439 = smul.addr %s438, 4
        %s440 = smul.addr %s439, 2
        %s441 = scalar_lea.vmem %s6, %s440
      $region56: #{decoder_forward.10} parent=51 // pred_fallthru
        _
    $region52: #{decoder_forward.10} parent=5 // pred_fallthru
      _
  $region6: #{decoder_forward.10} parent=0 // loop_footer
    %s16 = sadd.s32 1, %s12
  $region7: #{decoder_forward.10} parent=0 // loop_footer_branch
    %11 = sbr.rel target = $region3
  $region8: #{decoder_forward.10} parent=0 // loop_exit
    _

// kernel: decoder_forward.9
$region0: #{decoder_forward.9}
  #allocation0 [shape = 'u32[]', space=smem, size = 0x4, offset = 0x4, fixed_abs, tag = 'smem constant byte address 0x4 - core index']
  #allocation1 [shape = 'u32[144,128]{1,0:T(1,128)}', space=vmem, size = 0x12000, scoped, tag = 'internal scratch']
  #allocation2 [shape = 'bf16[6,6,128]{2,1,0:T(8,128)(2,1)}', space=vmem, size = 0x3000, scoped, tag = 'scratch operand']
  %s0 = inlined_call_operand.vmem [shape: bf16[2,4,4,128], index: 0, kind: input, shape index: {}]
  %s1 = inlined_call_operand.vmem [shape: f32[2,1,128], index: 1, kind: input, shape index: {}]
  %s2 = inlined_call_operand.vmem [shape: f32[2,1,128], index: 2, kind: input, shape index: {}]
  %s3 = inlined_call_operand.vmem [shape: f32[1,128], index: 3, kind: input, shape index: {}]
  %s4 = inlined_call_operand.vmem [shape: f32[1,128], index: 4, kind: input, shape index: {}]
  %s5 = inlined_call_operand.vmem [shape: bf16[1152,128], index: 5, kind: input, shape index: {}]
  %s6 = inlined_call_operand.vmem [shape: f32[1,128], index: 6, kind: input, shape index: {}]
  %s7 = inlined_call_operand.vmem [shape: bf16[2,4,4,128], index: 7, kind: output, shape index: {0}]
  %s8 = inlined_call_operand.vmem [shape: f32[2,1,128], index: 8, kind: output, shape index: {1}]
  %s9 = inlined_call_operand.vmem [shape: f32[2,1,128], index: 9, kind: output, shape index: {2}]
  %10 = xla_tuple %s7, %s8, %s9
  %s11 = sld [smem:[#allocation0]]
  $region77: #{decoder_forward.9} parent=0
    _
  %s13 = ssub.s32 1, %s11
  %s14 = scalar_select 0, %s13, %s11
  loop: start=0, step=1, limit=4
  $region2: #{decoder_forward.9} parent=0 // loop_pre_header
    _
  $region3: #{decoder_forward.9} parent=0 // loop_header
    %s16 = sphi 0, %s20
    %p17 = scmp.ge.s32.totalorder %s16, 4
    %s26 = sphi 0, %s28
    %s29 = sphi 0, %s26
    %s30 = sphi 0, %s29
    %s46 = sphi 0, %s30
    %s50 = sphi 0, %s50
    %s52 = sphi 0, %s50
    %s53 = sphi 0, %s52
    %s67 = sphi 0, %s53
    %s71 = sphi 0, %s71
    %s73 = sphi 0, %s71
    %s74 = sphi 0, %s73
    %s88 = sphi 0, %s74
    %s92 = sphi 0, %s92
    %s94 = sphi 0, %s92
    %s95 = sphi 0, %s94
    %s109 = sphi 0, %s95
    %s113 = sphi 0, %s113
    %s115 = sphi 0, %s113
    %s116 = sphi 0, %s115
    %s130 = sphi 0, %s116
    %s134 = sphi 0, %s134
    %s136 = sphi 0, %s134
    %s137 = sphi 0, %s136
    %s151 = sphi 0, %s137
    %s155 = sphi 0, %s155
    %s157 = sphi 0, %s155
    %s158 = sphi 0, %s157
    %s172 = sphi 0, %s158
    %s178 = sphi 0, %s180
    %s181 = sphi 0, %s178
    %s182 = sphi 0, %s181
    %s198 = sphi 0, %s182
    %s204 = sphi 0, %s206
    %s207 = sphi 0, %s204
    %s208 = sphi 0, %s207
    %s224 = sphi 0, %s208
    %s230 = sphi 0, %s232
    %s233 = sphi 0, %s230
    %s234 = sphi 0, %s233
    %s250 = sphi 0, %s234
  $region4: #{decoder_forward.9} parent=0 // loop_header_branch
    %19 = sbr.rel (%p17) target = $region8
  $region5: #{decoder_forward.9} parent=0 // loop_body
    %s21 = ssub.s32 %s16, 1
    %s22 = ssub.s32 %s16, 2
    %s23 = sadd.s32 %s16, 1
    %s24 = ssub.s32 %s16, %s23
    %p25 = scmp.eq.s32.totalorder %s24, 0
    %s27 = sadd.s32 %s26, 1
    %s28 = scalar_select %p25, %s26, %s27
    %p31 = pneg %p25
    %p32 = scmp.eq.s32.totalorder %s16, 1
    %p33 = por %p31, %p32
    %p34 = scmp.ne.s32.totalorder %s26, %s29
    %p35 = scmp.eq.s32.totalorder %s16, 0
    %p36 = por %p34, %p35
    %p37 = scmp.ne.s32.totalorder %s26, %s29
    %p38 = scmp.eq.s32.totalorder %s21, 1
    %p39 = por %p37, %p38
    %p40 = scmp.ne.s32.totalorder %s29, %s30
    %p41 = scmp.eq.s32.totalorder %s21, 0
    %p42 = por %p40, %p41
    %p43 = scmp.ne.s32.totalorder %s29, %s30
    %p44 = scmp.eq.s32.totalorder %s22, 1
    %p45 = por %p43, %p44
    %p47 = scmp.ne.s32.totalorder %s30, %s46
    %p48 = scmp.eq.s32.totalorder %s22, 0
    %p49 = por %p47, %p48
    %s51 = sadd.s32 %s50, 1
    %p54 = scmp.eq.s32.totalorder %s16, 1
    %p55 = scmp.ne.s32.totalorder %s50, %s52
    %p56 = scmp.eq.s32.totalorder %s16, 0
    %p57 = por %p55, %p56
    %p58 = scmp.ne.s32.totalorder %s50, %s52
    %p59 = scmp.eq.s32.totalorder %s21, 1
    %p60 = por %p58, %p59
    %p61 = scmp.ne.s32.totalorder %s52, %s53
    %p62 = scmp.eq.s32.totalorder %s21, 0
    %p63 = por %p61, %p62
    %p64 = scmp.ne.s32.totalorder %s52, %s53
    %p65 = scmp.eq.s32.totalorder %s22, 1
    %p66 = por %p64, %p65
    %p68 = scmp.ne.s32.totalorder %s53, %s67
    %p69 = scmp.eq.s32.totalorder %s22, 0
    %p70 = por %p68, %p69
    %s72 = sadd.s32 %s71, 1
    %p75 = scmp.eq.s32.totalorder %s16, 1
    %p76 = scmp.ne.s32.totalorder %s71, %s73
    %p77 = scmp.eq.s32.totalorder %s16, 0
    %p78 = por %p76, %p77
    %p79 = scmp.ne.s32.totalorder %s71, %s73
    %p80 = scmp.eq.s32.totalorder %s21, 1
    %p81 = por %p79, %p80
    %p82 = scmp.ne.s32.totalorder %s73, %s74
    %p83 = scmp.eq.s32.totalorder %s21, 0
    %p84 = por %p82, %p83
    %p85 = scmp.ne.s32.totalorder %s73, %s74
    %p86 = scmp.eq.s32.totalorder %s22, 1
    %p87 = por %p85, %p86
    %p89 = scmp.ne.s32.totalorder %s74, %s88
    %p90 = scmp.eq.s32.totalorder %s22, 0
    %p91 = por %p89, %p90
    %s93 = sadd.s32 %s92, 1
    %p96 = scmp.eq.s32.totalorder %s16, 1
    %p97 = scmp.ne.s32.totalorder %s92, %s94
    %p98 = scmp.eq.s32.totalorder %s16, 0
    %p99 = por %p97, %p98
    %p100 = scmp.ne.s32.totalorder %s92, %s94
    %p101 = scmp.eq.s32.totalorder %s21, 1
    %p102 = por %p100, %p101
    %p103 = scmp.ne.s32.totalorder %s94, %s95
    %p104 = scmp.eq.s32.totalorder %s21, 0
    %p105 = por %p103, %p104
    %p106 = scmp.ne.s32.totalorder %s94, %s95
    %p107 = scmp.eq.s32.totalorder %s22, 1
    %p108 = por %p106, %p107
    %p110 = scmp.ne.s32.totalorder %s95, %s109
    %p111 = scmp.eq.s32.totalorder %s22, 0
    %p112 = por %p110, %p111
    %s114 = sadd.s32 %s113, 1
    %p117 = scmp.eq.s32.totalorder %s16, 1
    %p118 = scmp.ne.s32.totalorder %s113, %s115
    %p119 = scmp.eq.s32.totalorder %s16, 0
    %p120 = por %p118, %p119
    %p121 = scmp.ne.s32.totalorder %s113, %s115
    %p122 = scmp.eq.s32.totalorder %s21, 1
    %p123 = por %p121, %p122
    %p124 = scmp.ne.s32.totalorder %s115, %s116
    %p125 = scmp.eq.s32.totalorder %s21, 0
    %p126 = por %p124, %p125
    %p127 = scmp.ne.s32.totalorder %s115, %s116
    %p128 = scmp.eq.s32.totalorder %s22, 1
    %p129 = por %p127, %p128
    %p131 = scmp.ne.s32.totalorder %s116, %s130
    %p132 = scmp.eq.s32.totalorder %s22, 0
    %p133 = por %p131, %p132
    %s135 = sadd.s32 %s134, 1
    %p138 = scmp.eq.s32.totalorder %s16, 1
    %p139 = scmp.ne.s32.totalorder %s134, %s136
    %p140 = scmp.eq.s32.totalorder %s16, 0
    %p141 = por %p139, %p140
    %p142 = scmp.ne.s32.totalorder %s134, %s136
    %p143 = scmp.eq.s32.totalorder %s21, 1
    %p144 = por %p142, %p143
    %p145 = scmp.ne.s32.totalorder %s136, %s137
    %p146 = scmp.eq.s32.totalorder %s21, 0
    %p147 = por %p145, %p146
    %p148 = scmp.ne.s32.totalorder %s136, %s137
    %p149 = scmp.eq.s32.totalorder %s22, 1
    %p150 = por %p148, %p149
    %p152 = scmp.ne.s32.totalorder %s137, %s151
    %p153 = scmp.eq.s32.totalorder %s22, 0
    %p154 = por %p152, %p153
    %s156 = sadd.s32 %s155, 1
    %p159 = scmp.eq.s32.totalorder %s16, 1
    %p160 = scmp.ne.s32.totalorder %s155, %s157
    %p161 = scmp.eq.s32.totalorder %s16, 0
    %p162 = por %p160, %p161
    %p163 = scmp.ne.s32.totalorder %s155, %s157
    %p164 = scmp.eq.s32.totalorder %s21, 1
    %p165 = por %p163, %p164
    %p166 = scmp.ne.s32.totalorder %s157, %s158
    %p167 = scmp.eq.s32.totalorder %s21, 0
    %p168 = por %p166, %p167
    %p169 = scmp.ne.s32.totalorder %s157, %s158
    %p170 = scmp.eq.s32.totalorder %s22, 1
    %p171 = por %p169, %p170
    %p173 = scmp.ne.s32.totalorder %s158, %s172
    %p174 = scmp.eq.s32.totalorder %s22, 0
    %p175 = por %p173, %p174
    %s176 = ssub.s32 %s16, %s23
    %p177 = scmp.eq.s32.totalorder %s176, 0
    %s179 = sadd.s32 %s178, 1
    %s180 = scalar_select %p177, %s178, %s179
    %p183 = pneg %p177
    %p184 = scmp.eq.s32.totalorder %s16, 1
    %p185 = por %p183, %p184
    %p186 = scmp.ne.s32.totalorder %s178, %s181
    %p187 = scmp.eq.s32.totalorder %s16, 0
    %p188 = por %p186, %p187
    %p189 = scmp.ne.s32.totalorder %s178, %s181
    %p190 = scmp.eq.s32.totalorder %s21, 1
    %p191 = por %p189, %p190
    %p192 = scmp.ne.s32.totalorder %s181, %s182
    %p193 = scmp.eq.s32.totalorder %s21, 0
    %p194 = por %p192, %p193
    %p195 = scmp.ne.s32.totalorder %s181, %s182
    %p196 = scmp.eq.s32.totalorder %s22, 1
    %p197 = por %p195, %p196
    %p199 = scmp.ne.s32.totalorder %s182, %s198
    %p200 = scmp.eq.s32.totalorder %s22, 0
    %p201 = por %p199, %p200
    %s202 = ssub.s32 %s16, %s23
    %p203 = scmp.eq.s32.totalorder %s202, 0
    %s205 = sadd.s32 %s204, 1
    %s206 = scalar_select %p203, %s204, %s205
    %p209 = pneg %p203
    %p210 = scmp.eq.s32.totalorder %s16, 1
    %p211 = por %p209, %p210
    %p212 = scmp.ne.s32.totalorder %s204, %s207
    %p213 = scmp.eq.s32.totalorder %s16, 0
    %p214 = por %p212, %p213
    %p215 = scmp.ne.s32.totalorder %s204, %s207
    %p216 = scmp.eq.s32.totalorder %s21, 1
    %p217 = por %p215, %p216
    %p218 = scmp.ne.s32.totalorder %s207, %s208
    %p219 = scmp.eq.s32.totalorder %s21, 0
    %p220 = por %p218, %p219
    %p221 = scmp.ne.s32.totalorder %s207, %s208
    %p222 = scmp.eq.s32.totalorder %s22, 1
    %p223 = por %p221, %p222
    %p225 = scmp.ne.s32.totalorder %s208, %s224
    %p226 = scmp.eq.s32.totalorder %s22, 0
    %p227 = por %p225, %p226
    %s228 = ssub.s32 %s16, %s23
    %p229 = scmp.eq.s32.totalorder %s228, 0
    %s231 = sadd.s32 %s230, 1
    %s232 = scalar_select %p229, %s230, %s231
    %p235 = pneg %p229
    %p236 = scmp.eq.s32.totalorder %s16, 1
    %p237 = por %p235, %p236
    %p238 = scmp.ne.s32.totalorder %s230, %s233
    %p239 = scmp.eq.s32.totalorder %s16, 0
    %p240 = por %p238, %p239
    %p241 = scmp.ne.s32.totalorder %s230, %s233
    %p242 = scmp.eq.s32.totalorder %s21, 1
    %p243 = por %p241, %p242
    %p244 = scmp.ne.s32.totalorder %s233, %s234
    %p245 = scmp.eq.s32.totalorder %s21, 0
    %p246 = por %p244, %p245
    %p247 = scmp.ne.s32.totalorder %s233, %s234
    %p248 = scmp.eq.s32.totalorder %s22, 1
    %p249 = por %p247, %p248
    %p251 = scmp.ne.s32.totalorder %s234, %s250
    %p252 = scmp.eq.s32.totalorder %s22, 0
    %p253 = por %p251, %p252
    %p254 = scmp.le.s32.totalorder 1, %s16
    %p255 = scmp.lt.s32.totalorder %s16, 3
    %p256 = pnand %p254, %p255
    %p257 = pneg %p256
    // Predicated region
    $region9: #{decoder_forward.9} parent=5 // pred_check
      _
    $region10: #{decoder_forward.9} parent=5 // pred_check_branch
      %259 = sbr.rel (%p256) target = $region12
    $region11: #{decoder_forward.9} parent=5 // pred_region
      %s260 = ssub.s32 %s16, 1
      // Predicated region
      $region13: #{decoder_forward.9} parent=11 // pred_check
        %p261 = pneg %p63
      $region14: #{decoder_forward.9} parent=11 // pred_check_branch
        %263 = sbr.rel (%p261) target = $region16
      $region15: #{decoder_forward.9} parent=11 // pred_region
        _
      $region16: #{decoder_forward.9} parent=11 // pred_fallthru
        _
      // Predicated region
      $region17: #{decoder_forward.9} parent=11 // pred_check
        %p264 = pneg %p84
      $region18: #{decoder_forward.9} parent=11 // pred_check_branch
        %266 = sbr.rel (%p264) target = $region20
      $region19: #{decoder_forward.9} parent=11 // pred_region
        _
      $region20: #{decoder_forward.9} parent=11 // pred_fallthru
        _
      // Predicated region
      $region21: #{decoder_forward.9} parent=11 // pred_check
        %p267 = pneg %p105
      $region22: #{decoder_forward.9} parent=11 // pred_check_branch
        %269 = sbr.rel (%p267) target = $region24
      $region23: #{decoder_forward.9} parent=11 // pred_region
        _
      $region24: #{decoder_forward.9} parent=11 // pred_fallthru
        _
      // Predicated region
      $region25: #{decoder_forward.9} parent=11 // pred_check
        %p270 = pneg %p126
      $region26: #{decoder_forward.9} parent=11 // pred_check_branch
        %272 = sbr.rel (%p270) target = $region28
      $region27: #{decoder_forward.9} parent=11 // pred_region
        _
      $region28: #{decoder_forward.9} parent=11 // pred_fallthru
        _
      // Predicated region
      $region29: #{decoder_forward.9} parent=11 // pred_check
        %p273 = pneg %p147
      $region30: #{decoder_forward.9} parent=11 // pred_check_branch
        %275 = sbr.rel (%p273) target = $region32
      $region31: #{decoder_forward.9} parent=11 // pred_region
        _
      $region32: #{decoder_forward.9} parent=11 // pred_fallthru
        _
      // Predicated region
      $region33: #{decoder_forward.9} parent=11 // pred_check
        %p276 = pneg %p168
      $region34: #{decoder_forward.9} parent=11 // pred_check_branch
        %278 = sbr.rel (%p276) target = $region36
      $region35: #{decoder_forward.9} parent=11 // pred_region
        _
      $region36: #{decoder_forward.9} parent=11 // pred_fallthru
        _
    $region12: #{decoder_forward.9} parent=5 // pred_fallthru
      _
    %p279 = scmp.lt.s32.totalorder %s16, 2
    // Predicated region
    $region37: #{decoder_forward.9} parent=5 // pred_check
      %p280 = pneg %p279
    $region38: #{decoder_forward.9} parent=5 // pred_check_branch
      %282 = sbr.rel (%p280) target = $region40
    $region39: #{decoder_forward.9} parent=5 // pred_region
      // Predicated region
      $region41: #{decoder_forward.9} parent=39 // pred_check
        %p283 = pneg %p36
      $region42: #{decoder_forward.9} parent=39 // pred_check_branch
        %285 = sbr.rel (%p283) target = $region44
      $region43: #{decoder_forward.9} parent=39 // pred_region
        %p286 = scmp.lt.s32.totalorder %s16, 1
        %s287 = scalar_select %p286, %s16, 1
        %s288 = smul.addr %s287, 4
        %s289 = smul.addr %s288, 2
        %s290 = scalar_lea.vmem %s0, %s289
      $region44: #{decoder_forward.9} parent=39 // pred_fallthru
        _
    $region40: #{decoder_forward.9} parent=5 // pred_fallthru
      _
    %p291 = scmp.le.s32.totalorder 1, %s16
    %p292 = scmp.lt.s32.totalorder %s16, 3
    %p293 = pnand %p291, %p292
    %p294 = pneg %p293
    // Predicated region
    $region45: #{decoder_forward.9} parent=5 // pred_check
      _
    $region46: #{decoder_forward.9} parent=5 // pred_check_branch
      %296 = sbr.rel (%p293) target = $region48
    $region47: #{decoder_forward.9} parent=5 // pred_region
      %s297 = ssub.s32 %s16, 1
      %p298 = scmp.lt.s32.totalorder %s21, 1
      %s299 = scalar_select %p298, %s21, 1
      %s300 = smul.addr %s299, 4
      %s301 = smul.addr %s300, 2
      %s302 = scalar_lea.vmem %s0, %s301
      %p303 = pneg %p42
      %p304 = pneg %p39
      %p305 = pneg %p63
      %p306 = pneg %p60
      %p307 = pneg %p84
      %p308 = pneg %p81
      %p309 = pneg %p105
      %p310 = pneg %p102
      %p311 = pneg %p126
      %p312 = pneg %p123
      %p313 = pneg %p147
      %p314 = pneg %p144
      %p315 = pneg %p168
      %p316 = pneg %p165
      %p317 = pneg %p194
      %p318 = pneg %p191
      %p319 = scmp.lt.s32.totalorder %s21, 1
      %s320 = scalar_select %p319, %s21, 1
      %s321 = smul.addr %s320, 4
      %s322 = smul.addr %s321, 2
      %s323 = scalar_lea.vmem %s7, %s322
      %p324 = pneg %p220
      %p325 = pneg %p217
      %p326 = scmp.lt.s32.totalorder %s21, 1
      %s327 = scalar_select %p326, %s21, 1
      %s328 = scalar_lea.vmem %s8, %s327
      %p329 = pneg %p246
      %p330 = pneg %p243
      %p331 = scmp.lt.s32.totalorder %s21, 1
      %s332 = scalar_select %p331, %s21, 1
      %s333 = scalar_lea.vmem %s9, %s332
      %p334 = scmp.lt.s32.totalorder %s21, 1
      %s335 = scalar_select %p334, %s21, 1
      %s336 = smul.addr %s335, 4
      %s337 = smul.addr %s336, 2
      %s338 = scalar_lea.vmem %s0, %s337
      %p339 = scmp.lt.s32.totalorder %s21, 1
      %s340 = scalar_select %p339, %s21, 1
      %s341 = smul.addr %s340, 4
      %s342 = smul.addr %s341, 2
      %s343 = scalar_lea.vmem %s7, %s342
      %p344 = scmp.lt.s32.totalorder %s21, 1
      %s345 = scalar_select %p344, %s21, 1
      %s346 = scalar_lea.vmem %s8, %s345
      %p347 = scmp.lt.s32.totalorder %s21, 1
      %s348 = scalar_select %p347, %s21, 1
      %s349 = scalar_lea.vmem %s9, %s348
      %v351 = vld [vmem:[%s1] sm:$0x1]
      %v352 = vld [vmem:[%s1 + $0x1] sm:$0x1]
      %vm353 = vcmask 1040384
      %v354 = vsel %vm353, %v351, 0.0
      %v355 = vsel %vm353, %v352, 0.0
      %v356 = vadd.f32 %v354, %v355
      %v357 = vld [vmem:[%s2] sm:$0x1]
      %v358 = vld [vmem:[%s2 + $0x1] sm:$0x1]
      %v359 = vsel %vm353, %v357, 0.0
      %v360 = vsel %vm353, %v358, 0.0
      %v361 = vadd.f32 %v359, %v360
      %v362 = vmul.f32 %v356, 0.03125
      %v363 = vmul.f32 %v361, 0.03125
      %v364 = vmul.f32 %v362, %v362
      %v365 = vsub.f32 %v363, %v364
      %v366 = vmax.f32 %v365, 0.0
      %v367 = vld [vmem:[%s3] sm:$0x1]
      %v368 = vadd.f32 %v366, 1e-05
      %v369 = vrsqrt.pop %v368
      %v370 = vmul.f32 %v367, %v369
      %v371 = vld [vmem:[%s4] sm:$0x1]
      %v372 = vmul.f32 %v362, %v370
      %v373 = vsub.f32 %v371, %v372
      %v374 = vld [vmem:[%s338] sm:$0x3]
      %v375 = vld [vmem:[%s338 + $0x2] sm:$0x3]
      %v376 = vld [vmem:[%s338 + $0x4] sm:$0x3]
      %v377 = vld [vmem:[%s338 + $0x6] sm:$0x3]
      %v378 = vunpack.c.l.bf16 %v374
      %v379 = vunpack.c.l.bf16 %v375
      %v380 = vunpack.c.l.bf16 %v376
      %v381 = vunpack.c.l.bf16 %v377
      %v383 = vlaneseq
      %v384 = vshrl.u32 %v383, 7
      %v385 = vsub.s32 0, %v384
      %v386 = vrot.slane %v370, %v385
      %v388 = vmul.f32 %v378, %v386
      %v389 = vmul.f32 %v379, %v386
      %v390 = vmul.f32 %v380, %v386
      %v391 = vmul.f32 %v381, %v386
      %v393 = vlaneseq
      %v394 = vshrl.u32 %v393, 7
      %v395 = vsub.s32 0, %v394
      %v396 = vrot.slane %v373, %v395
      %v398 = vadd.f32 %v388, %v396
      %v399 = vadd.f32 %v389, %v396
      %v400 = vadd.f32 %v390, %v396
      %v401 = vadd.f32 %v391, %v396
      %v402 = vmax.f32 %v398, 0.0
      %v403 = vmax.f32 %v399, 0.0
      %v404 = vmax.f32 %v400, 0.0
      %v405 = vmax.f32 %v401, 0.0
      %v406 = vpack.c.bf16 %v402, %v402
      %v407 = vpack.c.bf16 %v403, %v403
      %v408 = vpack.c.bf16 %v404, %v404
      %v409 = vpack.c.bf16 %v405, %v405
      %410 = vst [vmem:[#allocation2] sm:$0x7] 0
      %411 = vst [vmem:[#allocation2 + $0x4] sm:$0x7] 0
      %412 = vst [vmem:[#allocation2 + $0x8] sm:$0x7] 0
      %413 = vst [vmem:[#allocation2 + $0xc] sm:$0x7] 0
      %414 = vst [vmem:[#allocation2 + $0x10] sm:$0x7] 0
      %415 = vst [vmem:[#allocation2 + $0x14] sm:$0x7] 0
      %v420 = vunpack.c.l.b16 %v406
      %v421 = vunpack.c.l.b16 %v407
      %v422 = vunpack.c.l.b16 %v408
      %v423 = vunpack.c.l.b16 %v409
      %v424 = vpack.c.b16 %v420, %v420
      %v425 = vpack.c.b16 %v421, %v421
      %v426 = vpack.c.b16 %v422, %v422
      %v427 = vpack.c.b16 %v423, %v423
      %v429 = vshrl.u32 %v424, 16
      %v431 = vrot.slane %v429, 7
      %v432 = vshll.u32 %v424, 16
      %v434 = vor.u32 %v431, %v432
      %v436 = vshrl.u32 %v425, 16
      %v438 = vrot.slane %v436, 7
      %v439 = vshll.u32 %v425, 16
      %v441 = vor.u32 %v438, %v439
      %v443 = vshrl.u32 %v426, 16
      %v445 = vrot.slane %v443, 7
      %v446 = vshll.u32 %v426, 16
      %v448 = vor.u32 %v445, %v446
      %v450 = vshrl.u32 %v427, 16
      %v452 = vrot.slane %v450, 7
      %v453 = vshll.u32 %v427, 16
      %v455 = vor.u32 %v452, %v453
      %s460 = scalar_lea.vmem [#allocation2], 4
      %vm461 = vcmask 1042432
      %vm462 = vsmask.f32 2306
      %vm463 = vmand %vm461, %vm462
      %v464 = vld [vmem:[%s460] sm:$0x7]
      %v465 = vsel %vm463, %v434, %v464
      %466 = vst [vmem:[%s460] sm:$0x7] %v465
      %v467 = vld [vmem:[%s460 + $0x4] sm:$0x7]
      %v468 = vsel %vm463, %v441, %v467
      %469 = vst [vmem:[%s460 + $0x4] sm:$0x7] %v468
      %v470 = vld [vmem:[%s460 + $0x8] sm:$0x7]
      %v471 = vsel %vm463, %v448, %v470
      %472 = vst [vmem:[%s460 + $0x8] sm:$0x7] %v471
      %v473 = vld [vmem:[%s460 + $0xc] sm:$0x7]
      %v474 = vsel %vm463, %v455, %v473
      %475 = vst [vmem:[%s460 + $0xc] sm:$0x7] %v474
      %v476 = vld [vmem:[#allocation2] sm:$0x3]
      %v477 = vld [vmem:[#allocation2 + $0x4] sm:$0x3]
      %v478 = vld [vmem:[#allocation2 + $0x8] sm:$0x3]
      %v479 = vld [vmem:[#allocation2 + $0xc] sm:$0x3]
      %v480 = vld [vmem:[#allocation2] sm:$0x7]
      %v481 = vld [vmem:[#allocation2 + $0x4] sm:$0x7]
      %v482 = vld [vmem:[#allocation2 + $0x8] sm:$0x7]
      %v483 = vld [vmem:[#allocation2 + $0xc] sm:$0x7]
      %v484 = vld [vmem:[#allocation2] sm:$0x6]
      %v485 = vld [vmem:[#allocation2 + $0x4] sm:$0x6]
      %v486 = vld [vmem:[#allocation2 + $0x8] sm:$0x6]
      %v487 = vld [vmem:[#allocation2 + $0xc] sm:$0x6]
      %v488 = vld [vmem:[%s460] sm:$0x3]
      %v489 = vld [vmem:[%s460 + $0x4] sm:$0x3]
      %v490 = vld [vmem:[%s460 + $0x8] sm:$0x3]
      %v491 = vld [vmem:[%s460 + $0xc] sm:$0x3]
      %v492 = vld [vmem:[%s460] sm:$0x7]
      %v493 = vld [vmem:[%s460 + $0x4] sm:$0x7]
      %v494 = vld [vmem:[%s460 + $0x8] sm:$0x7]
      %v495 = vld [vmem:[%s460 + $0xc] sm:$0x7]
      %v496 = vld [vmem:[%s460] sm:$0x6]
      %v497 = vld [vmem:[%s460 + $0x4] sm:$0x6]
      %v498 = vld [vmem:[%s460 + $0x8] sm:$0x6]
      %v499 = vld [vmem:[%s460 + $0xc] sm:$0x6]
      %s500 = scalar_lea.vmem [#allocation2], 8
      %v501 = vld [vmem:[%s500] sm:$0x3]
      %v502 = vld [vmem:[%s500 + $0x4] sm:$0x3]
      %v503 = vld [vmem:[%s500 + $0x8] sm:$0x3]
      %v504 = vld [vmem:[%s500 + $0xc] sm:$0x3]
      %v505 = vld [vmem:[%s500] sm:$0x7]
      %v506 = vld [vmem:[%s500 + $0x4] sm:$0x7]
      %v507 = vld [vmem:[%s500 + $0x8] sm:$0x7]
      %v508 = vld [vmem:[%s500 + $0xc] sm:$0x7]
      %v509 = vld [vmem:[%s500] sm:$0x6]
      %v510 = vld [vmem:[%s500 + $0x4] sm:$0x6]
      %v511 = vld [vmem:[%s500 + $0x8] sm:$0x6]
      %v512 = vld [vmem:[%s500 + $0xc] sm:$0x6]
      %v517 = vunpack.c.l.b16 %v480
      %v518 = vunpack.c.l.b16 %v481
      %v519 = vunpack.c.l.b16 %v482
      %v520 = vunpack.c.l.b16 %v483
      %v521 = vpack.c.b16 %v517, %v517
      %v522 = vpack.c.b16 %v518, %v518
      %v523 = vpack.c.b16 %v519, %v519
      %v524 = vpack.c.b16 %v520, %v520
      %v526 = vshrl.u32 %v521, 16
      %v528 = vshll.u32 %v521, 16
      %v530 = vrot.slane %v528, 1
      %v531 = vor.u32 %v526, %v530
      %v533 = vshrl.u32 %v522, 16
      %v535 = vshll.u32 %v522, 16
      %v537 = vrot.slane %v535, 1
      %v538 = vor.u32 %v533, %v537
      %v540 = vshrl.u32 %v523, 16
      %v542 = vshll.u32 %v523, 16
      %v544 = vrot.slane %v542, 1
      %v545 = vor.u32 %v540, %v544
      %v547 = vshrl.u32 %v524, 16
      %v549 = vshll.u32 %v524, 16
      %v551 = vrot.slane %v549, 1
      %v552 = vor.u32 %v547, %v551
      %v557 = vunpack.c.l.b16 %v484
      %v558 = vunpack.c.l.b16 %v485
      %v559 = vunpack.c.l.b16 %v486
      %v560 = vunpack.c.l.b16 %v487
      %v561 = vpack.c.b16 %v557, %v557
      %v562 = vpack.c.b16 %v558, %v558
      %v563 = vpack.c.b16 %v559, %v559
      %v564 = vpack.c.b16 %v560, %v560
      %v565 = vrot.slane %v561, 1
      %v566 = vrot.slane %v562, 1
      %v567 = vrot.slane %v563, 1
      %v568 = vrot.slane %v564, 1
      %v573 = vunpack.c.l.b16 %v492
      %v574 = vunpack.c.l.b16 %v493
      %v575 = vunpack.c.l.b16 %v494
      %v576 = vunpack.c.l.b16 %v495
      %v577 = vpack.c.b16 %v573, %v573
      %v578 = vpack.c.b16 %v574, %v574
      %v579 = vpack.c.b16 %v575, %v575
      %v580 = vpack.c.b16 %v576, %v576
      %v582 = vshrl.u32 %v577, 16
      %v584 = vshll.u32 %v577, 16
      %v586 = vrot.slane %v584, 1
      %v587 = vor.u32 %v582, %v586
      %v589 = vshrl.u32 %v578, 16
      %v591 = vshll.u32 %v578, 16
      %v593 = vrot.slane %v591, 1
      %v594 = vor.u32 %v589, %v593
      %v596 = vshrl.u32 %v579, 16
      %v598 = vshll.u32 %v579, 16
      %v600 = vrot.slane %v598, 1
      %v601 = vor.u32 %v596, %v600
      %v603 = vshrl.u32 %v580, 16
      %v605 = vshll.u32 %v580, 16
      %v607 = vrot.slane %v605, 1
      %v608 = vor.u32 %v603, %v607
      %v613 = vunpack.c.l.b16 %v496
      %v614 = vunpack.c.l.b16 %v497
      %v615 = vunpack.c.l.b16 %v498
      %v616 = vunpack.c.l.b16 %v499
      %v617 = vpack.c.b16 %v613, %v613
      %v618 = vpack.c.b16 %v614, %v614
      %v619 = vpack.c.b16 %v615, %v615
      %v620 = vpack.c.b16 %v616, %v616
      %v621 = vrot.slane %v617, 1
      %v622 = vrot.slane %v618, 1
      %v623 = vrot.slane %v619, 1
      %v624 = vrot.slane %v620, 1
      %v629 = vunpack.c.l.b16 %v505
      %v630 = vunpack.c.l.b16 %v506
      %v631 = vunpack.c.l.b16 %v507
      %v632 = vunpack.c.l.b16 %v508
      %v633 = vpack.c.b16 %v629, %v629
      %v634 = vpack.c.b16 %v630, %v630
      %v635 = vpack.c.b16 %v631, %v631
      %v636 = vpack.c.b16 %v632, %v632
      %v638 = vshrl.u32 %v633, 16
      %v640 = vshll.u32 %v633, 16
      %v642 = vrot.slane %v640, 1
      %v643 = vor.u32 %v638, %v642
      %v645 = vshrl.u32 %v634, 16
      %v647 = vshll.u32 %v634, 16
      %v649 = vrot.slane %v647, 1
      %v650 = vor.u32 %v645, %v649
      %v652 = vshrl.u32 %v635, 16
      %v654 = vshll.u32 %v635, 16
      %v656 = vrot.slane %v654, 1
      %v657 = vor.u32 %v652, %v656
      %v659 = vshrl.u32 %v636, 16
      %v661 = vshll.u32 %v636, 16
      %v663 = vrot.slane %v661, 1
      %v664 = vor.u32 %v659, %v663
      %v669 = vunpack.c.l.b16 %v509
      %v670 = vunpack.c.l.b16 %v510
      %v671 = vunpack.c.l.b16 %v511
      %v672 = vunpack.c.l.b16 %v512
      %v673 = vpack.c.b16 %v669, %v669
      %v674 = vpack.c.b16 %v670, %v670
      %v675 = vpack.c.b16 %v671, %v671
      %v676 = vpack.c.b16 %v672, %v672
      %v677 = vrot.slane %v673, 1
      %v678 = vrot.slane %v674, 1
      %v679 = vrot.slane %v675, 1
      %v680 = vrot.slane %v676, 1
      %v693 = vcombine.low %v476, %v531
      %v694 = vcombine.low %v565, %v488
      %v696 = vunpack.c.l.s4 1983009808
      %v697 = vunpack.c.0.s8 %v696
      %v698 = vlaneseq
      %v699 = vshrl.u32 %v698, 7
      %v700 = vsub.s32 %v697, %v699
      %v701 = vrot.slane %v693, %v700
      %v703 = vunpack.c.l.s4 1983009808
      %v704 = vunpack.c.0.s8 %v703
      %v705 = vlaneseq
      %v706 = vshrl.u32 %v705, 7
      %v707 = vsub.s32 %v704, %v706
      %v708 = vrot.slane %v694, %v707
      %v709 = vcombine.low %v701, %v708
      %v710 = vcombine.low %v587, %v621
      %v711 = vcombine.low %v501, %v643
      %v713 = vunpack.c.l.s4 1983009808
      %v714 = vunpack.c.0.s8 %v713
      %v715 = vlaneseq
      %v716 = vshrl.u32 %v715, 7
      %v717 = vsub.s32 %v714, %v716
      %v718 = vrot.slane %v710, %v717
      %v720 = vunpack.c.l.s4 1983009808
      %v721 = vunpack.c.0.s8 %v720
      %v722 = vlaneseq
      %v723 = vshrl.u32 %v722, 7
      %v724 = vsub.s32 %v721, %v723
      %v725 = vrot.slane %v711, %v724
      %v726 = vcombine.low %v718, %v725
      %v728 = vunpack.c.l.s4 1983009808
      %v729 = vunpack.c.0.s8 %v728
      %v730 = vlaneseq
      %v731 = vshrl.u32 %v730, 7
      %v732 = vsub.s32 %v729, %v731
      %v733 = vrot.slane %v677, %v732
      %v734 = vcombine.low %v477, %v538
      %v735 = vcombine.low %v566, %v489
      %v737 = vunpack.c.l.s4 1983009808
      %v738 = vunpack.c.0.s8 %v737
      %v739 = vlaneseq
      %v740 = vshrl.u32 %v739, 7
      %v741 = vsub.s32 %v738, %v740
      %v742 = vrot.slane %v734, %v741
      %v744 = vunpack.c.l.s4 1983009808
      %v745 = vunpack.c.0.s8 %v744
      %v746 = vlaneseq
      %v747 = vshrl.u32 %v746, 7
      %v748 = vsub.s32 %v745, %v747
      %v749 = vrot.slane %v735, %v748
      %v750 = vcombine.low %v742, %v749
      %v751 = vcombine.low %v594, %v622
      %v752 = vcombine.low %v502, %v650
      %v754 = vunpack.c.l.s4 1983009808
      %v755 = vunpack.c.0.s8 %v754
      %v756 = vlaneseq
      %v757 = vshrl.u32 %v756, 7
      %v758 = vsub.s32 %v755, %v757
      %v759 = vrot.slane %v751, %v758
      %v761 = vunpack.c.l.s4 1983009808
      %v762 = vunpack.c.0.s8 %v761
      %v763 = vlaneseq
      %v764 = vshrl.u32 %v763, 7
      %v765 = vsub.s32 %v762, %v764
      %v766 = vrot.slane %v752, %v765
      %v767 = vcombine.low %v759, %v766
      %v769 = vunpack.c.l.s4 1983009808
      %v770 = vunpack.c.0.s8 %v769
      %v771 = vlaneseq
      %v772 = vshrl.u32 %v771, 7
      %v773 = vsub.s32 %v770, %v772
      %v774 = vrot.slane %v678, %v773
      %v775 = vcombine.low %v478, %v545
      %v776 = vcombine.low %v567, %v490
      %v778 = vunpack.c.l.s4 1983009808
      %v779 = vunpack.c.0.s8 %v778
      %v780 = vlaneseq
      %v781 = vshrl.u32 %v780, 7
      %v782 = vsub.s32 %v779, %v781
      %v783 = vrot.slane %v775, %v782
      %v785 = vunpack.c.l.s4 1983009808
      %v786 = vunpack.c.0.s8 %v785
      %v787 = vlaneseq
      %v788 = vshrl.u32 %v787, 7
      %v789 = vsub.s32 %v786, %v788
      %v790 = vrot.slane %v776, %v789
      %v791 = vcombine.low %v783, %v790
      %v792 = vcombine.low %v601, %v623
      %v793 = vcombine.low %v503, %v657
      %v795 = vunpack.c.l.s4 1983009808
      %v796 = vunpack.c.0.s8 %v795
      %v797 = vlaneseq
      %v798 = vshrl.u32 %v797, 7
      %v799 = vsub.s32 %v796, %v798
      %v800 = vrot.slane %v792, %v799
      %v802 = vunpack.c.l.s4 1983009808
      %v803 = vunpack.c.0.s8 %v802
      %v804 = vlaneseq
      %v805 = vshrl.u32 %v804, 7
      %v806 = vsub.s32 %v803, %v805
      %v807 = vrot.slane %v793, %v806
      %v808 = vcombine.low %v800, %v807
      %v810 = vunpack.c.l.s4 1983009808
      %v811 = vunpack.c.0.s8 %v810
      %v812 = vlaneseq
      %v813 = vshrl.u32 %v812, 7
      %v814 = vsub.s32 %v811, %v813
      %v815 = vrot.slane %v679, %v814
      %v816 = vcombine.low %v479, %v552
      %v817 = vcombine.low %v568, %v491
      %v819 = vunpack.c.l.s4 1983009808
      %v820 = vunpack.c.0.s8 %v819
      %v821 = vlaneseq
      %v822 = vshrl.u32 %v821, 7
      %v823 = vsub.s32 %v820, %v822
      %v824 = vrot.slane %v816, %v823
      %v826 = vunpack.c.l.s4 1983009808
      %v827 = vunpack.c.0.s8 %v826
      %v828 = vlaneseq
      %v829 = vshrl.u32 %v828, 7
      %v830 = vsub.s32 %v827, %v829
      %v831 = vrot.slane %v817, %v830
      %v832 = vcombine.low %v824, %v831
      %v833 = vcombine.low %v608, %v624
      %v834 = vcombine.low %v504, %v664
      %v836 = vunpack.c.l.s4 1983009808
      %v837 = vunpack.c.0.s8 %v836
      %v838 = vlaneseq
      %v839 = vshrl.u32 %v838, 7
      %v840 = vsub.s32 %v837, %v839
      %v841 = vrot.slane %v833, %v840
      %v843 = vunpack.c.l.s4 1983009808
      %v844 = vunpack.c.0.s8 %v843
      %v845 = vlaneseq
      %v846 = vshrl.u32 %v845, 7
      %v847 = vsub.s32 %v844, %v846
      %v848 = vrot.slane %v834, %v847
      %v849 = vcombine.low %v841, %v848
      %v851 = vunpack.c.l.s4 1983009808
      %v852 = vunpack.c.0.s8 %v851
      %v853 = vlaneseq
      %v854 = vshrl.u32 %v853, 7
      %v855 = vsub.s32 %v852, %v854
      %v856 = vrot.slane %v680, %v855
      %v857 = vld [vmem:[%s5] sm:$0xf]
      %v858 = vld [vmem:[%s5 + $0x4] sm:$0xf]
      %v859 = vld [vmem:[%s5 + $0x8] sm:$0xf]
      %v860 = vld [vmem:[%s5 + $0xc] sm:$0xf]
      %v861 = vld [vmem:[%s5 + $0x10] sm:$0xf]
      %v862 = vld [vmem:[%s5 + $0x14] sm:$0xf]
      %v863 = vld [vmem:[%s5 + $0x18] sm:$0xf]
      %v864 = vld [vmem:[%s5 + $0x1c] sm:$0xf]
      %v865 = vld [vmem:[%s5 + $0x20] sm:$0xf]
      %v866 = vld [vmem:[%s5 + $0x24] sm:$0xf]
      %v867 = vld [vmem:[%s5 + $0x28] sm:$0xf]
      %v868 = vld [vmem:[%s5 + $0x2c] sm:$0xf]
      %v869 = vld [vmem:[%s5 + $0x30] sm:$0xf]
      %v870 = vld [vmem:[%s5 + $0x34] sm:$0xf]
      %v871 = vld [vmem:[%s5 + $0x38] sm:$0xf]
      %v872 = vld [vmem:[%s5 + $0x3c] sm:$0xf]
      %v873 = vld [vmem:[%s5 + $0x40] sm:$0xf]
      %v874 = vld [vmem:[%s5 + $0x44] sm:$0xf]
      %v875 = vld [vmem:[%s5 + $0x48] sm:$0xf]
      %v876 = vld [vmem:[%s5 + $0x4c] sm:$0xf]
      %v877 = vld [vmem:[%s5 + $0x50] sm:$0xf]
      %v878 = vld [vmem:[%s5 + $0x54] sm:$0xf]
      %v879 = vld [vmem:[%s5 + $0x58] sm:$0xf]
      %v880 = vld [vmem:[%s5 + $0x5c] sm:$0xf]
      %v881 = vld [vmem:[%s5 + $0x60] sm:$0xf]
      %v882 = vld [vmem:[%s5 + $0x64] sm:$0xf]
      %v883 = vld [vmem:[%s5 + $0x68] sm:$0xf]
      %v884 = vld [vmem:[%s5 + $0x6c] sm:$0xf]
      %v885 = vld [vmem:[%s5 + $0x70] sm:$0xf]
      %v886 = vld [vmem:[%s5 + $0x74] sm:$0xf]
      %v887 = vld [vmem:[%s5 + $0x78] sm:$0xf]
      %v888 = vld [vmem:[%s5 + $0x7c] sm:$0xf]
      %v889 = vld [vmem:[%s5 + $0x80] sm:$0xf]
      %v890 = vld [vmem:[%s5 + $0x84] sm:$0xf]
      %v891 = vld [vmem:[%s5 + $0x88] sm:$0xf]
      %v892 = vld [vmem:[%s5 + $0x8c] sm:$0xf]
      %v893 = vld [vmem:[%s5 + $0x90] sm:$0xf]
      %v894 = vld [vmem:[%s5 + $0x94] sm:$0xf]
      %v895 = vld [vmem:[%s5 + $0x98] sm:$0xf]
      %v896 = vld [vmem:[%s5 + $0x9c] sm:$0xf]
      %v897 = vld [vmem:[%s5 + $0xa0] sm:$0xf]
      %v898 = vld [vmem:[%s5 + $0xa4] sm:$0xf]
      %v899 = vld [vmem:[%s5 + $0xa8] sm:$0xf]
      %v900 = vld [vmem:[%s5 + $0xac] sm:$0xf]
      %v901 = vld [vmem:[%s5 + $0xb0] sm:$0xf]
      %v902 = vld [vmem:[%s5 + $0xb4] sm:$0xf]
      %v903 = vld [vmem:[%s5 + $0xb8] sm:$0xf]
      %v904 = vld [vmem:[%s5 + $0xbc] sm:$0xf]
      %v905 = vld [vmem:[%s5 + $0xc0] sm:$0xf]
      %v906 = vld [vmem:[%s5 + $0xc4] sm:$0xf]
      %v907 = vld [vmem:[%s5 + $0xc8] sm:$0xf]
      %v908 = vld [vmem:[%s5 + $0xcc] sm:$0xf]
      %v909 = vld [vmem:[%s5 + $0xd0] sm:$0xf]
      %v910 = vld [vmem:[%s5 + $0xd4] sm:$0xf]
      %v911 = vld [vmem:[%s5 + $0xd8] sm:$0xf]
      %v912 = vld [vmem:[%s5 + $0xdc] sm:$0xf]
      %v913 = vld [vmem:[%s5 + $0xe0] sm:$0xf]
      %v914 = vld [vmem:[%s5 + $0xe4] sm:$0xf]
      %v915 = vld [vmem:[%s5 + $0xe8] sm:$0xf]
      %v916 = vld [vmem:[%s5 + $0xec] sm:$0xf]
      %v917 = vld [vmem:[%s5 + $0xf0] sm:$0xf]
      %v918 = vld [vmem:[%s5 + $0xf4] sm:$0xf]
      %v919 = vld [vmem:[%s5 + $0xf8] sm:$0xf]
      %v920 = vld [vmem:[%s5 + $0xfc] sm:$0xf]
      %v921 = vld [vmem:[%s5 + $0x100] sm:$0xf]
      %v922 = vld [vmem:[%s5 + $0x104] sm:$0xf]
      %v923 = vld [vmem:[%s5 + $0x108] sm:$0xf]
      %v924 = vld [vmem:[%s5 + $0x10c] sm:$0xf]
      %v925 = vld [vmem:[%s5 + $0x110] sm:$0xf]
      %v926 = vld [vmem:[%s5 + $0x114] sm:$0xf]
      %v927 = vld [vmem:[%s5 + $0x118] sm:$0xf]
      %v928 = vld [vmem:[%s5 + $0x11c] sm:$0xf]
      %v929 = vld [vmem:[%s5 + $0x120] sm:$0xf]
      %v930 = vld [vmem:[%s5 + $0x124] sm:$0xf]
      %v931 = vld [vmem:[%s5 + $0x128] sm:$0xf]
      %v932 = vld [vmem:[%s5 + $0x12c] sm:$0xf]
      %v933 = vld [vmem:[%s5 + $0x130] sm:$0xf]
      %v934 = vld [vmem:[%s5 + $0x134] sm:$0xf]
      %v935 = vld [vmem:[%s5 + $0x138] sm:$0xf]
      %v936 = vld [vmem:[%s5 + $0x13c] sm:$0xf]
      %v937 = vld [vmem:[%s5 + $0x140] sm:$0xf]
      %v938 = vld [vmem:[%s5 + $0x144] sm:$0xf]
      %v939 = vld [vmem:[%s5 + $0x148] sm:$0xf]
      %v940 = vld [vmem:[%s5 + $0x14c] sm:$0xf]
      %v941 = vld [vmem:[%s5 + $0x150] sm:$0xf]
      %v942 = vld [vmem:[%s5 + $0x154] sm:$0xf]
      %v943 = vld [vmem:[%s5 + $0x158] sm:$0xf]
      %v944 = vld [vmem:[%s5 + $0x15c] sm:$0xf]
      %v945 = vld [vmem:[%s5 + $0x160] sm:$0xf]
      %v946 = vld [vmem:[%s5 + $0x164] sm:$0xf]
      %v947 = vld [vmem:[%s5 + $0x168] sm:$0xf]
      %v948 = vld [vmem:[%s5 + $0x16c] sm:$0xf]
      %v949 = vld [vmem:[%s5 + $0x170] sm:$0xf]
      %v950 = vld [vmem:[%s5 + $0x174] sm:$0xf]
      %v951 = vld [vmem:[%s5 + $0x178] sm:$0xf]
      %v952 = vld [vmem:[%s5 + $0x17c] sm:$0xf]
      %v953 = vld [vmem:[%s5 + $0x180] sm:$0xf]
      %v954 = vld [vmem:[%s5 + $0x184] sm:$0xf]
      %v955 = vld [vmem:[%s5 + $0x188] sm:$0xf]
      %v956 = vld [vmem:[%s5 + $0x18c] sm:$0xf]
      %v957 = vld [vmem:[%s5 + $0x190] sm:$0xf]
      %v958 = vld [vmem:[%s5 + $0x194] sm:$0xf]
      %v959 = vld [vmem:[%s5 + $0x198] sm:$0xf]
      %v960 = vld [vmem:[%s5 + $0x19c] sm:$0xf]
      %v961 = vld [vmem:[%s5 + $0x1a0] sm:$0xf]
      %v962 = vld [vmem:[%s5 + $0x1a4] sm:$0xf]
      %v963 = vld [vmem:[%s5 + $0x1a8] sm:$0xf]
      %v964 = vld [vmem:[%s5 + $0x1ac] sm:$0xf]
      %v965 = vld [vmem:[%s5 + $0x1b0] sm:$0xf]
      %v966 = vld [vmem:[%s5 + $0x1b4] sm:$0xf]
      %v967 = vld [vmem:[%s5 + $0x1b8] sm:$0xf]
      %v968 = vld [vmem:[%s5 + $0x1bc] sm:$0xf]
      %v969 = vld [vmem:[%s5 + $0x1c0] sm:$0xf]
      %v970 = vld [vmem:[%s5 + $0x1c4] sm:$0xf]
      %v971 = vld [vmem:[%s5 + $0x1c8] sm:$0xf]
      %v972 = vld [vmem:[%s5 + $0x1cc] sm:$0xf]
      %v973 = vld [vmem:[%s5 + $0x1d0] sm:$0xf]
      %v974 = vld [vmem:[%s5 + $0x1d4] sm:$0xf]
      %v975 = vld [vmem:[%s5 + $0x1d8] sm:$0xf]
      %v976 = vld [vmem:[%s5 + $0x1dc] sm:$0xf]
      %v977 = vld [vmem:[%s5 + $0x1e0] sm:$0xf]
      %v978 = vld [vmem:[%s5 + $0x1e4] sm:$0xf]
      %v979 = vld [vmem:[%s5 + $0x1e8] sm:$0xf]
      %v980 = vld [vmem:[%s5 + $0x1ec] sm:$0xf]
      %v981 = vld [vmem:[%s5 + $0x1f0] sm:$0xf]
      %v982 = vld [vmem:[%s5 + $0x1f4] sm:$0xf]
      %v983 = vld [vmem:[%s5 + $0x1f8] sm:$0xf]
      %v984 = vld [vmem:[%s5 + $0x1fc] sm:$0xf]
      %v985 = vld [vmem:[%s5 + $0x200] sm:$0xf]
      %v986 = vld [vmem:[%s5 + $0x204] sm:$0xf]
      %v987 = vld [vmem:[%s5 + $0x208] sm:$0xf]
      %v988 = vld [vmem:[%s5 + $0x20c] sm:$0xf]
      %v989 = vld [vmem:[%s5 + $0x210] sm:$0xf]
      %v990 = vld [vmem:[%s5 + $0x214] sm:$0xf]
      %v991 = vld [vmem:[%s5 + $0x218] sm:$0xf]
      %v992 = vld [vmem:[%s5 + $0x21c] sm:$0xf]
      %v993 = vld [vmem:[%s5 + $0x220] sm:$0xf]
      %v994 = vld [vmem:[%s5 + $0x224] sm:$0xf]
      %v995 = vld [vmem:[%s5 + $0x228] sm:$0xf]
      %v996 = vld [vmem:[%s5 + $0x22c] sm:$0xf]
      %v997 = vld [vmem:[%s5 + $0x230] sm:$0xf]
      %v998 = vld [vmem:[%s5 + $0x234] sm:$0xf]
      %v999 = vld [vmem:[%s5 + $0x238] sm:$0xf]
      %v1000 = vld [vmem:[%s5 + $0x23c] sm:$0xf]
      %v1001 = vld [vmem:[%s6] sm:$0x1]
      %v1003 = vlaneseq
      %v1004 = vshrl.u32 %v1003, 7
      %v1005 = vsub.s32 0, %v1004
      %v1006 = vrot.slane %v1001, %v1005
      %v1008 = vcombine.low %v709, %v750
      %v1009 = vcombine.high %v709, %v750
      %v1010 = vcombine.low %v791, %v832
      %v1011 = vcombine.high %v791, %v832
      %v1013 = vunpack.c.l.s4 1983009808
      %v1014 = vunpack.c.0.s8 %v1013
      %v1015 = vlaneseq
      %v1016 = vshrl.u32 %v1015, 7
      %v1017 = vsub.s32 %v1014, %v1016
      %v1018 = vrot.slane %v1008, %v1017
      %v1020 = vunpack.c.l.s4 1983009808
      %v1021 = vunpack.c.0.s8 %v1020
      %v1022 = vlaneseq
      %v1023 = vshrl.u32 %v1022, 7
      %v1024 = vsub.s32 %v1021, %v1023
      %v1025 = vrot.slane %v1009, %v1024
      %v1027 = vunpack.c.l.s4 1983009808
      %v1028 = vunpack.c.0.s8 %v1027
      %v1029 = vlaneseq
      %v1030 = vshrl.u32 %v1029, 7
      %v1031 = vsub.s32 %v1028, %v1030
      %v1032 = vrot.slane %v1010, %v1031
      %v1034 = vunpack.c.l.s4 1983009808
      %v1035 = vunpack.c.0.s8 %v1034
      %v1036 = vlaneseq
      %v1037 = vshrl.u32 %v1036, 7
      %v1038 = vsub.s32 %v1035, %v1037
      %v1039 = vrot.slane %v1011, %v1038
      %v1040 = vcombine.low %v1018, %v1032
      %v1041 = vcombine.high %v1018, %v1032
      %v1042 = vcombine.low %v1025, %v1039
      %v1043 = vcombine.high %v1025, %v1039
      %v1044 = vcombine.low %v726, %v767
      %v1045 = vcombine.high %v726, %v767
      %v1046 = vcombine.low %v808, %v849
      %v1047 = vcombine.high %v808, %v849
      %v1049 = vunpack.c.l.s4 1983009808
      %v1050 = vunpack.c.0.s8 %v1049
      %v1051 = vlaneseq
      %v1052 = vshrl.u32 %v1051, 7
      %v1053 = vsub.s32 %v1050, %v1052
      %v1054 = vrot.slane %v1044, %v1053
      %v1056 = vunpack.c.l.s4 1983009808
      %v1057 = vunpack.c.0.s8 %v1056
      %v1058 = vlaneseq
      %v1059 = vshrl.u32 %v1058, 7
      %v1060 = vsub.s32 %v1057, %v1059
      %v1061 = vrot.slane %v1045, %v1060
      %v1063 = vunpack.c.l.s4 1983009808
      %v1064 = vunpack.c.0.s8 %v1063
      %v1065 = vlaneseq
      %v1066 = vshrl.u32 %v1065, 7
      %v1067 = vsub.s32 %v1064, %v1066
      %v1068 = vrot.slane %v1046, %v1067
      %v1070 = vunpack.c.l.s4 1983009808
      %v1071 = vunpack.c.0.s8 %v1070
      %v1072 = vlaneseq
      %v1073 = vshrl.u32 %v1072, 7
      %v1074 = vsub.s32 %v1071, %v1073
      %v1075 = vrot.slane %v1047, %v1074
      %v1076 = vcombine.low %v1054, %v1068
      %v1077 = vcombine.high %v1054, %v1068
      %v1078 = vcombine.low %v1061, %v1075
      %v1079 = vcombine.high %v1061, %v1075
      %v1080 = vcombine.low %v733, %v774
      %v1081 = vcombine.low %v815, %v856
      %v1083 = vunpack.c.l.s4 1983009808
      %v1084 = vunpack.c.0.s8 %v1083
      %v1085 = vlaneseq
      %v1086 = vshrl.u32 %v1085, 7
      %v1087 = vsub.s32 %v1084, %v1086
      %v1088 = vrot.slane %v1080, %v1087
      %v1090 = vunpack.c.l.s4 1983009808
      %v1091 = vunpack.c.0.s8 %v1090
      %v1092 = vlaneseq
      %v1093 = vshrl.u32 %v1092, 7
      %v1094 = vsub.s32 %v1091, %v1093
      %v1095 = vrot.slane %v1081, %v1094
      %v1096 = vcombine.low %v1088, %v1095
      %v1250 = vunpack.c.l.b16 %v857
      %v1251 = vunpack.c.l.b16 %v858
      %v1252 = vunpack.c.l.b16 %v859
      %v1253 = vunpack.c.l.b16 %v860
      %v1254 = vunpack.c.l.b16 %v861
      %v1255 = vunpack.c.l.b16 %v862
      %v1256 = vunpack.c.l.b16 %v863
      %v1257 = vunpack.c.l.b16 %v864
      %v1258 = vunpack.c.l.b16 %v865
      %v1259 = vunpack.c.l.b16 %v866
      %v1260 = vunpack.c.l.b16 %v867
      %v1261 = vunpack.c.l.b16 %v868
      %v1262 = vunpack.c.l.b16 %v869
      %v1263 = vunpack.c.l.b16 %v870
      %v1264 = vunpack.c.l.b16 %v871
      %v1265 = vunpack.c.l.b16 %v872
      %v1266 = vunpack.c.l.b16 %v873
      %v1267 = vunpack.c.l.b16 %v874
      %v1268 = vunpack.c.l.b16 %v875
      %v1269 = vunpack.c.l.b16 %v876
      %v1270 = vunpack.c.l.b16 %v877
      %v1271 = vunpack.c.l.b16 %v878
      %v1272 = vunpack.c.l.b16 %v879
      %v1273 = vunpack.c.l.b16 %v880
      %v1274 = vunpack.c.l.b16 %v881
      %v1275 = vunpack.c.l.b16 %v882
      %v1276 = vunpack.c.l.b16 %v883
      %v1277 = vunpack.c.l.b16 %v884
      %v1278 = vunpack.c.l.b16 %v885
      %v1279 = vunpack.c.l.b16 %v886
      %v1280 = vunpack.c.l.b16 %v887
      %v1281 = vunpack.c.l.b16 %v888
      %v1282 = vunpack.c.l.b16 %v889
      %v1283 = vunpack.c.l.b16 %v890
      %v1284 = vunpack.c.l.b16 %v891
      %v1285 = vunpack.c.l.b16 %v892
      %v1286 = vunpack.c.l.b16 %v893
      %v1287 = vunpack.c.l.b16 %v894
      %v1288 = vunpack.c.l.b16 %v895
      %v1289 = vunpack.c.l.b16 %v896
      %v1290 = vunpack.c.l.b16 %v897
      %v1291 = vunpack.c.l.b16 %v898
      %v1292 = vunpack.c.l.b16 %v899
      %v1293 = vunpack.c.l.b16 %v900
      %v1294 = vunpack.c.l.b16 %v901
      %v1295 = vunpack.c.l.b16 %v902
      %v1296 = vunpack.c.l.b16 %v903
      %v1297 = vunpack.c.l.b16 %v904
      %v1298 = vunpack.c.l.b16 %v905
      %v1299 = vunpack.c.l.b16 %v906
      %v1300 = vunpack.c.l.b16 %v907
      %v1301 = vunpack.c.l.b16 %v908
      %v1302 = vunpack.c.l.b16 %v909
      %v1303 = vunpack.c.l.b16 %v910
      %v1304 = vunpack.c.l.b16 %v911
      %v1305 = vunpack.c.l.b16 %v912
      %v1306 = vunpack.c.l.b16 %v913
      %v1307 = vunpack.c.l.b16 %v914
      %v1308 = vunpack.c.l.b16 %v915
      %v1309 = vunpack.c.l.b16 %v916
      %v1310 = vunpack.c.l.b16 %v917
      %v1311 = vunpack.c.l.b16 %v918
      %v1312 = vunpack.c.l.b16 %v919
      %v1313 = vunpack.c.l.b16 %v920
      %v1314 = vunpack.c.l.b16 %v921
      %v1315 = vunpack.c.l.b16 %v922
      %v1316 = vunpack.c.l.b16 %v923
      %v1317 = vunpack.c.l.b16 %v924
      %v1318 = vunpack.c.l.b16 %v925
      %v1319 = vunpack.c.l.b16 %v926
      %v1320 = vunpack.c.l.b16 %v927
      %v1321 = vunpack.c.l.b16 %v928
      %v1322 = vunpack.c.l.b16 %v929
      %v1323 = vunpack.c.l.b16 %v930
      %v1324 = vunpack.c.l.b16 %v931
      %v1325 = vunpack.c.l.b16 %v932
      %v1326 = vunpack.c.l.b16 %v933
      %v1327 = vunpack.c.l.b16 %v934
      %v1328 = vunpack.c.l.b16 %v935
      %v1329 = vunpack.c.l.b16 %v936
      %v1330 = vunpack.c.l.b16 %v937
      %v1331 = vunpack.c.l.b16 %v938
      %v1332 = vunpack.c.l.b16 %v939
      %v1333 = vunpack.c.l.b16 %v940
      %v1334 = vunpack.c.l.b16 %v941
      %v1335 = vunpack.c.l.b16 %v942
      %v1336 = vunpack.c.l.b16 %v943
      %v1337 = vunpack.c.l.b16 %v944
      %v1338 = vunpack.c.l.b16 %v945
      %v1339 = vunpack.c.l.b16 %v946
      %v1340 = vunpack.c.l.b16 %v947
      %v1341 = vunpack.c.l.b16 %v948
      %v1342 = vunpack.c.l.b16 %v949
      %v1343 = vunpack.c.l.b16 %v950
      %v1344 = vunpack.c.l.b16 %v951
      %v1345 = vunpack.c.l.b16 %v952
      %v1346 = vunpack.c.l.b16 %v953
      %v1347 = vunpack.c.l.b16 %v954
      %v1348 = vunpack.c.l.b16 %v955
      %v1349 = vunpack.c.l.b16 %v956
      %v1350 = vunpack.c.l.b16 %v957
      %v1351 = vunpack.c.l.b16 %v958
      %v1352 = vunpack.c.l.b16 %v959
      %v1353 = vunpack.c.l.b16 %v960
      %v1354 = vunpack.c.l.b16 %v961
      %v1355 = vunpack.c.l.b16 %v962
      %v1356 = vunpack.c.l.b16 %v963
      %v1357 = vunpack.c.l.b16 %v964
      %v1358 = vunpack.c.l.b16 %v965
      %v1359 = vunpack.c.l.b16 %v966
      %v1360 = vunpack.c.l.b16 %v967
      %v1361 = vunpack.c.l.b16 %v968
      %v1362 = vunpack.c.l.b16 %v969
      %v1363 = vunpack.c.l.b16 %v970
      %v1364 = vunpack.c.l.b16 %v971
      %v1365 = vunpack.c.l.b16 %v972
      %v1366 = vunpack.c.l.b16 %v973
      %v1367 = vunpack.c.l.b16 %v974
      %v1368 = vunpack.c.l.b16 %v975
      %v1369 = vunpack.c.l.b16 %v976
      %v1370 = vunpack.c.l.b16 %v977
      %v1371 = vunpack.c.l.b16 %v978
      %v1372 = vunpack.c.l.b16 %v979
      %v1373 = vunpack.c.l.b16 %v980
      %v1374 = vunpack.c.l.b16 %v981
      %v1375 = vunpack.c.l.b16 %v982
      %v1376 = vunpack.c.l.b16 %v983
      %v1377 = vunpack.c.l.b16 %v984
      %v1378 = vunpack.c.l.b16 %v985
      %v1379 = vunpack.c.l.b16 %v986
      %v1380 = vunpack.c.l.b16 %v987
      %v1381 = vunpack.c.l.b16 %v988
      %v1382 = vunpack.c.l.b16 %v989
      %v1383 = vunpack.c.l.b16 %v990
      %v1384 = vunpack.c.l.b16 %v991
      %v1385 = vunpack.c.l.b16 %v992
      %v1386 = vunpack.c.l.b16 %v993
      %v1387 = vunpack.c.l.b16 %v994
      %v1388 = vunpack.c.l.b16 %v995
      %v1389 = vunpack.c.l.b16 %v996
      %v1390 = vunpack.c.l.b16 %v997
      %v1391 = vunpack.c.l.b16 %v998
      %v1392 = vunpack.c.l.b16 %v999
      %v1393 = vunpack.c.l.b16 %v1000
      %v1394 = vpack.c.b16 %v1251, %v1250
      %v1395 = vpack.c.b16 %v1253, %v1252
      %v1396 = vpack.c.b16 %v1255, %v1254
      %v1397 = vpack.c.b16 %v1257, %v1256
      %v1398 = vpack.c.b16 %v1259, %v1258
      %v1399 = vpack.c.b16 %v1261, %v1260
      %v1400 = vpack.c.b16 %v1263, %v1262
      %v1401 = vpack.c.b16 %v1265, %v1264
      %v1402 = vpack.c.b16 %v1267, %v1266
      %v1403 = vpack.c.b16 %v1269, %v1268
      %v1404 = vpack.c.b16 %v1271, %v1270
      %v1405 = vpack.c.b16 %v1273, %v1272
      %v1406 = vpack.c.b16 %v1275, %v1274
      %v1407 = vpack.c.b16 %v1277, %v1276
      %v1408 = vpack.c.b16 %v1279, %v1278
      %v1409 = vpack.c.b16 %v1281, %v1280
      %v1410 = vpack.c.b16 %v1283, %v1282
      %v1411 = vpack.c.b16 %v1285, %v1284
      %v1412 = vpack.c.b16 %v1287, %v1286
      %v1413 = vpack.c.b16 %v1289, %v1288
      %v1414 = vpack.c.b16 %v1291, %v1290
      %v1415 = vpack.c.b16 %v1293, %v1292
      %v1416 = vpack.c.b16 %v1295, %v1294
      %v1417 = vpack.c.b16 %v1297, %v1296
      %v1418 = vpack.c.b16 %v1299, %v1298
      %v1419 = vpack.c.b16 %v1301, %v1300
      %v1420 = vpack.c.b16 %v1303, %v1302
      %v1421 = vpack.c.b16 %v1305, %v1304
      %v1422 = vpack.c.b16 %v1307, %v1306
      %v1423 = vpack.c.b16 %v1309, %v1308
      %v1424 = vpack.c.b16 %v1311, %v1310
      %v1425 = vpack.c.b16 %v1313, %v1312
      %v1426 = vpack.c.b16 %v1315, %v1314
      %v1427 = vpack.c.b16 %v1317, %v1316
      %v1428 = vpack.c.b16 %v1319, %v1318
      %v1429 = vpack.c.b16 %v1321, %v1320
      %v1430 = vpack.c.b16 %v1323, %v1322
      %v1431 = vpack.c.b16 %v1325, %v1324
      %v1432 = vpack.c.b16 %v1327, %v1326
      %v1433 = vpack.c.b16 %v1329, %v1328
      %v1434 = vpack.c.b16 %v1331, %v1330
      %v1435 = vpack.c.b16 %v1333, %v1332
      %v1436 = vpack.c.b16 %v1335, %v1334
      %v1437 = vpack.c.b16 %v1337, %v1336
      %v1438 = vpack.c.b16 %v1339, %v1338
      %v1439 = vpack.c.b16 %v1341, %v1340
      %v1440 = vpack.c.b16 %v1343, %v1342
      %v1441 = vpack.c.b16 %v1345, %v1344
      %v1442 = vpack.c.b16 %v1347, %v1346
      %v1443 = vpack.c.b16 %v1349, %v1348
      %v1444 = vpack.c.b16 %v1351, %v1350
      %v1445 = vpack.c.b16 %v1353, %v1352
      %v1446 = vpack.c.b16 %v1355, %v1354
      %v1447 = vpack.c.b16 %v1357, %v1356
      %v1448 = vpack.c.b16 %v1359, %v1358
      %v1449 = vpack.c.b16 %v1361, %v1360
      %v1450 = vpack.c.b16 %v1363, %v1362
      %v1451 = vpack.c.b16 %v1365, %v1364
      %v1452 = vpack.c.b16 %v1367, %v1366
      %v1453 = vpack.c.b16 %v1369, %v1368
      %v1454 = vpack.c.b16 %v1371, %v1370
      %v1455 = vpack.c.b16 %v1373, %v1372
      %v1456 = vpack.c.b16 %v1375, %v1374
      %v1457 = vpack.c.b16 %v1377, %v1376
      %v1458 = vpack.c.b16 %v1379, %v1378
      %v1459 = vpack.c.b16 %v1381, %v1380
      %v1460 = vpack.c.b16 %v1383, %v1382
      %v1461 = vpack.c.b16 %v1385, %v1384
      %v1462 = vpack.c.b16 %v1387, %v1386
      %v1463 = vpack.c.b16 %v1389, %v1388
      %v1464 = vpack.c.b16 %v1391, %v1390
      %v1465 = vpack.c.b16 %v1393, %v1392
      %1538 = vmatprep.subr.bf16.mxu0 0
      %1539 = vmatpush1.bf16.msra.mxu0 %v1394
      %1540 = vmatprep.subr.bf16.mxu0 0
      %1541 = vmatpush1.bf16.msra.mxu0 %v1395
      %1542 = vmatprep.subr.bf16.mxu0 0
      %1543 = vmatpush1.bf16.msra.mxu0 %v1396
      %1544 = vmatprep.subr.bf16.mxu0 0
      %1545 = vmatpush1.bf16.msra.mxu0 %v1397
      %1546 = vmatprep.subr.bf16.mxu0 0
      %1547 = vmatpush1.bf16.msra.mxu0 %v1398
      %1548 = vmatprep.subr.bf16.mxu0 0
      %1549 = vmatpush1.bf16.msra.mxu0 %v1399
      %1550 = vmatprep.subr.bf16.mxu0 0
      %1551 = vmatpush1.bf16.msra.mxu0 %v1400
      %1552 = vmatprep.subr.bf16.mxu0 0
      %1553 = vmatpush1.bf16.msra.mxu0 %v1401
      %1554 = vmatprep.subr.bf16.mxu0 0
      %1555 = vmatpush1.bf16.msra.mxu0 %v1402
      %1556 = vmatprep.subr.bf16.mxu0 0
      %1557 = vmatpush1.bf16.msra.mxu0 %v1403
      %1558 = vmatprep.subr.bf16.mxu0 0
      %1559 = vmatpush1.bf16.msra.mxu0 %v1404
      %1560 = vmatprep.subr.bf16.mxu0 0
      %1561 = vmatpush1.bf16.msra.mxu0 %v1405
      %1562 = vmatprep.subr.bf16.mxu0 0
      %1563 = vmatpush1.bf16.msra.mxu0 %v1406
      %1564 = vmatprep.subr.bf16.mxu0 0
      %1565 = vmatpush1.bf16.msra.mxu0 %v1407
      %1566 = vmatprep.subr.bf16.mxu0 0
      %1567 = vmatpush1.bf16.msra.mxu0 %v1408
      %1568 = vmatprep.subr.bf16.mxu0 0
      %1569 = vmatpush1.bf16.msra.mxu0 %v1409
      %1570 = vmatprep.mubr.bf16.mxu0 %v1041
      %1571 = vmatmul.mubr.bf16.gmra.mrb[0].mxu0 %v1040
      %v1572 = vpop.f32.mrb[0].mxu0
      %v1573 = vadd.f32 %v1006, %v1572
      %v1574 = vpop.f32.mrb[0].mxu0
      %v1575 = vpop.f32.mrb[0].mxu0
      %v1576 = vadd.f32 %v1006, %v1575
      %v1577 = vpop.f32.mrb[0].mxu0
      %1578 = vdwg.mxu0
      %1579 = vmatprep.subr.bf16.mxu0 0
      %1580 = vmatpush1.bf16.msra.mxu0 %v1410
      %1581 = vmatprep.subr.bf16.mxu0 0
      %1582 = vmatpush1.bf16.msra.mxu0 %v1411
      %1583 = vmatprep.subr.bf16.mxu0 0
      %1584 = vmatpush1.bf16.msra.mxu0 %v1412
      %1585 = vmatprep.subr.bf16.mxu0 0
      %1586 = vmatpush1.bf16.msra.mxu0 %v1413
      %1587 = vmatprep.subr.bf16.mxu0 0
      %1588 = vmatpush1.bf16.msra.mxu0 %v1414
      %1589 = vmatprep.subr.bf16.mxu0 0
      %1590 = vmatpush1.bf16.msra.mxu0 %v1415
      %1591 = vmatprep.subr.bf16.mxu0 0
      %1592 = vmatpush1.bf16.msra.mxu0 %v1416
      %1593 = vmatprep.subr.bf16.mxu0 0
      %1594 = vmatpush1.bf16.msra.mxu0 %v1417
      %1595 = vmatprep.subr.bf16.mxu0 0
      %1596 = vmatpush1.bf16.msra.mxu0 %v1418
      %1597 = vmatprep.subr.bf16.mxu0 0
      %1598 = vmatpush1.bf16.msra.mxu0 %v1419
      %1599 = vmatprep.subr.bf16.mxu0 0
      %1600 = vmatpush1.bf16.msra.mxu0 %v1420
      %1601 = vmatprep.subr.bf16.mxu0 0
      %1602 = vmatpush1.bf16.msra.mxu0 %v1421
      %1603 = vmatprep.subr.bf16.mxu0 0
      %1604 = vmatpush1.bf16.msra.mxu0 %v1422
      %1605 = vmatprep.subr.bf16.mxu0 0
      %1606 = vmatpush1.bf16.msra.mxu0 %v1423
      %1607 = vmatprep.subr.bf16.mxu0 0
      %1608 = vmatpush1.bf16.msra.mxu0 %v1424
      %1609 = vmatprep.subr.bf16.mxu0 0
      %1610 = vmatpush1.bf16.msra.mxu0 %v1425
      %1611 = vmatprep.mubr.bf16.mxu0 %v1043
      %1612 = vmatmul.mubr.bf16.gmra.mrb[0].mxu0 %v1042
      %v1613 = vpop.f32.mrb[0].mxu0
      %v1614 = vadd.f32 %v1573, %v1613
      %v1615 = vpop.f32.mrb[0].mxu0
      %v1616 = vpop.f32.mrb[0].mxu0
      %v1617 = vadd.f32 %v1576, %v1616
      %v1618 = vpop.f32.mrb[0].mxu0
      %1619 = vdwg.mxu0
      %1620 = vmatprep.subr.bf16.mxu0 0
      %1621 = vmatpush1.bf16.msra.mxu0 %v1426
      %1622 = vmatprep.subr.bf16.mxu0 0
      %1623 = vmatpush1.bf16.msra.mxu0 %v1427
      %1624 = vmatprep.subr.bf16.mxu0 0
      %1625 = vmatpush1.bf16.msra.mxu0 %v1428
      %1626 = vmatprep.subr.bf16.mxu0 0
      %1627 = vmatpush1.bf16.msra.mxu0 %v1429
      %1628 = vmatprep.subr.bf16.mxu0 0
      %1629 = vmatpush1.bf16.msra.mxu0 %v1430
      %1630 = vmatprep.subr.bf16.mxu0 0
      %1631 = vmatpush1.bf16.msra.mxu0 %v1431
      %1632 = vmatprep.subr.bf16.mxu0 0
      %1633 = vmatpush1.bf16.msra.mxu0 %v1432
      %1634 = vmatprep.subr.bf16.mxu0 0
      %1635 = vmatpush1.bf16.msra.mxu0 %v1433
      %1636 = vmatprep.subr.bf16.mxu0 0
      %1637 = vmatpush1.bf16.msra.mxu0 %v1434
      %1638 = vmatprep.subr.bf16.mxu0 0
      %1639 = vmatpush1.bf16.msra.mxu0 %v1435
      %1640 = vmatprep.subr.bf16.mxu0 0
      %1641 = vmatpush1.bf16.msra.mxu0 %v1436
      %1642 = vmatprep.subr.bf16.mxu0 0
      %1643 = vmatpush1.bf16.msra.mxu0 %v1437
      %1644 = vmatprep.subr.bf16.mxu0 0
      %1645 = vmatpush1.bf16.msra.mxu0 %v1438
      %1646 = vmatprep.subr.bf16.mxu0 0
      %1647 = vmatpush1.bf16.msra.mxu0 %v1439
      %1648 = vmatprep.subr.bf16.mxu0 0
      %1649 = vmatpush1.bf16.msra.mxu0 %v1440
      %1650 = vmatprep.subr.bf16.mxu0 0
      %1651 = vmatpush1.bf16.msra.mxu0 %v1441
      %1652 = vmatprep.mubr.bf16.mxu0 %v1077
      %1653 = vmatmul.mubr.bf16.gmra.mrb[0].mxu0 %v1076
      %v1654 = vpop.f32.mrb[0].mxu0
      %v1655 = vadd.f32 %v1614, %v1654
      %v1656 = vpop.f32.mrb[0].mxu0
      %v1657 = vpop.f32.mrb[0].mxu0
      %v1658 = vadd.f32 %v1617, %v1657
      %v1659 = vpop.f32.mrb[0].mxu0
      %1660 = vdwg.mxu0
      %1661 = vmatprep.subr.bf16.mxu0 0
      %1662 = vmatpush1.bf16.msra.mxu0 %v1442
      %1663 = vmatprep.subr.bf16.mxu0 0
      %1664 = vmatpush1.bf16.msra.mxu0 %v1443
      %1665 = vmatprep.subr.bf16.mxu0 0
      %1666 = vmatpush1.bf16.msra.mxu0 %v1444
      %1667 = vmatprep.subr.bf16.mxu0 0
      %1668 = vmatpush1.bf16.msra.mxu0 %v1445
      %1669 = vmatprep.subr.bf16.mxu0 0
      %1670 = vmatpush1.bf16.msra.mxu0 %v1446
      %1671 = vmatprep.subr.bf16.mxu0 0
      %1672 = vmatpush1.bf16.msra.mxu0 %v1447
      %1673 = vmatprep.subr.bf16.mxu0 0
      %1674 = vmatpush1.bf16.msra.mxu0 %v1448
      %1675 = vmatprep.subr.bf16.mxu0 0
      %1676 = vmatpush1.bf16.msra.mxu0 %v1449
      %1677 = vmatprep.subr.bf16.mxu0 0
      %1678 = vmatpush1.bf16.msra.mxu0 %v1450
      %1679 = vmatprep.subr.bf16.mxu0 0
      %1680 = vmatpush1.bf16.msra.mxu0 %v1451
      %1681 = vmatprep.subr.bf16.mxu0 0
      %1682 = vmatpush1.bf16.msra.mxu0 %v1452
      %1683 = vmatprep.subr.bf16.mxu0 0
      %1684 = vmatpush1.bf16.msra.mxu0 %v1453
      %1685 = vmatprep.subr.bf16.mxu0 0
      %1686 = vmatpush1.bf16.msra.mxu0 %v1454
      %1687 = vmatprep.subr.bf16.mxu0 0
      %1688 = vmatpush1.bf16.msra.mxu0 %v1455
      %1689 = vmatprep.subr.bf16.mxu0 0
      %1690 = vmatpush1.bf16.msra.mxu0 %v1456
      %1691 = vmatprep.subr.bf16.mxu0 0
      %1692 = vmatpush1.bf16.msra.mxu0 %v1457
      %1693 = vmatprep.mubr.bf16.mxu0 %v1079
      %1694 = vmatmul.mubr.bf16.gmra.mrb[0].mxu0 %v1078
      %v1695 = vpop.f32.mrb[0].mxu0
      %v1696 = vadd.f32 %v1655, %v1695
      %v1697 = vpop.f32.mrb[0].mxu0
      %v1698 = vpop.f32.mrb[0].mxu0
      %v1699 = vadd.f32 %v1658, %v1698
      %v1700 = vpop.f32.mrb[0].mxu0
      %1701 = vdwg.mxu0
      %1702 = vmatprep.subr.bf16.mxu0 0
      %1703 = vmatpush1.bf16.msra.mxu0 %v1458
      %1704 = vmatprep.subr.bf16.mxu0 0
      %1705 = vmatpush1.bf16.msra.mxu0 %v1459
      %1706 = vmatprep.subr.bf16.mxu0 0
      %1707 = vmatpush1.bf16.msra.mxu0 %v1460
      %1708 = vmatprep.subr.bf16.mxu0 0
      %1709 = vmatpush1.bf16.msra.mxu0 %v1461
      %1710 = vmatprep.subr.bf16.mxu0 0
      %1711 = vmatpush1.bf16.msra.mxu0 %v1462
      %1712 = vmatprep.subr.bf16.mxu0 0
      %1713 = vmatpush1.bf16.msra.mxu0 %v1463
      %1714 = vmatprep.subr.bf16.mxu0 0
      %1715 = vmatpush1.bf16.msra.mxu0 %v1464
      %1716 = vmatprep.subr.bf16.mxu0 0
      %1717 = vmatpush1.bf16.msra.mxu0 %v1465
      %1718 = vmatprep.subr.bf16.mxu0 0
      %1719 = vmatpush1.bf16.msra.mxu0 0
      %1720 = vmatprep.subr.bf16.mxu0 0
      %1721 = vmatpush1.bf16.msra.mxu0 0
      %1722 = vmatprep.subr.bf16.mxu0 0
      %1723 = vmatpush1.bf16.msra.mxu0 0
      %1724 = vmatprep.subr.bf16.mxu0 0
      %1725 = vmatpush1.bf16.msra.mxu0 0
      %1726 = vmatprep.subr.bf16.mxu0 0
      %1727 = vmatpush1.bf16.msra.mxu0 0
      %1728 = vmatprep.subr.bf16.mxu0 0
      %1729 = vmatpush1.bf16.msra.mxu0 0
      %1730 = vmatprep.subr.bf16.mxu0 0
      %1731 = vmatpush1.bf16.msra.mxu0 0
      %1732 = vmatprep.subr.bf16.mxu0 0
      %1733 = vmatpush1.bf16.msra.mxu0 0
      %1734 = vmatprep.mubr.bf16.mxu0 0
      %1735 = vmatmul.mubr.bf16.gmra.mrb[0].mxu0 %v1096
      %v1736 = vpop.f32.mrb[0].mxu0
      %v1737 = vadd.f32 %v1696, %v1736
      %v1738 = vpop.f32.mrb[0].mxu0
      %v1739 = vpop.f32.mrb[0].mxu0
      %v1740 = vadd.f32 %v1699, %v1739
      %v1741 = vpop.f32.mrb[0].mxu0
      %1742 = vdwg.mxu0
      %v1745 = vcombine.high %v1737, %v1737
      %v1746 = vcombine.high %v1740, %v1740
      %v1749 = vpack.c.bf16 %v1737, %v1737
      %v1750 = vpack.c.bf16 %v1745, %v1745
      %v1751 = vpack.c.bf16 %v1740, %v1740
      %v1752 = vpack.c.bf16 %v1746, %v1746
      %1753 = vst [vmem:[%s343] sm:$0x3] %v1749
      %1754 = vst [vmem:[%s343 + $0x2] sm:$0x3] %v1750
      %1755 = vst [vmem:[%s343 + $0x4] sm:$0x3] %v1751
      %1756 = vst [vmem:[%s343 + $0x6] sm:$0x3] %v1752
      %v1757 = vadd.f32 %v1737, %v1740
      %v1758 = vrot.slane %v1757, 4
      %v1759 = vadd.f32 %v1757, %v1758
      %v1760 = vrot.slane %v1759, 2
      %v1761 = vadd.f32 %v1759, %v1760
      %v1762 = vrot.slane %v1761, 1
      %v1763 = vadd.f32 %v1761, %v1762
      %1764 = vst [vmem:[%s346] sm:$0x1] %v1763
      %v1765 = vmul.f32 %v1737, %v1737
      %v1766 = vmul.f32 %v1740, %v1740
      %v1767 = vadd.f32 %v1765, %v1766
      %v1768 = vrot.slane %v1767, 4
      %v1769 = vadd.f32 %v1767, %v1768
      %v1770 = vrot.slane %v1769, 2
      %v1771 = vadd.f32 %v1769, %v1770
      %v1772 = vrot.slane %v1771, 1
      %v1773 = vadd.f32 %v1771, %v1772
      %1774 = vst [vmem:[%s349] sm:$0x1] %v1773
      %p1775 = scmp.lt.s32.totalorder %s21, 1
      %s1776 = scalar_select %p1775, %s21, 1
      %s1777 = smul.addr %s1776, 4
      %s1778 = smul.addr %s1777, 2
      %s1779 = scalar_lea.vmem %s7, %s1778
      %p1780 = scmp.lt.s32.totalorder %s21, 1
      %s1781 = scalar_select %p1780, %s21, 1
      %s1782 = scalar_lea.vmem %s8, %s1781
      %p1783 = scmp.lt.s32.totalorder %s21, 1
      %s1784 = scalar_select %p1783, %s21, 1
      %s1785 = scalar_lea.vmem %s9, %s1784
      // Predicated region
      $region49: #{decoder_forward.9} parent=47 // pred_check
        %p1786 = pneg %p191
      $region50: #{decoder_forward.9} parent=47 // pred_check_branch
        %1788 = sbr.rel (%p1786) target = $region52
      $region51: #{decoder_forward.9} parent=47 // pred_region
        _
      $region52: #{decoder_forward.9} parent=47 // pred_fallthru
        _
      // Predicated region
      $region53: #{decoder_forward.9} parent=47 // pred_check
        %p1789 = pneg %p217
      $region54: #{decoder_forward.9} parent=47 // pred_check_branch
        %1791 = sbr.rel (%p1789) target = $region56
      $region55: #{decoder_forward.9} parent=47 // pred_region
        _
      $region56: #{decoder_forward.9} parent=47 // pred_fallthru
        _
      // Predicated region
      $region57: #{decoder_forward.9} parent=47 // pred_check
        %p1792 = pneg %p243
      $region58: #{decoder_forward.9} parent=47 // pred_check_branch
        %1794 = sbr.rel (%p1792) target = $region60
      $region59: #{decoder_forward.9} parent=47 // pred_region
        _
      $region60: #{decoder_forward.9} parent=47 // pred_fallthru
        _
    $region48: #{decoder_forward.9} parent=5 // pred_fallthru
      _
    %p1795 = scmp.le.s32.totalorder 2, %s16
    // Predicated region
    $region61: #{decoder_forward.9} parent=5 // pred_check
      %p1796 = pneg %p1795
    $region62: #{decoder_forward.9} parent=5 // pred_check_branch
      %1798 = sbr.rel (%p1796) target = $region64
    $region63: #{decoder_forward.9} parent=5 // pred_region
      %s1799 = ssub.s32 %s16, 2
      // Predicated region
      $region65: #{decoder_forward.9} parent=63 // pred_check
        %p1800 = pneg %p197
      $region66: #{decoder_forward.9} parent=63 // pred_check_branch
        %1802 = sbr.rel (%p1800) target = $region68
      $region67: #{decoder_forward.9} parent=63 // pred_region
        %p1803 = scmp.lt.s32.totalorder %s22, 1
        %s1804 = scalar_select %p1803, %s22, 1
        %s1805 = smul.addr %s1804, 4
        %s1806 = smul.addr %s1805, 2
        %s1807 = scalar_lea.vmem %s7, %s1806
      $region68: #{decoder_forward.9} parent=63 // pred_fallthru
        _
      // Predicated region
      $region69: #{decoder_forward.9} parent=63 // pred_check
        %p1808 = pneg %p223
      $region70: #{decoder_forward.9} parent=63 // pred_check_branch
        %1810 = sbr.rel (%p1808) target = $region72
      $region71: #{decoder_forward.9} parent=63 // pred_region
        %p1811 = scmp.lt.s32.totalorder %s22, 1
        %s1812 = scalar_select %p1811, %s22, 1
        %s1813 = scalar_lea.vmem %s8, %s1812
      $region72: #{decoder_forward.9} parent=63 // pred_fallthru
        _
      // Predicated region
      $region73: #{decoder_forward.9} parent=63 // pred_check
        %p1814 = pneg %p249
      $region74: #{decoder_forward.9} parent=63 // pred_check_branch
        %1816 = sbr.rel (%p1814) target = $region76
      $region75: #{decoder_forward.9} parent=63 // pred_region
        %p1817 = scmp.lt.s32.totalorder %s22, 1
        %s1818 = scalar_select %p1817, %s22, 1
        %s1819 = scalar_lea.vmem %s9, %s1818
      $region76: #{decoder_forward.9} parent=63 // pred_fallthru
        _
    $region64: #{decoder_forward.9} parent=5 // pred_fallthru
      _
  $region6: #{decoder_forward.9} parent=0 // loop_footer
    %s20 = sadd.s32 1, %s16
  $region7: #{decoder_forward.9} parent=0 // loop_footer_branch
    %15 = sbr.rel target = $region3
  $region8: #{decoder_forward.9} parent=0 // loop_exit
    _

// kernel: decoder_forward.8
$region0: #{decoder_forward.8}
  #allocation0 [shape = 'u32[]', space=smem, size = 0x4, offset = 0x4, fixed_abs, tag = 'smem constant byte address 0x4 - core index']
  #allocation1 [shape = 'u32[144,128]{1,0:T(1,128)}', space=vmem, size = 0x12000, scoped, tag = 'internal scratch']
  #allocation2 [shape = 'bf16[6,6,128]{2,1,0:T(8,128)(2,1)}', space=vmem, size = 0x3000, scoped, tag = 'scratch operand']
  %s0 = inlined_call_operand.vmem [shape: bf16[2,2,2,128], index: 0, kind: input, shape index: {}]
  %s1 = inlined_call_operand.hbm [shape: bf16[1152,128], index: 1, kind: input, shape index: {}]
  %s2 = inlined_call_operand.hbm [shape: f32[1,128], index: 2, kind: input, shape index: {}]
  %s3 = inlined_call_operand.vmem [shape: bf16[128,128], index: 3, kind: input, shape index: {}]
  %s4 = inlined_call_operand.hbm [shape: f32[1,128], index: 4, kind: input, shape index: {}]
  %s5 = inlined_call_operand.vmem [shape: bf16[2,4,4,128], index: 5, kind: output, shape index: {0}]
  %s6 = inlined_call_operand.vmem [shape: f32[2,2,2,128], index: 6, kind: output, shape index: {1}]
  %s7 = inlined_call_operand.vmem [shape: f32[2,1,128], index: 7, kind: output, shape index: {2}]
  %s8 = inlined_call_operand.vmem [shape: f32[2,1,128], index: 8, kind: output, shape index: {3}]
  %9 = xla_tuple %s5, %s6, %s7, %s8
  %s10 = sld [smem:[#allocation0]]
  $region89: #{decoder_forward.8} parent=0
    _
  %s12 = ssub.s32 1, %s10
  %s13 = scalar_select 0, %s12, %s10
  $region1: #{decoder_forward.8} parent=0
    #allocation3 [shape = 'u8[294912]{0}', space=vmem, size = 0x48000, scoped, tag = 'input window, operand 1, single buffered']
    #allocation4 [shape = 's32[2]{0}', space=sflag, size = 0x8, scoped, tag = 'scoped memory for decoder_forward.8']
    #allocation5 [shape = 'u8[512]{0}', space=vmem, size = 0x400, scoped, tag = 'input window, operand 2, single buffered']
    #allocation6 [shape = 's32[1]{0}', space=sflag, size = 0x4, scoped, tag = 'scoped memory for decoder_forward.8']
    #allocation7 [shape = 'u8[512]{0}', space=vmem, size = 0x400, scoped, tag = 'input window, operand 4, single buffered']
    %14 = vsyncpa [#allocation4], 0
    %15 = vsyncpa [#allocation6], 0
    loop: start=0, step=1, limit=4
    $region2: #{decoder_forward.8} parent=1 // loop_pre_header
      _
    $region3: #{decoder_forward.8} parent=1 // loop_header
      %s17 = sphi 0, %s21
      %p18 = scmp.ge.s32.totalorder %s17, 4
      %s27 = sphi 0, %s29
      %s30 = sphi 0, %s27
      %s31 = sphi 0, %s30
      %s47 = sphi 0, %s31
      %s51 = sphi 0, %s51
      %s53 = sphi 0, %s51
      %s54 = sphi 0, %s53
      %s68 = sphi 0, %s54
      %s72 = sphi 0, %s72
      %s74 = sphi 0, %s72
      %s75 = sphi 0, %s74
      %s89 = sphi 0, %s75
      %s93 = sphi 0, %s93
      %s95 = sphi 0, %s93
      %s96 = sphi 0, %s95
      %s110 = sphi 0, %s96
      %s114 = sphi 0, %s114
      %s116 = sphi 0, %s114
      %s117 = sphi 0, %s116
      %s131 = sphi 0, %s117
      %s137 = sphi 0, %s139
      %s140 = sphi 0, %s137
      %s141 = sphi 0, %s140
      %s157 = sphi 0, %s141
      %s163 = sphi 0, %s165
      %s166 = sphi 0, %s163
      %s167 = sphi 0, %s166
      %s183 = sphi 0, %s167
      %s189 = sphi 0, %s191
      %s192 = sphi 0, %s189
      %s193 = sphi 0, %s192
      %s209 = sphi 0, %s193
      %s215 = sphi 0, %s217
      %s218 = sphi 0, %s215
      %s219 = sphi 0, %s218
      %s235 = sphi 0, %s219
    $region4: #{decoder_forward.8} parent=1 // loop_header_branch
      %20 = sbr.rel (%p18) target = $region8
    $region5: #{decoder_forward.8} parent=1 // loop_body
      %s22 = ssub.s32 %s17, 1
      %s23 = ssub.s32 %s17, 2
      %s24 = sadd.s32 %s17, 1
      %s25 = ssub.s32 %s17, %s24
      %p26 = scmp.eq.s32.totalorder %s25, 0
      %s28 = sadd.s32 %s27, 1
      %s29 = scalar_select %p26, %s27, %s28
      %p32 = pneg %p26
      %p33 = scmp.eq.s32.totalorder %s17, 1
      %p34 = por %p32, %p33
      %p35 = scmp.ne.s32.totalorder %s27, %s30
      %p36 = scmp.eq.s32.totalorder %s17, 0
      %p37 = por %p35, %p36
      %p38 = scmp.ne.s32.totalorder %s27, %s30
      %p39 = scmp.eq.s32.totalorder %s22, 1
      %p40 = por %p38, %p39
      %p41 = scmp.ne.s32.totalorder %s30, %s31
      %p42 = scmp.eq.s32.totalorder %s22, 0
      %p43 = por %p41, %p42
      %p44 = scmp.ne.s32.totalorder %s30, %s31
      %p45 = scmp.eq.s32.totalorder %s23, 1
      %p46 = por %p44, %p45
      %p48 = scmp.ne.s32.totalorder %s31, %s47
      %p49 = scmp.eq.s32.totalorder %s23, 0
      %p50 = por %p48, %p49
      %s52 = sadd.s32 %s51, 1
      %p55 = scmp.eq.s32.totalorder %s17, 1
      %p56 = scmp.ne.s32.totalorder %s51, %s53
      %p57 = scmp.eq.s32.totalorder %s17, 0
      %p58 = por %p56, %p57
      %p59 = scmp.ne.s32.totalorder %s51, %s53
      %p60 = scmp.eq.s32.totalorder %s22, 1
      %p61 = por %p59, %p60
      %p62 = scmp.ne.s32.totalorder %s53, %s54
      %p63 = scmp.eq.s32.totalorder %s22, 0
      %p64 = por %p62, %p63
      %p65 = scmp.ne.s32.totalorder %s53, %s54
      %p66 = scmp.eq.s32.totalorder %s23, 1
      %p67 = por %p65, %p66
      %p69 = scmp.ne.s32.totalorder %s54, %s68
      %p70 = scmp.eq.s32.totalorder %s23, 0
      %p71 = por %p69, %p70
      %s73 = sadd.s32 %s72, 1
      %p76 = scmp.eq.s32.totalorder %s17, 1
      %p77 = scmp.ne.s32.totalorder %s72, %s74
      %p78 = scmp.eq.s32.totalorder %s17, 0
      %p79 = por %p77, %p78
      %p80 = scmp.ne.s32.totalorder %s72, %s74
      %p81 = scmp.eq.s32.totalorder %s22, 1
      %p82 = por %p80, %p81
      %p83 = scmp.ne.s32.totalorder %s74, %s75
      %p84 = scmp.eq.s32.totalorder %s22, 0
      %p85 = por %p83, %p84
      %p86 = scmp.ne.s32.totalorder %s74, %s75
      %p87 = scmp.eq.s32.totalorder %s23, 1
      %p88 = por %p86, %p87
      %p90 = scmp.ne.s32.totalorder %s75, %s89
      %p91 = scmp.eq.s32.totalorder %s23, 0
      %p92 = por %p90, %p91
      %s94 = sadd.s32 %s93, 1
      %p97 = scmp.eq.s32.totalorder %s17, 1
      %p98 = scmp.ne.s32.totalorder %s93, %s95
      %p99 = scmp.eq.s32.totalorder %s17, 0
      %p100 = por %p98, %p99
      %p101 = scmp.ne.s32.totalorder %s93, %s95
      %p102 = scmp.eq.s32.totalorder %s22, 1
      %p103 = por %p101, %p102
      %p104 = scmp.ne.s32.totalorder %s95, %s96
      %p105 = scmp.eq.s32.totalorder %s22, 0
      %p106 = por %p104, %p105
      %p107 = scmp.ne.s32.totalorder %s95, %s96
      %p108 = scmp.eq.s32.totalorder %s23, 1
      %p109 = por %p107, %p108
      %p111 = scmp.ne.s32.totalorder %s96, %s110
      %p112 = scmp.eq.s32.totalorder %s23, 0
      %p113 = por %p111, %p112
      %s115 = sadd.s32 %s114, 1
      %p118 = scmp.eq.s32.totalorder %s17, 1
      %p119 = scmp.ne.s32.totalorder %s114, %s116
      %p120 = scmp.eq.s32.totalorder %s17, 0
      %p121 = por %p119, %p120
      %p122 = scmp.ne.s32.totalorder %s114, %s116
      %p123 = scmp.eq.s32.totalorder %s22, 1
      %p124 = por %p122, %p123
      %p125 = scmp.ne.s32.totalorder %s116, %s117
      %p126 = scmp.eq.s32.totalorder %s22, 0
      %p127 = por %p125, %p126
      %p128 = scmp.ne.s32.totalorder %s116, %s117
      %p129 = scmp.eq.s32.totalorder %s23, 1
      %p130 = por %p128, %p129
      %p132 = scmp.ne.s32.totalorder %s117, %s131
      %p133 = scmp.eq.s32.totalorder %s23, 0
      %p134 = por %p132, %p133
      %s135 = ssub.s32 %s17, %s24
      %p136 = scmp.eq.s32.totalorder %s135, 0
      %s138 = sadd.s32 %s137, 1
      %s139 = scalar_select %p136, %s137, %s138
      %p142 = pneg %p136
      %p143 = scmp.eq.s32.totalorder %s17, 1
      %p144 = por %p142, %p143
      %p145 = scmp.ne.s32.totalorder %s137, %s140
      %p146 = scmp.eq.s32.totalorder %s17, 0
      %p147 = por %p145, %p146
      %p148 = scmp.ne.s32.totalorder %s137, %s140
      %p149 = scmp.eq.s32.totalorder %s22, 1
      %p150 = por %p148, %p149
      %p151 = scmp.ne.s32.totalorder %s140, %s141
      %p152 = scmp.eq.s32.totalorder %s22, 0
      %p153 = por %p151, %p152
      %p154 = scmp.ne.s32.totalorder %s140, %s141
      %p155 = scmp.eq.s32.totalorder %s23, 1
      %p156 = por %p154, %p155
      %p158 = scmp.ne.s32.totalorder %s141, %s157
      %p159 = scmp.eq.s32.totalorder %s23, 0
      %p160 = por %p158, %p159
      %s161 = ssub.s32 %s17, %s24
      %p162 = scmp.eq.s32.totalorder %s161, 0
      %s164 = sadd.s32 %s163, 1
      %s165 = scalar_select %p162, %s163, %s164
      %p168 = pneg %p162
      %p169 = scmp.eq.s32.totalorder %s17, 1
      %p170 = por %p168, %p169
      %p171 = scmp.ne.s32.totalorder %s163, %s166
      %p172 = scmp.eq.s32.totalorder %s17, 0
      %p173 = por %p171, %p172
      %p174 = scmp.ne.s32.totalorder %s163, %s166
      %p175 = scmp.eq.s32.totalorder %s22, 1
      %p176 = por %p174, %p175
      %p177 = scmp.ne.s32.totalorder %s166, %s167
      %p178 = scmp.eq.s32.totalorder %s22, 0
      %p179 = por %p177, %p178
      %p180 = scmp.ne.s32.totalorder %s166, %s167
      %p181 = scmp.eq.s32.totalorder %s23, 1
      %p182 = por %p180, %p181
      %p184 = scmp.ne.s32.totalorder %s167, %s183
      %p185 = scmp.eq.s32.totalorder %s23, 0
      %p186 = por %p184, %p185
      %s187 = ssub.s32 %s17, %s24
      %p188 = scmp.eq.s32.totalorder %s187, 0
      %s190 = sadd.s32 %s189, 1
      %s191 = scalar_select %p188, %s189, %s190
      %p194 = pneg %p188
      %p195 = scmp.eq.s32.totalorder %s17, 1
      %p196 = por %p194, %p195
      %p197 = scmp.ne.s32.totalorder %s189, %s192
      %p198 = scmp.eq.s32.totalorder %s17, 0
      %p199 = por %p197, %p198
      %p200 = scmp.ne.s32.totalorder %s189, %s192
      %p201 = scmp.eq.s32.totalorder %s22, 1
      %p202 = por %p200, %p201
      %p203 = scmp.ne.s32.totalorder %s192, %s193
      %p204 = scmp.eq.s32.totalorder %s22, 0
      %p205 = por %p203, %p204
      %p206 = scmp.ne.s32.totalorder %s192, %s193
      %p207 = scmp.eq.s32.totalorder %s23, 1
      %p208 = por %p206, %p207
      %p210 = scmp.ne.s32.totalorder %s193, %s209
      %p211 = scmp.eq.s32.totalorder %s23, 0
      %p212 = por %p210, %p211
      %s213 = ssub.s32 %s17, %s24
      %p214 = scmp.eq.s32.totalorder %s213, 0
      %s216 = sadd.s32 %s215, 1
      %s217 = scalar_select %p214, %s215, %s216
      %p220 = pneg %p214
      %p221 = scmp.eq.s32.totalorder %s17, 1
      %p222 = por %p220, %p221
      %p223 = scmp.ne.s32.totalorder %s215, %s218
      %p224 = scmp.eq.s32.totalorder %s17, 0
      %p225 = por %p223, %p224
      %p226 = scmp.ne.s32.totalorder %s215, %s218
      %p227 = scmp.eq.s32.totalorder %s22, 1
      %p228 = por %p226, %p227
      %p229 = scmp.ne.s32.totalorder %s218, %s219
      %p230 = scmp.eq.s32.totalorder %s22, 0
      %p231 = por %p229, %p230
      %p232 = scmp.ne.s32.totalorder %s218, %s219
      %p233 = scmp.eq.s32.totalorder %s23, 1
      %p234 = por %p232, %p233
      %p236 = scmp.ne.s32.totalorder %s219, %s235
      %p237 = scmp.eq.s32.totalorder %s23, 0
      %p238 = por %p236, %p237
      %p239 = scmp.le.s32.totalorder 1, %s17
      %p240 = scmp.lt.s32.totalorder %s17, 3
      %p241 = pnand %p239, %p240
      %p242 = pneg %p241
      // Predicated region
      $region9: #{decoder_forward.8} parent=5 // pred_check
        _
      $region10: #{decoder_forward.8} parent=5 // pred_check_branch
        %244 = sbr.rel (%p241) target = $region12
      $region11: #{decoder_forward.8} parent=5 // pred_region
        %s245 = ssub.s32 %s17, 1
        // Predicated region
        $region13: #{decoder_forward.8} parent=11 // pred_check
          %p246 = pneg %p64
        $region14: #{decoder_forward.8} parent=11 // pred_check_branch
          %248 = sbr.rel (%p246) target = $region16
        $region15: #{decoder_forward.8} parent=11 // pred_region
          %s250 = ssub.s32 9216, 9216
          %251 = vsyncadd [#allocation4], %s250
          %s252 = sshll.u32 [#allocation3], 4
          %s253 = int_to_ptr.vmem [resolvable:$true] %s252
          %258 = dma.hbm_to_vmem [thread:$0]  %s1, 9216, %s253, [#allocation4], 64, 64, 4
        $region16: #{decoder_forward.8} parent=11 // pred_fallthru
          _
        // Predicated region
        $region17: #{decoder_forward.8} parent=11 // pred_check
          %p259 = pneg %p85
        $region18: #{decoder_forward.8} parent=11 // pred_check_branch
          %261 = sbr.rel (%p259) target = $region20
        $region19: #{decoder_forward.8} parent=11 // pred_region
          %s263 = ssub.s32 16, 16
          %264 = vsyncadd [#allocation6], %s263
          %s266 = sshll.u32 [#allocation5], 4
          %s267 = int_to_ptr.vmem [resolvable:$true] %s266
          %269 = dma.hbm_to_vmem [thread:$0]  %s2, 16, %s267, [#allocation6]
        $region20: #{decoder_forward.8} parent=11 // pred_fallthru
          _
        // Predicated region
        $region21: #{decoder_forward.8} parent=11 // pred_check
          %p270 = pneg %p106
        $region22: #{decoder_forward.8} parent=11 // pred_check_branch
          %272 = sbr.rel (%p270) target = $region24
        $region23: #{decoder_forward.8} parent=11 // pred_region
          _
        $region24: #{decoder_forward.8} parent=11 // pred_fallthru
          _
        // Predicated region
        $region25: #{decoder_forward.8} parent=11 // pred_check
          %p273 = pneg %p127
        $region26: #{decoder_forward.8} parent=11 // pred_check_branch
          %275 = sbr.rel (%p273) target = $region28
        $region27: #{decoder_forward.8} parent=11 // pred_region
          %s277 = ssub.s32 16, 16
          %278 = vsyncadd [#allocation6], %s277
          %s280 = sshll.u32 [#allocation7], 4
          %s281 = int_to_ptr.vmem [resolvable:$true] %s280
          %283 = dma.hbm_to_vmem [thread:$0]  %s4, 16, %s281, [#allocation6]
        $region28: #{decoder_forward.8} parent=11 // pred_fallthru
          _
      $region12: #{decoder_forward.8} parent=5 // pred_fallthru
        _
      %p284 = scmp.lt.s32.totalorder %s17, 2
      // Predicated region
      $region29: #{decoder_forward.8} parent=5 // pred_check
        %p285 = pneg %p284
      $region30: #{decoder_forward.8} parent=5 // pred_check_branch
        %287 = sbr.rel (%p285) target = $region32
      $region31: #{decoder_forward.8} parent=5 // pred_region
        // Predicated region
        $region33: #{decoder_forward.8} parent=31 // pred_check
          %p288 = pneg %p37
        $region34: #{decoder_forward.8} parent=31 // pred_check_branch
          %290 = sbr.rel (%p288) target = $region36
        $region35: #{decoder_forward.8} parent=31 // pred_region
          %p291 = scmp.lt.s32.totalorder %s17, 1
          %s292 = scalar_select %p291, %s17, 1
          %s293 = smul.addr %s292, 2
          %s294 = scalar_lea.vmem %s0, %s293
        $region36: #{decoder_forward.8} parent=31 // pred_fallthru
          _
      $region32: #{decoder_forward.8} parent=5 // pred_fallthru
        _
      %p295 = scmp.le.s32.totalorder 1, %s17
      %p296 = scmp.lt.s32.totalorder %s17, 3
      %p297 = pnand %p295, %p296
      %p298 = pneg %p297
      // Predicated region
      $region37: #{decoder_forward.8} parent=5 // pred_check
        _
      $region38: #{decoder_forward.8} parent=5 // pred_check_branch
        %300 = sbr.rel (%p297) target = $region40
      $region39: #{decoder_forward.8} parent=5 // pred_region
        %s301 = ssub.s32 %s17, 1
        // Predicated region
        $region41: #{decoder_forward.8} parent=39 // pred_check
          %p302 = pneg %p64
        $region42: #{decoder_forward.8} parent=39 // pred_check_branch
          %304 = sbr.rel (%p302) target = $region44
        $region43: #{decoder_forward.8} parent=39 // pred_region
          %305 = dma.done [#allocation4], 9216
        $region44: #{decoder_forward.8} parent=39 // pred_fallthru
          _
        // Predicated region
        $region45: #{decoder_forward.8} parent=39 // pred_check
          %p306 = pneg %p85
        $region46: #{decoder_forward.8} parent=39 // pred_check_branch
          %308 = sbr.rel (%p306) target = $region48
        $region47: #{decoder_forward.8} parent=39 // pred_region
          %309 = dma.done [#allocation6], 16
        $region48: #{decoder_forward.8} parent=39 // pred_fallthru
          _
        // Predicated region
        $region49: #{decoder_forward.8} parent=39 // pred_check
          %p310 = pneg %p127
        $region50: #{decoder_forward.8} parent=39 // pred_check_branch
          %312 = sbr.rel (%p310) target = $region52
        $region51: #{decoder_forward.8} parent=39 // pred_region
          %313 = dma.done [#allocation6], 16
        $region52: #{decoder_forward.8} parent=39 // pred_fallthru
          _
        %p314 = scmp.lt.s32.totalorder %s22, 1
        %s315 = scalar_select %p314, %s22, 1
        %s316 = smul.addr %s315, 2
        %s317 = scalar_lea.vmem %s0, %s316
        %p318 = pneg %p43
        %p319 = pneg %p40
        %p320 = pneg %p64
        %p321 = pneg %p61
        %p322 = pneg %p85
        %p323 = pneg %p82
        %p324 = pneg %p106
        %p325 = pneg %p103
        %p326 = pneg %p127
        %p327 = pneg %p124
        %p328 = pneg %p153
        %p329 = pneg %p150
        %p330 = scmp.lt.s32.totalorder %s22, 1
        %s331 = scalar_select %p330, %s22, 1
        %s332 = smul.addr %s331, 4
        %s333 = smul.addr %s332, 2
        %s334 = scalar_lea.vmem %s5, %s333
        %p335 = pneg %p179
        %p336 = pneg %p176
        %p337 = scmp.lt.s32.totalorder %s22, 1
        %s338 = scalar_select %p337, %s22, 1
        %s339 = smul.addr %s338, 2
        %s340 = smul.addr %s339, 2
        %s341 = scalar_lea.vmem %s6, %s340
        %p342 = pneg %p205
        %p343 = pneg %p202
        %p344 = scmp.lt.s32.totalorder %s22, 1
        %s345 = scalar_select %p344, %s22, 1
        %s346 = scalar_lea.vmem %s7, %s345
        %p347 = pneg %p231
        %p348 = pneg %p228
        %p349 = scmp.lt.s32.totalorder %s22, 1
        %s350 = scalar_select %p349, %s22, 1
        %s351 = scalar_lea.vmem %s8, %s350
        %p352 = scmp.lt.s32.totalorder %s22, 1
        %s353 = scalar_select %p352, %s22, 1
        %s354 = smul.addr %s353, 2
        %s355 = scalar_lea.vmem %s0, %s354
        %p356 = scmp.lt.s32.totalorder %s22, 1
        %s357 = scalar_select %p356, %s22, 1
        %s358 = smul.addr %s357, 4
        %s359 = smul.addr %s358, 2
        %s360 = scalar_lea.vmem %s5, %s359
        %p361 = scmp.lt.s32.totalorder %s22, 1
        %s362 = scalar_select %p361, %s22, 1
        %s363 = smul.addr %s362, 2
        %s364 = smul.addr %s363, 2
        %s365 = scalar_lea.vmem %s6, %s364
        %p366 = scmp.lt.s32.totalorder %s22, 1
        %s367 = scalar_select %p366, %s22, 1
        %s368 = scalar_lea.vmem %s7, %s367
        %p369 = scmp.lt.s32.totalorder %s22, 1
        %s370 = scalar_select %p369, %s22, 1
        %s371 = scalar_lea.vmem %s8, %s370
        %v373 = vld [vmem:[%s355] sm:$0x1]
        %v374 = vld [vmem:[%s355 + $0x1] sm:$0x1]
        %v375 = vld [vmem:[%s3] sm:$0xf]
        %v376 = vld [vmem:[%s3 + $0x4] sm:$0xf]
        %v377 = vld [vmem:[%s3 + $0x8] sm:$0xf]
        %v378 = vld [vmem:[%s3 + $0xc] sm:$0xf]
        %v379 = vld [vmem:[%s3 + $0x10] sm:$0xf]
        %v380 = vld [vmem:[%s3 + $0x14] sm:$0xf]
        %v381 = vld [vmem:[%s3 + $0x18] sm:$0xf]
        %v382 = vld [vmem:[%s3 + $0x1c] sm:$0xf]
        %v383 = vld [vmem:[%s3 + $0x20] sm:$0xf]
        %v384 = vld [vmem:[%s3 + $0x24] sm:$0xf]
        %v385 = vld [vmem:[%s3 + $0x28] sm:$0xf]
        %v386 = vld [vmem:[%s3 + $0x2c] sm:$0xf]
        %v387 = vld [vmem:[%s3 + $0x30] sm:$0xf]
        %v388 = vld [vmem:[%s3 + $0x34] sm:$0xf]
        %v389 = vld [vmem:[%s3 + $0x38] sm:$0xf]
        %v390 = vld [vmem:[%s3 + $0x3c] sm:$0xf]
        %v391 = vld [vmem:[#allocation7] sm:$0x1]
        %v393 = vlaneseq
        %v394 = vshrl.u32 %v393, 7
        %v395 = vsub.s32 0, %v394
        %v396 = vrot.slane %v391, %v395
        %v400 = vcombine.low %v373, %v374
        %v402 = vunpack.c.l.s4 1966171168
        %v403 = vunpack.c.0.s8 %v402
        %v404 = vlaneseq
        %v405 = vshrl.u32 %v404, 7
        %v406 = vsub.s32 %v403, %v405
        %v407 = vrot.slane %v400, %v406
        %v409 = vunpack.c.l.s4 1966171168
        %v410 = vunpack.c.0.s8 %v409
        %v411 = vlaneseq
        %v412 = vshrl.u32 %v411, 7
        %v413 = vsub.s32 %v410, %v412
        %v414 = vrot.slane %v407, %v413
        %v432 = vunpack.c.l.b16 %v375
        %v433 = vunpack.c.l.b16 %v376
        %v434 = vunpack.c.l.b16 %v377
        %v435 = vunpack.c.l.b16 %v378
        %v436 = vunpack.c.l.b16 %v379
        %v437 = vunpack.c.l.b16 %v380
        %v438 = vunpack.c.l.b16 %v381
        %v439 = vunpack.c.l.b16 %v382
        %v440 = vunpack.c.l.b16 %v383
        %v441 = vunpack.c.l.b16 %v384
        %v442 = vunpack.c.l.b16 %v385
        %v443 = vunpack.c.l.b16 %v386
        %v444 = vunpack.c.l.b16 %v387
        %v445 = vunpack.c.l.b16 %v388
        %v446 = vunpack.c.l.b16 %v389
        %v447 = vunpack.c.l.b16 %v390
        %v448 = vpack.c.b16 %v433, %v432
        %v449 = vpack.c.b16 %v435, %v434
        %v450 = vpack.c.b16 %v437, %v436
        %v451 = vpack.c.b16 %v439, %v438
        %v452 = vpack.c.b16 %v441, %v440
        %v453 = vpack.c.b16 %v443, %v442
        %v454 = vpack.c.b16 %v445, %v444
        %v455 = vpack.c.b16 %v447, %v446
        %464 = vmatprep.subr.bf16.mxu0 0
        %465 = vmatpush1.bf16.msra.mxu0 %v448
        %466 = vmatprep.subr.bf16.mxu0 0
        %467 = vmatpush1.bf16.msra.mxu0 %v449
        %468 = vmatprep.subr.bf16.mxu0 0
        %469 = vmatpush1.bf16.msra.mxu0 %v450
        %470 = vmatprep.subr.bf16.mxu0 0
        %471 = vmatpush1.bf16.msra.mxu0 %v451
        %472 = vmatprep.subr.bf16.mxu0 0
        %473 = vmatpush1.bf16.msra.mxu0 %v452
        %474 = vmatprep.subr.bf16.mxu0 0
        %475 = vmatpush1.bf16.msra.mxu0 %v453
        %476 = vmatprep.subr.bf16.mxu0 0
        %477 = vmatpush1.bf16.msra.mxu0 %v454
        %478 = vmatprep.subr.bf16.mxu0 0
        %479 = vmatpush1.bf16.msra.mxu0 %v455
        %480 = vmatprep.subr.bf16.mxu0 0
        %481 = vmatpush1.bf16.msra.mxu0 0
        %482 = vmatprep.subr.bf16.mxu0 0
        %483 = vmatpush1.bf16.msra.mxu0 0
        %484 = vmatprep.subr.bf16.mxu0 0
        %485 = vmatpush1.bf16.msra.mxu0 0
        %486 = vmatprep.subr.bf16.mxu0 0
        %487 = vmatpush1.bf16.msra.mxu0 0
        %488 = vmatprep.subr.bf16.mxu0 0
        %489 = vmatpush1.bf16.msra.mxu0 0
        %490 = vmatprep.subr.bf16.mxu0 0
        %491 = vmatpush1.bf16.msra.mxu0 0
        %492 = vmatprep.subr.bf16.mxu0 0
        %493 = vmatpush1.bf16.msra.mxu0 0
        %494 = vmatprep.subr.bf16.mxu0 0
        %495 = vmatpush1.bf16.msra.mxu0 0
        %496 = vmatprep.mubr.bf16.mxu0 0
        %497 = vmatmul.mubr.bf16.gmra.mrb[0].mxu0 %v414
        %v498 = vpop.f32.mrb[0].mxu0
        %v499 = vadd.f32 %v396, %v498
        %v500 = vpop.f32.mrb[0].mxu0
        %v501 = vpop.f32.mrb[0].mxu0
        %v502 = vpop.f32.mrb[0].mxu0
        %503 = vdwg.mxu0
        %v506 = vunpack.c.l.s4 1983009808
        %v507 = vunpack.c.0.s8 %v506
        %v508 = vlaneseq
        %v509 = vshrl.u32 %v508, 7
        %v510 = vsub.s32 %v507, %v509
        %v511 = vrot.slane %v499, %v510
        %v512 = vcombine.high %v511, %v511
        %515 = vst [vmem:[%s365] sm:$0x3] %v511
        %516 = vst [vmem:[%s365 + $0x2] sm:$0x3] %v512
        %v517 = vunpack.i.l.s16 %v373
        %v518 = vunpack.i.h.s16 %v373
        %v519 = vunpack.i.l.s16 %v374
        %v520 = vunpack.i.h.s16 %v374
        %v521 = vpack.i.b16 %v517, %v517
        %v522 = vpack.i.b16 %v518, %v518
        %v523 = vpack.i.b16 %v519, %v519
        %v524 = vpack.i.b16 %v520, %v520
        %v525 = vlaneseq
        %v526 = vshrl.u32 %v525, 7
        %v527 = vsub.s32 0, %v526
        %v528 = vrot.slane %v521, %v527
        %v529 = vlaneseq
        %v530 = vshrl.u32 %v529, 7
        %v531 = vsub.s32 0, %v530
        %v532 = vrot.slane %v522, %v531
        %v533 = vlaneseq
        %v534 = vshrl.u32 %v533, 7
        %v535 = vsub.s32 0, %v534
        %v536 = vrot.slane %v523, %v535
        %v537 = vlaneseq
        %v538 = vshrl.u32 %v537, 7
        %v539 = vsub.s32 0, %v538
        %v540 = vrot.slane %v524, %v539
        %v542 = vpack.i.b16 %v528, %v528
        %v544 = vlaneseq
        %v545 = vshrl.u32 %v544, 7
        %v546 = vsub.s32 0, %v545
        %v547 = vrot.slane %v542, %v546
        %v549 = vpack.i.b16 %v532, %v532
        %v551 = vlaneseq
        %v552 = vshrl.u32 %v551, 7
        %v553 = vsub.s32 0, %v552
        %v554 = vrot.slane %v549, %v553
        %v556 = vpack.i.b16 %v536, %v536
        %v558 = vlaneseq
        %v559 = vshrl.u32 %v558, 7
        %v560 = vsub.s32 0, %v559
        %v561 = vrot.slane %v556, %v560
        %v563 = vpack.i.b16 %v540, %v540
        %v565 = vlaneseq
        %v566 = vshrl.u32 %v565, 7
        %v567 = vsub.s32 0, %v566
        %v568 = vrot.slane %v563, %v567
        %569 = vst [vmem:[#allocation2] sm:$0x7] 0
        %570 = vst [vmem:[#allocation2 + $0x4] sm:$0x7] 0
        %571 = vst [vmem:[#allocation2 + $0x8] sm:$0x7] 0
        %572 = vst [vmem:[#allocation2 + $0xc] sm:$0x7] 0
        %573 = vst [vmem:[#allocation2 + $0x10] sm:$0x7] 0
        %574 = vst [vmem:[#allocation2 + $0x14] sm:$0x7] 0
        %v580 = vunpack.c.l.s4 1935823168
        %v581 = vunpack.c.0.s8 %v580
        %v582 = vlaneseq
        %v583 = vshrl.u32 %v582, 7
        %v584 = vsub.s32 %v581, %v583
        %v585 = vrot.slane %v547, %v584
        %v587 = vunpack.c.l.s4 1935823168
        %v588 = vunpack.c.0.s8 %v587
        %v589 = vlaneseq
        %v590 = vshrl.u32 %v589, 7
        %v591 = vsub.s32 %v588, %v590
        %v592 = vrot.slane %v554, %v591
        %v593 = vcombine.low %v585, %v592
        %v595 = vunpack.c.l.s4 1935823168
        %v596 = vunpack.c.0.s8 %v595
        %v597 = vlaneseq
        %v598 = vshrl.u32 %v597, 7
        %v599 = vsub.s32 %v596, %v598
        %v600 = vrot.slane %v593, %v599
        %v602 = vunpack.c.l.s4 1935823168
        %v603 = vunpack.c.0.s8 %v602
        %v604 = vlaneseq
        %v605 = vshrl.u32 %v604, 7
        %v606 = vsub.s32 %v603, %v605
        %v607 = vrot.slane %v561, %v606
        %v609 = vunpack.c.l.s4 1935823168
        %v610 = vunpack.c.0.s8 %v609
        %v611 = vlaneseq
        %v612 = vshrl.u32 %v611, 7
        %v613 = vsub.s32 %v610, %v612
        %v614 = vrot.slane %v568, %v613
        %v615 = vcombine.low %v607, %v614
        %v617 = vunpack.c.l.s4 1935823168
        %v618 = vunpack.c.0.s8 %v617
        %v619 = vlaneseq
        %v620 = vshrl.u32 %v619, 7
        %v621 = vsub.s32 %v618, %v620
        %v622 = vrot.slane %v615, %v621
        %v624 = vshrl.u32 %v600, 16
        %v626 = vrot.slane %v624, 7
        %v627 = vshll.u32 %v600, 16
        %v629 = vor.u32 %v626, %v627
        %v631 = vshrl.u32 %v622, 16
        %v633 = vrot.slane %v631, 7
        %v634 = vshll.u32 %v622, 16
        %v636 = vor.u32 %v633, %v634
        %s639 = scalar_lea.vmem [#allocation2], 4
        %vm640 = vcmask 1042432
        %vm641 = vsmask.f32 2306
        %vm642 = vmand %vm640, %vm641
        %v643 = vld [vmem:[%s639] sm:$0x7]
        %v644 = vsel %vm642, %v629, %v643
        %645 = vst [vmem:[%s639] sm:$0x7] %v644
        %v646 = vld [vmem:[%s639 + $0x4] sm:$0x7]
        %v647 = vsel %vm642, %v629, %v646
        %648 = vst [vmem:[%s639 + $0x4] sm:$0x7] %v647
        %v649 = vld [vmem:[%s639 + $0x8] sm:$0x7]
        %v650 = vsel %vm642, %v636, %v649
        %651 = vst [vmem:[%s639 + $0x8] sm:$0x7] %v650
        %v652 = vld [vmem:[%s639 + $0xc] sm:$0x7]
        %v653 = vsel %vm642, %v636, %v652
        %654 = vst [vmem:[%s639 + $0xc] sm:$0x7] %v653
        %v655 = vld [vmem:[#allocation2] sm:$0x3]
        %v656 = vld [vmem:[#allocation2 + $0x4] sm:$0x3]
        %v657 = vld [vmem:[#allocation2 + $0x8] sm:$0x3]
        %v658 = vld [vmem:[#allocation2 + $0xc] sm:$0x3]
        %v659 = vld [vmem:[#allocation2] sm:$0x7]
        %v660 = vld [vmem:[#allocation2 + $0x4] sm:$0x7]
        %v661 = vld [vmem:[#allocation2 + $0x8] sm:$0x7]
        %v662 = vld [vmem:[#allocation2 + $0xc] sm:$0x7]
        %v663 = vld [vmem:[#allocation2] sm:$0x6]
        %v664 = vld [vmem:[#allocation2 + $0x4] sm:$0x6]
        %v665 = vld [vmem:[#allocation2 + $0x8] sm:$0x6]
        %v666 = vld [vmem:[#allocation2 + $0xc] sm:$0x6]
        %v667 = vld [vmem:[%s639] sm:$0x3]
        %v668 = vld [vmem:[%s639 + $0x4] sm:$0x3]
        %v669 = vld [vmem:[%s639 + $0x8] sm:$0x3]
        %v670 = vld [vmem:[%s639 + $0xc] sm:$0x3]
        %v671 = vld [vmem:[%s639] sm:$0x7]
        %v672 = vld [vmem:[%s639 + $0x4] sm:$0x7]
        %v673 = vld [vmem:[%s639 + $0x8] sm:$0x7]
        %v674 = vld [vmem:[%s639 + $0xc] sm:$0x7]
        %v675 = vld [vmem:[%s639] sm:$0x6]
        %v676 = vld [vmem:[%s639 + $0x4] sm:$0x6]
        %v677 = vld [vmem:[%s639 + $0x8] sm:$0x6]
        %v678 = vld [vmem:[%s639 + $0xc] sm:$0x6]
        %s679 = scalar_lea.vmem [#allocation2], 8
        %v680 = vld [vmem:[%s679] sm:$0x3]
        %v681 = vld [vmem:[%s679 + $0x4] sm:$0x3]
        %v682 = vld [vmem:[%s679 + $0x8] sm:$0x3]
        %v683 = vld [vmem:[%s679 + $0xc] sm:$0x3]
        %v684 = vld [vmem:[%s679] sm:$0x7]
        %v685 = vld [vmem:[%s679 + $0x4] sm:$0x7]
        %v686 = vld [vmem:[%s679 + $0x8] sm:$0x7]
        %v687 = vld [vmem:[%s679 + $0xc] sm:$0x7]
        %v688 = vld [vmem:[%s679] sm:$0x6]
        %v689 = vld [vmem:[%s679 + $0x4] sm:$0x6]
        %v690 = vld [vmem:[%s679 + $0x8] sm:$0x6]
        %v691 = vld [vmem:[%s679 + $0xc] sm:$0x6]
        %v696 = vunpack.c.l.b16 %v659
        %v697 = vunpack.c.l.b16 %v660
        %v698 = vunpack.c.l.b16 %v661
        %v699 = vunpack.c.l.b16 %v662
        %v700 = vpack.c.b16 %v696, %v696
        %v701 = vpack.c.b16 %v697, %v697
        %v702 = vpack.c.b16 %v698, %v698
        %v703 = vpack.c.b16 %v699, %v699
        %v705 = vshrl.u32 %v700, 16
        %v707 = vshll.u32 %v700, 16
        %v709 = vrot.slane %v707, 1
        %v710 = vor.u32 %v705, %v709
        %v712 = vshrl.u32 %v701, 16
        %v714 = vshll.u32 %v701, 16
        %v716 = vrot.slane %v714, 1
        %v717 = vor.u32 %v712, %v716
        %v719 = vshrl.u32 %v702, 16
        %v721 = vshll.u32 %v702, 16
        %v723 = vrot.slane %v721, 1
        %v724 = vor.u32 %v719, %v723
        %v726 = vshrl.u32 %v703, 16
        %v728 = vshll.u32 %v703, 16
        %v730 = vrot.slane %v728, 1
        %v731 = vor.u32 %v726, %v730
        %v736 = vunpack.c.l.b16 %v663
        %v737 = vunpack.c.l.b16 %v664
        %v738 = vunpack.c.l.b16 %v665
        %v739 = vunpack.c.l.b16 %v666
        %v740 = vpack.c.b16 %v736, %v736
        %v741 = vpack.c.b16 %v737, %v737
        %v742 = vpack.c.b16 %v738, %v738
        %v743 = vpack.c.b16 %v739, %v739
        %v744 = vrot.slane %v740, 1
        %v745 = vrot.slane %v741, 1
        %v746 = vrot.slane %v742, 1
        %v747 = vrot.slane %v743, 1
        %v752 = vunpack.c.l.b16 %v671
        %v753 = vunpack.c.l.b16 %v672
        %v754 = vunpack.c.l.b16 %v673
        %v755 = vunpack.c.l.b16 %v674
        %v756 = vpack.c.b16 %v752, %v752
        %v757 = vpack.c.b16 %v753, %v753
        %v758 = vpack.c.b16 %v754, %v754
        %v759 = vpack.c.b16 %v755, %v755
        %v761 = vshrl.u32 %v756, 16
        %v763 = vshll.u32 %v756, 16
        %v765 = vrot.slane %v763, 1
        %v766 = vor.u32 %v761, %v765
        %v768 = vshrl.u32 %v757, 16
        %v770 = vshll.u32 %v757, 16
        %v772 = vrot.slane %v770, 1
        %v773 = vor.u32 %v768, %v772
        %v775 = vshrl.u32 %v758, 16
        %v777 = vshll.u32 %v758, 16
        %v779 = vrot.slane %v777, 1
        %v780 = vor.u32 %v775, %v779
        %v782 = vshrl.u32 %v759, 16
        %v784 = vshll.u32 %v759, 16
        %v786 = vrot.slane %v784, 1
        %v787 = vor.u32 %v782, %v786
        %v792 = vunpack.c.l.b16 %v675
        %v793 = vunpack.c.l.b16 %v676
        %v794 = vunpack.c.l.b16 %v677
        %v795 = vunpack.c.l.b16 %v678
        %v796 = vpack.c.b16 %v792, %v792
        %v797 = vpack.c.b16 %v793, %v793
        %v798 = vpack.c.b16 %v794, %v794
        %v799 = vpack.c.b16 %v795, %v795
        %v800 = vrot.slane %v796, 1
        %v801 = vrot.slane %v797, 1
        %v802 = vrot.slane %v798, 1
        %v803 = vrot.slane %v799, 1
        %v808 = vunpack.c.l.b16 %v684
        %v809 = vunpack.c.l.b16 %v685
        %v810 = vunpack.c.l.b16 %v686
        %v811 = vunpack.c.l.b16 %v687
        %v812 = vpack.c.b16 %v808, %v808
        %v813 = vpack.c.b16 %v809, %v809
        %v814 = vpack.c.b16 %v810, %v810
        %v815 = vpack.c.b16 %v811, %v811
        %v817 = vshrl.u32 %v812, 16
        %v819 = vshll.u32 %v812, 16
        %v821 = vrot.slane %v819, 1
        %v822 = vor.u32 %v817, %v821
        %v824 = vshrl.u32 %v813, 16
        %v826 = vshll.u32 %v813, 16
        %v828 = vrot.slane %v826, 1
        %v829 = vor.u32 %v824, %v828
        %v831 = vshrl.u32 %v814, 16
        %v833 = vshll.u32 %v814, 16
        %v835 = vrot.slane %v833, 1
        %v836 = vor.u32 %v831, %v835
        %v838 = vshrl.u32 %v815, 16
        %v840 = vshll.u32 %v815, 16
        %v842 = vrot.slane %v840, 1
        %v843 = vor.u32 %v838, %v842
        %v848 = vunpack.c.l.b16 %v688
        %v849 = vunpack.c.l.b16 %v689
        %v850 = vunpack.c.l.b16 %v690
        %v851 = vunpack.c.l.b16 %v691
        %v852 = vpack.c.b16 %v848, %v848
        %v853 = vpack.c.b16 %v849, %v849
        %v854 = vpack.c.b16 %v850, %v850
        %v855 = vpack.c.b16 %v851, %v851
        %v856 = vrot.slane %v852, 1
        %v857 = vrot.slane %v853, 1
        %v858 = vrot.slane %v854, 1
        %v859 = vrot.slane %v855, 1
        %v872 = vcombine.low %v655, %v710
        %v873 = vcombine.low %v744, %v667
        %v875 = vunpack.c.l.s4 1983009808
        %v876 = vunpack.c.0.s8 %v875
        %v877 = vlaneseq
        %v878 = vshrl.u32 %v877, 7
        %v879 = vsub.s32 %v876, %v878
        %v880 = vrot.slane %v872, %v879
        %v882 = vunpack.c.l.s4 1983009808
        %v883 = vunpack.c.0.s8 %v882
        %v884 = vlaneseq
        %v885 = vshrl.u32 %v884, 7
        %v886 = vsub.s32 %v883, %v885
        %v887 = vrot.slane %v873, %v886
        %v888 = vcombine.low %v880, %v887
        %v889 = vcombine.low %v766, %v800
        %v890 = vcombine.low %v680, %v822
        %v892 = vunpack.c.l.s4 1983009808
        %v893 = vunpack.c.0.s8 %v892
        %v894 = vlaneseq
        %v895 = vshrl.u32 %v894, 7
        %v896 = vsub.s32 %v893, %v895
        %v897 = vrot.slane %v889, %v896
        %v899 = vunpack.c.l.s4 1983009808
        %v900 = vunpack.c.0.s8 %v899
        %v901 = vlaneseq
        %v902 = vshrl.u32 %v901, 7
        %v903 = vsub.s32 %v900, %v902
        %v904 = vrot.slane %v890, %v903
        %v905 = vcombine.low %v897, %v904
        %v907 = vunpack.c.l.s4 1983009808
        %v908 = vunpack.c.0.s8 %v907
        %v909 = vlaneseq
        %v910 = vshrl.u32 %v909, 7
        %v911 = vsub.s32 %v908, %v910
        %v912 = vrot.slane %v856, %v911
        %v913 = vcombine.low %v656, %v717
        %v914 = vcombine.low %v745, %v668
        %v916 = vunpack.c.l.s4 1983009808
        %v917 = vunpack.c.0.s8 %v916
        %v918 = vlaneseq
        %v919 = vshrl.u32 %v918, 7
        %v920 = vsub.s32 %v917, %v919
        %v921 = vrot.slane %v913, %v920
        %v923 = vunpack.c.l.s4 1983009808
        %v924 = vunpack.c.0.s8 %v923
        %v925 = vlaneseq
        %v926 = vshrl.u32 %v925, 7
        %v927 = vsub.s32 %v924, %v926
        %v928 = vrot.slane %v914, %v927
        %v929 = vcombine.low %v921, %v928
        %v930 = vcombine.low %v773, %v801
        %v931 = vcombine.low %v681, %v829
        %v933 = vunpack.c.l.s4 1983009808
        %v934 = vunpack.c.0.s8 %v933
        %v935 = vlaneseq
        %v936 = vshrl.u32 %v935, 7
        %v937 = vsub.s32 %v934, %v936
        %v938 = vrot.slane %v930, %v937
        %v940 = vunpack.c.l.s4 1983009808
        %v941 = vunpack.c.0.s8 %v940
        %v942 = vlaneseq
        %v943 = vshrl.u32 %v942, 7
        %v944 = vsub.s32 %v941, %v943
        %v945 = vrot.slane %v931, %v944
        %v946 = vcombine.low %v938, %v945
        %v948 = vunpack.c.l.s4 1983009808
        %v949 = vunpack.c.0.s8 %v948
        %v950 = vlaneseq
        %v951 = vshrl.u32 %v950, 7
        %v952 = vsub.s32 %v949, %v951
        %v953 = vrot.slane %v857, %v952
        %v954 = vcombine.low %v657, %v724
        %v955 = vcombine.low %v746, %v669
        %v957 = vunpack.c.l.s4 1983009808
        %v958 = vunpack.c.0.s8 %v957
        %v959 = vlaneseq
        %v960 = vshrl.u32 %v959, 7
        %v961 = vsub.s32 %v958, %v960
        %v962 = vrot.slane %v954, %v961
        %v964 = vunpack.c.l.s4 1983009808
        %v965 = vunpack.c.0.s8 %v964
        %v966 = vlaneseq
        %v967 = vshrl.u32 %v966, 7
        %v968 = vsub.s32 %v965, %v967
        %v969 = vrot.slane %v955, %v968
        %v970 = vcombine.low %v962, %v969
        %v971 = vcombine.low %v780, %v802
        %v972 = vcombine.low %v682, %v836
        %v974 = vunpack.c.l.s4 1983009808
        %v975 = vunpack.c.0.s8 %v974
        %v976 = vlaneseq
        %v977 = vshrl.u32 %v976, 7
        %v978 = vsub.s32 %v975, %v977
        %v979 = vrot.slane %v971, %v978
        %v981 = vunpack.c.l.s4 1983009808
        %v982 = vunpack.c.0.s8 %v981
        %v983 = vlaneseq
        %v984 = vshrl.u32 %v983, 7
        %v985 = vsub.s32 %v982, %v984
        %v986 = vrot.slane %v972, %v985
        %v987 = vcombine.low %v979, %v986
        %v989 = vunpack.c.l.s4 1983009808
        %v990 = vunpack.c.0.s8 %v989
        %v991 = vlaneseq
        %v992 = vshrl.u32 %v991, 7
        %v993 = vsub.s32 %v990, %v992
        %v994 = vrot.slane %v858, %v993
        %v995 = vcombine.low %v658, %v731
        %v996 = vcombine.low %v747, %v670
        %v998 = vunpack.c.l.s4 1983009808
        %v999 = vunpack.c.0.s8 %v998
        %v1000 = vlaneseq
        %v1001 = vshrl.u32 %v1000, 7
        %v1002 = vsub.s32 %v999, %v1001
        %v1003 = vrot.slane %v995, %v1002
        %v1005 = vunpack.c.l.s4 1983009808
        %v1006 = vunpack.c.0.s8 %v1005
        %v1007 = vlaneseq
        %v1008 = vshrl.u32 %v1007, 7
        %v1009 = vsub.s32 %v1006, %v1008
        %v1010 = vrot.slane %v996, %v1009
        %v1011 = vcombine.low %v1003, %v1010
        %v1012 = vcombine.low %v787, %v803
        %v1013 = vcombine.low %v683, %v843
        %v1015 = vunpack.c.l.s4 1983009808
        %v1016 = vunpack.c.0.s8 %v1015
        %v1017 = vlaneseq
        %v1018 = vshrl.u32 %v1017, 7
        %v1019 = vsub.s32 %v1016, %v1018
        %v1020 = vrot.slane %v1012, %v1019
        %v1022 = vunpack.c.l.s4 1983009808
        %v1023 = vunpack.c.0.s8 %v1022
        %v1024 = vlaneseq
        %v1025 = vshrl.u32 %v1024, 7
        %v1026 = vsub.s32 %v1023, %v1025
        %v1027 = vrot.slane %v1013, %v1026
        %v1028 = vcombine.low %v1020, %v1027
        %v1030 = vunpack.c.l.s4 1983009808
        %v1031 = vunpack.c.0.s8 %v1030
        %v1032 = vlaneseq
        %v1033 = vshrl.u32 %v1032, 7
        %v1034 = vsub.s32 %v1031, %v1033
        %v1035 = vrot.slane %v859, %v1034
        %v1036 = vld [vmem:[#allocation3] sm:$0xf]
        %v1037 = vld [vmem:[#allocation3 + $0x4] sm:$0xf]
        %v1038 = vld [vmem:[#allocation3 + $0x8] sm:$0xf]
        %v1039 = vld [vmem:[#allocation3 + $0xc] sm:$0xf]
        %v1040 = vld [vmem:[#allocation3 + $0x10] sm:$0xf]
        %v1041 = vld [vmem:[#allocation3 + $0x14] sm:$0xf]
        %v1042 = vld [vmem:[#allocation3 + $0x18] sm:$0xf]
        %v1043 = vld [vmem:[#allocation3 + $0x1c] sm:$0xf]
        %v1044 = vld [vmem:[#allocation3 + $0x20] sm:$0xf]
        %v1045 = vld [vmem:[#allocation3 + $0x24] sm:$0xf]
        %v1046 = vld [vmem:[#allocation3 + $0x28] sm:$0xf]
        %v1047 = vld [vmem:[#allocation3 + $0x2c] sm:$0xf]
        %v1048 = vld [vmem:[#allocation3 + $0x30] sm:$0xf]
        %v1049 = vld [vmem:[#allocation3 + $0x34] sm:$0xf]
        %v1050 = vld [vmem:[#allocation3 + $0x38] sm:$0xf]
        %v1051 = vld [vmem:[#allocation3 + $0x3c] sm:$0xf]
        %v1052 = vld [vmem:[#allocation3 + $0x40] sm:$0xf]
        %v1053 = vld [vmem:[#allocation3 + $0x44] sm:$0xf]
        %v1054 = vld [vmem:[#allocation3 + $0x48] sm:$0xf]
        %v1055 = vld [vmem:[#allocation3 + $0x4c] sm:$0xf]
        %v1056 = vld [vmem:[#allocation3 + $0x50] sm:$0xf]
        %v1057 = vld [vmem:[#allocation3 + $0x54] sm:$0xf]
        %v1058 = vld [vmem:[#allocation3 + $0x58] sm:$0xf]
        %v1059 = vld [vmem:[#allocation3 + $0x5c] sm:$0xf]
        %v1060 = vld [vmem:[#allocation3 + $0x60] sm:$0xf]
        %v1061 = vld [vmem:[#allocation3 + $0x64] sm:$0xf]
        %v1062 = vld [vmem:[#allocation3 + $0x68] sm:$0xf]
        %v1063 = vld [vmem:[#allocation3 + $0x6c] sm:$0xf]
        %v1064 = vld [vmem:[#allocation3 + $0x70] sm:$0xf]
        %v1065 = vld [vmem:[#allocation3 + $0x74] sm:$0xf]
        %v1066 = vld [vmem:[#allocation3 + $0x78] sm:$0xf]
        %v1067 = vld [vmem:[#allocation3 + $0x7c] sm:$0xf]
        %v1068 = vld [vmem:[#allocation3 + $0x80] sm:$0xf]
        %v1069 = vld [vmem:[#allocation3 + $0x84] sm:$0xf]
        %v1070 = vld [vmem:[#allocation3 + $0x88] sm:$0xf]
        %v1071 = vld [vmem:[#allocation3 + $0x8c] sm:$0xf]
        %v1072 = vld [vmem:[#allocation3 + $0x90] sm:$0xf]
        %v1073 = vld [vmem:[#allocation3 + $0x94] sm:$0xf]
        %v1074 = vld [vmem:[#allocation3 + $0x98] sm:$0xf]
        %v1075 = vld [vmem:[#allocation3 + $0x9c] sm:$0xf]
        %v1076 = vld [vmem:[#allocation3 + $0xa0] sm:$0xf]
        %v1077 = vld [vmem:[#allocation3 + $0xa4] sm:$0xf]
        %v1078 = vld [vmem:[#allocation3 + $0xa8] sm:$0xf]
        %v1079 = vld [vmem:[#allocation3 + $0xac] sm:$0xf]
        %v1080 = vld [vmem:[#allocation3 + $0xb0] sm:$0xf]
        %v1081 = vld [vmem:[#allocation3 + $0xb4] sm:$0xf]
        %v1082 = vld [vmem:[#allocation3 + $0xb8] sm:$0xf]
        %v1083 = vld [vmem:[#allocation3 + $0xbc] sm:$0xf]
        %v1084 = vld [vmem:[#allocation3 + $0xc0] sm:$0xf]
        %v1085 = vld [vmem:[#allocation3 + $0xc4] sm:$0xf]
        %v1086 = vld [vmem:[#allocation3 + $0xc8] sm:$0xf]
        %v1087 = vld [vmem:[#allocation3 + $0xcc] sm:$0xf]
        %v1088 = vld [vmem:[#allocation3 + $0xd0] sm:$0xf]
        %v1089 = vld [vmem:[#allocation3 + $0xd4] sm:$0xf]
        %v1090 = vld [vmem:[#allocation3 + $0xd8] sm:$0xf]
        %v1091 = vld [vmem:[#allocation3 + $0xdc] sm:$0xf]
        %v1092 = vld [vmem:[#allocation3 + $0xe0] sm:$0xf]
        %v1093 = vld [vmem:[#allocation3 + $0xe4] sm:$0xf]
        %v1094 = vld [vmem:[#allocation3 + $0xe8] sm:$0xf]
        %v1095 = vld [vmem:[#allocation3 + $0xec] sm:$0xf]
        %v1096 = vld [vmem:[#allocation3 + $0xf0] sm:$0xf]
        %v1097 = vld [vmem:[#allocation3 + $0xf4] sm:$0xf]
        %v1098 = vld [vmem:[#allocation3 + $0xf8] sm:$0xf]
        %v1099 = vld [vmem:[#allocation3 + $0xfc] sm:$0xf]
        %v1100 = vld [vmem:[#allocation3 + $0x100] sm:$0xf]
        %v1101 = vld [vmem:[#allocation3 + $0x104] sm:$0xf]
        %v1102 = vld [vmem:[#allocation3 + $0x108] sm:$0xf]
        %v1103 = vld [vmem:[#allocation3 + $0x10c] sm:$0xf]
        %v1104 = vld [vmem:[#allocation3 + $0x110] sm:$0xf]
        %v1105 = vld [vmem:[#allocation3 + $0x114] sm:$0xf]
        %v1106 = vld [vmem:[#allocation3 + $0x118] sm:$0xf]
        %v1107 = vld [vmem:[#allocation3 + $0x11c] sm:$0xf]
        %v1108 = vld [vmem:[#allocation3 + $0x120] sm:$0xf]
        %v1109 = vld [vmem:[#allocation3 + $0x124] sm:$0xf]
        %v1110 = vld [vmem:[#allocation3 + $0x128] sm:$0xf]
        %v1111 = vld [vmem:[#allocation3 + $0x12c] sm:$0xf]
        %v1112 = vld [vmem:[#allocation3 + $0x130] sm:$0xf]
        %v1113 = vld [vmem:[#allocation3 + $0x134] sm:$0xf]
        %v1114 = vld [vmem:[#allocation3 + $0x138] sm:$0xf]
        %v1115 = vld [vmem:[#allocation3 + $0x13c] sm:$0xf]
        %v1116 = vld [vmem:[#allocation3 + $0x140] sm:$0xf]
        %v1117 = vld [vmem:[#allocation3 + $0x144] sm:$0xf]
        %v1118 = vld [vmem:[#allocation3 + $0x148] sm:$0xf]
        %v1119 = vld [vmem:[#allocation3 + $0x14c] sm:$0xf]
        %v1120 = vld [vmem:[#allocation3 + $0x150] sm:$0xf]
        %v1121 = vld [vmem:[#allocation3 + $0x154] sm:$0xf]
        %v1122 = vld [vmem:[#allocation3 + $0x158] sm:$0xf]
        %v1123 = vld [vmem:[#allocation3 + $0x15c] sm:$0xf]
        %v1124 = vld [vmem:[#allocation3 + $0x160] sm:$0xf]
        %v1125 = vld [vmem:[#allocation3 + $0x164] sm:$0xf]
        %v1126 = vld [vmem:[#allocation3 + $0x168] sm:$0xf]
        %v1127 = vld [vmem:[#allocation3 + $0x16c] sm:$0xf]
        %v1128 = vld [vmem:[#allocation3 + $0x170] sm:$0xf]
        %v1129 = vld [vmem:[#allocation3 + $0x174] sm:$0xf]
        %v1130 = vld [vmem:[#allocation3 + $0x178] sm:$0xf]
        %v1131 = vld [vmem:[#allocation3 + $0x17c] sm:$0xf]
        %v1132 = vld [vmem:[#allocation3 + $0x180] sm:$0xf]
        %v1133 = vld [vmem:[#allocation3 + $0x184] sm:$0xf]
        %v1134 = vld [vmem:[#allocation3 + $0x188] sm:$0xf]
        %v1135 = vld [vmem:[#allocation3 + $0x18c] sm:$0xf]
        %v1136 = vld [vmem:[#allocation3 + $0x190] sm:$0xf]
        %v1137 = vld [vmem:[#allocation3 + $0x194] sm:$0xf]
        %v1138 = vld [vmem:[#allocation3 + $0x198] sm:$0xf]
        %v1139 = vld [vmem:[#allocation3 + $0x19c] sm:$0xf]
        %v1140 = vld [vmem:[#allocation3 + $0x1a0] sm:$0xf]
        %v1141 = vld [vmem:[#allocation3 + $0x1a4] sm:$0xf]
        %v1142 = vld [vmem:[#allocation3 + $0x1a8] sm:$0xf]
        %v1143 = vld [vmem:[#allocation3 + $0x1ac] sm:$0xf]
        %v1144 = vld [vmem:[#allocation3 + $0x1b0] sm:$0xf]
        %v1145 = vld [vmem:[#allocation3 + $0x1b4] sm:$0xf]
        %v1146 = vld [vmem:[#allocation3 + $0x1b8] sm:$0xf]
        %v1147 = vld [vmem:[#allocation3 + $0x1bc] sm:$0xf]
        %v1148 = vld [vmem:[#allocation3 + $0x1c0] sm:$0xf]
        %v1149 = vld [vmem:[#allocation3 + $0x1c4] sm:$0xf]
        %v1150 = vld [vmem:[#allocation3 + $0x1c8] sm:$0xf]
        %v1151 = vld [vmem:[#allocation3 + $0x1cc] sm:$0xf]
        %v1152 = vld [vmem:[#allocation3 + $0x1d0] sm:$0xf]
        %v1153 = vld [vmem:[#allocation3 + $0x1d4] sm:$0xf]
        %v1154 = vld [vmem:[#allocation3 + $0x1d8] sm:$0xf]
        %v1155 = vld [vmem:[#allocation3 + $0x1dc] sm:$0xf]
        %v1156 = vld [vmem:[#allocation3 + $0x1e0] sm:$0xf]
        %v1157 = vld [vmem:[#allocation3 + $0x1e4] sm:$0xf]
        %v1158 = vld [vmem:[#allocation3 + $0x1e8] sm:$0xf]
        %v1159 = vld [vmem:[#allocation3 + $0x1ec] sm:$0xf]
        %v1160 = vld [vmem:[#allocation3 + $0x1f0] sm:$0xf]
        %v1161 = vld [vmem:[#allocation3 + $0x1f4] sm:$0xf]
        %v1162 = vld [vmem:[#allocation3 + $0x1f8] sm:$0xf]
        %v1163 = vld [vmem:[#allocation3 + $0x1fc] sm:$0xf]
        %v1164 = vld [vmem:[#allocation3 + $0x200] sm:$0xf]
        %v1165 = vld [vmem:[#allocation3 + $0x204] sm:$0xf]
        %v1166 = vld [vmem:[#allocation3 + $0x208] sm:$0xf]
        %v1167 = vld [vmem:[#allocation3 + $0x20c] sm:$0xf]
        %v1168 = vld [vmem:[#allocation3 + $0x210] sm:$0xf]
        %v1169 = vld [vmem:[#allocation3 + $0x214] sm:$0xf]
        %v1170 = vld [vmem:[#allocation3 + $0x218] sm:$0xf]
        %v1171 = vld [vmem:[#allocation3 + $0x21c] sm:$0xf]
        %v1172 = vld [vmem:[#allocation3 + $0x220] sm:$0xf]
        %v1173 = vld [vmem:[#allocation3 + $0x224] sm:$0xf]
        %v1174 = vld [vmem:[#allocation3 + $0x228] sm:$0xf]
        %v1175 = vld [vmem:[#allocation3 + $0x22c] sm:$0xf]
        %v1176 = vld [vmem:[#allocation3 + $0x230] sm:$0xf]
        %v1177 = vld [vmem:[#allocation3 + $0x234] sm:$0xf]
        %v1178 = vld [vmem:[#allocation3 + $0x238] sm:$0xf]
        %v1179 = vld [vmem:[#allocation3 + $0x23c] sm:$0xf]
        %v1180 = vld [vmem:[#allocation5] sm:$0x1]
        %v1182 = vlaneseq
        %v1183 = vshrl.u32 %v1182, 7
        %v1184 = vsub.s32 0, %v1183
        %v1185 = vrot.slane %v1180, %v1184
        %v1187 = vcombine.low %v888, %v929
        %v1188 = vcombine.high %v888, %v929
        %v1189 = vcombine.low %v970, %v1011
        %v1190 = vcombine.high %v970, %v1011
        %v1192 = vunpack.c.l.s4 1983009808
        %v1193 = vunpack.c.0.s8 %v1192
        %v1194 = vlaneseq
        %v1195 = vshrl.u32 %v1194, 7
        %v1196 = vsub.s32 %v1193, %v1195
        %v1197 = vrot.slane %v1187, %v1196
        %v1199 = vunpack.c.l.s4 1983009808
        %v1200 = vunpack.c.0.s8 %v1199
        %v1201 = vlaneseq
        %v1202 = vshrl.u32 %v1201, 7
        %v1203 = vsub.s32 %v1200, %v1202
        %v1204 = vrot.slane %v1188, %v1203
        %v1206 = vunpack.c.l.s4 1983009808
        %v1207 = vunpack.c.0.s8 %v1206
        %v1208 = vlaneseq
        %v1209 = vshrl.u32 %v1208, 7
        %v1210 = vsub.s32 %v1207, %v1209
        %v1211 = vrot.slane %v1189, %v1210
        %v1213 = vunpack.c.l.s4 1983009808
        %v1214 = vunpack.c.0.s8 %v1213
        %v1215 = vlaneseq
        %v1216 = vshrl.u32 %v1215, 7
        %v1217 = vsub.s32 %v1214, %v1216
        %v1218 = vrot.slane %v1190, %v1217
        %v1219 = vcombine.low %v1197, %v1211
        %v1220 = vcombine.high %v1197, %v1211
        %v1221 = vcombine.low %v1204, %v1218
        %v1222 = vcombine.high %v1204, %v1218
        %v1223 = vcombine.low %v905, %v946
        %v1224 = vcombine.high %v905, %v946
        %v1225 = vcombine.low %v987, %v1028
        %v1226 = vcombine.high %v987, %v1028
        %v1228 = vunpack.c.l.s4 1983009808
        %v1229 = vunpack.c.0.s8 %v1228
        %v1230 = vlaneseq
        %v1231 = vshrl.u32 %v1230, 7
        %v1232 = vsub.s32 %v1229, %v1231
        %v1233 = vrot.slane %v1223, %v1232
        %v1235 = vunpack.c.l.s4 1983009808
        %v1236 = vunpack.c.0.s8 %v1235
        %v1237 = vlaneseq
        %v1238 = vshrl.u32 %v1237, 7
        %v1239 = vsub.s32 %v1236, %v1238
        %v1240 = vrot.slane %v1224, %v1239
        %v1242 = vunpack.c.l.s4 1983009808
        %v1243 = vunpack.c.0.s8 %v1242
        %v1244 = vlaneseq
        %v1245 = vshrl.u32 %v1244, 7
        %v1246 = vsub.s32 %v1243, %v1245
        %v1247 = vrot.slane %v1225, %v1246
        %v1249 = vunpack.c.l.s4 1983009808
        %v1250 = vunpack.c.0.s8 %v1249
        %v1251 = vlaneseq
        %v1252 = vshrl.u32 %v1251, 7
        %v1253 = vsub.s32 %v1250, %v1252
        %v1254 = vrot.slane %v1226, %v1253
        %v1255 = vcombine.low %v1233, %v1247
        %v1256 = vcombine.high %v1233, %v1247
        %v1257 = vcombine.low %v1240, %v1254
        %v1258 = vcombine.high %v1240, %v1254
        %v1259 = vcombine.low %v912, %v953
        %v1260 = vcombine.low %v994, %v1035
        %v1262 = vunpack.c.l.s4 1983009808
        %v1263 = vunpack.c.0.s8 %v1262
        %v1264 = vlaneseq
        %v1265 = vshrl.u32 %v1264, 7
        %v1266 = vsub.s32 %v1263, %v1265
        %v1267 = vrot.slane %v1259, %v1266
        %v1269 = vunpack.c.l.s4 1983009808
        %v1270 = vunpack.c.0.s8 %v1269
        %v1271 = vlaneseq
        %v1272 = vshrl.u32 %v1271, 7
        %v1273 = vsub.s32 %v1270, %v1272
        %v1274 = vrot.slane %v1260, %v1273
        %v1275 = vcombine.low %v1267, %v1274
        %v1429 = vunpack.c.l.b16 %v1036
        %v1430 = vunpack.c.l.b16 %v1037
        %v1431 = vunpack.c.l.b16 %v1038
        %v1432 = vunpack.c.l.b16 %v1039
        %v1433 = vunpack.c.l.b16 %v1040
        %v1434 = vunpack.c.l.b16 %v1041
        %v1435 = vunpack.c.l.b16 %v1042
        %v1436 = vunpack.c.l.b16 %v1043
        %v1437 = vunpack.c.l.b16 %v1044
        %v1438 = vunpack.c.l.b16 %v1045
        %v1439 = vunpack.c.l.b16 %v1046
        %v1440 = vunpack.c.l.b16 %v1047
        %v1441 = vunpack.c.l.b16 %v1048
        %v1442 = vunpack.c.l.b16 %v1049
        %v1443 = vunpack.c.l.b16 %v1050
        %v1444 = vunpack.c.l.b16 %v1051
        %v1445 = vunpack.c.l.b16 %v1052
        %v1446 = vunpack.c.l.b16 %v1053
        %v1447 = vunpack.c.l.b16 %v1054
        %v1448 = vunpack.c.l.b16 %v1055
        %v1449 = vunpack.c.l.b16 %v1056
        %v1450 = vunpack.c.l.b16 %v1057
        %v1451 = vunpack.c.l.b16 %v1058
        %v1452 = vunpack.c.l.b16 %v1059
        %v1453 = vunpack.c.l.b16 %v1060
        %v1454 = vunpack.c.l.b16 %v1061
        %v1455 = vunpack.c.l.b16 %v1062
        %v1456 = vunpack.c.l.b16 %v1063
        %v1457 = vunpack.c.l.b16 %v1064
        %v1458 = vunpack.c.l.b16 %v1065
        %v1459 = vunpack.c.l.b16 %v1066
        %v1460 = vunpack.c.l.b16 %v1067
        %v1461 = vunpack.c.l.b16 %v1068
        %v1462 = vunpack.c.l.b16 %v1069
        %v1463 = vunpack.c.l.b16 %v1070
        %v1464 = vunpack.c.l.b16 %v1071
        %v1465 = vunpack.c.l.b16 %v1072
        %v1466 = vunpack.c.l.b16 %v1073
        %v1467 = vunpack.c.l.b16 %v1074
        %v1468 = vunpack.c.l.b16 %v1075
        %v1469 = vunpack.c.l.b16 %v1076
        %v1470 = vunpack.c.l.b16 %v1077
        %v1471 = vunpack.c.l.b16 %v1078
        %v1472 = vunpack.c.l.b16 %v1079
        %v1473 = vunpack.c.l.b16 %v1080
        %v1474 = vunpack.c.l.b16 %v1081
        %v1475 = vunpack.c.l.b16 %v1082
        %v1476 = vunpack.c.l.b16 %v1083
        %v1477 = vunpack.c.l.b16 %v1084
        %v1478 = vunpack.c.l.b16 %v1085
        %v1479 = vunpack.c.l.b16 %v1086
        %v1480 = vunpack.c.l.b16 %v1087
        %v1481 = vunpack.c.l.b16 %v1088
        %v1482 = vunpack.c.l.b16 %v1089
        %v1483 = vunpack.c.l.b16 %v1090
        %v1484 = vunpack.c.l.b16 %v1091
        %v1485 = vunpack.c.l.b16 %v1092
        %v1486 = vunpack.c.l.b16 %v1093
        %v1487 = vunpack.c.l.b16 %v1094
        %v1488 = vunpack.c.l.b16 %v1095
        %v1489 = vunpack.c.l.b16 %v1096
        %v1490 = vunpack.c.l.b16 %v1097
        %v1491 = vunpack.c.l.b16 %v1098
        %v1492 = vunpack.c.l.b16 %v1099
        %v1493 = vunpack.c.l.b16 %v1100
        %v1494 = vunpack.c.l.b16 %v1101
        %v1495 = vunpack.c.l.b16 %v1102
        %v1496 = vunpack.c.l.b16 %v1103
        %v1497 = vunpack.c.l.b16 %v1104
        %v1498 = vunpack.c.l.b16 %v1105
        %v1499 = vunpack.c.l.b16 %v1106
        %v1500 = vunpack.c.l.b16 %v1107
        %v1501 = vunpack.c.l.b16 %v1108
        %v1502 = vunpack.c.l.b16 %v1109
        %v1503 = vunpack.c.l.b16 %v1110
        %v1504 = vunpack.c.l.b16 %v1111
        %v1505 = vunpack.c.l.b16 %v1112
        %v1506 = vunpack.c.l.b16 %v1113
        %v1507 = vunpack.c.l.b16 %v1114
        %v1508 = vunpack.c.l.b16 %v1115
        %v1509 = vunpack.c.l.b16 %v1116
        %v1510 = vunpack.c.l.b16 %v1117
        %v1511 = vunpack.c.l.b16 %v1118
        %v1512 = vunpack.c.l.b16 %v1119
        %v1513 = vunpack.c.l.b16 %v1120
        %v1514 = vunpack.c.l.b16 %v1121
        %v1515 = vunpack.c.l.b16 %v1122
        %v1516 = vunpack.c.l.b16 %v1123
        %v1517 = vunpack.c.l.b16 %v1124
        %v1518 = vunpack.c.l.b16 %v1125
        %v1519 = vunpack.c.l.b16 %v1126
        %v1520 = vunpack.c.l.b16 %v1127
        %v1521 = vunpack.c.l.b16 %v1128
        %v1522 = vunpack.c.l.b16 %v1129
        %v1523 = vunpack.c.l.b16 %v1130
        %v1524 = vunpack.c.l.b16 %v1131
        %v1525 = vunpack.c.l.b16 %v1132
        %v1526 = vunpack.c.l.b16 %v1133
        %v1527 = vunpack.c.l.b16 %v1134
        %v1528 = vunpack.c.l.b16 %v1135
        %v1529 = vunpack.c.l.b16 %v1136
        %v1530 = vunpack.c.l.b16 %v1137
        %v1531 = vunpack.c.l.b16 %v1138
        %v1532 = vunpack.c.l.b16 %v1139
        %v1533 = vunpack.c.l.b16 %v1140
        %v1534 = vunpack.c.l.b16 %v1141
        %v1535 = vunpack.c.l.b16 %v1142
        %v1536 = vunpack.c.l.b16 %v1143
        %v1537 = vunpack.c.l.b16 %v1144
        %v1538 = vunpack.c.l.b16 %v1145
        %v1539 = vunpack.c.l.b16 %v1146
        %v1540 = vunpack.c.l.b16 %v1147
        %v1541 = vunpack.c.l.b16 %v1148
        %v1542 = vunpack.c.l.b16 %v1149
        %v1543 = vunpack.c.l.b16 %v1150
        %v1544 = vunpack.c.l.b16 %v1151
        %v1545 = vunpack.c.l.b16 %v1152
        %v1546 = vunpack.c.l.b16 %v1153
        %v1547 = vunpack.c.l.b16 %v1154
        %v1548 = vunpack.c.l.b16 %v1155
        %v1549 = vunpack.c.l.b16 %v1156
        %v1550 = vunpack.c.l.b16 %v1157
        %v1551 = vunpack.c.l.b16 %v1158
        %v1552 = vunpack.c.l.b16 %v1159
        %v1553 = vunpack.c.l.b16 %v1160
        %v1554 = vunpack.c.l.b16 %v1161
        %v1555 = vunpack.c.l.b16 %v1162
        %v1556 = vunpack.c.l.b16 %v1163
        %v1557 = vunpack.c.l.b16 %v1164
        %v1558 = vunpack.c.l.b16 %v1165
        %v1559 = vunpack.c.l.b16 %v1166
        %v1560 = vunpack.c.l.b16 %v1167
        %v1561 = vunpack.c.l.b16 %v1168
        %v1562 = vunpack.c.l.b16 %v1169
        %v1563 = vunpack.c.l.b16 %v1170
        %v1564 = vunpack.c.l.b16 %v1171
        %v1565 = vunpack.c.l.b16 %v1172
        %v1566 = vunpack.c.l.b16 %v1173
        %v1567 = vunpack.c.l.b16 %v1174
        %v1568 = vunpack.c.l.b16 %v1175
        %v1569 = vunpack.c.l.b16 %v1176
        %v1570 = vunpack.c.l.b16 %v1177
        %v1571 = vunpack.c.l.b16 %v1178
        %v1572 = vunpack.c.l.b16 %v1179
        %v1573 = vpack.c.b16 %v1430, %v1429
        %v1574 = vpack.c.b16 %v1432, %v1431
        %v1575 = vpack.c.b16 %v1434, %v1433
        %v1576 = vpack.c.b16 %v1436, %v1435
        %v1577 = vpack.c.b16 %v1438, %v1437
        %v1578 = vpack.c.b16 %v1440, %v1439
        %v1579 = vpack.c.b16 %v1442, %v1441
        %v1580 = vpack.c.b16 %v1444, %v1443
        %v1581 = vpack.c.b16 %v1446, %v1445
        %v1582 = vpack.c.b16 %v1448, %v1447
        %v1583 = vpack.c.b16 %v1450, %v1449
        %v1584 = vpack.c.b16 %v1452, %v1451
        %v1585 = vpack.c.b16 %v1454, %v1453
        %v1586 = vpack.c.b16 %v1456, %v1455
        %v1587 = vpack.c.b16 %v1458, %v1457
        %v1588 = vpack.c.b16 %v1460, %v1459
        %v1589 = vpack.c.b16 %v1462, %v1461
        %v1590 = vpack.c.b16 %v1464, %v1463
        %v1591 = vpack.c.b16 %v1466, %v1465
        %v1592 = vpack.c.b16 %v1468, %v1467
        %v1593 = vpack.c.b16 %v1470, %v1469
        %v1594 = vpack.c.b16 %v1472, %v1471
        %v1595 = vpack.c.b16 %v1474, %v1473
        %v1596 = vpack.c.b16 %v1476, %v1475
        %v1597 = vpack.c.b16 %v1478, %v1477
        %v1598 = vpack.c.b16 %v1480, %v1479
        %v1599 = vpack.c.b16 %v1482, %v1481
        %v1600 = vpack.c.b16 %v1484, %v1483
        %v1601 = vpack.c.b16 %v1486, %v1485
        %v1602 = vpack.c.b16 %v1488, %v1487
        %v1603 = vpack.c.b16 %v1490, %v1489
        %v1604 = vpack.c.b16 %v1492, %v1491
        %v1605 = vpack.c.b16 %v1494, %v1493
        %v1606 = vpack.c.b16 %v1496, %v1495
        %v1607 = vpack.c.b16 %v1498, %v1497
        %v1608 = vpack.c.b16 %v1500, %v1499
        %v1609 = vpack.c.b16 %v1502, %v1501
        %v1610 = vpack.c.b16 %v1504, %v1503
        %v1611 = vpack.c.b16 %v1506, %v1505
        %v1612 = vpack.c.b16 %v1508, %v1507
        %v1613 = vpack.c.b16 %v1510, %v1509
        %v1614 = vpack.c.b16 %v1512, %v1511
        %v1615 = vpack.c.b16 %v1514, %v1513
        %v1616 = vpack.c.b16 %v1516, %v1515
        %v1617 = vpack.c.b16 %v1518, %v1517
        %v1618 = vpack.c.b16 %v1520, %v1519
        %v1619 = vpack.c.b16 %v1522, %v1521
        %v1620 = vpack.c.b16 %v1524, %v1523
        %v1621 = vpack.c.b16 %v1526, %v1525
        %v1622 = vpack.c.b16 %v1528, %v1527
        %v1623 = vpack.c.b16 %v1530, %v1529
        %v1624 = vpack.c.b16 %v1532, %v1531
        %v1625 = vpack.c.b16 %v1534, %v1533
        %v1626 = vpack.c.b16 %v1536, %v1535
        %v1627 = vpack.c.b16 %v1538, %v1537
        %v1628 = vpack.c.b16 %v1540, %v1539
        %v1629 = vpack.c.b16 %v1542, %v1541
        %v1630 = vpack.c.b16 %v1544, %v1543
        %v1631 = vpack.c.b16 %v1546, %v1545
        %v1632 = vpack.c.b16 %v1548, %v1547
        %v1633 = vpack.c.b16 %v1550, %v1549
        %v1634 = vpack.c.b16 %v1552, %v1551
        %v1635 = vpack.c.b16 %v1554, %v1553
        %v1636 = vpack.c.b16 %v1556, %v1555
        %v1637 = vpack.c.b16 %v1558, %v1557
        %v1638 = vpack.c.b16 %v1560, %v1559
        %v1639 = vpack.c.b16 %v1562, %v1561
        %v1640 = vpack.c.b16 %v1564, %v1563
        %v1641 = vpack.c.b16 %v1566, %v1565
        %v1642 = vpack.c.b16 %v1568, %v1567
        %v1643 = vpack.c.b16 %v1570, %v1569
        %v1644 = vpack.c.b16 %v1572, %v1571
        %1717 = vmatprep.subr.bf16.mxu0 0
        %1718 = vmatpush1.bf16.msra.mxu0 %v1573
        %1719 = vmatprep.subr.bf16.mxu0 0
        %1720 = vmatpush1.bf16.msra.mxu0 %v1574
        %1721 = vmatprep.subr.bf16.mxu0 0
        %1722 = vmatpush1.bf16.msra.mxu0 %v1575
        %1723 = vmatprep.subr.bf16.mxu0 0
        %1724 = vmatpush1.bf16.msra.mxu0 %v1576
        %1725 = vmatprep.subr.bf16.mxu0 0
        %1726 = vmatpush1.bf16.msra.mxu0 %v1577
        %1727 = vmatprep.subr.bf16.mxu0 0
        %1728 = vmatpush1.bf16.msra.mxu0 %v1578
        %1729 = vmatprep.subr.bf16.mxu0 0
        %1730 = vmatpush1.bf16.msra.mxu0 %v1579
        %1731 = vmatprep.subr.bf16.mxu0 0
        %1732 = vmatpush1.bf16.msra.mxu0 %v1580
        %1733 = vmatprep.subr.bf16.mxu0 0
        %1734 = vmatpush1.bf16.msra.mxu0 %v1581
        %1735 = vmatprep.subr.bf16.mxu0 0
        %1736 = vmatpush1.bf16.msra.mxu0 %v1582
        %1737 = vmatprep.subr.bf16.mxu0 0
        %1738 = vmatpush1.bf16.msra.mxu0 %v1583
        %1739 = vmatprep.subr.bf16.mxu0 0
        %1740 = vmatpush1.bf16.msra.mxu0 %v1584
        %1741 = vmatprep.subr.bf16.mxu0 0
        %1742 = vmatpush1.bf16.msra.mxu0 %v1585
        %1743 = vmatprep.subr.bf16.mxu0 0
        %1744 = vmatpush1.bf16.msra.mxu0 %v1586
        %1745 = vmatprep.subr.bf16.mxu0 0
        %1746 = vmatpush1.bf16.msra.mxu0 %v1587
        %1747 = vmatprep.subr.bf16.mxu0 0
        %1748 = vmatpush1.bf16.msra.mxu0 %v1588
        %1749 = vmatprep.mubr.bf16.mxu0 %v1220
        %1750 = vmatmul.mubr.bf16.gmra.mrb[0].mxu0 %v1219
        %v1751 = vpop.f32.mrb[0].mxu0
        %v1752 = vadd.f32 %v1185, %v1751
        %v1753 = vpop.f32.mrb[0].mxu0
        %v1754 = vpop.f32.mrb[0].mxu0
        %v1755 = vadd.f32 %v1185, %v1754
        %v1756 = vpop.f32.mrb[0].mxu0
        %1757 = vdwg.mxu0
        %1758 = vmatprep.subr.bf16.mxu0 0
        %1759 = vmatpush1.bf16.msra.mxu0 %v1589
        %1760 = vmatprep.subr.bf16.mxu0 0
        %1761 = vmatpush1.bf16.msra.mxu0 %v1590
        %1762 = vmatprep.subr.bf16.mxu0 0
        %1763 = vmatpush1.bf16.msra.mxu0 %v1591
        %1764 = vmatprep.subr.bf16.mxu0 0
        %1765 = vmatpush1.bf16.msra.mxu0 %v1592
        %1766 = vmatprep.subr.bf16.mxu0 0
        %1767 = vmatpush1.bf16.msra.mxu0 %v1593
        %1768 = vmatprep.subr.bf16.mxu0 0
        %1769 = vmatpush1.bf16.msra.mxu0 %v1594
        %1770 = vmatprep.subr.bf16.mxu0 0
        %1771 = vmatpush1.bf16.msra.mxu0 %v1595
        %1772 = vmatprep.subr.bf16.mxu0 0
        %1773 = vmatpush1.bf16.msra.mxu0 %v1596
        %1774 = vmatprep.subr.bf16.mxu0 0
        %1775 = vmatpush1.bf16.msra.mxu0 %v1597
        %1776 = vmatprep.subr.bf16.mxu0 0
        %1777 = vmatpush1.bf16.msra.mxu0 %v1598
        %1778 = vmatprep.subr.bf16.mxu0 0
        %1779 = vmatpush1.bf16.msra.mxu0 %v1599
        %1780 = vmatprep.subr.bf16.mxu0 0
        %1781 = vmatpush1.bf16.msra.mxu0 %v1600
        %1782 = vmatprep.subr.bf16.mxu0 0
        %1783 = vmatpush1.bf16.msra.mxu0 %v1601
        %1784 = vmatprep.subr.bf16.mxu0 0
        %1785 = vmatpush1.bf16.msra.mxu0 %v1602
        %1786 = vmatprep.subr.bf16.mxu0 0
        %1787 = vmatpush1.bf16.msra.mxu0 %v1603
        %1788 = vmatprep.subr.bf16.mxu0 0
        %1789 = vmatpush1.bf16.msra.mxu0 %v1604
        %1790 = vmatprep.mubr.bf16.mxu0 %v1222
        %1791 = vmatmul.mubr.bf16.gmra.mrb[0].mxu0 %v1221
        %v1792 = vpop.f32.mrb[0].mxu0
        %v1793 = vadd.f32 %v1752, %v1792
        %v1794 = vpop.f32.mrb[0].mxu0
        %v1795 = vpop.f32.mrb[0].mxu0
        %v1796 = vadd.f32 %v1755, %v1795
        %v1797 = vpop.f32.mrb[0].mxu0
        %1798 = vdwg.mxu0
        %1799 = vmatprep.subr.bf16.mxu0 0
        %1800 = vmatpush1.bf16.msra.mxu0 %v1605
        %1801 = vmatprep.subr.bf16.mxu0 0
        %1802 = vmatpush1.bf16.msra.mxu0 %v1606
        %1803 = vmatprep.subr.bf16.mxu0 0
        %1804 = vmatpush1.bf16.msra.mxu0 %v1607
        %1805 = vmatprep.subr.bf16.mxu0 0
        %1806 = vmatpush1.bf16.msra.mxu0 %v1608
        %1807 = vmatprep.subr.bf16.mxu0 0
        %1808 = vmatpush1.bf16.msra.mxu0 %v1609
        %1809 = vmatprep.subr.bf16.mxu0 0
        %1810 = vmatpush1.bf16.msra.mxu0 %v1610
        %1811 = vmatprep.subr.bf16.mxu0 0
        %1812 = vmatpush1.bf16.msra.mxu0 %v1611
        %1813 = vmatprep.subr.bf16.mxu0 0
        %1814 = vmatpush1.bf16.msra.mxu0 %v1612
        %1815 = vmatprep.subr.bf16.mxu0 0
        %1816 = vmatpush1.bf16.msra.mxu0 %v1613
        %1817 = vmatprep.subr.bf16.mxu0 0
        %1818 = vmatpush1.bf16.msra.mxu0 %v1614
        %1819 = vmatprep.subr.bf16.mxu0 0
        %1820 = vmatpush1.bf16.msra.mxu0 %v1615
        %1821 = vmatprep.subr.bf16.mxu0 0
        %1822 = vmatpush1.bf16.msra.mxu0 %v1616
        %1823 = vmatprep.subr.bf16.mxu0 0
        %1824 = vmatpush1.bf16.msra.mxu0 %v1617
        %1825 = vmatprep.subr.bf16.mxu0 0
        %1826 = vmatpush1.bf16.msra.mxu0 %v1618
        %1827 = vmatprep.subr.bf16.mxu0 0
        %1828 = vmatpush1.bf16.msra.mxu0 %v1619
        %1829 = vmatprep.subr.bf16.mxu0 0
        %1830 = vmatpush1.bf16.msra.mxu0 %v1620
        %1831 = vmatprep.mubr.bf16.mxu0 %v1256
        %1832 = vmatmul.mubr.bf16.gmra.mrb[0].mxu0 %v1255
        %v1833 = vpop.f32.mrb[0].mxu0
        %v1834 = vadd.f32 %v1793, %v1833
        %v1835 = vpop.f32.mrb[0].mxu0
        %v1836 = vpop.f32.mrb[0].mxu0
        %v1837 = vadd.f32 %v1796, %v1836
        %v1838 = vpop.f32.mrb[0].mxu0
        %1839 = vdwg.mxu0
        %1840 = vmatprep.subr.bf16.mxu0 0
        %1841 = vmatpush1.bf16.msra.mxu0 %v1621
        %1842 = vmatprep.subr.bf16.mxu0 0
        %1843 = vmatpush1.bf16.msra.mxu0 %v1622
        %1844 = vmatprep.subr.bf16.mxu0 0
        %1845 = vmatpush1.bf16.msra.mxu0 %v1623
        %1846 = vmatprep.subr.bf16.mxu0 0
        %1847 = vmatpush1.bf16.msra.mxu0 %v1624
        %1848 = vmatprep.subr.bf16.mxu0 0
        %1849 = vmatpush1.bf16.msra.mxu0 %v1625
        %1850 = vmatprep.subr.bf16.mxu0 0
        %1851 = vmatpush1.bf16.msra.mxu0 %v1626
        %1852 = vmatprep.subr.bf16.mxu0 0
        %1853 = vmatpush1.bf16.msra.mxu0 %v1627
        %1854 = vmatprep.subr.bf16.mxu0 0
        %1855 = vmatpush1.bf16.msra.mxu0 %v1628
        %1856 = vmatprep.subr.bf16.mxu0 0
        %1857 = vmatpush1.bf16.msra.mxu0 %v1629
        %1858 = vmatprep.subr.bf16.mxu0 0
        %1859 = vmatpush1.bf16.msra.mxu0 %v1630
        %1860 = vmatprep.subr.bf16.mxu0 0
        %1861 = vmatpush1.bf16.msra.mxu0 %v1631
        %1862 = vmatprep.subr.bf16.mxu0 0
        %1863 = vmatpush1.bf16.msra.mxu0 %v1632
        %1864 = vmatprep.subr.bf16.mxu0 0
        %1865 = vmatpush1.bf16.msra.mxu0 %v1633
        %1866 = vmatprep.subr.bf16.mxu0 0
        %1867 = vmatpush1.bf16.msra.mxu0 %v1634
        %1868 = vmatprep.subr.bf16.mxu0 0
        %1869 = vmatpush1.bf16.msra.mxu0 %v1635
        %1870 = vmatprep.subr.bf16.mxu0 0
        %1871 = vmatpush1.bf16.msra.mxu0 %v1636
        %1872 = vmatprep.mubr.bf16.mxu0 %v1258
        %1873 = vmatmul.mubr.bf16.gmra.mrb[0].mxu0 %v1257
        %v1874 = vpop.f32.mrb[0].mxu0
        %v1875 = vadd.f32 %v1834, %v1874
        %v1876 = vpop.f32.mrb[0].mxu0
        %v1877 = vpop.f32.mrb[0].mxu0
        %v1878 = vadd.f32 %v1837, %v1877
        %v1879 = vpop.f32.mrb[0].mxu0
        %1880 = vdwg.mxu0
        %1881 = vmatprep.subr.bf16.mxu0 0
        %1882 = vmatpush1.bf16.msra.mxu0 %v1637
        %1883 = vmatprep.subr.bf16.mxu0 0
        %1884 = vmatpush1.bf16.msra.mxu0 %v1638
        %1885 = vmatprep.subr.bf16.mxu0 0
        %1886 = vmatpush1.bf16.msra.mxu0 %v1639
        %1887 = vmatprep.subr.bf16.mxu0 0
        %1888 = vmatpush1.bf16.msra.mxu0 %v1640
        %1889 = vmatprep.subr.bf16.mxu0 0
        %1890 = vmatpush1.bf16.msra.mxu0 %v1641
        %1891 = vmatprep.subr.bf16.mxu0 0
        %1892 = vmatpush1.bf16.msra.mxu0 %v1642
        %1893 = vmatprep.subr.bf16.mxu0 0
        %1894 = vmatpush1.bf16.msra.mxu0 %v1643
        %1895 = vmatprep.subr.bf16.mxu0 0
        %1896 = vmatpush1.bf16.msra.mxu0 %v1644
        %1897 = vmatprep.subr.bf16.mxu0 0
        %1898 = vmatpush1.bf16.msra.mxu0 0
        %1899 = vmatprep.subr.bf16.mxu0 0
        %1900 = vmatpush1.bf16.msra.mxu0 0
        %1901 = vmatprep.subr.bf16.mxu0 0
        %1902 = vmatpush1.bf16.msra.mxu0 0
        %1903 = vmatprep.subr.bf16.mxu0 0
        %1904 = vmatpush1.bf16.msra.mxu0 0
        %1905 = vmatprep.subr.bf16.mxu0 0
        %1906 = vmatpush1.bf16.msra.mxu0 0
        %1907 = vmatprep.subr.bf16.mxu0 0
        %1908 = vmatpush1.bf16.msra.mxu0 0
        %1909 = vmatprep.subr.bf16.mxu0 0
        %1910 = vmatpush1.bf16.msra.mxu0 0
        %1911 = vmatprep.subr.bf16.mxu0 0
        %1912 = vmatpush1.bf16.msra.mxu0 0
        %1913 = vmatprep.mubr.bf16.mxu0 0
        %1914 = vmatmul.mubr.bf16.gmra.mrb[0].mxu0 %v1275
        %v1915 = vpop.f32.mrb[0].mxu0
        %v1916 = vadd.f32 %v1875, %v1915
        %v1917 = vpop.f32.mrb[0].mxu0
        %v1918 = vpop.f32.mrb[0].mxu0
        %v1919 = vadd.f32 %v1878, %v1918
        %v1920 = vpop.f32.mrb[0].mxu0
        %1921 = vdwg.mxu0
        %v1924 = vcombine.high %v1916, %v1916
        %v1925 = vcombine.high %v1919, %v1919
        %v1928 = vpack.c.bf16 %v1916, %v1916
        %v1929 = vpack.c.bf16 %v1924, %v1924
        %v1930 = vpack.c.bf16 %v1919, %v1919
        %v1931 = vpack.c.bf16 %v1925, %v1925
        %1932 = vst [vmem:[%s360] sm:$0x3] %v1928
        %1933 = vst [vmem:[%s360 + $0x2] sm:$0x3] %v1929
        %1934 = vst [vmem:[%s360 + $0x4] sm:$0x3] %v1930
        %1935 = vst [vmem:[%s360 + $0x6] sm:$0x3] %v1931
        %v1936 = vadd.f32 %v1916, %v1919
        %v1937 = vrot.slane %v1936, 4
        %v1938 = vadd.f32 %v1936, %v1937
        %v1939 = vrot.slane %v1938, 2
        %v1940 = vadd.f32 %v1938, %v1939
        %v1941 = vrot.slane %v1940, 1
        %v1942 = vadd.f32 %v1940, %v1941
        %1943 = vst [vmem:[%s368] sm:$0x1] %v1942
        %v1944 = vmul.f32 %v1916, %v1916
        %v1945 = vmul.f32 %v1919, %v1919
        %v1946 = vadd.f32 %v1944, %v1945
        %v1947 = vrot.slane %v1946, 4
        %v1948 = vadd.f32 %v1946, %v1947
        %v1949 = vrot.slane %v1948, 2
        %v1950 = vadd.f32 %v1948, %v1949
        %v1951 = vrot.slane %v1950, 1
        %v1952 = vadd.f32 %v1950, %v1951
        %1953 = vst [vmem:[%s371] sm:$0x1] %v1952
        %p1954 = scmp.lt.s32.totalorder %s22, 1
        %s1955 = scalar_select %p1954, %s22, 1
        %s1956 = smul.addr %s1955, 4
        %s1957 = smul.addr %s1956, 2
        %s1958 = scalar_lea.vmem %s5, %s1957
        %p1959 = scmp.lt.s32.totalorder %s22, 1
        %s1960 = scalar_select %p1959, %s22, 1
        %s1961 = smul.addr %s1960, 2
        %s1962 = smul.addr %s1961, 2
        %s1963 = scalar_lea.vmem %s6, %s1962
        %p1964 = scmp.lt.s32.totalorder %s22, 1
        %s1965 = scalar_select %p1964, %s22, 1
        %s1966 = scalar_lea.vmem %s7, %s1965
        %p1967 = scmp.lt.s32.totalorder %s22, 1
        %s1968 = scalar_select %p1967, %s22, 1
        %s1969 = scalar_lea.vmem %s8, %s1968
        // Predicated region
        $region53: #{decoder_forward.8} parent=39 // pred_check
          %p1970 = pneg %p150
        $region54: #{decoder_forward.8} parent=39 // pred_check_branch
          %1972 = sbr.rel (%p1970) target = $region56
        $region55: #{decoder_forward.8} parent=39 // pred_region
          _
        $region56: #{decoder_forward.8} parent=39 // pred_fallthru
          _
        // Predicated region
        $region57: #{decoder_forward.8} parent=39 // pred_check
          %p1973 = pneg %p176
        $region58: #{decoder_forward.8} parent=39 // pred_check_branch
          %1975 = sbr.rel (%p1973) target = $region60
        $region59: #{decoder_forward.8} parent=39 // pred_region
          _
        $region60: #{decoder_forward.8} parent=39 // pred_fallthru
          _
        // Predicated region
        $region61: #{decoder_forward.8} parent=39 // pred_check
          %p1976 = pneg %p202
        $region62: #{decoder_forward.8} parent=39 // pred_check_branch
          %1978 = sbr.rel (%p1976) target = $region64
        $region63: #{decoder_forward.8} parent=39 // pred_region
          _
        $region64: #{decoder_forward.8} parent=39 // pred_fallthru
          _
        // Predicated region
        $region65: #{decoder_forward.8} parent=39 // pred_check
          %p1979 = pneg %p228
        $region66: #{decoder_forward.8} parent=39 // pred_check_branch
          %1981 = sbr.rel (%p1979) target = $region68
        $region67: #{decoder_forward.8} parent=39 // pred_region
          _
        $region68: #{decoder_forward.8} parent=39 // pred_fallthru
          _
      $region40: #{decoder_forward.8} parent=5 // pred_fallthru
        _
      %p1982 = scmp.le.s32.totalorder 2, %s17
      // Predicated region
      $region69: #{decoder_forward.8} parent=5 // pred_check
        %p1983 = pneg %p1982
      $region70: #{decoder_forward.8} parent=5 // pred_check_branch
        %1985 = sbr.rel (%p1983) target = $region72
      $region71: #{decoder_forward.8} parent=5 // pred_region
        %s1986 = ssub.s32 %s17, 2
        // Predicated region
        $region73: #{decoder_forward.8} parent=71 // pred_check
          %p1987 = pneg %p156
        $region74: #{decoder_forward.8} parent=71 // pred_check_branch
          %1989 = sbr.rel (%p1987) target = $region76
        $region75: #{decoder_forward.8} parent=71 // pred_region
          %p1990 = scmp.lt.s32.totalorder %s23, 1
          %s1991 = scalar_select %p1990, %s23, 1
          %s1992 = smul.addr %s1991, 4
          %s1993 = smul.addr %s1992, 2
          %s1994 = scalar_lea.vmem %s5, %s1993
        $region76: #{decoder_forward.8} parent=71 // pred_fallthru
          _
        // Predicated region
        $region77: #{decoder_forward.8} parent=71 // pred_check
          %p1995 = pneg %p182
        $region78: #{decoder_forward.8} parent=71 // pred_check_branch
          %1997 = sbr.rel (%p1995) target = $region80
        $region79: #{decoder_forward.8} parent=71 // pred_region
          %p1998 = scmp.lt.s32.totalorder %s23, 1
          %s1999 = scalar_select %p1998, %s23, 1
          %s2000 = smul.addr %s1999, 2
          %s2001 = smul.addr %s2000, 2
          %s2002 = scalar_lea.vmem %s6, %s2001
        $region80: #{decoder_forward.8} parent=71 // pred_fallthru
          _
        // Predicated region
        $region81: #{decoder_forward.8} parent=71 // pred_check
          %p2003 = pneg %p208
        $region82: #{decoder_forward.8} parent=71 // pred_check_branch
          %2005 = sbr.rel (%p2003) target = $region84
        $region83: #{decoder_forward.8} parent=71 // pred_region
          %p2006 = scmp.lt.s32.totalorder %s23, 1
          %s2007 = scalar_select %p2006, %s23, 1
          %s2008 = scalar_lea.vmem %s7, %s2007
        $region84: #{decoder_forward.8} parent=71 // pred_fallthru
          _
        // Predicated region
        $region85: #{decoder_forward.8} parent=71 // pred_check
          %p2009 = pneg %p234
        $region86: #{decoder_forward.8} parent=71 // pred_check_branch
          %2011 = sbr.rel (%p2009) target = $region88
        $region87: #{decoder_forward.8} parent=71 // pred_region
          %p2012 = scmp.lt.s32.totalorder %s23, 1
          %s2013 = scalar_select %p2012, %s23, 1
          %s2014 = scalar_lea.vmem %s8, %s2013
        $region88: #{decoder_forward.8} parent=71 // pred_fallthru
          _
      $region72: #{decoder_forward.8} parent=5 // pred_fallthru
        _
    $region6: #{decoder_forward.8} parent=1 // loop_footer
      %s21 = sadd.s32 1, %s17
    $region7: #{decoder_forward.8} parent=1 // loop_footer_branch
      %16 = sbr.rel target = $region3
    $region8: #{decoder_forward.8} parent=1 // loop_exit
      _
    %2015 = vsyncpa [#allocation4], 1
    %s2016 = scalar_lea.sflag [#allocation4], 1
    %2017 = vsyncpa %s2016, 1
    %2018 = vsyncpa [#allocation6], 1

// kernel: decoder_forward.11
$region0: #{decoder_forward.11}
  #allocation0 [shape = 'u32[]', space=smem, size = 0x4, offset = 0x4, fixed_abs, tag = 'smem constant byte address 0x4 - core index']
  #allocation1 [shape = 'u32[144,128]{1,0:T(1,128)}', space=vmem, size = 0x12000, scoped, tag = 'internal scratch']
  #allocation2 [shape = 'bf16[10,10,128]{2,1,0:T(8,128)(2,1)}', space=vmem, size = 0xa000, scoped, tag = 'scratch operand']
  %s0 = inlined_call_operand.vmem [shape: bf16[2,4,4,128], index: 0, kind: input, shape index: {}]
  %s1 = inlined_call_operand.vmem [shape: bf16[1152,128], index: 1, kind: input, shape index: {}]
  %s2 = inlined_call_operand.vmem [shape: f32[1,128], index: 2, kind: input, shape index: {}]
  %s3 = inlined_call_operand.vmem [shape: bf16[128,128], index: 3, kind: input, shape index: {}]
  %s4 = inlined_call_operand.vmem [shape: f32[1,128], index: 4, kind: input, shape index: {}]
  %s5 = inlined_call_operand.vmem [shape: bf16[2,8,8,128], index: 5, kind: output, shape index: {0}]
  %s6 = inlined_call_operand.vmem [shape: f32[2,4,4,128], index: 6, kind: output, shape index: {1}]
  %s7 = inlined_call_operand.vmem [shape: f32[2,1,128], index: 7, kind: output, shape index: {2}]
  %s8 = inlined_call_operand.vmem [shape: f32[2,1,128], index: 8, kind: output, shape index: {3}]
  %9 = xla_tuple %s5, %s6, %s7, %s8
  %s10 = sld [smem:[#allocation0]]
  $region77: #{decoder_forward.11} parent=0
    _
  %s12 = ssub.s32 1, %s10
  %s13 = scalar_select 0, %s12, %s10
  loop: start=0, step=1, limit=4
  $region2: #{decoder_forward.11} parent=0 // loop_pre_header
    _
  $region3: #{decoder_forward.11} parent=0 // loop_header
    %s15 = sphi 0, %s19
    %p16 = scmp.ge.s32.totalorder %s15, 4
    %s25 = sphi 0, %s27
    %s28 = sphi 0, %s25
    %s29 = sphi 0, %s28
    %s45 = sphi 0, %s29
    %s49 = sphi 0, %s49
    %s51 = sphi 0, %s49
    %s52 = sphi 0, %s51
    %s66 = sphi 0, %s52
    %s70 = sphi 0, %s70
    %s72 = sphi 0, %s70
    %s73 = sphi 0, %s72
    %s87 = sphi 0, %s73
    %s91 = sphi 0, %s91
    %s93 = sphi 0, %s91
    %s94 = sphi 0, %s93
    %s108 = sphi 0, %s94
    %s112 = sphi 0, %s112
    %s114 = sphi 0, %s112
    %s115 = sphi 0, %s114
    %s129 = sphi 0, %s115
    %s135 = sphi 0, %s137
    %s138 = sphi 0, %s135
    %s139 = sphi 0, %s138
    %s155 = sphi 0, %s139
    %s161 = sphi 0, %s163
    %s164 = sphi 0, %s161
    %s165 = sphi 0, %s164
    %s181 = sphi 0, %s165
    %s187 = sphi 0, %s189
    %s190 = sphi 0, %s187
    %s191 = sphi 0, %s190
    %s207 = sphi 0, %s191
    %s213 = sphi 0, %s215
    %s216 = sphi 0, %s213
    %s217 = sphi 0, %s216
    %s233 = sphi 0, %s217
  $region4: #{decoder_forward.11} parent=0 // loop_header_branch
    %18 = sbr.rel (%p16) target = $region8
  $region5: #{decoder_forward.11} parent=0 // loop_body
    %s20 = ssub.s32 %s15, 1
    %s21 = ssub.s32 %s15, 2
    %s22 = sadd.s32 %s15, 1
    %s23 = ssub.s32 %s15, %s22
    %p24 = scmp.eq.s32.totalorder %s23, 0
    %s26 = sadd.s32 %s25, 1
    %s27 = scalar_select %p24, %s25, %s26
    %p30 = pneg %p24
    %p31 = scmp.eq.s32.totalorder %s15, 1
    %p32 = por %p30, %p31
    %p33 = scmp.ne.s32.totalorder %s25, %s28
    %p34 = scmp.eq.s32.totalorder %s15, 0
    %p35 = por %p33, %p34
    %p36 = scmp.ne.s32.totalorder %s25, %s28
    %p37 = scmp.eq.s32.totalorder %s20, 1
    %p38 = por %p36, %p37
    %p39 = scmp.ne.s32.totalorder %s28, %s29
    %p40 = scmp.eq.s32.totalorder %s20, 0
    %p41 = por %p39, %p40
    %p42 = scmp.ne.s32.totalorder %s28, %s29
    %p43 = scmp.eq.s32.totalorder %s21, 1
    %p44 = por %p42, %p43
    %p46 = scmp.ne.s32.totalorder %s29, %s45
    %p47 = scmp.eq.s32.totalorder %s21, 0
    %p48 = por %p46, %p47
    %s50 = sadd.s32 %s49, 1
    %p53 = scmp.eq.s32.totalorder %s15, 1
    %p54 = scmp.ne.s32.totalorder %s49, %s51
    %p55 = scmp.eq.s32.totalorder %s15, 0
    %p56 = por %p54, %p55
    %p57 = scmp.ne.s32.totalorder %s49, %s51
    %p58 = scmp.eq.s32.totalorder %s20, 1
    %p59 = por %p57, %p58
    %p60 = scmp.ne.s32.totalorder %s51, %s52
    %p61 = scmp.eq.s32.totalorder %s20, 0
    %p62 = por %p60, %p61
    %p63 = scmp.ne.s32.totalorder %s51, %s52
    %p64 = scmp.eq.s32.totalorder %s21, 1
    %p65 = por %p63, %p64
    %p67 = scmp.ne.s32.totalorder %s52, %s66
    %p68 = scmp.eq.s32.totalorder %s21, 0
    %p69 = por %p67, %p68
    %s71 = sadd.s32 %s70, 1
    %p74 = scmp.eq.s32.totalorder %s15, 1
    %p75 = scmp.ne.s32.totalorder %s70, %s72
    %p76 = scmp.eq.s32.totalorder %s15, 0
    %p77 = por %p75, %p76
    %p78 = scmp.ne.s32.totalorder %s70, %s72
    %p79 = scmp.eq.s32.totalorder %s20, 1
    %p80 = por %p78, %p79
    %p81 = scmp.ne.s32.totalorder %s72, %s73
    %p82 = scmp.eq.s32.totalorder %s20, 0
    %p83 = por %p81, %p82
    %p84 = scmp.ne.s32.totalorder %s72, %s73
    %p85 = scmp.eq.s32.totalorder %s21, 1
    %p86 = por %p84, %p85
    %p88 = scmp.ne.s32.totalorder %s73, %s87
    %p89 = scmp.eq.s32.totalorder %s21, 0
    %p90 = por %p88, %p89
    %s92 = sadd.s32 %s91, 1
    %p95 = scmp.eq.s32.totalorder %s15, 1
    %p96 = scmp.ne.s32.totalorder %s91, %s93
    %p97 = scmp.eq.s32.totalorder %s15, 0
    %p98 = por %p96, %p97
    %p99 = scmp.ne.s32.totalorder %s91, %s93
    %p100 = scmp.eq.s32.totalorder %s20, 1
    %p101 = por %p99, %p100
    %p102 = scmp.ne.s32.totalorder %s93, %s94
    %p103 = scmp.eq.s32.totalorder %s20, 0
    %p104 = por %p102, %p103
    %p105 = scmp.ne.s32.totalorder %s93, %s94
    %p106 = scmp.eq.s32.totalorder %s21, 1
    %p107 = por %p105, %p106
    %p109 = scmp.ne.s32.totalorder %s94, %s108
    %p110 = scmp.eq.s32.totalorder %s21, 0
    %p111 = por %p109, %p110
    %s113 = sadd.s32 %s112, 1
    %p116 = scmp.eq.s32.totalorder %s15, 1
    %p117 = scmp.ne.s32.totalorder %s112, %s114
    %p118 = scmp.eq.s32.totalorder %s15, 0
    %p119 = por %p117, %p118
    %p120 = scmp.ne.s32.totalorder %s112, %s114
    %p121 = scmp.eq.s32.totalorder %s20, 1
    %p122 = por %p120, %p121
    %p123 = scmp.ne.s32.totalorder %s114, %s115
    %p124 = scmp.eq.s32.totalorder %s20, 0
    %p125 = por %p123, %p124
    %p126 = scmp.ne.s32.totalorder %s114, %s115
    %p127 = scmp.eq.s32.totalorder %s21, 1
    %p128 = por %p126, %p127
    %p130 = scmp.ne.s32.totalorder %s115, %s129
    %p131 = scmp.eq.s32.totalorder %s21, 0
    %p132 = por %p130, %p131
    %s133 = ssub.s32 %s15, %s22
    %p134 = scmp.eq.s32.totalorder %s133, 0
    %s136 = sadd.s32 %s135, 1
    %s137 = scalar_select %p134, %s135, %s136
    %p140 = pneg %p134
    %p141 = scmp.eq.s32.totalorder %s15, 1
    %p142 = por %p140, %p141
    %p143 = scmp.ne.s32.totalorder %s135, %s138
    %p144 = scmp.eq.s32.totalorder %s15, 0
    %p145 = por %p143, %p144
    %p146 = scmp.ne.s32.totalorder %s135, %s138
    %p147 = scmp.eq.s32.totalorder %s20, 1
    %p148 = por %p146, %p147
    %p149 = scmp.ne.s32.totalorder %s138, %s139
    %p150 = scmp.eq.s32.totalorder %s20, 0
    %p151 = por %p149, %p150
    %p152 = scmp.ne.s32.totalorder %s138, %s139
    %p153 = scmp.eq.s32.totalorder %s21, 1
    %p154 = por %p152, %p153
    %p156 = scmp.ne.s32.totalorder %s139, %s155
    %p157 = scmp.eq.s32.totalorder %s21, 0
    %p158 = por %p156, %p157
    %s159 = ssub.s32 %s15, %s22
    %p160 = scmp.eq.s32.totalorder %s159, 0
    %s162 = sadd.s32 %s161, 1
    %s163 = scalar_select %p160, %s161, %s162
    %p166 = pneg %p160
    %p167 = scmp.eq.s32.totalorder %s15, 1
    %p168 = por %p166, %p167
    %p169 = scmp.ne.s32.totalorder %s161, %s164
    %p170 = scmp.eq.s32.totalorder %s15, 0
    %p171 = por %p169, %p170
    %p172 = scmp.ne.s32.totalorder %s161, %s164
    %p173 = scmp.eq.s32.totalorder %s20, 1
    %p174 = por %p172, %p173
    %p175 = scmp.ne.s32.totalorder %s164, %s165
    %p176 = scmp.eq.s32.totalorder %s20, 0
    %p177 = por %p175, %p176
    %p178 = scmp.ne.s32.totalorder %s164, %s165
    %p179 = scmp.eq.s32.totalorder %s21, 1
    %p180 = por %p178, %p179
    %p182 = scmp.ne.s32.totalorder %s165, %s181
    %p183 = scmp.eq.s32.totalorder %s21, 0
    %p184 = por %p182, %p183
    %s185 = ssub.s32 %s15, %s22
    %p186 = scmp.eq.s32.totalorder %s185, 0
    %s188 = sadd.s32 %s187, 1
    %s189 = scalar_select %p186, %s187, %s188
    %p192 = pneg %p186
    %p193 = scmp.eq.s32.totalorder %s15, 1
    %p194 = por %p192, %p193
    %p195 = scmp.ne.s32.totalorder %s187, %s190
    %p196 = scmp.eq.s32.totalorder %s15, 0
    %p197 = por %p195, %p196
    %p198 = scmp.ne.s32.totalorder %s187, %s190
    %p199 = scmp.eq.s32.totalorder %s20, 1
    %p200 = por %p198, %p199
    %p201 = scmp.ne.s32.totalorder %s190, %s191
    %p202 = scmp.eq.s32.totalorder %s20, 0
    %p203 = por %p201, %p202
    %p204 = scmp.ne.s32.totalorder %s190, %s191
    %p205 = scmp.eq.s32.totalorder %s21, 1
    %p206 = por %p204, %p205
    %p208 = scmp.ne.s32.totalorder %s191, %s207
    %p209 = scmp.eq.s32.totalorder %s21, 0
    %p210 = por %p208, %p209
    %s211 = ssub.s32 %s15, %s22
    %p212 = scmp.eq.s32.totalorder %s211, 0
    %s214 = sadd.s32 %s213, 1
    %s215 = scalar_select %p212, %s213, %s214
    %p218 = pneg %p212
    %p219 = scmp.eq.s32.totalorder %s15, 1
    %p220 = por %p218, %p219
    %p221 = scmp.ne.s32.totalorder %s213, %s216
    %p222 = scmp.eq.s32.totalorder %s15, 0
    %p223 = por %p221, %p222
    %p224 = scmp.ne.s32.totalorder %s213, %s216
    %p225 = scmp.eq.s32.totalorder %s20, 1
    %p226 = por %p224, %p225
    %p227 = scmp.ne.s32.totalorder %s216, %s217
    %p228 = scmp.eq.s32.totalorder %s20, 0
    %p229 = por %p227, %p228
    %p230 = scmp.ne.s32.totalorder %s216, %s217
    %p231 = scmp.eq.s32.totalorder %s21, 1
    %p232 = por %p230, %p231
    %p234 = scmp.ne.s32.totalorder %s217, %s233
    %p235 = scmp.eq.s32.totalorder %s21, 0
    %p236 = por %p234, %p235
    %p237 = scmp.le.s32.totalorder 1, %s15
    %p238 = scmp.lt.s32.totalorder %s15, 3
    %p239 = pnand %p237, %p238
    %p240 = pneg %p239
    // Predicated region
    $region9: #{decoder_forward.11} parent=5 // pred_check
      _
    $region10: #{decoder_forward.11} parent=5 // pred_check_branch
      %242 = sbr.rel (%p239) target = $region12
    $region11: #{decoder_forward.11} parent=5 // pred_region
      %s243 = ssub.s32 %s15, 1
      // Predicated region
      $region13: #{decoder_forward.11} parent=11 // pred_check
        %p244 = pneg %p62
      $region14: #{decoder_forward.11} parent=11 // pred_check_branch
        %246 = sbr.rel (%p244) target = $region16
      $region15: #{decoder_forward.11} parent=11 // pred_region
        _
      $region16: #{decoder_forward.11} parent=11 // pred_fallthru
        _
      // Predicated region
      $region17: #{decoder_forward.11} parent=11 // pred_check
        %p247 = pneg %p83
      $region18: #{decoder_forward.11} parent=11 // pred_check_branch
        %249 = sbr.rel (%p247) target = $region20
      $region19: #{decoder_forward.11} parent=11 // pred_region
        _
      $region20: #{decoder_forward.11} parent=11 // pred_fallthru
        _
      // Predicated region
      $region21: #{decoder_forward.11} parent=11 // pred_check
        %p250 = pneg %p104
      $region22: #{decoder_forward.11} parent=11 // pred_check_branch
        %252 = sbr.rel (%p250) target = $region24
      $region23: #{decoder_forward.11} parent=11 // pred_region
        _
      $region24: #{decoder_forward.11} parent=11 // pred_fallthru
        _
      // Predicated region
      $region25: #{decoder_forward.11} parent=11 // pred_check
        %p253 = pneg %p125
      $region26: #{decoder_forward.11} parent=11 // pred_check_branch
        %255 = sbr.rel (%p253) target = $region28
      $region27: #{decoder_forward.11} parent=11 // pred_region
        _
      $region28: #{decoder_forward.11} parent=11 // pred_fallthru
        _
    $region12: #{decoder_forward.11} parent=5 // pred_fallthru
      _
    %p256 = scmp.lt.s32.totalorder %s15, 2
    // Predicated region
    $region29: #{decoder_forward.11} parent=5 // pred_check
      %p257 = pneg %p256
    $region30: #{decoder_forward.11} parent=5 // pred_check_branch
      %259 = sbr.rel (%p257) target = $region32
    $region31: #{decoder_forward.11} parent=5 // pred_region
      // Predicated region
      $region33: #{decoder_forward.11} parent=31 // pred_check
        %p260 = pneg %p35
      $region34: #{decoder_forward.11} parent=31 // pred_check_branch
        %262 = sbr.rel (%p260) target = $region36
      $region35: #{decoder_forward.11} parent=31 // pred_region
        %p263 = scmp.lt.s32.totalorder %s15, 1
        %s264 = scalar_select %p263, %s15, 1
        %s265 = smul.addr %s264, 4
        %s266 = smul.addr %s265, 2
        %s267 = scalar_lea.vmem %s0, %s266
      $region36: #{decoder_forward.11} parent=31 // pred_fallthru
        _
    $region32: #{decoder_forward.11} parent=5 // pred_fallthru
      _
    %p268 = scmp.le.s32.totalorder 1, %s15
    %p269 = scmp.lt.s32.totalorder %s15, 3
    %p270 = pnand %p268, %p269
    %p271 = pneg %p270
    // Predicated region
    $region37: #{decoder_forward.11} parent=5 // pred_check
      _
    $region38: #{decoder_forward.11} parent=5 // pred_check_branch
      %273 = sbr.rel (%p270) target = $region40
    $region39: #{decoder_forward.11} parent=5 // pred_region
      %s274 = ssub.s32 %s15, 1
      %p275 = scmp.lt.s32.totalorder %s20, 1
      %s276 = scalar_select %p275, %s20, 1
      %s277 = smul.addr %s276, 4
      %s278 = smul.addr %s277, 2
      %s279 = scalar_lea.vmem %s0, %s278
      %p280 = pneg %p41
      %p281 = pneg %p38
      %p282 = pneg %p62
      %p283 = pneg %p59
      %p284 = pneg %p83
      %p285 = pneg %p80
      %p286 = pneg %p104
      %p287 = pneg %p101
      %p288 = pneg %p125
      %p289 = pneg %p122
      %p290 = pneg %p151
      %p291 = pneg %p148
      %p292 = scmp.lt.s32.totalorder %s20, 1
      %s293 = scalar_select %p292, %s20, 1
      %s294 = smul.addr %s293, 8
      %s295 = smul.addr %s294, 4
      %s296 = scalar_lea.vmem %s5, %s295
      %p297 = pneg %p177
      %p298 = pneg %p174
      %p299 = scmp.lt.s32.totalorder %s20, 1
      %s300 = scalar_select %p299, %s20, 1
      %s301 = smul.addr %s300, 4
      %s302 = smul.addr %s301, 4
      %s303 = scalar_lea.vmem %s6, %s302
      %p304 = pneg %p203
      %p305 = pneg %p200
      %p306 = scmp.lt.s32.totalorder %s20, 1
      %s307 = scalar_select %p306, %s20, 1
      %s308 = scalar_lea.vmem %s7, %s307
      %p309 = pneg %p229
      %p310 = pneg %p226
      %p311 = scmp.lt.s32.totalorder %s20, 1
      %s312 = scalar_select %p311, %s20, 1
      %s313 = scalar_lea.vmem %s8, %s312
      %p314 = scmp.lt.s32.totalorder %s20, 1
      %s315 = scalar_select %p314, %s20, 1
      %s316 = smul.addr %s315, 4
      %s317 = smul.addr %s316, 2
      %s318 = scalar_lea.vmem %s0, %s317
      %p319 = scmp.lt.s32.totalorder %s20, 1
      %s320 = scalar_select %p319, %s20, 1
      %s321 = smul.addr %s320, 8
      %s322 = smul.addr %s321, 4
      %s323 = scalar_lea.vmem %s5, %s322
      %p324 = scmp.lt.s32.totalorder %s20, 1
      %s325 = scalar_select %p324, %s20, 1
      %s326 = smul.addr %s325, 4
      %s327 = smul.addr %s326, 4
      %s328 = scalar_lea.vmem %s6, %s327
      %p329 = scmp.lt.s32.totalorder %s20, 1
      %s330 = scalar_select %p329, %s20, 1
      %s331 = scalar_lea.vmem %s7, %s330
      %p332 = scmp.lt.s32.totalorder %s20, 1
      %s333 = scalar_select %p332, %s20, 1
      %s334 = scalar_lea.vmem %s8, %s333
      %v336 = vld [vmem:[%s318] sm:$0x3]
      %v337 = vld [vmem:[%s318 + $0x2] sm:$0x3]
      %v338 = vld [vmem:[%s318 + $0x4] sm:$0x3]
      %v339 = vld [vmem:[%s318 + $0x6] sm:$0x3]
      %v340 = vld [vmem:[%s3] sm:$0xf]
      %v341 = vld [vmem:[%s3 + $0x4] sm:$0xf]
      %v342 = vld [vmem:[%s3 + $0x8] sm:$0xf]
      %v343 = vld [vmem:[%s3 + $0xc] sm:$0xf]
      %v344 = vld [vmem:[%s3 + $0x10] sm:$0xf]
      %v345 = vld [vmem:[%s3 + $0x14] sm:$0xf]
      %v346 = vld [vmem:[%s3 + $0x18] sm:$0xf]
      %v347 = vld [vmem:[%s3 + $0x1c] sm:$0xf]
      %v348 = vld [vmem:[%s3 + $0x20] sm:$0xf]
      %v349 = vld [vmem:[%s3 + $0x24] sm:$0xf]
      %v350 = vld [vmem:[%s3 + $0x28] sm:$0xf]
      %v351 = vld [vmem:[%s3 + $0x2c] sm:$0xf]
      %v352 = vld [vmem:[%s3 + $0x30] sm:$0xf]
      %v353 = vld [vmem:[%s3 + $0x34] sm:$0xf]
      %v354 = vld [vmem:[%s3 + $0x38] sm:$0xf]
      %v355 = vld [vmem:[%s3 + $0x3c] sm:$0xf]
      %v356 = vld [vmem:[%s4] sm:$0x1]
      %v358 = vlaneseq
      %v359 = vshrl.u32 %v358, 7
      %v360 = vsub.s32 0, %v359
      %v361 = vrot.slane %v356, %v360
      %v367 = vcombine.low %v336, %v337
      %v368 = vcombine.low %v338, %v339
      %v370 = vunpack.c.l.s4 1983009808
      %v371 = vunpack.c.0.s8 %v370
      %v372 = vlaneseq
      %v373 = vshrl.u32 %v372, 7
      %v374 = vsub.s32 %v371, %v373
      %v375 = vrot.slane %v367, %v374
      %v377 = vunpack.c.l.s4 1983009808
      %v378 = vunpack.c.0.s8 %v377
      %v379 = vlaneseq
      %v380 = vshrl.u32 %v379, 7
      %v381 = vsub.s32 %v378, %v380
      %v382 = vrot.slane %v368, %v381
      %v383 = vcombine.low %v375, %v382
      %v401 = vunpack.c.l.b16 %v340
      %v402 = vunpack.c.l.b16 %v341
      %v403 = vunpack.c.l.b16 %v342
      %v404 = vunpack.c.l.b16 %v343
      %v405 = vunpack.c.l.b16 %v344
      %v406 = vunpack.c.l.b16 %v345
      %v407 = vunpack.c.l.b16 %v346
      %v408 = vunpack.c.l.b16 %v347
      %v409 = vunpack.c.l.b16 %v348
      %v410 = vunpack.c.l.b16 %v349
      %v411 = vunpack.c.l.b16 %v350
      %v412 = vunpack.c.l.b16 %v351
      %v413 = vunpack.c.l.b16 %v352
      %v414 = vunpack.c.l.b16 %v353
      %v415 = vunpack.c.l.b16 %v354
      %v416 = vunpack.c.l.b16 %v355
      %v417 = vpack.c.b16 %v402, %v401
      %v418 = vpack.c.b16 %v404, %v403
      %v419 = vpack.c.b16 %v406, %v405
      %v420 = vpack.c.b16 %v408, %v407
      %v421 = vpack.c.b16 %v410, %v409
      %v422 = vpack.c.b16 %v412, %v411
      %v423 = vpack.c.b16 %v414, %v413
      %v424 = vpack.c.b16 %v416, %v415
      %433 = vmatprep.subr.bf16.mxu0 0
      %434 = vmatpush1.bf16.msra.mxu0 %v417
      %435 = vmatprep.subr.bf16.mxu0 0
      %436 = vmatpush1.bf16.msra.mxu0 %v418
      %437 = vmatprep.subr.bf16.mxu0 0
      %438 = vmatpush1.bf16.msra.mxu0 %v419
      %439 = vmatprep.subr.bf16.mxu0 0
      %440 = vmatpush1.bf16.msra.mxu0 %v420
      %441 = vmatprep.subr.bf16.mxu0 0
      %442 = vmatpush1.bf16.msra.mxu0 %v421
      %443 = vmatprep.subr.bf16.mxu0 0
      %444 = vmatpush1.bf16.msra.mxu0 %v422
      %445 = vmatprep.subr.bf16.mxu0 0
      %446 = vmatpush1.bf16.msra.mxu0 %v423
      %447 = vmatprep.subr.bf16.mxu0 0
      %448 = vmatpush1.bf16.msra.mxu0 %v424
      %449 = vmatprep.subr.bf16.mxu0 0
      %450 = vmatpush1.bf16.msra.mxu0 0
      %451 = vmatprep.subr.bf16.mxu0 0
      %452 = vmatpush1.bf16.msra.mxu0 0
      %453 = vmatprep.subr.bf16.mxu0 0
      %454 = vmatpush1.bf16.msra.mxu0 0
      %455 = vmatprep.subr.bf16.mxu0 0
      %456 = vmatpush1.bf16.msra.mxu0 0
      %457 = vmatprep.subr.bf16.mxu0 0
      %458 = vmatpush1.bf16.msra.mxu0 0
      %459 = vmatprep.subr.bf16.mxu0 0
      %460 = vmatpush1.bf16.msra.mxu0 0
      %461 = vmatprep.subr.bf16.mxu0 0
      %462 = vmatpush1.bf16.msra.mxu0 0
      %463 = vmatprep.subr.bf16.mxu0 0
      %464 = vmatpush1.bf16.msra.mxu0 0
      %465 = vmatprep.mubr.bf16.mxu0 0
      %466 = vmatmul.mubr.bf16.gmra.mrb[0].mxu0 %v383
      %v467 = vpop.f32.mrb[0].mxu0
      %v468 = vadd.f32 %v361, %v467
      %v469 = vpop.f32.mrb[0].mxu0
      %v470 = vpop.f32.mrb[0].mxu0
      %v471 = vadd.f32 %v361, %v470
      %v472 = vpop.f32.mrb[0].mxu0
      %473 = vdwg.mxu0
      %v476 = vcombine.high %v468, %v468
      %v477 = vcombine.high %v471, %v471
      %480 = vst [vmem:[%s328] sm:$0xf] %v468
      %481 = vst [vmem:[%s328 + $0x4] sm:$0xf] %v476
      %482 = vst [vmem:[%s328 + $0x8] sm:$0xf] %v471
      %483 = vst [vmem:[%s328 + $0xc] sm:$0xf] %v477
      %v485 = vunpack.c.l.s4 1966171168
      %v486 = vunpack.c.0.s8 %v485
      %v487 = vlaneseq
      %v488 = vshrl.u32 %v487, 7
      %v489 = vsub.s32 %v486, %v488
      %v490 = vrot.slane %v336, %v489
      %v491 = vcombine.high %v490, %v490
      %v493 = vunpack.c.l.s4 1966171168
      %v494 = vunpack.c.0.s8 %v493
      %v495 = vlaneseq
      %v496 = vshrl.u32 %v495, 7
      %v497 = vsub.s32 %v494, %v496
      %v498 = vrot.slane %v337, %v497
      %v499 = vcombine.high %v498, %v498
      %v501 = vunpack.c.l.s4 1966171168
      %v502 = vunpack.c.0.s8 %v501
      %v503 = vlaneseq
      %v504 = vshrl.u32 %v503, 7
      %v505 = vsub.s32 %v502, %v504
      %v506 = vrot.slane %v338, %v505
      %v507 = vcombine.high %v506, %v506
      %v509 = vunpack.c.l.s4 1966171168
      %v510 = vunpack.c.0.s8 %v509
      %v511 = vlaneseq
      %v512 = vshrl.u32 %v511, 7
      %v513 = vsub.s32 %v510, %v512
      %v514 = vrot.slane %v339, %v513
      %v515 = vcombine.high %v514, %v514
      %v516 = vunpack.i.l.s16 %v490
      %v517 = vunpack.i.h.s16 %v490
      %v518 = vunpack.i.l.s16 %v491
      %v519 = vunpack.i.h.s16 %v491
      %v520 = vunpack.i.l.s16 %v498
      %v521 = vunpack.i.h.s16 %v498
      %v522 = vunpack.i.l.s16 %v499
      %v523 = vunpack.i.h.s16 %v499
      %v524 = vunpack.i.l.s16 %v506
      %v525 = vunpack.i.h.s16 %v506
      %v526 = vunpack.i.l.s16 %v507
      %v527 = vunpack.i.h.s16 %v507
      %v528 = vunpack.i.l.s16 %v514
      %v529 = vunpack.i.h.s16 %v514
      %v530 = vunpack.i.l.s16 %v515
      %v531 = vunpack.i.h.s16 %v515
      %v532 = vpack.i.b16 %v516, %v516
      %v533 = vpack.i.b16 %v517, %v517
      %v534 = vpack.i.b16 %v518, %v518
      %v535 = vpack.i.b16 %v519, %v519
      %v536 = vpack.i.b16 %v520, %v520
      %v537 = vpack.i.b16 %v521, %v521
      %v538 = vpack.i.b16 %v522, %v522
      %v539 = vpack.i.b16 %v523, %v523
      %v540 = vpack.i.b16 %v524, %v524
      %v541 = vpack.i.b16 %v525, %v525
      %v542 = vpack.i.b16 %v526, %v526
      %v543 = vpack.i.b16 %v527, %v527
      %v544 = vpack.i.b16 %v528, %v528
      %v545 = vpack.i.b16 %v529, %v529
      %v546 = vpack.i.b16 %v530, %v530
      %v547 = vpack.i.b16 %v531, %v531
      %v548 = vlaneseq
      %v549 = vshrl.u32 %v548, 7
      %v550 = vsub.s32 0, %v549
      %v551 = vrot.slane %v532, %v550
      %v552 = vlaneseq
      %v553 = vshrl.u32 %v552, 7
      %v554 = vsub.s32 0, %v553
      %v555 = vrot.slane %v533, %v554
      %v556 = vlaneseq
      %v557 = vshrl.u32 %v556, 7
      %v558 = vsub.s32 0, %v557
      %v559 = vrot.slane %v534, %v558
      %v560 = vlaneseq
      %v561 = vshrl.u32 %v560, 7
      %v562 = vsub.s32 0, %v561
      %v563 = vrot.slane %v535, %v562
      %v564 = vlaneseq
      %v565 = vshrl.u32 %v564, 7
      %v566 = vsub.s32 0, %v565
      %v567 = vrot.slane %v536, %v566
      %v568 = vlaneseq
      %v569 = vshrl.u32 %v568, 7
      %v570 = vsub.s32 0, %v569
      %v571 = vrot.slane %v537, %v570
      %v572 = vlaneseq
      %v573 = vshrl.u32 %v572, 7
      %v574 = vsub.s32 0, %v573
      %v575 = vrot.slane %v538, %v574
      %v576 = vlaneseq
      %v577 = vshrl.u32 %v576, 7
      %v578 = vsub.s32 0, %v577
      %v579 = vrot.slane %v539, %v578
      %v580 = vlaneseq
      %v581 = vshrl.u32 %v580, 7
      %v582 = vsub.s32 0, %v581
      %v583 = vrot.slane %v540, %v582
      %v584 = vlaneseq
      %v585 = vshrl.u32 %v584, 7
      %v586 = vsub.s32 0, %v585
      %v587 = vrot.slane %v541, %v586
      %v588 = vlaneseq
      %v589 = vshrl.u32 %v588, 7
      %v590 = vsub.s32 0, %v589
      %v591 = vrot.slane %v542, %v590
      %v592 = vlaneseq
      %v593 = vshrl.u32 %v592, 7
      %v594 = vsub.s32 0, %v593
      %v595 = vrot.slane %v543, %v594
      %v596 = vlaneseq
      %v597 = vshrl.u32 %v596, 7
      %v598 = vsub.s32 0, %v597
      %v599 = vrot.slane %v544, %v598
      %v600 = vlaneseq
      %v601 = vshrl.u32 %v600, 7
      %v602 = vsub.s32 0, %v601
      %v603 = vrot.slane %v545, %v602
      %v604 = vlaneseq
      %v605 = vshrl.u32 %v604, 7
      %v606 = vsub.s32 0, %v605
      %v607 = vrot.slane %v546, %v606
      %v608 = vlaneseq
      %v609 = vshrl.u32 %v608, 7
      %v610 = vsub.s32 0, %v609
      %v611 = vrot.slane %v547, %v610
      %v613 = vpack.i.b16 %v551, %v551
      %v615 = vlaneseq
      %v616 = vshrl.u32 %v615, 7
      %v617 = vsub.s32 0, %v616
      %v618 = vrot.slane %v613, %v617
      %v620 = vpack.i.b16 %v555, %v555
      %v622 = vlaneseq
      %v623 = vshrl.u32 %v622, 7
      %v624 = vsub.s32 0, %v623
      %v625 = vrot.slane %v620, %v624
      %v627 = vpack.i.b16 %v559, %v559
      %v629 = vlaneseq
      %v630 = vshrl.u32 %v629, 7
      %v631 = vsub.s32 0, %v630
      %v632 = vrot.slane %v627, %v631
      %v634 = vpack.i.b16 %v563, %v563
      %v636 = vlaneseq
      %v637 = vshrl.u32 %v636, 7
      %v638 = vsub.s32 0, %v637
      %v639 = vrot.slane %v634, %v638
      %v641 = vpack.i.b16 %v567, %v567
      %v643 = vlaneseq
      %v644 = vshrl.u32 %v643, 7
      %v645 = vsub.s32 0, %v644
      %v646 = vrot.slane %v641, %v645
      %v648 = vpack.i.b16 %v571, %v571
      %v650 = vlaneseq
      %v651 = vshrl.u32 %v650, 7
      %v652 = vsub.s32 0, %v651
      %v653 = vrot.slane %v648, %v652
      %v655 = vpack.i.b16 %v575, %v575
      %v657 = vlaneseq
      %v658 = vshrl.u32 %v657, 7
      %v659 = vsub.s32 0, %v658
      %v660 = vrot.slane %v655, %v659
      %v662 = vpack.i.b16 %v579, %v579
      %v664 = vlaneseq
      %v665 = vshrl.u32 %v664, 7
      %v666 = vsub.s32 0, %v665
      %v667 = vrot.slane %v662, %v666
      %v669 = vpack.i.b16 %v583, %v583
      %v671 = vlaneseq
      %v672 = vshrl.u32 %v671, 7
      %v673 = vsub.s32 0, %v672
      %v674 = vrot.slane %v669, %v673
      %v676 = vpack.i.b16 %v587, %v587
      %v678 = vlaneseq
      %v679 = vshrl.u32 %v678, 7
      %v680 = vsub.s32 0, %v679
      %v681 = vrot.slane %v676, %v680
      %v683 = vpack.i.b16 %v591, %v591
      %v685 = vlaneseq
      %v686 = vshrl.u32 %v685, 7
      %v687 = vsub.s32 0, %v686
      %v688 = vrot.slane %v683, %v687
      %v690 = vpack.i.b16 %v595, %v595
      %v692 = vlaneseq
      %v693 = vshrl.u32 %v692, 7
      %v694 = vsub.s32 0, %v693
      %v695 = vrot.slane %v690, %v694
      %v697 = vpack.i.b16 %v599, %v599
      %v699 = vlaneseq
      %v700 = vshrl.u32 %v699, 7
      %v701 = vsub.s32 0, %v700
      %v702 = vrot.slane %v697, %v701
      %v704 = vpack.i.b16 %v603, %v603
      %v706 = vlaneseq
      %v707 = vshrl.u32 %v706, 7
      %v708 = vsub.s32 0, %v707
      %v709 = vrot.slane %v704, %v708
      %v711 = vpack.i.b16 %v607, %v607
      %v713 = vlaneseq
      %v714 = vshrl.u32 %v713, 7
      %v715 = vsub.s32 0, %v714
      %v716 = vrot.slane %v711, %v715
      %v718 = vpack.i.b16 %v611, %v611
      %v720 = vlaneseq
      %v721 = vshrl.u32 %v720, 7
      %v722 = vsub.s32 0, %v721
      %v723 = vrot.slane %v718, %v722
      %724 = vst [vmem:[#allocation2] sm:$0xf] 0
      %725 = vst [vmem:[#allocation2 + $0x4] sm:$0x1] 0
      %726 = vst [vmem:[#allocation2 + $0x8] sm:$0xf] 0
      %727 = vst [vmem:[#allocation2 + $0xc] sm:$0x1] 0
      %728 = vst [vmem:[#allocation2 + $0x10] sm:$0xf] 0
      %729 = vst [vmem:[#allocation2 + $0x14] sm:$0x1] 0
      %730 = vst [vmem:[#allocation2 + $0x18] sm:$0xf] 0
      %731 = vst [vmem:[#allocation2 + $0x1c] sm:$0x1] 0
      %732 = vst [vmem:[#allocation2 + $0x20] sm:$0xf] 0
      %733 = vst [vmem:[#allocation2 + $0x24] sm:$0x1] 0
      %734 = vst [vmem:[#allocation2 + $0x28] sm:$0xf] 0
      %735 = vst [vmem:[#allocation2 + $0x2c] sm:$0x1] 0
      %736 = vst [vmem:[#allocation2 + $0x30] sm:$0xf] 0
      %737 = vst [vmem:[#allocation2 + $0x34] sm:$0x1] 0
      %738 = vst [vmem:[#allocation2 + $0x38] sm:$0xf] 0
      %739 = vst [vmem:[#allocation2 + $0x3c] sm:$0x1] 0
      %740 = vst [vmem:[#allocation2 + $0x40] sm:$0xf] 0
      %741 = vst [vmem:[#allocation2 + $0x44] sm:$0x1] 0
      %742 = vst [vmem:[#allocation2 + $0x48] sm:$0xf] 0
      %743 = vst [vmem:[#allocation2 + $0x4c] sm:$0x1] 0
      %v760 = vcombine.low %v618, %v632
      %v761 = vcombine.low %v625, %v639
      %v763 = vunpack.c.l.s4 1935823168
      %v764 = vunpack.c.0.s8 %v763
      %v765 = vlaneseq
      %v766 = vshrl.u32 %v765, 7
      %v767 = vsub.s32 %v764, %v766
      %v768 = vrot.slane %v760, %v767
      %v770 = vunpack.c.l.s4 1935823168
      %v771 = vunpack.c.0.s8 %v770
      %v772 = vlaneseq
      %v773 = vshrl.u32 %v772, 7
      %v774 = vsub.s32 %v771, %v773
      %v775 = vrot.slane %v761, %v774
      %v776 = vcombine.low %v768, %v775
      %v778 = vunpack.c.l.s4 1935823168
      %v779 = vunpack.c.0.s8 %v778
      %v780 = vlaneseq
      %v781 = vshrl.u32 %v780, 7
      %v782 = vsub.s32 %v779, %v781
      %v783 = vrot.slane %v776, %v782
      %v784 = vcombine.low %v646, %v660
      %v785 = vcombine.low %v653, %v667
      %v787 = vunpack.c.l.s4 1935823168
      %v788 = vunpack.c.0.s8 %v787
      %v789 = vlaneseq
      %v790 = vshrl.u32 %v789, 7
      %v791 = vsub.s32 %v788, %v790
      %v792 = vrot.slane %v784, %v791
      %v794 = vunpack.c.l.s4 1935823168
      %v795 = vunpack.c.0.s8 %v794
      %v796 = vlaneseq
      %v797 = vshrl.u32 %v796, 7
      %v798 = vsub.s32 %v795, %v797
      %v799 = vrot.slane %v785, %v798
      %v800 = vcombine.low %v792, %v799
      %v802 = vunpack.c.l.s4 1935823168
      %v803 = vunpack.c.0.s8 %v802
      %v804 = vlaneseq
      %v805 = vshrl.u32 %v804, 7
      %v806 = vsub.s32 %v803, %v805
      %v807 = vrot.slane %v800, %v806
      %v808 = vcombine.low %v674, %v688
      %v809 = vcombine.low %v681, %v695
      %v811 = vunpack.c.l.s4 1935823168
      %v812 = vunpack.c.0.s8 %v811
      %v813 = vlaneseq
      %v814 = vshrl.u32 %v813, 7
      %v815 = vsub.s32 %v812, %v814
      %v816 = vrot.slane %v808, %v815
      %v818 = vunpack.c.l.s4 1935823168
      %v819 = vunpack.c.0.s8 %v818
      %v820 = vlaneseq
      %v821 = vshrl.u32 %v820, 7
      %v822 = vsub.s32 %v819, %v821
      %v823 = vrot.slane %v809, %v822
      %v824 = vcombine.low %v816, %v823
      %v826 = vunpack.c.l.s4 1935823168
      %v827 = vunpack.c.0.s8 %v826
      %v828 = vlaneseq
      %v829 = vshrl.u32 %v828, 7
      %v830 = vsub.s32 %v827, %v829
      %v831 = vrot.slane %v824, %v830
      %v832 = vcombine.low %v702, %v716
      %v833 = vcombine.low %v709, %v723
      %v835 = vunpack.c.l.s4 1935823168
      %v836 = vunpack.c.0.s8 %v835
      %v837 = vlaneseq
      %v838 = vshrl.u32 %v837, 7
      %v839 = vsub.s32 %v836, %v838
      %v840 = vrot.slane %v832, %v839
      %v842 = vunpack.c.l.s4 1935823168
      %v843 = vunpack.c.0.s8 %v842
      %v844 = vlaneseq
      %v845 = vshrl.u32 %v844, 7
      %v846 = vsub.s32 %v843, %v845
      %v847 = vrot.slane %v833, %v846
      %v848 = vcombine.low %v840, %v847
      %v850 = vunpack.c.l.s4 1935823168
      %v851 = vunpack.c.0.s8 %v850
      %v852 = vlaneseq
      %v853 = vshrl.u32 %v852, 7
      %v854 = vsub.s32 %v851, %v853
      %v855 = vrot.slane %v848, %v854
      %v857 = vshrl.u32 %v783, 16
      %v859 = vrot.slane %v857, 7
      %v860 = vshll.u32 %v783, 16
      %v862 = vor.u32 %v859, %v860
      %v863 = vrot.slane %v859, 4
      %v865 = vshrl.u32 %v807, 16
      %v867 = vrot.slane %v865, 7
      %v868 = vshll.u32 %v807, 16
      %v870 = vor.u32 %v867, %v868
      %v871 = vrot.slane %v867, 4
      %v873 = vshrl.u32 %v831, 16
      %v875 = vrot.slane %v873, 7
      %v876 = vshll.u32 %v831, 16
      %v878 = vor.u32 %v875, %v876
      %v879 = vrot.slane %v875, 4
      %v881 = vshrl.u32 %v855, 16
      %v883 = vrot.slane %v881, 7
      %v884 = vshll.u32 %v855, 16
      %v886 = vor.u32 %v883, %v884
      %v887 = vrot.slane %v883, 4
      %s896 = scalar_lea.vmem [#allocation2], 8
      %vm897 = vcmask 1043456
      %vm898 = vsmask.f32 7938
      %vm899 = vmand %vm897, %vm898
      %v900 = vld [vmem:[%s896] sm:$0xf]
      %v901 = vsel %vm899, %v862, %v900
      %902 = vst [vmem:[%s896] sm:$0xf] %v901
      %vm903 = vcmask 1040384
      %vm904 = vsmask.f32 256
      %vm905 = vmand %vm903, %vm904
      %v906 = vld [vmem:[%s896 + $0x4] sm:$0x1]
      %v907 = vsel %vm905, %v863, %v906
      %908 = vst [vmem:[%s896 + $0x4] sm:$0x1] %v907
      %v909 = vld [vmem:[%s896 + $0x8] sm:$0xf]
      %v910 = vsel %vm899, %v862, %v909
      %911 = vst [vmem:[%s896 + $0x8] sm:$0xf] %v910
      %v912 = vld [vmem:[%s896 + $0xc] sm:$0x1]
      %v913 = vsel %vm905, %v863, %v912
      %914 = vst [vmem:[%s896 + $0xc] sm:$0x1] %v913
      %v915 = vld [vmem:[%s896 + $0x10] sm:$0xf]
      %v916 = vsel %vm899, %v870, %v915
      %917 = vst [vmem:[%s896 + $0x10] sm:$0xf] %v916
      %v918 = vld [vmem:[%s896 + $0x14] sm:$0x1]
      %v919 = vsel %vm905, %v871, %v918
      %920 = vst [vmem:[%s896 + $0x14] sm:$0x1] %v919
      %v921 = vld [vmem:[%s896 + $0x18] sm:$0xf]
      %v922 = vsel %vm899, %v870, %v921
      %923 = vst [vmem:[%s896 + $0x18] sm:$0xf] %v922
      %v924 = vld [vmem:[%s896 + $0x1c] sm:$0x1]
      %v925 = vsel %vm905, %v871, %v924
      %926 = vst [vmem:[%s896 + $0x1c] sm:$0x1] %v925
      %v927 = vld [vmem:[%s896 + $0x20] sm:$0xf]
      %v928 = vsel %vm899, %v878, %v927
      %929 = vst [vmem:[%s896 + $0x20] sm:$0xf] %v928
      %v930 = vld [vmem:[%s896 + $0x24] sm:$0x1]
      %v931 = vsel %vm905, %v879, %v930
      %932 = vst [vmem:[%s896 + $0x24] sm:$0x1] %v931
      %v933 = vld [vmem:[%s896 + $0x28] sm:$0xf]
      %v934 = vsel %vm899, %v878, %v933
      %935 = vst [vmem:[%s896 + $0x28] sm:$0xf] %v934
      %v936 = vld [vmem:[%s896 + $0x2c] sm:$0x1]
      %v937 = vsel %vm905, %v879, %v936
      %938 = vst [vmem:[%s896 + $0x2c] sm:$0x1] %v937
      %v939 = vld [vmem:[%s896 + $0x30] sm:$0xf]
      %v940 = vsel %vm899, %v886, %v939
      %941 = vst [vmem:[%s896 + $0x30] sm:$0xf] %v940
      %v942 = vld [vmem:[%s896 + $0x34] sm:$0x1]
      %v943 = vsel %vm905, %v887, %v942
      %944 = vst [vmem:[%s896 + $0x34] sm:$0x1] %v943
      %v945 = vld [vmem:[%s896 + $0x38] sm:$0xf]
      %v946 = vsel %vm899, %v886, %v945
      %947 = vst [vmem:[%s896 + $0x38] sm:$0xf] %v946
      %v948 = vld [vmem:[%s896 + $0x3c] sm:$0x1]
      %v949 = vsel %vm905, %v887, %v948
      %950 = vst [vmem:[%s896 + $0x3c] sm:$0x1] %v949
      %v951 = vld [vmem:[#allocation2] sm:$0xf]
      %v952 = vld [vmem:[#allocation2 + $0x8] sm:$0xf]
      %v953 = vld [vmem:[#allocation2 + $0x10] sm:$0xf]
      %v954 = vld [vmem:[#allocation2 + $0x18] sm:$0xf]
      %v955 = vld [vmem:[#allocation2 + $0x20] sm:$0xf]
      %v956 = vld [vmem:[#allocation2 + $0x28] sm:$0xf]
      %v957 = vld [vmem:[#allocation2 + $0x30] sm:$0xf]
      %v958 = vld [vmem:[#allocation2 + $0x38] sm:$0xf]
      %v959 = vld [vmem:[#allocation2 + $0x4] sm:$0x1]
      %v960 = vld [vmem:[#allocation2 + $0xc] sm:$0x1]
      %v961 = vld [vmem:[#allocation2 + $0x14] sm:$0x1]
      %v962 = vld [vmem:[#allocation2 + $0x1c] sm:$0x1]
      %v963 = vld [vmem:[#allocation2 + $0x24] sm:$0x1]
      %v964 = vld [vmem:[#allocation2 + $0x2c] sm:$0x1]
      %v965 = vld [vmem:[#allocation2 + $0x34] sm:$0x1]
      %v966 = vld [vmem:[#allocation2 + $0x3c] sm:$0x1]
      %v967 = vld [vmem:[#allocation2] sm:$0xe]
      %v968 = vld [vmem:[#allocation2 + $0x8] sm:$0xe]
      %v969 = vld [vmem:[#allocation2 + $0x10] sm:$0xe]
      %v970 = vld [vmem:[#allocation2 + $0x18] sm:$0xe]
      %v971 = vld [vmem:[#allocation2 + $0x20] sm:$0xe]
      %v972 = vld [vmem:[#allocation2 + $0x28] sm:$0xe]
      %v973 = vld [vmem:[#allocation2 + $0x30] sm:$0xe]
      %v974 = vld [vmem:[#allocation2 + $0x38] sm:$0xe]
      %v975 = vld [vmem:[%s896] sm:$0xf]
      %v976 = vld [vmem:[%s896 + $0x8] sm:$0xf]
      %v977 = vld [vmem:[%s896 + $0x10] sm:$0xf]
      %v978 = vld [vmem:[%s896 + $0x18] sm:$0xf]
      %v979 = vld [vmem:[%s896 + $0x20] sm:$0xf]
      %v980 = vld [vmem:[%s896 + $0x28] sm:$0xf]
      %v981 = vld [vmem:[%s896 + $0x30] sm:$0xf]
      %v982 = vld [vmem:[%s896 + $0x38] sm:$0xf]
      %v983 = vld [vmem:[%s896 + $0x4] sm:$0x1]
      %v984 = vld [vmem:[%s896 + $0xc] sm:$0x1]
      %v985 = vld [vmem:[%s896 + $0x14] sm:$0x1]
      %v986 = vld [vmem:[%s896 + $0x1c] sm:$0x1]
      %v987 = vld [vmem:[%s896 + $0x24] sm:$0x1]
      %v988 = vld [vmem:[%s896 + $0x2c] sm:$0x1]
      %v989 = vld [vmem:[%s896 + $0x34] sm:$0x1]
      %v990 = vld [vmem:[%s896 + $0x3c] sm:$0x1]
      %v991 = vld [vmem:[%s896] sm:$0xe]
      %v992 = vld [vmem:[%s896 + $0x8] sm:$0xe]
      %v993 = vld [vmem:[%s896 + $0x10] sm:$0xe]
      %v994 = vld [vmem:[%s896 + $0x18] sm:$0xe]
      %v995 = vld [vmem:[%s896 + $0x20] sm:$0xe]
      %v996 = vld [vmem:[%s896 + $0x28] sm:$0xe]
      %v997 = vld [vmem:[%s896 + $0x30] sm:$0xe]
      %v998 = vld [vmem:[%s896 + $0x38] sm:$0xe]
      %s999 = scalar_lea.vmem [#allocation2], 16
      %v1000 = vld [vmem:[%s999] sm:$0xf]
      %v1001 = vld [vmem:[%s999 + $0x8] sm:$0xf]
      %v1002 = vld [vmem:[%s999 + $0x10] sm:$0xf]
      %v1003 = vld [vmem:[%s999 + $0x18] sm:$0xf]
      %v1004 = vld [vmem:[%s999 + $0x20] sm:$0xf]
      %v1005 = vld [vmem:[%s999 + $0x28] sm:$0xf]
      %v1006 = vld [vmem:[%s999 + $0x30] sm:$0xf]
      %v1007 = vld [vmem:[%s999 + $0x38] sm:$0xf]
      %v1008 = vld [vmem:[%s999 + $0x4] sm:$0x1]
      %v1009 = vld [vmem:[%s999 + $0xc] sm:$0x1]
      %v1010 = vld [vmem:[%s999 + $0x14] sm:$0x1]
      %v1011 = vld [vmem:[%s999 + $0x1c] sm:$0x1]
      %v1012 = vld [vmem:[%s999 + $0x24] sm:$0x1]
      %v1013 = vld [vmem:[%s999 + $0x2c] sm:$0x1]
      %v1014 = vld [vmem:[%s999 + $0x34] sm:$0x1]
      %v1015 = vld [vmem:[%s999 + $0x3c] sm:$0x1]
      %v1016 = vld [vmem:[%s999] sm:$0xe]
      %v1017 = vld [vmem:[%s999 + $0x8] sm:$0xe]
      %v1018 = vld [vmem:[%s999 + $0x10] sm:$0xe]
      %v1019 = vld [vmem:[%s999 + $0x18] sm:$0xe]
      %v1020 = vld [vmem:[%s999 + $0x20] sm:$0xe]
      %v1021 = vld [vmem:[%s999 + $0x28] sm:$0xe]
      %v1022 = vld [vmem:[%s999 + $0x30] sm:$0xe]
      %v1023 = vld [vmem:[%s999 + $0x38] sm:$0xe]
      %v1040 = vunpack.c.l.b16 %v951
      %v1041 = vunpack.c.l.b16 %v959
      %v1042 = vunpack.c.l.b16 %v952
      %v1043 = vunpack.c.l.b16 %v960
      %v1044 = vunpack.c.l.b16 %v953
      %v1045 = vunpack.c.l.b16 %v961
      %v1046 = vunpack.c.l.b16 %v954
      %v1047 = vunpack.c.l.b16 %v962
      %v1048 = vunpack.c.l.b16 %v955
      %v1049 = vunpack.c.l.b16 %v963
      %v1050 = vunpack.c.l.b16 %v956
      %v1051 = vunpack.c.l.b16 %v964
      %v1052 = vunpack.c.l.b16 %v957
      %v1053 = vunpack.c.l.b16 %v965
      %v1054 = vunpack.c.l.b16 %v958
      %v1055 = vunpack.c.l.b16 %v966
      %v1056 = vpack.c.b16 %v1041, %v1040
      %v1057 = vpack.c.b16 %v1043, %v1042
      %v1058 = vpack.c.b16 %v1045, %v1044
      %v1059 = vpack.c.b16 %v1047, %v1046
      %v1060 = vpack.c.b16 %v1049, %v1048
      %v1061 = vpack.c.b16 %v1051, %v1050
      %v1062 = vpack.c.b16 %v1053, %v1052
      %v1063 = vpack.c.b16 %v1055, %v1054
      %v1065 = vshrl.u32 %v1056, 16
      %v1067 = vshll.u32 %v1056, 16
      %v1069 = vrot.slane %v1067, 1
      %v1070 = vor.u32 %v1065, %v1069
      %v1072 = vshrl.u32 %v1057, 16
      %v1074 = vshll.u32 %v1057, 16
      %v1076 = vrot.slane %v1074, 1
      %v1077 = vor.u32 %v1072, %v1076
      %v1079 = vshrl.u32 %v1058, 16
      %v1081 = vshll.u32 %v1058, 16
      %v1083 = vrot.slane %v1081, 1
      %v1084 = vor.u32 %v1079, %v1083
      %v1086 = vshrl.u32 %v1059, 16
      %v1088 = vshll.u32 %v1059, 16
      %v1090 = vrot.slane %v1088, 1
      %v1091 = vor.u32 %v1086, %v1090
      %v1093 = vshrl.u32 %v1060, 16
      %v1095 = vshll.u32 %v1060, 16
      %v1097 = vrot.slane %v1095, 1
      %v1098 = vor.u32 %v1093, %v1097
      %v1100 = vshrl.u32 %v1061, 16
      %v1102 = vshll.u32 %v1061, 16
      %v1104 = vrot.slane %v1102, 1
      %v1105 = vor.u32 %v1100, %v1104
      %v1107 = vshrl.u32 %v1062, 16
      %v1109 = vshll.u32 %v1062, 16
      %v1111 = vrot.slane %v1109, 1
      %v1112 = vor.u32 %v1107, %v1111
      %v1114 = vshrl.u32 %v1063, 16
      %v1116 = vshll.u32 %v1063, 16
      %v1118 = vrot.slane %v1116, 1
      %v1119 = vor.u32 %v1114, %v1118
      %v1128 = vunpack.c.l.b16 %v967
      %v1129 = vunpack.c.l.b16 %v968
      %v1130 = vunpack.c.l.b16 %v969
      %v1131 = vunpack.c.l.b16 %v970
      %v1132 = vunpack.c.l.b16 %v971
      %v1133 = vunpack.c.l.b16 %v972
      %v1134 = vunpack.c.l.b16 %v973
      %v1135 = vunpack.c.l.b16 %v974
      %v1136 = vpack.c.b16 %v1041, %v1128
      %v1137 = vpack.c.b16 %v1043, %v1129
      %v1138 = vpack.c.b16 %v1045, %v1130
      %v1139 = vpack.c.b16 %v1047, %v1131
      %v1140 = vpack.c.b16 %v1049, %v1132
      %v1141 = vpack.c.b16 %v1051, %v1133
      %v1142 = vpack.c.b16 %v1053, %v1134
      %v1143 = vpack.c.b16 %v1055, %v1135
      %v1144 = vrot.slane %v1136, 1
      %v1145 = vrot.slane %v1137, 1
      %v1146 = vrot.slane %v1138, 1
      %v1147 = vrot.slane %v1139, 1
      %v1148 = vrot.slane %v1140, 1
      %v1149 = vrot.slane %v1141, 1
      %v1150 = vrot.slane %v1142, 1
      %v1151 = vrot.slane %v1143, 1
      %v1168 = vunpack.c.l.b16 %v975
      %v1169 = vunpack.c.l.b16 %v983
      %v1170 = vunpack.c.l.b16 %v976
      %v1171 = vunpack.c.l.b16 %v984
      %v1172 = vunpack.c.l.b16 %v977
      %v1173 = vunpack.c.l.b16 %v985
      %v1174 = vunpack.c.l.b16 %v978
      %v1175 = vunpack.c.l.b16 %v986
      %v1176 = vunpack.c.l.b16 %v979
      %v1177 = vunpack.c.l.b16 %v987
      %v1178 = vunpack.c.l.b16 %v980
      %v1179 = vunpack.c.l.b16 %v988
      %v1180 = vunpack.c.l.b16 %v981
      %v1181 = vunpack.c.l.b16 %v989
      %v1182 = vunpack.c.l.b16 %v982
      %v1183 = vunpack.c.l.b16 %v990
      %v1184 = vpack.c.b16 %v1169, %v1168
      %v1185 = vpack.c.b16 %v1171, %v1170
      %v1186 = vpack.c.b16 %v1173, %v1172
      %v1187 = vpack.c.b16 %v1175, %v1174
      %v1188 = vpack.c.b16 %v1177, %v1176
      %v1189 = vpack.c.b16 %v1179, %v1178
      %v1190 = vpack.c.b16 %v1181, %v1180
      %v1191 = vpack.c.b16 %v1183, %v1182
      %v1193 = vshrl.u32 %v1184, 16
      %v1195 = vshll.u32 %v1184, 16
      %v1197 = vrot.slane %v1195, 1
      %v1198 = vor.u32 %v1193, %v1197
      %v1200 = vshrl.u32 %v1185, 16
      %v1202 = vshll.u32 %v1185, 16
      %v1204 = vrot.slane %v1202, 1
      %v1205 = vor.u32 %v1200, %v1204
      %v1207 = vshrl.u32 %v1186, 16
      %v1209 = vshll.u32 %v1186, 16
      %v1211 = vrot.slane %v1209, 1
      %v1212 = vor.u32 %v1207, %v1211
      %v1214 = vshrl.u32 %v1187, 16
      %v1216 = vshll.u32 %v1187, 16
      %v1218 = vrot.slane %v1216, 1
      %v1219 = vor.u32 %v1214, %v1218
      %v1221 = vshrl.u32 %v1188, 16
      %v1223 = vshll.u32 %v1188, 16
      %v1225 = vrot.slane %v1223, 1
      %v1226 = vor.u32 %v1221, %v1225
      %v1228 = vshrl.u32 %v1189, 16
      %v1230 = vshll.u32 %v1189, 16
      %v1232 = vrot.slane %v1230, 1
      %v1233 = vor.u32 %v1228, %v1232
      %v1235 = vshrl.u32 %v1190, 16
      %v1237 = vshll.u32 %v1190, 16
      %v1239 = vrot.slane %v1237, 1
      %v1240 = vor.u32 %v1235, %v1239
      %v1242 = vshrl.u32 %v1191, 16
      %v1244 = vshll.u32 %v1191, 16
      %v1246 = vrot.slane %v1244, 1
      %v1247 = vor.u32 %v1242, %v1246
      %v1256 = vunpack.c.l.b16 %v991
      %v1257 = vunpack.c.l.b16 %v992
      %v1258 = vunpack.c.l.b16 %v993
      %v1259 = vunpack.c.l.b16 %v994
      %v1260 = vunpack.c.l.b16 %v995
      %v1261 = vunpack.c.l.b16 %v996
      %v1262 = vunpack.c.l.b16 %v997
      %v1263 = vunpack.c.l.b16 %v998
      %v1264 = vpack.c.b16 %v1169, %v1256
      %v1265 = vpack.c.b16 %v1171, %v1257
      %v1266 = vpack.c.b16 %v1173, %v1258
      %v1267 = vpack.c.b16 %v1175, %v1259
      %v1268 = vpack.c.b16 %v1177, %v1260
      %v1269 = vpack.c.b16 %v1179, %v1261
      %v1270 = vpack.c.b16 %v1181, %v1262
      %v1271 = vpack.c.b16 %v1183, %v1263
      %v1272 = vrot.slane %v1264, 1
      %v1273 = vrot.slane %v1265, 1
      %v1274 = vrot.slane %v1266, 1
      %v1275 = vrot.slane %v1267, 1
      %v1276 = vrot.slane %v1268, 1
      %v1277 = vrot.slane %v1269, 1
      %v1278 = vrot.slane %v1270, 1
      %v1279 = vrot.slane %v1271, 1
      %v1296 = vunpack.c.l.b16 %v1000
      %v1297 = vunpack.c.l.b16 %v1008
      %v1298 = vunpack.c.l.b16 %v1001
      %v1299 = vunpack.c.l.b16 %v1009
      %v1300 = vunpack.c.l.b16 %v1002
      %v1301 = vunpack.c.l.b16 %v1010
      %v1302 = vunpack.c.l.b16 %v1003
      %v1303 = vunpack.c.l.b16 %v1011
      %v1304 = vunpack.c.l.b16 %v1004
      %v1305 = vunpack.c.l.b16 %v1012
      %v1306 = vunpack.c.l.b16 %v1005
      %v1307 = vunpack.c.l.b16 %v1013
      %v1308 = vunpack.c.l.b16 %v1006
      %v1309 = vunpack.c.l.b16 %v1014
      %v1310 = vunpack.c.l.b16 %v1007
      %v1311 = vunpack.c.l.b16 %v1015
      %v1312 = vpack.c.b16 %v1297, %v1296
      %v1313 = vpack.c.b16 %v1299, %v1298
      %v1314 = vpack.c.b16 %v1301, %v1300
      %v1315 = vpack.c.b16 %v1303, %v1302
      %v1316 = vpack.c.b16 %v1305, %v1304
      %v1317 = vpack.c.b16 %v1307, %v1306
      %v1318 = vpack.c.b16 %v1309, %v1308
      %v1319 = vpack.c.b16 %v1311, %v1310
      %v1321 = vshrl.u32 %v1312, 16
      %v1323 = vshll.u32 %v1312, 16
      %v1325 = vrot.slane %v1323, 1
      %v1326 = vor.u32 %v1321, %v1325
      %v1328 = vshrl.u32 %v1313, 16
      %v1330 = vshll.u32 %v1313, 16
      %v1332 = vrot.slane %v1330, 1
      %v1333 = vor.u32 %v1328, %v1332
      %v1335 = vshrl.u32 %v1314, 16
      %v1337 = vshll.u32 %v1314, 16
      %v1339 = vrot.slane %v1337, 1
      %v1340 = vor.u32 %v1335, %v1339
      %v1342 = vshrl.u32 %v1315, 16
      %v1344 = vshll.u32 %v1315, 16
      %v1346 = vrot.slane %v1344, 1
      %v1347 = vor.u32 %v1342, %v1346
      %v1349 = vshrl.u32 %v1316, 16
      %v1351 = vshll.u32 %v1316, 16
      %v1353 = vrot.slane %v1351, 1
      %v1354 = vor.u32 %v1349, %v1353
      %v1356 = vshrl.u32 %v1317, 16
      %v1358 = vshll.u32 %v1317, 16
      %v1360 = vrot.slane %v1358, 1
      %v1361 = vor.u32 %v1356, %v1360
      %v1363 = vshrl.u32 %v1318, 16
      %v1365 = vshll.u32 %v1318, 16
      %v1367 = vrot.slane %v1365, 1
      %v1368 = vor.u32 %v1363, %v1367
      %v1370 = vshrl.u32 %v1319, 16
      %v1372 = vshll.u32 %v1319, 16
      %v1374 = vrot.slane %v1372, 1
      %v1375 = vor.u32 %v1370, %v1374
      %v1384 = vunpack.c.l.b16 %v1016
      %v1385 = vunpack.c.l.b16 %v1017
      %v1386 = vunpack.c.l.b16 %v1018
      %v1387 = vunpack.c.l.b16 %v1019
      %v1388 = vunpack.c.l.b16 %v1020
      %v1389 = vunpack.c.l.b16 %v1021
      %v1390 = vunpack.c.l.b16 %v1022
      %v1391 = vunpack.c.l.b16 %v1023
      %v1392 = vpack.c.b16 %v1297, %v1384
      %v1393 = vpack.c.b16 %v1299, %v1385
      %v1394 = vpack.c.b16 %v1301, %v1386
      %v1395 = vpack.c.b16 %v1303, %v1387
      %v1396 = vpack.c.b16 %v1305, %v1388
      %v1397 = vpack.c.b16 %v1307, %v1389
      %v1398 = vpack.c.b16 %v1309, %v1390
      %v1399 = vpack.c.b16 %v1311, %v1391
      %v1400 = vrot.slane %v1392, 1
      %v1401 = vrot.slane %v1393, 1
      %v1402 = vrot.slane %v1394, 1
      %v1403 = vrot.slane %v1395, 1
      %v1404 = vrot.slane %v1396, 1
      %v1405 = vrot.slane %v1397, 1
      %v1406 = vrot.slane %v1398, 1
      %v1407 = vrot.slane %v1399, 1
      %v1408 = vunpack.c.l.b16 %v1070
      %v1409 = vunpack.c.l.b16 %v1144
      %v1410 = vunpack.c.l.b16 %v1198
      %v1411 = vunpack.c.l.b16 %v1272
      %v1412 = vunpack.c.l.b16 %v1326
      %v1413 = vunpack.c.l.b16 %v1400
      %v1414 = vunpack.c.l.b16 %v1077
      %v1415 = vunpack.c.l.b16 %v1145
      %v1416 = vunpack.c.l.b16 %v1205
      %v1417 = vunpack.c.l.b16 %v1273
      %v1418 = vunpack.c.l.b16 %v1333
      %v1419 = vunpack.c.l.b16 %v1401
      %v1420 = vunpack.c.l.b16 %v1084
      %v1421 = vunpack.c.l.b16 %v1146
      %v1422 = vunpack.c.l.b16 %v1212
      %v1423 = vunpack.c.l.b16 %v1274
      %v1424 = vunpack.c.l.b16 %v1340
      %v1425 = vunpack.c.l.b16 %v1402
      %v1426 = vunpack.c.l.b16 %v1091
      %v1427 = vunpack.c.l.b16 %v1147
      %v1428 = vunpack.c.l.b16 %v1219
      %v1429 = vunpack.c.l.b16 %v1275
      %v1430 = vunpack.c.l.b16 %v1347
      %v1431 = vunpack.c.l.b16 %v1403
      %v1432 = vunpack.c.l.b16 %v1098
      %v1433 = vunpack.c.l.b16 %v1148
      %v1434 = vunpack.c.l.b16 %v1226
      %v1435 = vunpack.c.l.b16 %v1276
      %v1436 = vunpack.c.l.b16 %v1354
      %v1437 = vunpack.c.l.b16 %v1404
      %v1438 = vunpack.c.l.b16 %v1105
      %v1439 = vunpack.c.l.b16 %v1149
      %v1440 = vunpack.c.l.b16 %v1233
      %v1441 = vunpack.c.l.b16 %v1277
      %v1442 = vunpack.c.l.b16 %v1361
      %v1443 = vunpack.c.l.b16 %v1405
      %v1444 = vunpack.c.l.b16 %v1112
      %v1445 = vunpack.c.l.b16 %v1150
      %v1446 = vunpack.c.l.b16 %v1240
      %v1447 = vunpack.c.l.b16 %v1278
      %v1448 = vunpack.c.l.b16 %v1368
      %v1449 = vunpack.c.l.b16 %v1406
      %v1450 = vunpack.c.l.b16 %v1119
      %v1451 = vunpack.c.l.b16 %v1151
      %v1452 = vunpack.c.l.b16 %v1247
      %v1453 = vunpack.c.l.b16 %v1279
      %v1454 = vunpack.c.l.b16 %v1375
      %v1455 = vunpack.c.l.b16 %v1407
      %v1456 = vld [vmem:[%s1] sm:$0xf]
      %v1457 = vld [vmem:[%s1 + $0x4] sm:$0xf]
      %v1458 = vld [vmem:[%s1 + $0x8] sm:$0xf]
      %v1459 = vld [vmem:[%s1 + $0xc] sm:$0xf]
      %v1460 = vld [vmem:[%s1 + $0x10] sm:$0xf]
      %v1461 = vld [vmem:[%s1 + $0x14] sm:$0xf]
      %v1462 = vld [vmem:[%s1 + $0x18] sm:$0xf]
      %v1463 = vld [vmem:[%s1 + $0x1c] sm:$0xf]
      %v1464 = vld [vmem:[%s1 + $0x20] sm:$0xf]
      %v1465 = vld [vmem:[%s1 + $0x24] sm:$0xf]
      %v1466 = vld [vmem:[%s1 + $0x28] sm:$0xf]
      %v1467 = vld [vmem:[%s1 + $0x2c] sm:$0xf]
      %v1468 = vld [vmem:[%s1 + $0x30] sm:$0xf]
      %v1469 = vld [vmem:[%s1 + $0x34] sm:$0xf]
      %v1470 = vld [vmem:[%s1 + $0x38] sm:$0xf]
      %v1471 = vld [vmem:[%s1 + $0x3c] sm:$0xf]
      %v1472 = vld [vmem:[%s1 + $0x40] sm:$0xf]
      %v1473 = vld [vmem:[%s1 + $0x44] sm:$0xf]
      %v1474 = vld [vmem:[%s1 + $0x48] sm:$0xf]
      %v1475 = vld [vmem:[%s1 + $0x4c] sm:$0xf]
      %v1476 = vld [vmem:[%s1 + $0x50] sm:$0xf]
      %v1477 = vld [vmem:[%s1 + $0x54] sm:$0xf]
      %v1478 = vld [vmem:[%s1 + $0x58] sm:$0xf]
      %v1479 = vld [vmem:[%s1 + $0x5c] sm:$0xf]
      %v1480 = vld [vmem:[%s1 + $0x60] sm:$0xf]
      %v1481 = vld [vmem:[%s1 + $0x64] sm:$0xf]
      %v1482 = vld [vmem:[%s1 + $0x68] sm:$0xf]
      %v1483 = vld [vmem:[%s1 + $0x6c] sm:$0xf]
      %v1484 = vld [vmem:[%s1 + $0x70] sm:$0xf]
      %v1485 = vld [vmem:[%s1 + $0x74] sm:$0xf]
      %v1486 = vld [vmem:[%s1 + $0x78] sm:$0xf]
      %v1487 = vld [vmem:[%s1 + $0x7c] sm:$0xf]
      %v1488 = vld [vmem:[%s1 + $0x80] sm:$0xf]
      %v1489 = vld [vmem:[%s1 + $0x84] sm:$0xf]
      %v1490 = vld [vmem:[%s1 + $0x88] sm:$0xf]
      %v1491 = vld [vmem:[%s1 + $0x8c] sm:$0xf]
      %v1492 = vld [vmem:[%s1 + $0x90] sm:$0xf]
      %v1493 = vld [vmem:[%s1 + $0x94] sm:$0xf]
      %v1494 = vld [vmem:[%s1 + $0x98] sm:$0xf]
      %v1495 = vld [vmem:[%s1 + $0x9c] sm:$0xf]
      %v1496 = vld [vmem:[%s1 + $0xa0] sm:$0xf]
      %v1497 = vld [vmem:[%s1 + $0xa4] sm:$0xf]
      %v1498 = vld [vmem:[%s1 + $0xa8] sm:$0xf]
      %v1499 = vld [vmem:[%s1 + $0xac] sm:$0xf]
      %v1500 = vld [vmem:[%s1 + $0xb0] sm:$0xf]
      %v1501 = vld [vmem:[%s1 + $0xb4] sm:$0xf]
      %v1502 = vld [vmem:[%s1 + $0xb8] sm:$0xf]
      %v1503 = vld [vmem:[%s1 + $0xbc] sm:$0xf]
      %v1504 = vld [vmem:[%s1 + $0xc0] sm:$0xf]
      %v1505 = vld [vmem:[%s1 + $0xc4] sm:$0xf]
      %v1506 = vld [vmem:[%s1 + $0xc8] sm:$0xf]
      %v1507 = vld [vmem:[%s1 + $0xcc] sm:$0xf]
      %v1508 = vld [vmem:[%s1 + $0xd0] sm:$0xf]
      %v1509 = vld [vmem:[%s1 + $0xd4] sm:$0xf]
      %v1510 = vld [vmem:[%s1 + $0xd8] sm:$0xf]
      %v1511 = vld [vmem:[%s1 + $0xdc] sm:$0xf]
      %v1512 = vld [vmem:[%s1 + $0xe0] sm:$0xf]
      %v1513 = vld [vmem:[%s1 + $0xe4] sm:$0xf]
      %v1514 = vld [vmem:[%s1 + $0xe8] sm:$0xf]
      %v1515 = vld [vmem:[%s1 + $0xec] sm:$0xf]
      %v1516 = vld [vmem:[%s1 + $0xf0] sm:$0xf]
      %v1517 = vld [vmem:[%s1 + $0xf4] sm:$0xf]
      %v1518 = vld [vmem:[%s1 + $0xf8] sm:$0xf]
      %v1519 = vld [vmem:[%s1 + $0xfc] sm:$0xf]
      %v1520 = vld [vmem:[%s1 + $0x100] sm:$0xf]
      %v1521 = vld [vmem:[%s1 + $0x104] sm:$0xf]
      %v1522 = vld [vmem:[%s1 + $0x108] sm:$0xf]
      %v1523 = vld [vmem:[%s1 + $0x10c] sm:$0xf]
      %v1524 = vld [vmem:[%s1 + $0x110] sm:$0xf]
      %v1525 = vld [vmem:[%s1 + $0x114] sm:$0xf]
      %v1526 = vld [vmem:[%s1 + $0x118] sm:$0xf]
      %v1527 = vld [vmem:[%s1 + $0x11c] sm:$0xf]
      %v1528 = vld [vmem:[%s1 + $0x120] sm:$0xf]
      %v1529 = vld [vmem:[%s1 + $0x124] sm:$0xf]
      %v1530 = vld [vmem:[%s1 + $0x128] sm:$0xf]
      %v1531 = vld [vmem:[%s1 + $0x12c] sm:$0xf]
      %v1532 = vld [vmem:[%s1 + $0x130] sm:$0xf]
      %v1533 = vld [vmem:[%s1 + $0x134] sm:$0xf]
      %v1534 = vld [vmem:[%s1 + $0x138] sm:$0xf]
      %v1535 = vld [vmem:[%s1 + $0x13c] sm:$0xf]
      %v1536 = vld [vmem:[%s1 + $0x140] sm:$0xf]
      %v1537 = vld [vmem:[%s1 + $0x144] sm:$0xf]
      %v1538 = vld [vmem:[%s1 + $0x148] sm:$0xf]
      %v1539 = vld [vmem:[%s1 + $0x14c] sm:$0xf]
      %v1540 = vld [vmem:[%s1 + $0x150] sm:$0xf]
      %v1541 = vld [vmem:[%s1 + $0x154] sm:$0xf]
      %v1542 = vld [vmem:[%s1 + $0x158] sm:$0xf]
      %v1543 = vld [vmem:[%s1 + $0x15c] sm:$0xf]
      %v1544 = vld [vmem:[%s1 + $0x160] sm:$0xf]
      %v1545 = vld [vmem:[%s1 + $0x164] sm:$0xf]
      %v1546 = vld [vmem:[%s1 + $0x168] sm:$0xf]
      %v1547 = vld [vmem:[%s1 + $0x16c] sm:$0xf]
      %v1548 = vld [vmem:[%s1 + $0x170] sm:$0xf]
      %v1549 = vld [vmem:[%s1 + $0x174] sm:$0xf]
      %v1550 = vld [vmem:[%s1 + $0x178] sm:$0xf]
      %v1551 = vld [vmem:[%s1 + $0x17c] sm:$0xf]
      %v1552 = vld [vmem:[%s1 + $0x180] sm:$0xf]
      %v1553 = vld [vmem:[%s1 + $0x184] sm:$0xf]
      %v1554 = vld [vmem:[%s1 + $0x188] sm:$0xf]
      %v1555 = vld [vmem:[%s1 + $0x18c] sm:$0xf]
      %v1556 = vld [vmem:[%s1 + $0x190] sm:$0xf]
      %v1557 = vld [vmem:[%s1 + $0x194] sm:$0xf]
      %v1558 = vld [vmem:[%s1 + $0x198] sm:$0xf]
      %v1559 = vld [vmem:[%s1 + $0x19c] sm:$0xf]
      %v1560 = vld [vmem:[%s1 + $0x1a0] sm:$0xf]
      %v1561 = vld [vmem:[%s1 + $0x1a4] sm:$0xf]
      %v1562 = vld [vmem:[%s1 + $0x1a8] sm:$0xf]
      %v1563 = vld [vmem:[%s1 + $0x1ac] sm:$0xf]
      %v1564 = vld [vmem:[%s1 + $0x1b0] sm:$0xf]
      %v1565 = vld [vmem:[%s1 + $0x1b4] sm:$0xf]
      %v1566 = vld [vmem:[%s1 + $0x1b8] sm:$0xf]
      %v1567 = vld [vmem:[%s1 + $0x1bc] sm:$0xf]
      %v1568 = vld [vmem:[%s1 + $0x1c0] sm:$0xf]
      %v1569 = vld [vmem:[%s1 + $0x1c4] sm:$0xf]
      %v1570 = vld [vmem:[%s1 + $0x1c8] sm:$0xf]
      %v1571 = vld [vmem:[%s1 + $0x1cc] sm:$0xf]
      %v1572 = vld [vmem:[%s1 + $0x1d0] sm:$0xf]
      %v1573 = vld [vmem:[%s1 + $0x1d4] sm:$0xf]
      %v1574 = vld [vmem:[%s1 + $0x1d8] sm:$0xf]
      %v1575 = vld [vmem:[%s1 + $0x1dc] sm:$0xf]
      %v1576 = vld [vmem:[%s1 + $0x1e0] sm:$0xf]
      %v1577 = vld [vmem:[%s1 + $0x1e4] sm:$0xf]
      %v1578 = vld [vmem:[%s1 + $0x1e8] sm:$0xf]
      %v1579 = vld [vmem:[%s1 + $0x1ec] sm:$0xf]
      %v1580 = vld [vmem:[%s1 + $0x1f0] sm:$0xf]
      %v1581 = vld [vmem:[%s1 + $0x1f4] sm:$0xf]
      %v1582 = vld [vmem:[%s1 + $0x1f8] sm:$0xf]
      %v1583 = vld [vmem:[%s1 + $0x1fc] sm:$0xf]
      %v1584 = vld [vmem:[%s1 + $0x200] sm:$0xf]
      %v1585 = vld [vmem:[%s1 + $0x204] sm:$0xf]
      %v1586 = vld [vmem:[%s1 + $0x208] sm:$0xf]
      %v1587 = vld [vmem:[%s1 + $0x20c] sm:$0xf]
      %v1588 = vld [vmem:[%s1 + $0x210] sm:$0xf]
      %v1589 = vld [vmem:[%s1 + $0x214] sm:$0xf]
      %v1590 = vld [vmem:[%s1 + $0x218] sm:$0xf]
      %v1591 = vld [vmem:[%s1 + $0x21c] sm:$0xf]
      %v1592 = vld [vmem:[%s1 + $0x220] sm:$0xf]
      %v1593 = vld [vmem:[%s1 + $0x224] sm:$0xf]
      %v1594 = vld [vmem:[%s1 + $0x228] sm:$0xf]
      %v1595 = vld [vmem:[%s1 + $0x22c] sm:$0xf]
      %v1596 = vld [vmem:[%s1 + $0x230] sm:$0xf]
      %v1597 = vld [vmem:[%s1 + $0x234] sm:$0xf]
      %v1598 = vld [vmem:[%s1 + $0x238] sm:$0xf]
      %v1599 = vld [vmem:[%s1 + $0x23c] sm:$0xf]
      %v1600 = vld [vmem:[%s2] sm:$0x1]
      %v1602 = vlaneseq
      %v1603 = vshrl.u32 %v1602, 7
      %v1604 = vsub.s32 0, %v1603
      %v1605 = vrot.slane %v1600, %v1604
      %v1607 = vpack.c.b16 %v1042, %v1040
      %v1608 = vpack.c.b16 %v1414, %v1408
      %v1609 = vpack.c.b16 %v1415, %v1409
      %v1610 = vpack.c.b16 %v1170, %v1168
      %v1611 = vpack.c.b16 %v1416, %v1410
      %v1612 = vpack.c.b16 %v1417, %v1411
      %v1613 = vpack.c.b16 %v1298, %v1296
      %v1614 = vpack.c.b16 %v1418, %v1412
      %v1615 = vpack.c.b16 %v1419, %v1413
      %v1616 = vpack.c.b16 %v1046, %v1044
      %v1617 = vpack.c.b16 %v1426, %v1420
      %v1618 = vpack.c.b16 %v1427, %v1421
      %v1619 = vpack.c.b16 %v1174, %v1172
      %v1620 = vpack.c.b16 %v1428, %v1422
      %v1621 = vpack.c.b16 %v1429, %v1423
      %v1622 = vpack.c.b16 %v1302, %v1300
      %v1623 = vpack.c.b16 %v1430, %v1424
      %v1624 = vpack.c.b16 %v1431, %v1425
      %v1625 = vpack.c.b16 %v1050, %v1048
      %v1626 = vpack.c.b16 %v1438, %v1432
      %v1627 = vpack.c.b16 %v1439, %v1433
      %v1628 = vpack.c.b16 %v1178, %v1176
      %v1629 = vpack.c.b16 %v1440, %v1434
      %v1630 = vpack.c.b16 %v1441, %v1435
      %v1631 = vpack.c.b16 %v1306, %v1304
      %v1632 = vpack.c.b16 %v1442, %v1436
      %v1633 = vpack.c.b16 %v1443, %v1437
      %v1634 = vpack.c.b16 %v1054, %v1052
      %v1635 = vpack.c.b16 %v1450, %v1444
      %v1636 = vpack.c.b16 %v1451, %v1445
      %v1637 = vpack.c.b16 %v1182, %v1180
      %v1638 = vpack.c.b16 %v1452, %v1446
      %v1639 = vpack.c.b16 %v1453, %v1447
      %v1640 = vpack.c.b16 %v1310, %v1308
      %v1641 = vpack.c.b16 %v1454, %v1448
      %v1642 = vpack.c.b16 %v1455, %v1449
      %v1823 = vunpack.c.l.b16 %v1456
      %v1824 = vunpack.c.l.b16 %v1457
      %v1825 = vunpack.c.l.b16 %v1458
      %v1826 = vunpack.c.l.b16 %v1459
      %v1827 = vunpack.c.l.b16 %v1460
      %v1828 = vunpack.c.l.b16 %v1461
      %v1829 = vunpack.c.l.b16 %v1462
      %v1830 = vunpack.c.l.b16 %v1463
      %v1831 = vunpack.c.l.b16 %v1464
      %v1832 = vunpack.c.l.b16 %v1465
      %v1833 = vunpack.c.l.b16 %v1466
      %v1834 = vunpack.c.l.b16 %v1467
      %v1835 = vunpack.c.l.b16 %v1468
      %v1836 = vunpack.c.l.b16 %v1469
      %v1837 = vunpack.c.l.b16 %v1470
      %v1838 = vunpack.c.l.b16 %v1471
      %v1839 = vunpack.c.l.b16 %v1472
      %v1840 = vunpack.c.l.b16 %v1473
      %v1841 = vunpack.c.l.b16 %v1474
      %v1842 = vunpack.c.l.b16 %v1475
      %v1843 = vunpack.c.l.b16 %v1476
      %v1844 = vunpack.c.l.b16 %v1477
      %v1845 = vunpack.c.l.b16 %v1478
      %v1846 = vunpack.c.l.b16 %v1479
      %v1847 = vunpack.c.l.b16 %v1480
      %v1848 = vunpack.c.l.b16 %v1481
      %v1849 = vunpack.c.l.b16 %v1482
      %v1850 = vunpack.c.l.b16 %v1483
      %v1851 = vunpack.c.l.b16 %v1484
      %v1852 = vunpack.c.l.b16 %v1485
      %v1853 = vunpack.c.l.b16 %v1486
      %v1854 = vunpack.c.l.b16 %v1487
      %v1855 = vunpack.c.l.b16 %v1488
      %v1856 = vunpack.c.l.b16 %v1489
      %v1857 = vunpack.c.l.b16 %v1490
      %v1858 = vunpack.c.l.b16 %v1491
      %v1859 = vunpack.c.l.b16 %v1492
      %v1860 = vunpack.c.l.b16 %v1493
      %v1861 = vunpack.c.l.b16 %v1494
      %v1862 = vunpack.c.l.b16 %v1495
      %v1863 = vunpack.c.l.b16 %v1496
      %v1864 = vunpack.c.l.b16 %v1497
      %v1865 = vunpack.c.l.b16 %v1498
      %v1866 = vunpack.c.l.b16 %v1499
      %v1867 = vunpack.c.l.b16 %v1500
      %v1868 = vunpack.c.l.b16 %v1501
      %v1869 = vunpack.c.l.b16 %v1502
      %v1870 = vunpack.c.l.b16 %v1503
      %v1871 = vunpack.c.l.b16 %v1504
      %v1872 = vunpack.c.l.b16 %v1505
      %v1873 = vunpack.c.l.b16 %v1506
      %v1874 = vunpack.c.l.b16 %v1507
      %v1875 = vunpack.c.l.b16 %v1508
      %v1876 = vunpack.c.l.b16 %v1509
      %v1877 = vunpack.c.l.b16 %v1510
      %v1878 = vunpack.c.l.b16 %v1511
      %v1879 = vunpack.c.l.b16 %v1512
      %v1880 = vunpack.c.l.b16 %v1513
      %v1881 = vunpack.c.l.b16 %v1514
      %v1882 = vunpack.c.l.b16 %v1515
      %v1883 = vunpack.c.l.b16 %v1516
      %v1884 = vunpack.c.l.b16 %v1517
      %v1885 = vunpack.c.l.b16 %v1518
      %v1886 = vunpack.c.l.b16 %v1519
      %v1887 = vunpack.c.l.b16 %v1520
      %v1888 = vunpack.c.l.b16 %v1521
      %v1889 = vunpack.c.l.b16 %v1522
      %v1890 = vunpack.c.l.b16 %v1523
      %v1891 = vunpack.c.l.b16 %v1524
      %v1892 = vunpack.c.l.b16 %v1525
      %v1893 = vunpack.c.l.b16 %v1526
      %v1894 = vunpack.c.l.b16 %v1527
      %v1895 = vunpack.c.l.b16 %v1528
      %v1896 = vunpack.c.l.b16 %v1529
      %v1897 = vunpack.c.l.b16 %v1530
      %v1898 = vunpack.c.l.b16 %v1531
      %v1899 = vunpack.c.l.b16 %v1532
      %v1900 = vunpack.c.l.b16 %v1533
      %v1901 = vunpack.c.l.b16 %v1534
      %v1902 = vunpack.c.l.b16 %v1535
      %v1903 = vunpack.c.l.b16 %v1536
      %v1904 = vunpack.c.l.b16 %v1537
      %v1905 = vunpack.c.l.b16 %v1538
      %v1906 = vunpack.c.l.b16 %v1539
      %v1907 = vunpack.c.l.b16 %v1540
      %v1908 = vunpack.c.l.b16 %v1541
      %v1909 = vunpack.c.l.b16 %v1542
      %v1910 = vunpack.c.l.b16 %v1543
      %v1911 = vunpack.c.l.b16 %v1544
      %v1912 = vunpack.c.l.b16 %v1545
      %v1913 = vunpack.c.l.b16 %v1546
      %v1914 = vunpack.c.l.b16 %v1547
      %v1915 = vunpack.c.l.b16 %v1548
      %v1916 = vunpack.c.l.b16 %v1549
      %v1917 = vunpack.c.l.b16 %v1550
      %v1918 = vunpack.c.l.b16 %v1551
      %v1919 = vunpack.c.l.b16 %v1552
      %v1920 = vunpack.c.l.b16 %v1553
      %v1921 = vunpack.c.l.b16 %v1554
      %v1922 = vunpack.c.l.b16 %v1555
      %v1923 = vunpack.c.l.b16 %v1556
      %v1924 = vunpack.c.l.b16 %v1557
      %v1925 = vunpack.c.l.b16 %v1558
      %v1926 = vunpack.c.l.b16 %v1559
      %v1927 = vunpack.c.l.b16 %v1560
      %v1928 = vunpack.c.l.b16 %v1561
      %v1929 = vunpack.c.l.b16 %v1562
      %v1930 = vunpack.c.l.b16 %v1563
      %v1931 = vunpack.c.l.b16 %v1564
      %v1932 = vunpack.c.l.b16 %v1565
      %v1933 = vunpack.c.l.b16 %v1566
      %v1934 = vunpack.c.l.b16 %v1567
      %v1935 = vunpack.c.l.b16 %v1568
      %v1936 = vunpack.c.l.b16 %v1569
      %v1937 = vunpack.c.l.b16 %v1570
      %v1938 = vunpack.c.l.b16 %v1571
      %v1939 = vunpack.c.l.b16 %v1572
      %v1940 = vunpack.c.l.b16 %v1573
      %v1941 = vunpack.c.l.b16 %v1574
      %v1942 = vunpack.c.l.b16 %v1575
      %v1943 = vunpack.c.l.b16 %v1576
      %v1944 = vunpack.c.l.b16 %v1577
      %v1945 = vunpack.c.l.b16 %v1578
      %v1946 = vunpack.c.l.b16 %v1579
      %v1947 = vunpack.c.l.b16 %v1580
      %v1948 = vunpack.c.l.b16 %v1581
      %v1949 = vunpack.c.l.b16 %v1582
      %v1950 = vunpack.c.l.b16 %v1583
      %v1951 = vunpack.c.l.b16 %v1584
      %v1952 = vunpack.c.l.b16 %v1585
      %v1953 = vunpack.c.l.b16 %v1586
      %v1954 = vunpack.c.l.b16 %v1587
      %v1955 = vunpack.c.l.b16 %v1588
      %v1956 = vunpack.c.l.b16 %v1589
      %v1957 = vunpack.c.l.b16 %v1590
      %v1958 = vunpack.c.l.b16 %v1591
      %v1959 = vunpack.c.l.b16 %v1592
      %v1960 = vunpack.c.l.b16 %v1593
      %v1961 = vunpack.c.l.b16 %v1594
      %v1962 = vunpack.c.l.b16 %v1595
      %v1963 = vunpack.c.l.b16 %v1596
      %v1964 = vunpack.c.l.b16 %v1597
      %v1965 = vunpack.c.l.b16 %v1598
      %v1966 = vunpack.c.l.b16 %v1599
      %v1967 = vpack.c.b16 %v1824, %v1823
      %v1968 = vpack.c.b16 %v1826, %v1825
      %v1969 = vpack.c.b16 %v1828, %v1827
      %v1970 = vpack.c.b16 %v1830, %v1829
      %v1971 = vpack.c.b16 %v1832, %v1831
      %v1972 = vpack.c.b16 %v1834, %v1833
      %v1973 = vpack.c.b16 %v1836, %v1835
      %v1974 = vpack.c.b16 %v1838, %v1837
      %v1975 = vpack.c.b16 %v1840, %v1839
      %v1976 = vpack.c.b16 %v1842, %v1841
      %v1977 = vpack.c.b16 %v1844, %v1843
      %v1978 = vpack.c.b16 %v1846, %v1845
      %v1979 = vpack.c.b16 %v1848, %v1847
      %v1980 = vpack.c.b16 %v1850, %v1849
      %v1981 = vpack.c.b16 %v1852, %v1851
      %v1982 = vpack.c.b16 %v1854, %v1853
      %v1983 = vpack.c.b16 %v1856, %v1855
      %v1984 = vpack.c.b16 %v1858, %v1857
      %v1985 = vpack.c.b16 %v1860, %v1859
      %v1986 = vpack.c.b16 %v1862, %v1861
      %v1987 = vpack.c.b16 %v1864, %v1863
      %v1988 = vpack.c.b16 %v1866, %v1865
      %v1989 = vpack.c.b16 %v1868, %v1867
      %v1990 = vpack.c.b16 %v1870, %v1869
      %v1991 = vpack.c.b16 %v1872, %v1871
      %v1992 = vpack.c.b16 %v1874, %v1873
      %v1993 = vpack.c.b16 %v1876, %v1875
      %v1994 = vpack.c.b16 %v1878, %v1877
      %v1995 = vpack.c.b16 %v1880, %v1879
      %v1996 = vpack.c.b16 %v1882, %v1881
      %v1997 = vpack.c.b16 %v1884, %v1883
      %v1998 = vpack.c.b16 %v1886, %v1885
      %v1999 = vpack.c.b16 %v1888, %v1887
      %v2000 = vpack.c.b16 %v1890, %v1889
      %v2001 = vpack.c.b16 %v1892, %v1891
      %v2002 = vpack.c.b16 %v1894, %v1893
      %v2003 = vpack.c.b16 %v1896, %v1895
      %v2004 = vpack.c.b16 %v1898, %v1897
      %v2005 = vpack.c.b16 %v1900, %v1899
      %v2006 = vpack.c.b16 %v1902, %v1901
      %v2007 = vpack.c.b16 %v1904, %v1903
      %v2008 = vpack.c.b16 %v1906, %v1905
      %v2009 = vpack.c.b16 %v1908, %v1907
      %v2010 = vpack.c.b16 %v1910, %v1909
      %v2011 = vpack.c.b16 %v1912, %v1911
      %v2012 = vpack.c.b16 %v1914, %v1913
      %v2013 = vpack.c.b16 %v1916, %v1915
      %v2014 = vpack.c.b16 %v1918, %v1917
      %v2015 = vpack.c.b16 %v1920, %v1919
      %v2016 = vpack.c.b16 %v1922, %v1921
      %v2017 = vpack.c.b16 %v1924, %v1923
      %v2018 = vpack.c.b16 %v1926, %v1925
      %v2019 = vpack.c.b16 %v1928, %v1927
      %v2020 = vpack.c.b16 %v1930, %v1929
      %v2021 = vpack.c.b16 %v1932, %v1931
      %v2022 = vpack.c.b16 %v1934, %v1933
      %v2023 = vpack.c.b16 %v1936, %v1935
      %v2024 = vpack.c.b16 %v1938, %v1937
      %v2025 = vpack.c.b16 %v1940, %v1939
      %v2026 = vpack.c.b16 %v1942, %v1941
      %v2027 = vpack.c.b16 %v1944, %v1943
      %v2028 = vpack.c.b16 %v1946, %v1945
      %v2029 = vpack.c.b16 %v1948, %v1947
      %v2030 = vpack.c.b16 %v1950, %v1949
      %v2031 = vpack.c.b16 %v1952, %v1951
      %v2032 = vpack.c.b16 %v1954, %v1953
      %v2033 = vpack.c.b16 %v1956, %v1955
      %v2034 = vpack.c.b16 %v1958, %v1957
      %v2035 = vpack.c.b16 %v1960, %v1959
      %v2036 = vpack.c.b16 %v1962, %v1961
      %v2037 = vpack.c.b16 %v1964, %v1963
      %v2038 = vpack.c.b16 %v1966, %v1965
      %2111 = vmatprep.subr.bf16.mxu0 0
      %2112 = vmatpush1.bf16.msra.mxu0 %v1967
      %2113 = vmatprep.subr.bf16.mxu0 0
      %2114 = vmatpush1.bf16.msra.mxu0 %v1968
      %2115 = vmatprep.subr.bf16.mxu0 0
      %2116 = vmatpush1.bf16.msra.mxu0 %v1969
      %2117 = vmatprep.subr.bf16.mxu0 0
      %2118 = vmatpush1.bf16.msra.mxu0 %v1970
      %2119 = vmatprep.subr.bf16.mxu0 0
      %2120 = vmatpush1.bf16.msra.mxu0 %v1971
      %2121 = vmatprep.subr.bf16.mxu0 0
      %2122 = vmatpush1.bf16.msra.mxu0 %v1972
      %2123 = vmatprep.subr.bf16.mxu0 0
      %2124 = vmatpush1.bf16.msra.mxu0 %v1973
      %2125 = vmatprep.subr.bf16.mxu0 0
      %2126 = vmatpush1.bf16.msra.mxu0 %v1974
      %2127 = vmatprep.subr.bf16.mxu0 0
      %2128 = vmatpush1.bf16.msra.mxu0 %v1975
      %2129 = vmatprep.subr.bf16.mxu0 0
      %2130 = vmatpush1.bf16.msra.mxu0 %v1976
      %2131 = vmatprep.subr.bf16.mxu0 0
      %2132 = vmatpush1.bf16.msra.mxu0 %v1977
      %2133 = vmatprep.subr.bf16.mxu0 0
      %2134 = vmatpush1.bf16.msra.mxu0 %v1978
      %2135 = vmatprep.subr.bf16.mxu0 0
      %2136 = vmatpush1.bf16.msra.mxu0 %v1979
      %2137 = vmatprep.subr.bf16.mxu0 0
      %2138 = vmatpush1.bf16.msra.mxu0 %v1980
      %2139 = vmatprep.subr.bf16.mxu0 0
      %2140 = vmatpush1.bf16.msra.mxu0 %v1981
      %2141 = vmatprep.subr.bf16.mxu0 0
      %2142 = vmatpush1.bf16.msra.mxu0 %v1982
      %2143 = vmatprep.mubr.bf16.mxu0 %v1608
      %2144 = vmatmul.mubr.bf16.gmra.mrb[0].mxu0 %v1607
      %v2145 = vpop.f32.mrb[0].mxu0
      %v2146 = vadd.f32 %v1605, %v2145
      %v2147 = vpop.f32.mrb[0].mxu0
      %v2148 = vpop.f32.mrb[0].mxu0
      %v2149 = vadd.f32 %v1605, %v2148
      %v2150 = vpop.f32.mrb[0].mxu0
      %2151 = vmatprep.mubr.bf16.mxu0 %v1617
      %2152 = vmatmul.mubr.bf16.gmra.mrb[0].mxu0 %v1616
      %v2153 = vpop.f32.mrb[0].mxu0
      %v2154 = vadd.f32 %v1605, %v2153
      %v2155 = vpop.f32.mrb[0].mxu0
      %v2156 = vpop.f32.mrb[0].mxu0
      %v2157 = vadd.f32 %v1605, %v2156
      %v2158 = vpop.f32.mrb[0].mxu0
      %2159 = vmatprep.mubr.bf16.mxu0 %v1626
      %2160 = vmatmul.mubr.bf16.gmra.mrb[0].mxu0 %v1625
      %v2161 = vpop.f32.mrb[0].mxu0
      %v2162 = vadd.f32 %v1605, %v2161
      %v2163 = vpop.f32.mrb[0].mxu0
      %v2164 = vpop.f32.mrb[0].mxu0
      %v2165 = vadd.f32 %v1605, %v2164
      %v2166 = vpop.f32.mrb[0].mxu0
      %2167 = vmatprep.mubr.bf16.mxu0 %v1635
      %2168 = vmatmul.mubr.bf16.gmra.mrb[0].mxu0 %v1634
      %v2169 = vpop.f32.mrb[0].mxu0
      %v2170 = vadd.f32 %v1605, %v2169
      %v2171 = vpop.f32.mrb[0].mxu0
      %v2172 = vpop.f32.mrb[0].mxu0
      %v2173 = vadd.f32 %v1605, %v2172
      %v2174 = vpop.f32.mrb[0].mxu0
      %2175 = vdwg.mxu0
      %2176 = vmatprep.subr.bf16.mxu0 0
      %2177 = vmatpush1.bf16.msra.mxu0 %v1983
      %2178 = vmatprep.subr.bf16.mxu0 0
      %2179 = vmatpush1.bf16.msra.mxu0 %v1984
      %2180 = vmatprep.subr.bf16.mxu0 0
      %2181 = vmatpush1.bf16.msra.mxu0 %v1985
      %2182 = vmatprep.subr.bf16.mxu0 0
      %2183 = vmatpush1.bf16.msra.mxu0 %v1986
      %2184 = vmatprep.subr.bf16.mxu0 0
      %2185 = vmatpush1.bf16.msra.mxu0 %v1987
      %2186 = vmatprep.subr.bf16.mxu0 0
      %2187 = vmatpush1.bf16.msra.mxu0 %v1988
      %2188 = vmatprep.subr.bf16.mxu0 0
      %2189 = vmatpush1.bf16.msra.mxu0 %v1989
      %2190 = vmatprep.subr.bf16.mxu0 0
      %2191 = vmatpush1.bf16.msra.mxu0 %v1990
      %2192 = vmatprep.subr.bf16.mxu0 0
      %2193 = vmatpush1.bf16.msra.mxu0 %v1991
      %2194 = vmatprep.subr.bf16.mxu0 0
      %2195 = vmatpush1.bf16.msra.mxu0 %v1992
      %2196 = vmatprep.subr.bf16.mxu0 0
      %2197 = vmatpush1.bf16.msra.mxu0 %v1993
      %2198 = vmatprep.subr.bf16.mxu0 0
      %2199 = vmatpush1.bf16.msra.mxu0 %v1994
      %2200 = vmatprep.subr.bf16.mxu0 0
      %2201 = vmatpush1.bf16.msra.mxu0 %v1995
      %2202 = vmatprep.subr.bf16.mxu0 0
      %2203 = vmatpush1.bf16.msra.mxu0 %v1996
      %2204 = vmatprep.subr.bf16.mxu0 0
      %2205 = vmatpush1.bf16.msra.mxu0 %v1997
      %2206 = vmatprep.subr.bf16.mxu0 0
      %2207 = vmatpush1.bf16.msra.mxu0 %v1998
      %2208 = vmatprep.mubr.bf16.mxu0 %v1610
      %2209 = vmatmul.mubr.bf16.gmra.mrb[0].mxu0 %v1609
      %v2210 = vpop.f32.mrb[0].mxu0
      %v2211 = vadd.f32 %v2146, %v2210
      %v2212 = vpop.f32.mrb[0].mxu0
      %v2213 = vpop.f32.mrb[0].mxu0
      %v2214 = vadd.f32 %v2149, %v2213
      %v2215 = vpop.f32.mrb[0].mxu0
      %2216 = vmatprep.mubr.bf16.mxu0 %v1619
      %2217 = vmatmul.mubr.bf16.gmra.mrb[0].mxu0 %v1618
      %v2218 = vpop.f32.mrb[0].mxu0
      %v2219 = vadd.f32 %v2154, %v2218
      %v2220 = vpop.f32.mrb[0].mxu0
      %v2221 = vpop.f32.mrb[0].mxu0
      %v2222 = vadd.f32 %v2157, %v2221
      %v2223 = vpop.f32.mrb[0].mxu0
      %2224 = vmatprep.mubr.bf16.mxu0 %v1628
      %2225 = vmatmul.mubr.bf16.gmra.mrb[0].mxu0 %v1627
      %v2226 = vpop.f32.mrb[0].mxu0
      %v2227 = vadd.f32 %v2162, %v2226
      %v2228 = vpop.f32.mrb[0].mxu0
      %v2229 = vpop.f32.mrb[0].mxu0
      %v2230 = vadd.f32 %v2165, %v2229
      %v2231 = vpop.f32.mrb[0].mxu0
      %2232 = vmatprep.mubr.bf16.mxu0 %v1637
      %2233 = vmatmul.mubr.bf16.gmra.mrb[0].mxu0 %v1636
      %v2234 = vpop.f32.mrb[0].mxu0
      %v2235 = vadd.f32 %v2170, %v2234
      %v2236 = vpop.f32.mrb[0].mxu0
      %v2237 = vpop.f32.mrb[0].mxu0
      %v2238 = vadd.f32 %v2173, %v2237
      %v2239 = vpop.f32.mrb[0].mxu0
      %2240 = vdwg.mxu0
      %2241 = vmatprep.subr.bf16.mxu0 0
      %2242 = vmatpush1.bf16.msra.mxu0 %v1999
      %2243 = vmatprep.subr.bf16.mxu0 0
      %2244 = vmatpush1.bf16.msra.mxu0 %v2000
      %2245 = vmatprep.subr.bf16.mxu0 0
      %2246 = vmatpush1.bf16.msra.mxu0 %v2001
      %2247 = vmatprep.subr.bf16.mxu0 0
      %2248 = vmatpush1.bf16.msra.mxu0 %v2002
      %2249 = vmatprep.subr.bf16.mxu0 0
      %2250 = vmatpush1.bf16.msra.mxu0 %v2003
      %2251 = vmatprep.subr.bf16.mxu0 0
      %2252 = vmatpush1.bf16.msra.mxu0 %v2004
      %2253 = vmatprep.subr.bf16.mxu0 0
      %2254 = vmatpush1.bf16.msra.mxu0 %v2005
      %2255 = vmatprep.subr.bf16.mxu0 0
      %2256 = vmatpush1.bf16.msra.mxu0 %v2006
      %2257 = vmatprep.subr.bf16.mxu0 0
      %2258 = vmatpush1.bf16.msra.mxu0 %v2007
      %2259 = vmatprep.subr.bf16.mxu0 0
      %2260 = vmatpush1.bf16.msra.mxu0 %v2008
      %2261 = vmatprep.subr.bf16.mxu0 0
      %2262 = vmatpush1.bf16.msra.mxu0 %v2009
      %2263 = vmatprep.subr.bf16.mxu0 0
      %2264 = vmatpush1.bf16.msra.mxu0 %v2010
      %2265 = vmatprep.subr.bf16.mxu0 0
      %2266 = vmatpush1.bf16.msra.mxu0 %v2011
      %2267 = vmatprep.subr.bf16.mxu0 0
      %2268 = vmatpush1.bf16.msra.mxu0 %v2012
      %2269 = vmatprep.subr.bf16.mxu0 0
      %2270 = vmatpush1.bf16.msra.mxu0 %v2013
      %2271 = vmatprep.subr.bf16.mxu0 0
      %2272 = vmatpush1.bf16.msra.mxu0 %v2014
      %2273 = vmatprep.mubr.bf16.mxu0 %v1612
      %2274 = vmatmul.mubr.bf16.gmra.mrb[0].mxu0 %v1611
      %v2275 = vpop.f32.mrb[0].mxu0
      %v2276 = vadd.f32 %v2211, %v2275
      %v2277 = vpop.f32.mrb[0].mxu0
      %v2278 = vpop.f32.mrb[0].mxu0
      %v2279 = vadd.f32 %v2214, %v2278
      %v2280 = vpop.f32.mrb[0].mxu0
      %2281 = vmatprep.mubr.bf16.mxu0 %v1621
      %2282 = vmatmul.mubr.bf16.gmra.mrb[0].mxu0 %v1620
      %v2283 = vpop.f32.mrb[0].mxu0
      %v2284 = vadd.f32 %v2219, %v2283
      %v2285 = vpop.f32.mrb[0].mxu0
      %v2286 = vpop.f32.mrb[0].mxu0
      %v2287 = vadd.f32 %v2222, %v2286
      %v2288 = vpop.f32.mrb[0].mxu0
      %2289 = vmatprep.mubr.bf16.mxu0 %v1630
      %2290 = vmatmul.mubr.bf16.gmra.mrb[0].mxu0 %v1629
      %v2291 = vpop.f32.mrb[0].mxu0
      %v2292 = vadd.f32 %v2227, %v2291
      %v2293 = vpop.f32.mrb[0].mxu0
      %v2294 = vpop.f32.mrb[0].mxu0
      %v2295 = vadd.f32 %v2230, %v2294
      %v2296 = vpop.f32.mrb[0].mxu0
      %2297 = vmatprep.mubr.bf16.mxu0 %v1639
      %2298 = vmatmul.mubr.bf16.gmra.mrb[0].mxu0 %v1638
      %v2299 = vpop.f32.mrb[0].mxu0
      %v2300 = vadd.f32 %v2235, %v2299
      %v2301 = vpop.f32.mrb[0].mxu0
      %v2302 = vpop.f32.mrb[0].mxu0
      %v2303 = vadd.f32 %v2238, %v2302
      %v2304 = vpop.f32.mrb[0].mxu0
      %2305 = vdwg.mxu0
      %2306 = vmatprep.subr.bf16.mxu0 0
      %2307 = vmatpush1.bf16.msra.mxu0 %v2015
      %2308 = vmatprep.subr.bf16.mxu0 0
      %2309 = vmatpush1.bf16.msra.mxu0 %v2016
      %2310 = vmatprep.subr.bf16.mxu0 0
      %2311 = vmatpush1.bf16.msra.mxu0 %v2017
      %2312 = vmatprep.subr.bf16.mxu0 0
      %2313 = vmatpush1.bf16.msra.mxu0 %v2018
      %2314 = vmatprep.subr.bf16.mxu0 0
      %2315 = vmatpush1.bf16.msra.mxu0 %v2019
      %2316 = vmatprep.subr.bf16.mxu0 0
      %2317 = vmatpush1.bf16.msra.mxu0 %v2020
      %2318 = vmatprep.subr.bf16.mxu0 0
      %2319 = vmatpush1.bf16.msra.mxu0 %v2021
      %2320 = vmatprep.subr.bf16.mxu0 0
      %2321 = vmatpush1.bf16.msra.mxu0 %v2022
      %2322 = vmatprep.subr.bf16.mxu0 0
      %2323 = vmatpush1.bf16.msra.mxu0 %v2023
      %2324 = vmatprep.subr.bf16.mxu0 0
      %2325 = vmatpush1.bf16.msra.mxu0 %v2024
      %2326 = vmatprep.subr.bf16.mxu0 0
      %2327 = vmatpush1.bf16.msra.mxu0 %v2025
      %2328 = vmatprep.subr.bf16.mxu0 0
      %2329 = vmatpush1.bf16.msra.mxu0 %v2026
      %2330 = vmatprep.subr.bf16.mxu0 0
      %2331 = vmatpush1.bf16.msra.mxu0 %v2027
      %2332 = vmatprep.subr.bf16.mxu0 0
      %2333 = vmatpush1.bf16.msra.mxu0 %v2028
      %2334 = vmatprep.subr.bf16.mxu0 0
      %2335 = vmatpush1.bf16.msra.mxu0 %v2029
      %2336 = vmatprep.subr.bf16.mxu0 0
      %2337 = vmatpush1.bf16.msra.mxu0 %v2030
      %2338 = vmatprep.mubr.bf16.mxu0 %v1614
      %2339 = vmatmul.mubr.bf16.gmra.mrb[0].mxu0 %v1613
      %v2340 = vpop.f32.mrb[0].mxu0
      %v2341 = vadd.f32 %v2276, %v2340
      %v2342 = vpop.f32.mrb[0].mxu0
      %v2343 = vpop.f32.mrb[0].mxu0
      %v2344 = vadd.f32 %v2279, %v2343
      %v2345 = vpop.f32.mrb[0].mxu0
      %2346 = vmatprep.mubr.bf16.mxu0 %v1623
      %2347 = vmatmul.mubr.bf16.gmra.mrb[0].mxu0 %v1622
      %v2348 = vpop.f32.mrb[0].mxu0
      %v2349 = vadd.f32 %v2284, %v2348
      %v2350 = vpop.f32.mrb[0].mxu0
      %v2351 = vpop.f32.mrb[0].mxu0
      %v2352 = vadd.f32 %v2287, %v2351
      %v2353 = vpop.f32.mrb[0].mxu0
      %2354 = vmatprep.mubr.bf16.mxu0 %v1632
      %2355 = vmatmul.mubr.bf16.gmra.mrb[0].mxu0 %v1631
      %v2356 = vpop.f32.mrb[0].mxu0
      %v2357 = vadd.f32 %v2292, %v2356
      %v2358 = vpop.f32.mrb[0].mxu0
      %v2359 = vpop.f32.mrb[0].mxu0
      %v2360 = vadd.f32 %v2295, %v2359
      %v2361 = vpop.f32.mrb[0].mxu0
      %2362 = vmatprep.mubr.bf16.mxu0 %v1641
      %2363 = vmatmul.mubr.bf16.gmra.mrb[0].mxu0 %v1640
      %v2364 = vpop.f32.mrb[0].mxu0
      %v2365 = vadd.f32 %v2300, %v2364
      %v2366 = vpop.f32.mrb[0].mxu0
      %v2367 = vpop.f32.mrb[0].mxu0
      %v2368 = vadd.f32 %v2303, %v2367
      %v2369 = vpop.f32.mrb[0].mxu0
      %2370 = vdwg.mxu0
      %2371 = vmatprep.subr.bf16.mxu0 0
      %2372 = vmatpush1.bf16.msra.mxu0 %v2031
      %2373 = vmatprep.subr.bf16.mxu0 0
      %2374 = vmatpush1.bf16.msra.mxu0 %v2032
      %2375 = vmatprep.subr.bf16.mxu0 0
      %2376 = vmatpush1.bf16.msra.mxu0 %v2033
      %2377 = vmatprep.subr.bf16.mxu0 0
      %2378 = vmatpush1.bf16.msra.mxu0 %v2034
      %2379 = vmatprep.subr.bf16.mxu0 0
      %2380 = vmatpush1.bf16.msra.mxu0 %v2035
      %2381 = vmatprep.subr.bf16.mxu0 0
      %2382 = vmatpush1.bf16.msra.mxu0 %v2036
      %2383 = vmatprep.subr.bf16.mxu0 0
      %2384 = vmatpush1.bf16.msra.mxu0 %v2037
      %2385 = vmatprep.subr.bf16.mxu0 0
      %2386 = vmatpush1.bf16.msra.mxu0 %v2038
      %2387 = vmatprep.subr.bf16.mxu0 0
      %2388 = vmatpush1.bf16.msra.mxu0 0
      %2389 = vmatprep.subr.bf16.mxu0 0
      %2390 = vmatpush1.bf16.msra.mxu0 0
      %2391 = vmatprep.subr.bf16.mxu0 0
      %2392 = vmatpush1.bf16.msra.mxu0 0
      %2393 = vmatprep.subr.bf16.mxu0 0
      %2394 = vmatpush1.bf16.msra.mxu0 0
      %2395 = vmatprep.subr.bf16.mxu0 0
      %2396 = vmatpush1.bf16.msra.mxu0 0
      %2397 = vmatprep.subr.bf16.mxu0 0
      %2398 = vmatpush1.bf16.msra.mxu0 0
      %2399 = vmatprep.subr.bf16.mxu0 0
      %2400 = vmatpush1.bf16.msra.mxu0 0
      %2401 = vmatprep.subr.bf16.mxu0 0
      %2402 = vmatpush1.bf16.msra.mxu0 0
      %2403 = vmatprep.mubr.bf16.mxu0 0
      %2404 = vmatmul.mubr.bf16.gmra.mrb[0].mxu0 %v1615
      %v2405 = vpop.f32.mrb[0].mxu0
      %v2406 = vadd.f32 %v2341, %v2405
      %v2407 = vpop.f32.mrb[0].mxu0
      %v2408 = vpop.f32.mrb[0].mxu0
      %v2409 = vadd.f32 %v2344, %v2408
      %v2410 = vpop.f32.mrb[0].mxu0
      %2411 = vmatprep.mubr.bf16.mxu0 0
      %2412 = vmatmul.mubr.bf16.gmra.mrb[0].mxu0 %v1624
      %v2413 = vpop.f32.mrb[0].mxu0
      %v2414 = vadd.f32 %v2349, %v2413
      %v2415 = vpop.f32.mrb[0].mxu0
      %v2416 = vpop.f32.mrb[0].mxu0
      %v2417 = vadd.f32 %v2352, %v2416
      %v2418 = vpop.f32.mrb[0].mxu0
      %2419 = vmatprep.mubr.bf16.mxu0 0
      %2420 = vmatmul.mubr.bf16.gmra.mrb[0].mxu0 %v1633
      %v2421 = vpop.f32.mrb[0].mxu0
      %v2422 = vadd.f32 %v2357, %v2421
      %v2423 = vpop.f32.mrb[0].mxu0
      %v2424 = vpop.f32.mrb[0].mxu0
      %v2425 = vadd.f32 %v2360, %v2424
      %v2426 = vpop.f32.mrb[0].mxu0
      %2427 = vmatprep.mubr.bf16.mxu0 0
      %2428 = vmatmul.mubr.bf16.gmra.mrb[0].mxu0 %v1642
      %v2429 = vpop.f32.mrb[0].mxu0
      %v2430 = vadd.f32 %v2365, %v2429
      %v2431 = vpop.f32.mrb[0].mxu0
      %v2432 = vpop.f32.mrb[0].mxu0
      %v2433 = vadd.f32 %v2368, %v2432
      %v2434 = vpop.f32.mrb[0].mxu0
      %2435 = vdwg.mxu0
      %v2436 = vpack.c.bf16 %v2406, %v2406
      %v2437 = vpack.c.bf16 %v2409, %v2409
      %v2438 = vpack.c.bf16 %v2414, %v2414
      %v2439 = vpack.c.bf16 %v2417, %v2417
      %v2440 = vpack.c.bf16 %v2422, %v2422
      %v2441 = vpack.c.bf16 %v2425, %v2425
      %v2442 = vpack.c.bf16 %v2430, %v2430
      %v2443 = vpack.c.bf16 %v2433, %v2433
      %2444 = vst [vmem:[%s323] sm:$0xf] %v2436
      %2445 = vst [vmem:[%s323 + $0x4] sm:$0xf] %v2437
      %2446 = vst [vmem:[%s323 + $0x8] sm:$0xf] %v2438
      %2447 = vst [vmem:[%s323 + $0xc] sm:$0xf] %v2439
      %2448 = vst [vmem:[%s323 + $0x10] sm:$0xf] %v2440
      %2449 = vst [vmem:[%s323 + $0x14] sm:$0xf] %v2441
      %2450 = vst [vmem:[%s323 + $0x18] sm:$0xf] %v2442
      %2451 = vst [vmem:[%s323 + $0x1c] sm:$0xf] %v2443
      %v2452 = vadd.f32 %v2406, %v2409
      %v2453 = vadd.f32 %v2452, %v2414
      %v2454 = vadd.f32 %v2453, %v2417
      %v2455 = vadd.f32 %v2454, %v2422
      %v2456 = vadd.f32 %v2455, %v2425
      %v2457 = vadd.f32 %v2456, %v2430
      %v2458 = vadd.f32 %v2457, %v2433
      %v2459 = vrot.slane %v2458, 4
      %v2460 = vadd.f32 %v2458, %v2459
      %v2461 = vrot.slane %v2460, 2
      %v2462 = vadd.f32 %v2460, %v2461
      %v2463 = vrot.slane %v2462, 1
      %v2464 = vadd.f32 %v2462, %v2463
      %2465 = vst [vmem:[%s331] sm:$0x1] %v2464
      %v2466 = vmul.f32 %v2406, %v2406
      %v2467 = vmul.f32 %v2409, %v2409
      %v2468 = vmul.f32 %v2414, %v2414
      %v2469 = vmul.f32 %v2417, %v2417
      %v2470 = vmul.f32 %v2422, %v2422
      %v2471 = vmul.f32 %v2425, %v2425
      %v2472 = vmul.f32 %v2430, %v2430
      %v2473 = vmul.f32 %v2433, %v2433
      %v2474 = vadd.f32 %v2466, %v2467
      %v2475 = vadd.f32 %v2474, %v2468
      %v2476 = vadd.f32 %v2475, %v2469
      %v2477 = vadd.f32 %v2476, %v2470
      %v2478 = vadd.f32 %v2477, %v2471
      %v2479 = vadd.f32 %v2478, %v2472
      %v2480 = vadd.f32 %v2479, %v2473
      %v2481 = vrot.slane %v2480, 4
      %v2482 = vadd.f32 %v2480, %v2481
      %v2483 = vrot.slane %v2482, 2
      %v2484 = vadd.f32 %v2482, %v2483
      %v2485 = vrot.slane %v2484, 1
      %v2486 = vadd.f32 %v2484, %v2485
      %2487 = vst [vmem:[%s334] sm:$0x1] %v2486
      %p2488 = scmp.lt.s32.totalorder %s20, 1
      %s2489 = scalar_select %p2488, %s20, 1
      %s2490 = smul.addr %s2489, 8
      %s2491 = smul.addr %s2490, 4
      %s2492 = scalar_lea.vmem %s5, %s2491
      %p2493 = scmp.lt.s32.totalorder %s20, 1
      %s2494 = scalar_select %p2493, %s20, 1
      %s2495 = smul.addr %s2494, 4
      %s2496 = smul.addr %s2495, 4
      %s2497 = scalar_lea.vmem %s6, %s2496
      %p2498 = scmp.lt.s32.totalorder %s20, 1
      %s2499 = scalar_select %p2498, %s20, 1
      %s2500 = scalar_lea.vmem %s7, %s2499
      %p2501 = scmp.lt.s32.totalorder %s20, 1
      %s2502 = scalar_select %p2501, %s20, 1
      %s2503 = scalar_lea.vmem %s8, %s2502
      // Predicated region
      $region41: #{decoder_forward.11} parent=39 // pred_check
        %p2504 = pneg %p148
      $region42: #{decoder_forward.11} parent=39 // pred_check_branch
        %2506 = sbr.rel (%p2504) target = $region44
      $region43: #{decoder_forward.11} parent=39 // pred_region
        _
      $region44: #{decoder_forward.11} parent=39 // pred_fallthru
        _
      // Predicated region
      $region45: #{decoder_forward.11} parent=39 // pred_check
        %p2507 = pneg %p174
      $region46: #{decoder_forward.11} parent=39 // pred_check_branch
        %2509 = sbr.rel (%p2507) target = $region48
      $region47: #{decoder_forward.11} parent=39 // pred_region
        _
      $region48: #{decoder_forward.11} parent=39 // pred_fallthru
        _
      // Predicated region
      $region49: #{decoder_forward.11} parent=39 // pred_check
        %p2510 = pneg %p200
      $region50: #{decoder_forward.11} parent=39 // pred_check_branch
        %2512 = sbr.rel (%p2510) target = $region52
      $region51: #{decoder_forward.11} parent=39 // pred_region
        _
      $region52: #{decoder_forward.11} parent=39 // pred_fallthru
        _
      // Predicated region
      $region53: #{decoder_forward.11} parent=39 // pred_check
        %p2513 = pneg %p226
      $region54: #{decoder_forward.11} parent=39 // pred_check_branch
        %2515 = sbr.rel (%p2513) target = $region56
      $region55: #{decoder_forward.11} parent=39 // pred_region
        _
      $region56: #{decoder_forward.11} parent=39 // pred_fallthru
        _
    $region40: #{decoder_forward.11} parent=5 // pred_fallthru
      _
    %p2516 = scmp.le.s32.totalorder 2, %s15
    // Predicated region
    $region57: #{decoder_forward.11} parent=5 // pred_check
      %p2517 = pneg %p2516
    $region58: #{decoder_forward.11} parent=5 // pred_check_branch
      %2519 = sbr.rel (%p2517) target = $region60
    $region59: #{decoder_forward.11} parent=5 // pred_region
      %s2520 = ssub.s32 %s15, 2
      // Predicated region
      $region61: #{decoder_forward.11} parent=59 // pred_check
        %p2521 = pneg %p154
      $region62: #{decoder_forward.11} parent=59 // pred_check_branch
        %2523 = sbr.rel (%p2521) target = $region64
      $region63: #{decoder_forward.11} parent=59 // pred_region
        %p2524 = scmp.lt.s32.totalorder %s21, 1
        %s2525 = scalar_select %p2524, %s21, 1
        %s2526 = smul.addr %s2525, 8
        %s2527 = smul.addr %s2526, 4
        %s2528 = scalar_lea.vmem %s5, %s2527
      $region64: #{decoder_forward.11} parent=59 // pred_fallthru
        _
      // Predicated region
      $region65: #{decoder_forward.11} parent=59 // pred_check
        %p2529 = pneg %p180
      $region66: #{decoder_forward.11} parent=59 // pred_check_branch
        %2531 = sbr.rel (%p2529) target = $region68
      $region67: #{decoder_forward.11} parent=59 // pred_region
        %p2532 = scmp.lt.s32.totalorder %s21, 1
        %s2533 = scalar_select %p2532, %s21, 1
        %s2534 = smul.addr %s2533, 4
        %s2535 = smul.addr %s2534, 4
        %s2536 = scalar_lea.vmem %s6, %s2535
      $region68: #{decoder_forward.11} parent=59 // pred_fallthru
        _
      // Predicated region
      $region69: #{decoder_forward.11} parent=59 // pred_check
        %p2537 = pneg %p206
      $region70: #{decoder_forward.11} parent=59 // pred_check_branch
        %2539 = sbr.rel (%p2537) target = $region72
      $region71: #{decoder_forward.11} parent=59 // pred_region
        %p2540 = scmp.lt.s32.totalorder %s21, 1
        %s2541 = scalar_select %p2540, %s21, 1
        %s2542 = scalar_lea.vmem %s7, %s2541
      $region72: #{decoder_forward.11} parent=59 // pred_fallthru
        _
      // Predicated region
      $region73: #{decoder_forward.11} parent=59 // pred_check
        %p2543 = pneg %p232
      $region74: #{decoder_forward.11} parent=59 // pred_check_branch
        %2545 = sbr.rel (%p2543) target = $region76
      $region75: #{decoder_forward.11} parent=59 // pred_region
        %p2546 = scmp.lt.s32.totalorder %s21, 1
        %s2547 = scalar_select %p2546, %s21, 1
        %s2548 = scalar_lea.vmem %s8, %s2547
      $region76: #{decoder_forward.11} parent=59 // pred_fallthru
        _
    $region60: #{decoder_forward.11} parent=5 // pred_fallthru
      _
  $region6: #{decoder_forward.11} parent=0 // loop_footer
    %s19 = sadd.s32 1, %s15
  $region7: #{decoder_forward.11} parent=0 // loop_footer_branch
    %14 = sbr.rel target = $region3
  $region8: #{decoder_forward.11} parent=0 // loop_exit
    _

// kernel: decoder_forward.13
$region0: #{decoder_forward.13}
  #allocation0 [shape = 'u32[]', space=smem, size = 0x4, offset = 0x4, fixed_abs, tag = 'smem constant byte address 0x4 - core index']
  #allocation1 [shape = 'u32[144,128]{1,0:T(1,128)}', space=vmem, size = 0x12000, scoped, tag = 'internal scratch']
  %s0 = inlined_call_operand.vmem [shape: bf16[2,8,8,128], index: 0, kind: input, shape index: {}]
  %s1 = inlined_call_operand.vmem [shape: f32[2,1,128], index: 1, kind: input, shape index: {}]
  %s2 = inlined_call_operand.vmem [shape: f32[2,1,128], index: 2, kind: input, shape index: {}]
  %s3 = inlined_call_operand.vmem [shape: f32[1,128], index: 3, kind: input, shape index: {}]
  %s4 = inlined_call_operand.vmem [shape: f32[1,128], index: 4, kind: input, shape index: {}]
  %s5 = inlined_call_operand.vmem [shape: f32[2,4,4,128], index: 5, kind: input, shape index: {}]
  %s6 = inlined_call_operand.vmem [shape: bf16[2,8,8,128], index: 6, kind: output, shape index: {}]
  %s7 = sld [smem:[#allocation0]]
  $region57: #{decoder_forward.13} parent=0
    _
  %s9 = ssub.s32 1, %s7
  %s10 = scalar_select 0, %s9, %s7
  loop: start=0, step=1, limit=4
  $region2: #{decoder_forward.13} parent=0 // loop_pre_header
    _
  $region3: #{decoder_forward.13} parent=0 // loop_header
    %s12 = sphi 0, %s16
    %p13 = scmp.ge.s32.totalorder %s12, 4
    %s22 = sphi 0, %s24
    %s25 = sphi 0, %s22
    %s26 = sphi 0, %s25
    %s42 = sphi 0, %s26
    %s46 = sphi 0, %s46
    %s48 = sphi 0, %s46
    %s49 = sphi 0, %s48
    %s63 = sphi 0, %s49
    %s67 = sphi 0, %s67
    %s69 = sphi 0, %s67
    %s70 = sphi 0, %s69
    %s84 = sphi 0, %s70
    %s88 = sphi 0, %s88
    %s90 = sphi 0, %s88
    %s91 = sphi 0, %s90
    %s105 = sphi 0, %s91
    %s109 = sphi 0, %s109
    %s111 = sphi 0, %s109
    %s112 = sphi 0, %s111
    %s126 = sphi 0, %s112
    %s132 = sphi 0, %s134
    %s135 = sphi 0, %s132
    %s136 = sphi 0, %s135
    %s152 = sphi 0, %s136
    %s158 = sphi 0, %s160
    %s161 = sphi 0, %s158
    %s162 = sphi 0, %s161
    %s178 = sphi 0, %s162
  $region4: #{decoder_forward.13} parent=0 // loop_header_branch
    %15 = sbr.rel (%p13) target = $region8
  $region5: #{decoder_forward.13} parent=0 // loop_body
    %s17 = ssub.s32 %s12, 1
    %s18 = ssub.s32 %s12, 2
    %s19 = sadd.s32 %s12, 1
    %s20 = ssub.s32 %s12, %s19
    %p21 = scmp.eq.s32.totalorder %s20, 0
    %s23 = sadd.s32 %s22, 1
    %s24 = scalar_select %p21, %s22, %s23
    %p27 = pneg %p21
    %p28 = scmp.eq.s32.totalorder %s12, 1
    %p29 = por %p27, %p28
    %p30 = scmp.ne.s32.totalorder %s22, %s25
    %p31 = scmp.eq.s32.totalorder %s12, 0
    %p32 = por %p30, %p31
    %p33 = scmp.ne.s32.totalorder %s22, %s25
    %p34 = scmp.eq.s32.totalorder %s17, 1
    %p35 = por %p33, %p34
    %p36 = scmp.ne.s32.totalorder %s25, %s26
    %p37 = scmp.eq.s32.totalorder %s17, 0
    %p38 = por %p36, %p37
    %p39 = scmp.ne.s32.totalorder %s25, %s26
    %p40 = scmp.eq.s32.totalorder %s18, 1
    %p41 = por %p39, %p40
    %p43 = scmp.ne.s32.totalorder %s26, %s42
    %p44 = scmp.eq.s32.totalorder %s18, 0
    %p45 = por %p43, %p44
    %s47 = sadd.s32 %s46, 1
    %p50 = scmp.eq.s32.totalorder %s12, 1
    %p51 = scmp.ne.s32.totalorder %s46, %s48
    %p52 = scmp.eq.s32.totalorder %s12, 0
    %p53 = por %p51, %p52
    %p54 = scmp.ne.s32.totalorder %s46, %s48
    %p55 = scmp.eq.s32.totalorder %s17, 1
    %p56 = por %p54, %p55
    %p57 = scmp.ne.s32.totalorder %s48, %s49
    %p58 = scmp.eq.s32.totalorder %s17, 0
    %p59 = por %p57, %p58
    %p60 = scmp.ne.s32.totalorder %s48, %s49
    %p61 = scmp.eq.s32.totalorder %s18, 1
    %p62 = por %p60, %p61
    %p64 = scmp.ne.s32.totalorder %s49, %s63
    %p65 = scmp.eq.s32.totalorder %s18, 0
    %p66 = por %p64, %p65
    %s68 = sadd.s32 %s67, 1
    %p71 = scmp.eq.s32.totalorder %s12, 1
    %p72 = scmp.ne.s32.totalorder %s67, %s69
    %p73 = scmp.eq.s32.totalorder %s12, 0
    %p74 = por %p72, %p73
    %p75 = scmp.ne.s32.totalorder %s67, %s69
    %p76 = scmp.eq.s32.totalorder %s17, 1
    %p77 = por %p75, %p76
    %p78 = scmp.ne.s32.totalorder %s69, %s70
    %p79 = scmp.eq.s32.totalorder %s17, 0
    %p80 = por %p78, %p79
    %p81 = scmp.ne.s32.totalorder %s69, %s70
    %p82 = scmp.eq.s32.totalorder %s18, 1
    %p83 = por %p81, %p82
    %p85 = scmp.ne.s32.totalorder %s70, %s84
    %p86 = scmp.eq.s32.totalorder %s18, 0
    %p87 = por %p85, %p86
    %s89 = sadd.s32 %s88, 1
    %p92 = scmp.eq.s32.totalorder %s12, 1
    %p93 = scmp.ne.s32.totalorder %s88, %s90
    %p94 = scmp.eq.s32.totalorder %s12, 0
    %p95 = por %p93, %p94
    %p96 = scmp.ne.s32.totalorder %s88, %s90
    %p97 = scmp.eq.s32.totalorder %s17, 1
    %p98 = por %p96, %p97
    %p99 = scmp.ne.s32.totalorder %s90, %s91
    %p100 = scmp.eq.s32.totalorder %s17, 0
    %p101 = por %p99, %p100
    %p102 = scmp.ne.s32.totalorder %s90, %s91
    %p103 = scmp.eq.s32.totalorder %s18, 1
    %p104 = por %p102, %p103
    %p106 = scmp.ne.s32.totalorder %s91, %s105
    %p107 = scmp.eq.s32.totalorder %s18, 0
    %p108 = por %p106, %p107
    %s110 = sadd.s32 %s109, 1
    %p113 = scmp.eq.s32.totalorder %s12, 1
    %p114 = scmp.ne.s32.totalorder %s109, %s111
    %p115 = scmp.eq.s32.totalorder %s12, 0
    %p116 = por %p114, %p115
    %p117 = scmp.ne.s32.totalorder %s109, %s111
    %p118 = scmp.eq.s32.totalorder %s17, 1
    %p119 = por %p117, %p118
    %p120 = scmp.ne.s32.totalorder %s111, %s112
    %p121 = scmp.eq.s32.totalorder %s17, 0
    %p122 = por %p120, %p121
    %p123 = scmp.ne.s32.totalorder %s111, %s112
    %p124 = scmp.eq.s32.totalorder %s18, 1
    %p125 = por %p123, %p124
    %p127 = scmp.ne.s32.totalorder %s112, %s126
    %p128 = scmp.eq.s32.totalorder %s18, 0
    %p129 = por %p127, %p128
    %s130 = ssub.s32 %s12, %s19
    %p131 = scmp.eq.s32.totalorder %s130, 0
    %s133 = sadd.s32 %s132, 1
    %s134 = scalar_select %p131, %s132, %s133
    %p137 = pneg %p131
    %p138 = scmp.eq.s32.totalorder %s12, 1
    %p139 = por %p137, %p138
    %p140 = scmp.ne.s32.totalorder %s132, %s135
    %p141 = scmp.eq.s32.totalorder %s12, 0
    %p142 = por %p140, %p141
    %p143 = scmp.ne.s32.totalorder %s132, %s135
    %p144 = scmp.eq.s32.totalorder %s17, 1
    %p145 = por %p143, %p144
    %p146 = scmp.ne.s32.totalorder %s135, %s136
    %p147 = scmp.eq.s32.totalorder %s17, 0
    %p148 = por %p146, %p147
    %p149 = scmp.ne.s32.totalorder %s135, %s136
    %p150 = scmp.eq.s32.totalorder %s18, 1
    %p151 = por %p149, %p150
    %p153 = scmp.ne.s32.totalorder %s136, %s152
    %p154 = scmp.eq.s32.totalorder %s18, 0
    %p155 = por %p153, %p154
    %s156 = ssub.s32 %s12, %s19
    %p157 = scmp.eq.s32.totalorder %s156, 0
    %s159 = sadd.s32 %s158, 1
    %s160 = scalar_select %p157, %s158, %s159
    %p163 = pneg %p157
    %p164 = scmp.eq.s32.totalorder %s12, 1
    %p165 = por %p163, %p164
    %p166 = scmp.ne.s32.totalorder %s158, %s161
    %p167 = scmp.eq.s32.totalorder %s12, 0
    %p168 = por %p166, %p167
    %p169 = scmp.ne.s32.totalorder %s158, %s161
    %p170 = scmp.eq.s32.totalorder %s17, 1
    %p171 = por %p169, %p170
    %p172 = scmp.ne.s32.totalorder %s161, %s162
    %p173 = scmp.eq.s32.totalorder %s17, 0
    %p174 = por %p172, %p173
    %p175 = scmp.ne.s32.totalorder %s161, %s162
    %p176 = scmp.eq.s32.totalorder %s18, 1
    %p177 = por %p175, %p176
    %p179 = scmp.ne.s32.totalorder %s162, %s178
    %p180 = scmp.eq.s32.totalorder %s18, 0
    %p181 = por %p179, %p180
    %p182 = scmp.le.s32.totalorder 1, %s12
    %p183 = scmp.lt.s32.totalorder %s12, 3
    %p184 = pnand %p182, %p183
    %p185 = pneg %p184
    // Predicated region
    $region9: #{decoder_forward.13} parent=5 // pred_check
      _
    $region10: #{decoder_forward.13} parent=5 // pred_check_branch
      %187 = sbr.rel (%p184) target = $region12
    $region11: #{decoder_forward.13} parent=5 // pred_region
      %s188 = ssub.s32 %s12, 1
      // Predicated region
      $region13: #{decoder_forward.13} parent=11 // pred_check
        %p189 = pneg %p59
      $region14: #{decoder_forward.13} parent=11 // pred_check_branch
        %191 = sbr.rel (%p189) target = $region16
      $region15: #{decoder_forward.13} parent=11 // pred_region
        _
      $region16: #{decoder_forward.13} parent=11 // pred_fallthru
        _
      // Predicated region
      $region17: #{decoder_forward.13} parent=11 // pred_check
        %p192 = pneg %p80
      $region18: #{decoder_forward.13} parent=11 // pred_check_branch
        %194 = sbr.rel (%p192) target = $region20
      $region19: #{decoder_forward.13} parent=11 // pred_region
        _
      $region20: #{decoder_forward.13} parent=11 // pred_fallthru
        _
      // Predicated region
      $region21: #{decoder_forward.13} parent=11 // pred_check
        %p195 = pneg %p101
      $region22: #{decoder_forward.13} parent=11 // pred_check_branch
        %197 = sbr.rel (%p195) target = $region24
      $region23: #{decoder_forward.13} parent=11 // pred_region
        _
      $region24: #{decoder_forward.13} parent=11 // pred_fallthru
        _
      // Predicated region
      $region25: #{decoder_forward.13} parent=11 // pred_check
        %p198 = pneg %p122
      $region26: #{decoder_forward.13} parent=11 // pred_check_branch
        %200 = sbr.rel (%p198) target = $region28
      $region27: #{decoder_forward.13} parent=11 // pred_region
        _
      $region28: #{decoder_forward.13} parent=11 // pred_fallthru
        _
    $region12: #{decoder_forward.13} parent=5 // pred_fallthru
      _
    %p201 = scmp.lt.s32.totalorder %s12, 2
    // Predicated region
    $region29: #{decoder_forward.13} parent=5 // pred_check
      %p202 = pneg %p201
    $region30: #{decoder_forward.13} parent=5 // pred_check_branch
      %204 = sbr.rel (%p202) target = $region32
    $region31: #{decoder_forward.13} parent=5 // pred_region
      // Predicated region
      $region33: #{decoder_forward.13} parent=31 // pred_check
        %p205 = pneg %p32
      $region34: #{decoder_forward.13} parent=31 // pred_check_branch
        %207 = sbr.rel (%p205) target = $region36
      $region35: #{decoder_forward.13} parent=31 // pred_region
        %p208 = scmp.lt.s32.totalorder %s12, 1
        %s209 = scalar_select %p208, %s12, 1
        %s210 = smul.addr %s209, 8
        %s211 = smul.addr %s210, 4
        %s212 = scalar_lea.vmem %s0, %s211
      $region36: #{decoder_forward.13} parent=31 // pred_fallthru
        _
      // Predicated region
      $region37: #{decoder_forward.13} parent=31 // pred_check
        %p213 = pneg %p142
      $region38: #{decoder_forward.13} parent=31 // pred_check_branch
        %215 = sbr.rel (%p213) target = $region40
      $region39: #{decoder_forward.13} parent=31 // pred_region
        %p216 = scmp.lt.s32.totalorder %s12, 1
        %s217 = scalar_select %p216, %s12, 1
        %s218 = smul.addr %s217, 4
        %s219 = smul.addr %s218, 4
        %s220 = scalar_lea.vmem %s5, %s219
      $region40: #{decoder_forward.13} parent=31 // pred_fallthru
        _
    $region32: #{decoder_forward.13} parent=5 // pred_fallthru
      _
    %p221 = scmp.le.s32.totalorder 1, %s12
    %p222 = scmp.lt.s32.totalorder %s12, 3
    %p223 = pnand %p221, %p222
    %p224 = pneg %p223
    // Predicated region
    $region41: #{decoder_forward.13} parent=5 // pred_check
      _
    $region42: #{decoder_forward.13} parent=5 // pred_check_branch
      %226 = sbr.rel (%p223) target = $region44
    $region43: #{decoder_forward.13} parent=5 // pred_region
      %s227 = ssub.s32 %s12, 1
      %p228 = scmp.lt.s32.totalorder %s17, 1
      %s229 = scalar_select %p228, %s17, 1
      %s230 = smul.addr %s229, 8
      %s231 = smul.addr %s230, 4
      %s232 = scalar_lea.vmem %s0, %s231
      %p233 = pneg %p38
      %p234 = pneg %p35
      %p235 = pneg %p59
      %p236 = pneg %p56
      %p237 = pneg %p80
      %p238 = pneg %p77
      %p239 = pneg %p101
      %p240 = pneg %p98
      %p241 = pneg %p122
      %p242 = pneg %p119
      %p243 = scmp.lt.s32.totalorder %s17, 1
      %s244 = scalar_select %p243, %s17, 1
      %s245 = smul.addr %s244, 4
      %s246 = smul.addr %s245, 4
      %s247 = scalar_lea.vmem %s5, %s246
      %p248 = pneg %p148
      %p249 = pneg %p145
      %p250 = pneg %p174
      %p251 = pneg %p171
      %p252 = scmp.lt.s32.totalorder %s17, 1
      %s253 = scalar_select %p252, %s17, 1
      %s254 = smul.addr %s253, 8
      %s255 = smul.addr %s254, 4
      %s256 = scalar_lea.vmem %s6, %s255
      %p257 = scmp.lt.s32.totalorder %s17, 1
      %s258 = scalar_select %p257, %s17, 1
      %s259 = smul.addr %s258, 8
      %s260 = smul.addr %s259, 4
      %s261 = scalar_lea.vmem %s0, %s260
      %p262 = scmp.lt.s32.totalorder %s17, 1
      %s263 = scalar_select %p262, %s17, 1
      %s264 = smul.addr %s263, 4
      %s265 = smul.addr %s264, 4
      %s266 = scalar_lea.vmem %s5, %s265
      %p267 = scmp.lt.s32.totalorder %s17, 1
      %s268 = scalar_select %p267, %s17, 1
      %s269 = smul.addr %s268, 8
      %s270 = smul.addr %s269, 4
      %s271 = scalar_lea.vmem %s6, %s270
      %v272 = vld [vmem:[%s1] sm:$0x1]
      %v273 = vld [vmem:[%s1 + $0x1] sm:$0x1]
      %vm274 = vcmask 1040384
      %v275 = vsel %vm274, %v272, 0.0
      %v276 = vsel %vm274, %v273, 0.0
      %v277 = vadd.f32 %v275, %v276
      %v278 = vld [vmem:[%s2] sm:$0x1]
      %v279 = vld [vmem:[%s2 + $0x1] sm:$0x1]
      %v280 = vsel %vm274, %v278, 0.0
      %v281 = vsel %vm274, %v279, 0.0
      %v282 = vadd.f32 %v280, %v281
      %v283 = vmul.f32 %v277, 0.0078125
      %v284 = vmul.f32 %v282, 0.0078125
      %v285 = vmul.f32 %v283, %v283
      %v286 = vsub.f32 %v284, %v285
      %v287 = vmax.f32 %v286, 0.0
      %v288 = vld [vmem:[%s3] sm:$0x1]
      %v289 = vadd.f32 %v287, 1e-05
      %v290 = vrsqrt.pop %v289
      %v291 = vmul.f32 %v288, %v290
      %v292 = vld [vmem:[%s4] sm:$0x1]
      %v293 = vmul.f32 %v283, %v291
      %v294 = vsub.f32 %v292, %v293
      %v295 = vld [vmem:[%s266] sm:$0xf]
      %v296 = vld [vmem:[%s266 + $0x4] sm:$0xf]
      %v297 = vld [vmem:[%s266 + $0x8] sm:$0xf]
      %v298 = vld [vmem:[%s266 + $0xc] sm:$0xf]
      %v304 = vunpack.c.l.s4 1966171168
      %v305 = vunpack.c.0.s8 %v304
      %v306 = vlaneseq
      %v307 = vshrl.u32 %v306, 7
      %v308 = vsub.s32 %v305, %v307
      %v309 = vrot.slane %v295, %v308
      %v310 = vcombine.high %v309, %v309
      %v312 = vunpack.c.l.s4 1966171168
      %v313 = vunpack.c.0.s8 %v312
      %v314 = vlaneseq
      %v315 = vshrl.u32 %v314, 7
      %v316 = vsub.s32 %v313, %v315
      %v317 = vrot.slane %v309, %v316
      %v319 = vunpack.c.l.s4 1966171168
      %v320 = vunpack.c.0.s8 %v319
      %v321 = vlaneseq
      %v322 = vshrl.u32 %v321, 7
      %v323 = vsub.s32 %v320, %v322
      %v324 = vrot.slane %v310, %v323
      %v325 = vcombine.high %v317, %v317
      %v326 = vcombine.high %v324, %v324
      %v328 = vunpack.c.l.s4 1966171168
      %v329 = vunpack.c.0.s8 %v328
      %v330 = vlaneseq
      %v331 = vshrl.u32 %v330, 7
      %v332 = vsub.s32 %v329, %v331
      %v333 = vrot.slane %v296, %v332
      %v334 = vcombine.high %v333, %v333
      %v336 = vunpack.c.l.s4 1966171168
      %v337 = vunpack.c.0.s8 %v336
      %v338 = vlaneseq
      %v339 = vshrl.u32 %v338, 7
      %v340 = vsub.s32 %v337, %v339
      %v341 = vrot.slane %v333, %v340
      %v343 = vunpack.c.l.s4 1966171168
      %v344 = vunpack.c.0.s8 %v343
      %v345 = vlaneseq
      %v346 = vshrl.u32 %v345, 7
      %v347 = vsub.s32 %v344, %v346
      %v348 = vrot.slane %v334, %v347
      %v349 = vcombine.high %v341, %v341
      %v350 = vcombine.high %v348, %v348
      %v352 = vunpack.c.l.s4 1966171168
      %v353 = vunpack.c.0.s8 %v352
      %v354 = vlaneseq
      %v355 = vshrl.u32 %v354, 7
      %v356 = vsub.s32 %v353, %v355
      %v357 = vrot.slane %v297, %v356
      %v358 = vcombine.high %v357, %v357
      %v360 = vunpack.c.l.s4 1966171168
      %v361 = vunpack.c.0.s8 %v360
      %v362 = vlaneseq
      %v363 = vshrl.u32 %v362, 7
      %v364 = vsub.s32 %v361, %v363
      %v365 = vrot.slane %v357, %v364
      %v367 = vunpack.c.l.s4 1966171168
      %v368 = vunpack.c.0.s8 %v367
      %v369 = vlaneseq
      %v370 = vshrl.u32 %v369, 7
      %v371 = vsub.s32 %v368, %v370
      %v372 = vrot.slane %v358, %v371
      %v373 = vcombine.high %v365, %v365
      %v374 = vcombine.high %v372, %v372
      %v376 = vunpack.c.l.s4 1966171168
      %v377 = vunpack.c.0.s8 %v376
      %v378 = vlaneseq
      %v379 = vshrl.u32 %v378, 7
      %v380 = vsub.s32 %v377, %v379
      %v381 = vrot.slane %v298, %v380
      %v382 = vcombine.high %v381, %v381
      %v384 = vunpack.c.l.s4 1966171168
      %v385 = vunpack.c.0.s8 %v384
      %v386 = vlaneseq
      %v387 = vshrl.u32 %v386, 7
      %v388 = vsub.s32 %v385, %v387
      %v389 = vrot.slane %v381, %v388
      %v391 = vunpack.c.l.s4 1966171168
      %v392 = vunpack.c.0.s8 %v391
      %v393 = vlaneseq
      %v394 = vshrl.u32 %v393, 7
      %v395 = vsub.s32 %v392, %v394
      %v396 = vrot.slane %v382, %v395
      %v397 = vcombine.high %v389, %v389
      %v398 = vcombine.high %v396, %v396
      %v399 = vlaneseq
      %v400 = vshrl.u32 %v399, 7
      %v401 = vsub.s32 0, %v400
      %v402 = vrot.slane %v317, %v401
      %v403 = vlaneseq
      %v404 = vshrl.u32 %v403, 7
      %v405 = vsub.s32 0, %v404
      %v406 = vrot.slane %v324, %v405
      %v407 = vlaneseq
      %v408 = vshrl.u32 %v407, 7
      %v409 = vsub.s32 0, %v408
      %v410 = vrot.slane %v325, %v409
      %v411 = vlaneseq
      %v412 = vshrl.u32 %v411, 7
      %v413 = vsub.s32 0, %v412
      %v414 = vrot.slane %v326, %v413
      %v415 = vlaneseq
      %v416 = vshrl.u32 %v415, 7
      %v417 = vsub.s32 0, %v416
      %v418 = vrot.slane %v341, %v417
      %v419 = vlaneseq
      %v420 = vshrl.u32 %v419, 7
      %v421 = vsub.s32 0, %v420
      %v422 = vrot.slane %v348, %v421
      %v423 = vlaneseq
      %v424 = vshrl.u32 %v423, 7
      %v425 = vsub.s32 0, %v424
      %v426 = vrot.slane %v349, %v425
      %v427 = vlaneseq
      %v428 = vshrl.u32 %v427, 7
      %v429 = vsub.s32 0, %v428
      %v430 = vrot.slane %v350, %v429
      %v431 = vlaneseq
      %v432 = vshrl.u32 %v431, 7
      %v433 = vsub.s32 0, %v432
      %v434 = vrot.slane %v365, %v433
      %v435 = vlaneseq
      %v436 = vshrl.u32 %v435, 7
      %v437 = vsub.s32 0, %v436
      %v438 = vrot.slane %v372, %v437
      %v439 = vlaneseq
      %v440 = vshrl.u32 %v439, 7
      %v441 = vsub.s32 0, %v440
      %v442 = vrot.slane %v373, %v441
      %v443 = vlaneseq
      %v444 = vshrl.u32 %v443, 7
      %v445 = vsub.s32 0, %v444
      %v446 = vrot.slane %v374, %v445
      %v447 = vlaneseq
      %v448 = vshrl.u32 %v447, 7
      %v449 = vsub.s32 0, %v448
      %v450 = vrot.slane %v389, %v449
      %v451 = vlaneseq
      %v452 = vshrl.u32 %v451, 7
      %v453 = vsub.s32 0, %v452
      %v454 = vrot.slane %v396, %v453
      %v455 = vlaneseq
      %v456 = vshrl.u32 %v455, 7
      %v457 = vsub.s32 0, %v456
      %v458 = vrot.slane %v397, %v457
      %v459 = vlaneseq
      %v460 = vshrl.u32 %v459, 7
      %v461 = vsub.s32 0, %v460
      %v462 = vrot.slane %v398, %v461
      %v463 = vld [vmem:[%s261] sm:$0xf]
      %v464 = vld [vmem:[%s261 + $0x4] sm:$0xf]
      %v465 = vld [vmem:[%s261 + $0x8] sm:$0xf]
      %v466 = vld [vmem:[%s261 + $0xc] sm:$0xf]
      %v467 = vld [vmem:[%s261 + $0x10] sm:$0xf]
      %v468 = vld [vmem:[%s261 + $0x14] sm:$0xf]
      %v469 = vld [vmem:[%s261 + $0x18] sm:$0xf]
      %v470 = vld [vmem:[%s261 + $0x1c] sm:$0xf]
      %v471 = vunpack.c.l.bf16 %v463
      %v472 = vunpack.c.l.bf16 %v464
      %v473 = vunpack.c.l.bf16 %v465
      %v474 = vunpack.c.l.bf16 %v466
      %v475 = vunpack.c.l.bf16 %v467
      %v476 = vunpack.c.l.bf16 %v468
      %v477 = vunpack.c.l.bf16 %v469
      %v478 = vunpack.c.l.bf16 %v470
      %v480 = vlaneseq
      %v481 = vshrl.u32 %v480, 7
      %v482 = vsub.s32 0, %v481
      %v483 = vrot.slane %v291, %v482
      %v485 = vmul.f32 %v471, %v483
      %v486 = vmul.f32 %v472, %v483
      %v487 = vmul.f32 %v473, %v483
      %v488 = vmul.f32 %v474, %v483
      %v489 = vmul.f32 %v475, %v483
      %v490 = vmul.f32 %v476, %v483
      %v491 = vmul.f32 %v477, %v483
      %v492 = vmul.f32 %v478, %v483
      %v494 = vlaneseq
      %v495 = vshrl.u32 %v494, 7
      %v496 = vsub.s32 0, %v495
      %v497 = vrot.slane %v294, %v496
      %v499 = vadd.f32 %v485, %v497
      %v500 = vadd.f32 %v486, %v497
      %v501 = vadd.f32 %v487, %v497
      %v502 = vadd.f32 %v488, %v497
      %v503 = vadd.f32 %v489, %v497
      %v504 = vadd.f32 %v490, %v497
      %v505 = vadd.f32 %v491, %v497
      %v506 = vadd.f32 %v492, %v497
      %v507 = vcombine.low %v402, %v406
      %v508 = vcombine.low %v410, %v414
      %v510 = vunpack.c.l.s4 1983009808
      %v511 = vunpack.c.0.s8 %v510
      %v512 = vlaneseq
      %v513 = vshrl.u32 %v512, 7
      %v514 = vsub.s32 %v511, %v513
      %v515 = vrot.slane %v507, %v514
      %v517 = vunpack.c.l.s4 1983009808
      %v518 = vunpack.c.0.s8 %v517
      %v519 = vlaneseq
      %v520 = vshrl.u32 %v519, 7
      %v521 = vsub.s32 %v518, %v520
      %v522 = vrot.slane %v508, %v521
      %v523 = vcombine.low %v515, %v522
      %v524 = vcombine.low %v418, %v422
      %v525 = vcombine.low %v426, %v430
      %v527 = vunpack.c.l.s4 1983009808
      %v528 = vunpack.c.0.s8 %v527
      %v529 = vlaneseq
      %v530 = vshrl.u32 %v529, 7
      %v531 = vsub.s32 %v528, %v530
      %v532 = vrot.slane %v524, %v531
      %v534 = vunpack.c.l.s4 1983009808
      %v535 = vunpack.c.0.s8 %v534
      %v536 = vlaneseq
      %v537 = vshrl.u32 %v536, 7
      %v538 = vsub.s32 %v535, %v537
      %v539 = vrot.slane %v525, %v538
      %v540 = vcombine.low %v532, %v539
      %v541 = vcombine.low %v434, %v438
      %v542 = vcombine.low %v442, %v446
      %v544 = vunpack.c.l.s4 1983009808
      %v545 = vunpack.c.0.s8 %v544
      %v546 = vlaneseq
      %v547 = vshrl.u32 %v546, 7
      %v548 = vsub.s32 %v545, %v547
      %v549 = vrot.slane %v541, %v548
      %v551 = vunpack.c.l.s4 1983009808
      %v552 = vunpack.c.0.s8 %v551
      %v553 = vlaneseq
      %v554 = vshrl.u32 %v553, 7
      %v555 = vsub.s32 %v552, %v554
      %v556 = vrot.slane %v542, %v555
      %v557 = vcombine.low %v549, %v556
      %v558 = vcombine.low %v450, %v454
      %v559 = vcombine.low %v458, %v462
      %v561 = vunpack.c.l.s4 1983009808
      %v562 = vunpack.c.0.s8 %v561
      %v563 = vlaneseq
      %v564 = vshrl.u32 %v563, 7
      %v565 = vsub.s32 %v562, %v564
      %v566 = vrot.slane %v558, %v565
      %v568 = vunpack.c.l.s4 1983009808
      %v569 = vunpack.c.0.s8 %v568
      %v570 = vlaneseq
      %v571 = vshrl.u32 %v570, 7
      %v572 = vsub.s32 %v569, %v571
      %v573 = vrot.slane %v559, %v572
      %v574 = vcombine.low %v566, %v573
      %v579 = vadd.f32 %v499, %v523
      %v580 = vadd.f32 %v500, %v523
      %v581 = vadd.f32 %v501, %v540
      %v582 = vadd.f32 %v502, %v540
      %v583 = vadd.f32 %v503, %v557
      %v584 = vadd.f32 %v504, %v557
      %v585 = vadd.f32 %v505, %v574
      %v586 = vadd.f32 %v506, %v574
      %v587 = vmax.f32 %v579, 0.0
      %v588 = vmax.f32 %v580, 0.0
      %v589 = vmax.f32 %v581, 0.0
      %v590 = vmax.f32 %v582, 0.0
      %v591 = vmax.f32 %v583, 0.0
      %v592 = vmax.f32 %v584, 0.0
      %v593 = vmax.f32 %v585, 0.0
      %v594 = vmax.f32 %v586, 0.0
      %v595 = vpack.c.bf16 %v587, %v587
      %v596 = vpack.c.bf16 %v588, %v588
      %v597 = vpack.c.bf16 %v589, %v589
      %v598 = vpack.c.bf16 %v590, %v590
      %v599 = vpack.c.bf16 %v591, %v591
      %v600 = vpack.c.bf16 %v592, %v592
      %v601 = vpack.c.bf16 %v593, %v593
      %v602 = vpack.c.bf16 %v594, %v594
      %603 = vst [vmem:[%s271] sm:$0xf] %v595
      %604 = vst [vmem:[%s271 + $0x4] sm:$0xf] %v596
      %605 = vst [vmem:[%s271 + $0x8] sm:$0xf] %v597
      %606 = vst [vmem:[%s271 + $0xc] sm:$0xf] %v598
      %607 = vst [vmem:[%s271 + $0x10] sm:$0xf] %v599
      %608 = vst [vmem:[%s271 + $0x14] sm:$0xf] %v600
      %609 = vst [vmem:[%s271 + $0x18] sm:$0xf] %v601
      %610 = vst [vmem:[%s271 + $0x1c] sm:$0xf] %v602
      %p611 = scmp.lt.s32.totalorder %s17, 1
      %s612 = scalar_select %p611, %s17, 1
      %s613 = smul.addr %s612, 8
      %s614 = smul.addr %s613, 4
      %s615 = scalar_lea.vmem %s6, %s614
      // Predicated region
      $region45: #{decoder_forward.13} parent=43 // pred_check
        %p616 = pneg %p171
      $region46: #{decoder_forward.13} parent=43 // pred_check_branch
        %618 = sbr.rel (%p616) target = $region48
      $region47: #{decoder_forward.13} parent=43 // pred_region
        _
      $region48: #{decoder_forward.13} parent=43 // pred_fallthru
        _
    $region44: #{decoder_forward.13} parent=5 // pred_fallthru
      _
    %p619 = scmp.le.s32.totalorder 2, %s12
    // Predicated region
    $region49: #{decoder_forward.13} parent=5 // pred_check
      %p620 = pneg %p619
    $region50: #{decoder_forward.13} parent=5 // pred_check_branch
      %622 = sbr.rel (%p620) target = $region52
    $region51: #{decoder_forward.13} parent=5 // pred_region
      %s623 = ssub.s32 %s12, 2
      // Predicated region
      $region53: #{decoder_forward.13} parent=51 // pred_check
        %p624 = pneg %p177
      $region54: #{decoder_forward.13} parent=51 // pred_check_branch
        %626 = sbr.rel (%p624) target = $region56
      $region55: #{decoder_forward.13} parent=51 // pred_region
        %p627 = scmp.lt.s32.totalorder %s18, 1
        %s628 = scalar_select %p627, %s18, 1
        %s629 = smul.addr %s628, 8
        %s630 = smul.addr %s629, 4
        %s631 = scalar_lea.vmem %s6, %s630
      $region56: #{decoder_forward.13} parent=51 // pred_fallthru
        _
    $region52: #{decoder_forward.13} parent=5 // pred_fallthru
      _
  $region6: #{decoder_forward.13} parent=0 // loop_footer
    %s16 = sadd.s32 1, %s12
  $region7: #{decoder_forward.13} parent=0 // loop_footer_branch
    %11 = sbr.rel target = $region3
  $region8: #{decoder_forward.13} parent=0 // loop_exit
    _

// kernel: decoder_forward.12
$region0: #{decoder_forward.12}
  #allocation0 [shape = 'u32[]', space=smem, size = 0x4, offset = 0x4, fixed_abs, tag = 'smem constant byte address 0x4 - core index']
  #allocation1 [shape = 'u32[144,128]{1,0:T(1,128)}', space=vmem, size = 0x12000, scoped, tag = 'internal scratch']
  #allocation2 [shape = 'bf16[10,10,128]{2,1,0:T(8,128)(2,1)}', space=vmem, size = 0xa000, scoped, tag = 'scratch operand']
  %s0 = inlined_call_operand.vmem [shape: bf16[2,8,8,128], index: 0, kind: input, shape index: {}]
  %s1 = inlined_call_operand.vmem [shape: f32[2,1,128], index: 1, kind: input, shape index: {}]
  %s2 = inlined_call_operand.vmem [shape: f32[2,1,128], index: 2, kind: input, shape index: {}]
  %s3 = inlined_call_operand.vmem [shape: f32[1,128], index: 3, kind: input, shape index: {}]
  %s4 = inlined_call_operand.vmem [shape: f32[1,128], index: 4, kind: input, shape index: {}]
  %s5 = inlined_call_operand.vmem [shape: bf16[1152,128], index: 5, kind: input, shape index: {}]
  %s6 = inlined_call_operand.vmem [shape: f32[1,128], index: 6, kind: input, shape index: {}]
  %s7 = inlined_call_operand.vmem [shape: bf16[2,8,8,128], index: 7, kind: output, shape index: {0}]
  %s8 = inlined_call_operand.vmem [shape: f32[2,1,128], index: 8, kind: output, shape index: {1}]
  %s9 = inlined_call_operand.vmem [shape: f32[2,1,128], index: 9, kind: output, shape index: {2}]
  %10 = xla_tuple %s7, %s8, %s9
  %s11 = sld [smem:[#allocation0]]
  $region77: #{decoder_forward.12} parent=0
    _
  %s13 = ssub.s32 1, %s11
  %s14 = scalar_select 0, %s13, %s11
  loop: start=0, step=1, limit=4
  $region2: #{decoder_forward.12} parent=0 // loop_pre_header
    _
  $region3: #{decoder_forward.12} parent=0 // loop_header
    %s16 = sphi 0, %s20
    %p17 = scmp.ge.s32.totalorder %s16, 4
    %s26 = sphi 0, %s28
    %s29 = sphi 0, %s26
    %s30 = sphi 0, %s29
    %s46 = sphi 0, %s30
    %s50 = sphi 0, %s50
    %s52 = sphi 0, %s50
    %s53 = sphi 0, %s52
    %s67 = sphi 0, %s53
    %s71 = sphi 0, %s71
    %s73 = sphi 0, %s71
    %s74 = sphi 0, %s73
    %s88 = sphi 0, %s74
    %s92 = sphi 0, %s92
    %s94 = sphi 0, %s92
    %s95 = sphi 0, %s94
    %s109 = sphi 0, %s95
    %s113 = sphi 0, %s113
    %s115 = sphi 0, %s113
    %s116 = sphi 0, %s115
    %s130 = sphi 0, %s116
    %s134 = sphi 0, %s134
    %s136 = sphi 0, %s134
    %s137 = sphi 0, %s136
    %s151 = sphi 0, %s137
    %s155 = sphi 0, %s155
    %s157 = sphi 0, %s155
    %s158 = sphi 0, %s157
    %s172 = sphi 0, %s158
    %s178 = sphi 0, %s180
    %s181 = sphi 0, %s178
    %s182 = sphi 0, %s181
    %s198 = sphi 0, %s182
    %s204 = sphi 0, %s206
    %s207 = sphi 0, %s204
    %s208 = sphi 0, %s207
    %s224 = sphi 0, %s208
    %s230 = sphi 0, %s232
    %s233 = sphi 0, %s230
    %s234 = sphi 0, %s233
    %s250 = sphi 0, %s234
  $region4: #{decoder_forward.12} parent=0 // loop_header_branch
    %19 = sbr.rel (%p17) target = $region8
  $region5: #{decoder_forward.12} parent=0 // loop_body
    %s21 = ssub.s32 %s16, 1
    %s22 = ssub.s32 %s16, 2
    %s23 = sadd.s32 %s16, 1
    %s24 = ssub.s32 %s16, %s23
    %p25 = scmp.eq.s32.totalorder %s24, 0
    %s27 = sadd.s32 %s26, 1
    %s28 = scalar_select %p25, %s26, %s27
    %p31 = pneg %p25
    %p32 = scmp.eq.s32.totalorder %s16, 1
    %p33 = por %p31, %p32
    %p34 = scmp.ne.s32.totalorder %s26, %s29
    %p35 = scmp.eq.s32.totalorder %s16, 0
    %p36 = por %p34, %p35
    %p37 = scmp.ne.s32.totalorder %s26, %s29
    %p38 = scmp.eq.s32.totalorder %s21, 1
    %p39 = por %p37, %p38
    %p40 = scmp.ne.s32.totalorder %s29, %s30
    %p41 = scmp.eq.s32.totalorder %s21, 0
    %p42 = por %p40, %p41
    %p43 = scmp.ne.s32.totalorder %s29, %s30
    %p44 = scmp.eq.s32.totalorder %s22, 1
    %p45 = por %p43, %p44
    %p47 = scmp.ne.s32.totalorder %s30, %s46
    %p48 = scmp.eq.s32.totalorder %s22, 0
    %p49 = por %p47, %p48
    %s51 = sadd.s32 %s50, 1
    %p54 = scmp.eq.s32.totalorder %s16, 1
    %p55 = scmp.ne.s32.totalorder %s50, %s52
    %p56 = scmp.eq.s32.totalorder %s16, 0
    %p57 = por %p55, %p56
    %p58 = scmp.ne.s32.totalorder %s50, %s52
    %p59 = scmp.eq.s32.totalorder %s21, 1
    %p60 = por %p58, %p59
    %p61 = scmp.ne.s32.totalorder %s52, %s53
    %p62 = scmp.eq.s32.totalorder %s21, 0
    %p63 = por %p61, %p62
    %p64 = scmp.ne.s32.totalorder %s52, %s53
    %p65 = scmp.eq.s32.totalorder %s22, 1
    %p66 = por %p64, %p65
    %p68 = scmp.ne.s32.totalorder %s53, %s67
    %p69 = scmp.eq.s32.totalorder %s22, 0
    %p70 = por %p68, %p69
    %s72 = sadd.s32 %s71, 1
    %p75 = scmp.eq.s32.totalorder %s16, 1
    %p76 = scmp.ne.s32.totalorder %s71, %s73
    %p77 = scmp.eq.s32.totalorder %s16, 0
    %p78 = por %p76, %p77
    %p79 = scmp.ne.s32.totalorder %s71, %s73
    %p80 = scmp.eq.s32.totalorder %s21, 1
    %p81 = por %p79, %p80
    %p82 = scmp.ne.s32.totalorder %s73, %s74
    %p83 = scmp.eq.s32.totalorder %s21, 0
    %p84 = por %p82, %p83
    %p85 = scmp.ne.s32.totalorder %s73, %s74
    %p86 = scmp.eq.s32.totalorder %s22, 1
    %p87 = por %p85, %p86
    %p89 = scmp.ne.s32.totalorder %s74, %s88
    %p90 = scmp.eq.s32.totalorder %s22, 0
    %p91 = por %p89, %p90
    %s93 = sadd.s32 %s92, 1
    %p96 = scmp.eq.s32.totalorder %s16, 1
    %p97 = scmp.ne.s32.totalorder %s92, %s94
    %p98 = scmp.eq.s32.totalorder %s16, 0
    %p99 = por %p97, %p98
    %p100 = scmp.ne.s32.totalorder %s92, %s94
    %p101 = scmp.eq.s32.totalorder %s21, 1
    %p102 = por %p100, %p101
    %p103 = scmp.ne.s32.totalorder %s94, %s95
    %p104 = scmp.eq.s32.totalorder %s21, 0
    %p105 = por %p103, %p104
    %p106 = scmp.ne.s32.totalorder %s94, %s95
    %p107 = scmp.eq.s32.totalorder %s22, 1
    %p108 = por %p106, %p107
    %p110 = scmp.ne.s32.totalorder %s95, %s109
    %p111 = scmp.eq.s32.totalorder %s22, 0
    %p112 = por %p110, %p111
    %s114 = sadd.s32 %s113, 1
    %p117 = scmp.eq.s32.totalorder %s16, 1
    %p118 = scmp.ne.s32.totalorder %s113, %s115
    %p119 = scmp.eq.s32.totalorder %s16, 0
    %p120 = por %p118, %p119
    %p121 = scmp.ne.s32.totalorder %s113, %s115
    %p122 = scmp.eq.s32.totalorder %s21, 1
    %p123 = por %p121, %p122
    %p124 = scmp.ne.s32.totalorder %s115, %s116
    %p125 = scmp.eq.s32.totalorder %s21, 0
    %p126 = por %p124, %p125
    %p127 = scmp.ne.s32.totalorder %s115, %s116
    %p128 = scmp.eq.s32.totalorder %s22, 1
    %p129 = por %p127, %p128
    %p131 = scmp.ne.s32.totalorder %s116, %s130
    %p132 = scmp.eq.s32.totalorder %s22, 0
    %p133 = por %p131, %p132
    %s135 = sadd.s32 %s134, 1
    %p138 = scmp.eq.s32.totalorder %s16, 1
    %p139 = scmp.ne.s32.totalorder %s134, %s136
    %p140 = scmp.eq.s32.totalorder %s16, 0
    %p141 = por %p139, %p140
    %p142 = scmp.ne.s32.totalorder %s134, %s136
    %p143 = scmp.eq.s32.totalorder %s21, 1
    %p144 = por %p142, %p143
    %p145 = scmp.ne.s32.totalorder %s136, %s137
    %p146 = scmp.eq.s32.totalorder %s21, 0
    %p147 = por %p145, %p146
    %p148 = scmp.ne.s32.totalorder %s136, %s137
    %p149 = scmp.eq.s32.totalorder %s22, 1
    %p150 = por %p148, %p149
    %p152 = scmp.ne.s32.totalorder %s137, %s151
    %p153 = scmp.eq.s32.totalorder %s22, 0
    %p154 = por %p152, %p153
    %s156 = sadd.s32 %s155, 1
    %p159 = scmp.eq.s32.totalorder %s16, 1
    %p160 = scmp.ne.s32.totalorder %s155, %s157
    %p161 = scmp.eq.s32.totalorder %s16, 0
    %p162 = por %p160, %p161
    %p163 = scmp.ne.s32.totalorder %s155, %s157
    %p164 = scmp.eq.s32.totalorder %s21, 1
    %p165 = por %p163, %p164
    %p166 = scmp.ne.s32.totalorder %s157, %s158
    %p167 = scmp.eq.s32.totalorder %s21, 0
    %p168 = por %p166, %p167
    %p169 = scmp.ne.s32.totalorder %s157, %s158
    %p170 = scmp.eq.s32.totalorder %s22, 1
    %p171 = por %p169, %p170
    %p173 = scmp.ne.s32.totalorder %s158, %s172
    %p174 = scmp.eq.s32.totalorder %s22, 0
    %p175 = por %p173, %p174
    %s176 = ssub.s32 %s16, %s23
    %p177 = scmp.eq.s32.totalorder %s176, 0
    %s179 = sadd.s32 %s178, 1
    %s180 = scalar_select %p177, %s178, %s179
    %p183 = pneg %p177
    %p184 = scmp.eq.s32.totalorder %s16, 1
    %p185 = por %p183, %p184
    %p186 = scmp.ne.s32.totalorder %s178, %s181
    %p187 = scmp.eq.s32.totalorder %s16, 0
    %p188 = por %p186, %p187
    %p189 = scmp.ne.s32.totalorder %s178, %s181
    %p190 = scmp.eq.s32.totalorder %s21, 1
    %p191 = por %p189, %p190
    %p192 = scmp.ne.s32.totalorder %s181, %s182
    %p193 = scmp.eq.s32.totalorder %s21, 0
    %p194 = por %p192, %p193
    %p195 = scmp.ne.s32.totalorder %s181, %s182
    %p196 = scmp.eq.s32.totalorder %s22, 1
    %p197 = por %p195, %p196
    %p199 = scmp.ne.s32.totalorder %s182, %s198
    %p200 = scmp.eq.s32.totalorder %s22, 0
    %p201 = por %p199, %p200
    %s202 = ssub.s32 %s16, %s23
    %p203 = scmp.eq.s32.totalorder %s202, 0
    %s205 = sadd.s32 %s204, 1
    %s206 = scalar_select %p203, %s204, %s205
    %p209 = pneg %p203
    %p210 = scmp.eq.s32.totalorder %s16, 1
    %p211 = por %p209, %p210
    %p212 = scmp.ne.s32.totalorder %s204, %s207
    %p213 = scmp.eq.s32.totalorder %s16, 0
    %p214 = por %p212, %p213
    %p215 = scmp.ne.s32.totalorder %s204, %s207
    %p216 = scmp.eq.s32.totalorder %s21, 1
    %p217 = por %p215, %p216
    %p218 = scmp.ne.s32.totalorder %s207, %s208
    %p219 = scmp.eq.s32.totalorder %s21, 0
    %p220 = por %p218, %p219
    %p221 = scmp.ne.s32.totalorder %s207, %s208
    %p222 = scmp.eq.s32.totalorder %s22, 1
    %p223 = por %p221, %p222
    %p225 = scmp.ne.s32.totalorder %s208, %s224
    %p226 = scmp.eq.s32.totalorder %s22, 0
    %p227 = por %p225, %p226
    %s228 = ssub.s32 %s16, %s23
    %p229 = scmp.eq.s32.totalorder %s228, 0
    %s231 = sadd.s32 %s230, 1
    %s232 = scalar_select %p229, %s230, %s231
    %p235 = pneg %p229
    %p236 = scmp.eq.s32.totalorder %s16, 1
    %p237 = por %p235, %p236
    %p238 = scmp.ne.s32.totalorder %s230, %s233
    %p239 = scmp.eq.s32.totalorder %s16, 0
    %p240 = por %p238, %p239
    %p241 = scmp.ne.s32.totalorder %s230, %s233
    %p242 = scmp.eq.s32.totalorder %s21, 1
    %p243 = por %p241, %p242
    %p244 = scmp.ne.s32.totalorder %s233, %s234
    %p245 = scmp.eq.s32.totalorder %s21, 0
    %p246 = por %p244, %p245
    %p247 = scmp.ne.s32.totalorder %s233, %s234
    %p248 = scmp.eq.s32.totalorder %s22, 1
    %p249 = por %p247, %p248
    %p251 = scmp.ne.s32.totalorder %s234, %s250
    %p252 = scmp.eq.s32.totalorder %s22, 0
    %p253 = por %p251, %p252
    %p254 = scmp.le.s32.totalorder 1, %s16
    %p255 = scmp.lt.s32.totalorder %s16, 3
    %p256 = pnand %p254, %p255
    %p257 = pneg %p256
    // Predicated region
    $region9: #{decoder_forward.12} parent=5 // pred_check
      _
    $region10: #{decoder_forward.12} parent=5 // pred_check_branch
      %259 = sbr.rel (%p256) target = $region12
    $region11: #{decoder_forward.12} parent=5 // pred_region
      %s260 = ssub.s32 %s16, 1
      // Predicated region
      $region13: #{decoder_forward.12} parent=11 // pred_check
        %p261 = pneg %p63
      $region14: #{decoder_forward.12} parent=11 // pred_check_branch
        %263 = sbr.rel (%p261) target = $region16
      $region15: #{decoder_forward.12} parent=11 // pred_region
        _
      $region16: #{decoder_forward.12} parent=11 // pred_fallthru
        _
      // Predicated region
      $region17: #{decoder_forward.12} parent=11 // pred_check
        %p264 = pneg %p84
      $region18: #{decoder_forward.12} parent=11 // pred_check_branch
        %266 = sbr.rel (%p264) target = $region20
      $region19: #{decoder_forward.12} parent=11 // pred_region
        _
      $region20: #{decoder_forward.12} parent=11 // pred_fallthru
        _
      // Predicated region
      $region21: #{decoder_forward.12} parent=11 // pred_check
        %p267 = pneg %p105
      $region22: #{decoder_forward.12} parent=11 // pred_check_branch
        %269 = sbr.rel (%p267) target = $region24
      $region23: #{decoder_forward.12} parent=11 // pred_region
        _
      $region24: #{decoder_forward.12} parent=11 // pred_fallthru
        _
      // Predicated region
      $region25: #{decoder_forward.12} parent=11 // pred_check
        %p270 = pneg %p126
      $region26: #{decoder_forward.12} parent=11 // pred_check_branch
        %272 = sbr.rel (%p270) target = $region28
      $region27: #{decoder_forward.12} parent=11 // pred_region
        _
      $region28: #{decoder_forward.12} parent=11 // pred_fallthru
        _
      // Predicated region
      $region29: #{decoder_forward.12} parent=11 // pred_check
        %p273 = pneg %p147
      $region30: #{decoder_forward.12} parent=11 // pred_check_branch
        %275 = sbr.rel (%p273) target = $region32
      $region31: #{decoder_forward.12} parent=11 // pred_region
        _
      $region32: #{decoder_forward.12} parent=11 // pred_fallthru
        _
      // Predicated region
      $region33: #{decoder_forward.12} parent=11 // pred_check
        %p276 = pneg %p168
      $region34: #{decoder_forward.12} parent=11 // pred_check_branch
        %278 = sbr.rel (%p276) target = $region36
      $region35: #{decoder_forward.12} parent=11 // pred_region
        _
      $region36: #{decoder_forward.12} parent=11 // pred_fallthru
        _
    $region12: #{decoder_forward.12} parent=5 // pred_fallthru
      _
    %p279 = scmp.lt.s32.totalorder %s16, 2
    // Predicated region
    $region37: #{decoder_forward.12} parent=5 // pred_check
      %p280 = pneg %p279
    $region38: #{decoder_forward.12} parent=5 // pred_check_branch
      %282 = sbr.rel (%p280) target = $region40
    $region39: #{decoder_forward.12} parent=5 // pred_region
      // Predicated region
      $region41: #{decoder_forward.12} parent=39 // pred_check
        %p283 = pneg %p36
      $region42: #{decoder_forward.12} parent=39 // pred_check_branch
        %285 = sbr.rel (%p283) target = $region44
      $region43: #{decoder_forward.12} parent=39 // pred_region
        %p286 = scmp.lt.s32.totalorder %s16, 1
        %s287 = scalar_select %p286, %s16, 1
        %s288 = smul.addr %s287, 8
        %s289 = smul.addr %s288, 4
        %s290 = scalar_lea.vmem %s0, %s289
      $region44: #{decoder_forward.12} parent=39 // pred_fallthru
        _
    $region40: #{decoder_forward.12} parent=5 // pred_fallthru
      _
    %p291 = scmp.le.s32.totalorder 1, %s16
    %p292 = scmp.lt.s32.totalorder %s16, 3
    %p293 = pnand %p291, %p292
    %p294 = pneg %p293
    // Predicated region
    $region45: #{decoder_forward.12} parent=5 // pred_check
      _
    $region46: #{decoder_forward.12} parent=5 // pred_check_branch
      %296 = sbr.rel (%p293) target = $region48
    $region47: #{decoder_forward.12} parent=5 // pred_region
      %s297 = ssub.s32 %s16, 1
      %p298 = scmp.lt.s32.totalorder %s21, 1
      %s299 = scalar_select %p298, %s21, 1
      %s300 = smul.addr %s299, 8
      %s301 = smul.addr %s300, 4
      %s302 = scalar_lea.vmem %s0, %s301
      %p303 = pneg %p42
      %p304 = pneg %p39
      %p305 = pneg %p63
      %p306 = pneg %p60
      %p307 = pneg %p84
      %p308 = pneg %p81
      %p309 = pneg %p105
      %p310 = pneg %p102
      %p311 = pneg %p126
      %p312 = pneg %p123
      %p313 = pneg %p147
      %p314 = pneg %p144
      %p315 = pneg %p168
      %p316 = pneg %p165
      %p317 = pneg %p194
      %p318 = pneg %p191
      %p319 = scmp.lt.s32.totalorder %s21, 1
      %s320 = scalar_select %p319, %s21, 1
      %s321 = smul.addr %s320, 8
      %s322 = smul.addr %s321, 4
      %s323 = scalar_lea.vmem %s7, %s322
      %p324 = pneg %p220
      %p325 = pneg %p217
      %p326 = scmp.lt.s32.totalorder %s21, 1
      %s327 = scalar_select %p326, %s21, 1
      %s328 = scalar_lea.vmem %s8, %s327
      %p329 = pneg %p246
      %p330 = pneg %p243
      %p331 = scmp.lt.s32.totalorder %s21, 1
      %s332 = scalar_select %p331, %s21, 1
      %s333 = scalar_lea.vmem %s9, %s332
      %p334 = scmp.lt.s32.totalorder %s21, 1
      %s335 = scalar_select %p334, %s21, 1
      %s336 = smul.addr %s335, 8
      %s337 = smul.addr %s336, 4
      %s338 = scalar_lea.vmem %s0, %s337
      %p339 = scmp.lt.s32.totalorder %s21, 1
      %s340 = scalar_select %p339, %s21, 1
      %s341 = smul.addr %s340, 8
      %s342 = smul.addr %s341, 4
      %s343 = scalar_lea.vmem %s7, %s342
      %p344 = scmp.lt.s32.totalorder %s21, 1
      %s345 = scalar_select %p344, %s21, 1
      %s346 = scalar_lea.vmem %s8, %s345
      %p347 = scmp.lt.s32.totalorder %s21, 1
      %s348 = scalar_select %p347, %s21, 1
      %s349 = scalar_lea.vmem %s9, %s348
      %v351 = vld [vmem:[%s1] sm:$0x1]
      %v352 = vld [vmem:[%s1 + $0x1] sm:$0x1]
      %vm353 = vcmask 1040384
      %v354 = vsel %vm353, %v351, 0.0
      %v355 = vsel %vm353, %v352, 0.0
      %v356 = vadd.f32 %v354, %v355
      %v357 = vld [vmem:[%s2] sm:$0x1]
      %v358 = vld [vmem:[%s2 + $0x1] sm:$0x1]
      %v359 = vsel %vm353, %v357, 0.0
      %v360 = vsel %vm353, %v358, 0.0
      %v361 = vadd.f32 %v359, %v360
      %v362 = vmul.f32 %v356, 0.0078125
      %v363 = vmul.f32 %v361, 0.0078125
      %v364 = vmul.f32 %v362, %v362
      %v365 = vsub.f32 %v363, %v364
      %v366 = vmax.f32 %v365, 0.0
      %v367 = vld [vmem:[%s3] sm:$0x1]
      %v368 = vadd.f32 %v366, 1e-05
      %v369 = vrsqrt.pop %v368
      %v370 = vmul.f32 %v367, %v369
      %v371 = vld [vmem:[%s4] sm:$0x1]
      %v372 = vmul.f32 %v362, %v370
      %v373 = vsub.f32 %v371, %v372
      %v374 = vld [vmem:[%s338] sm:$0xf]
      %v375 = vld [vmem:[%s338 + $0x4] sm:$0xf]
      %v376 = vld [vmem:[%s338 + $0x8] sm:$0xf]
      %v377 = vld [vmem:[%s338 + $0xc] sm:$0xf]
      %v378 = vld [vmem:[%s338 + $0x10] sm:$0xf]
      %v379 = vld [vmem:[%s338 + $0x14] sm:$0xf]
      %v380 = vld [vmem:[%s338 + $0x18] sm:$0xf]
      %v381 = vld [vmem:[%s338 + $0x1c] sm:$0xf]
      %v382 = vunpack.c.l.bf16 %v374
      %v383 = vunpack.c.l.bf16 %v375
      %v384 = vunpack.c.l.bf16 %v376
      %v385 = vunpack.c.l.bf16 %v377
      %v386 = vunpack.c.l.bf16 %v378
      %v387 = vunpack.c.l.bf16 %v379
      %v388 = vunpack.c.l.bf16 %v380
      %v389 = vunpack.c.l.bf16 %v381
      %v391 = vlaneseq
      %v392 = vshrl.u32 %v391, 7
      %v393 = vsub.s32 0, %v392
      %v394 = vrot.slane %v370, %v393
      %v396 = vmul.f32 %v382, %v394
      %v397 = vmul.f32 %v383, %v394
      %v398 = vmul.f32 %v384, %v394
      %v399 = vmul.f32 %v385, %v394
      %v400 = vmul.f32 %v386, %v394
      %v401 = vmul.f32 %v387, %v394
      %v402 = vmul.f32 %v388, %v394
      %v403 = vmul.f32 %v389, %v394
      %v405 = vlaneseq
      %v406 = vshrl.u32 %v405, 7
      %v407 = vsub.s32 0, %v406
      %v408 = vrot.slane %v373, %v407
      %v410 = vadd.f32 %v396, %v408
      %v411 = vadd.f32 %v397, %v408
      %v412 = vadd.f32 %v398, %v408
      %v413 = vadd.f32 %v399, %v408
      %v414 = vadd.f32 %v400, %v408
      %v415 = vadd.f32 %v401, %v408
      %v416 = vadd.f32 %v402, %v408
      %v417 = vadd.f32 %v403, %v408
      %v418 = vmax.f32 %v410, 0.0
      %v419 = vmax.f32 %v411, 0.0
      %v420 = vmax.f32 %v412, 0.0
      %v421 = vmax.f32 %v413, 0.0
      %v422 = vmax.f32 %v414, 0.0
      %v423 = vmax.f32 %v415, 0.0
      %v424 = vmax.f32 %v416, 0.0
      %v425 = vmax.f32 %v417, 0.0
      %v426 = vpack.c.bf16 %v418, %v418
      %v427 = vpack.c.bf16 %v419, %v419
      %v428 = vpack.c.bf16 %v420, %v420
      %v429 = vpack.c.bf16 %v421, %v421
      %v430 = vpack.c.bf16 %v422, %v422
      %v431 = vpack.c.bf16 %v423, %v423
      %v432 = vpack.c.bf16 %v424, %v424
      %v433 = vpack.c.bf16 %v425, %v425
      %434 = vst [vmem:[#allocation2] sm:$0xf] 0
      %435 = vst [vmem:[#allocation2 + $0x4] sm:$0x1] 0
      %436 = vst [vmem:[#allocation2 + $0x8] sm:$0xf] 0
      %437 = vst [vmem:[#allocation2 + $0xc] sm:$0x1] 0
      %438 = vst [vmem:[#allocation2 + $0x10] sm:$0xf] 0
      %439 = vst [vmem:[#allocation2 + $0x14] sm:$0x1] 0
      %440 = vst [vmem:[#allocation2 + $0x18] sm:$0xf] 0
      %441 = vst [vmem:[#allocation2 + $0x1c] sm:$0x1] 0
      %442 = vst [vmem:[#allocation2 + $0x20] sm:$0xf] 0
      %443 = vst [vmem:[#allocation2 + $0x24] sm:$0x1] 0
      %444 = vst [vmem:[#allocation2 + $0x28] sm:$0xf] 0
      %445 = vst [vmem:[#allocation2 + $0x2c] sm:$0x1] 0
      %446 = vst [vmem:[#allocation2 + $0x30] sm:$0xf] 0
      %447 = vst [vmem:[#allocation2 + $0x34] sm:$0x1] 0
      %448 = vst [vmem:[#allocation2 + $0x38] sm:$0xf] 0
      %449 = vst [vmem:[#allocation2 + $0x3c] sm:$0x1] 0
      %450 = vst [vmem:[#allocation2 + $0x40] sm:$0xf] 0
      %451 = vst [vmem:[#allocation2 + $0x44] sm:$0x1] 0
      %452 = vst [vmem:[#allocation2 + $0x48] sm:$0xf] 0
      %453 = vst [vmem:[#allocation2 + $0x4c] sm:$0x1] 0
      %v462 = vunpack.c.l.b16 %v426
      %v463 = vunpack.c.l.b16 %v427
      %v464 = vunpack.c.l.b16 %v428
      %v465 = vunpack.c.l.b16 %v429
      %v466 = vunpack.c.l.b16 %v430
      %v467 = vunpack.c.l.b16 %v431
      %v468 = vunpack.c.l.b16 %v432
      %v469 = vunpack.c.l.b16 %v433
      %v470 = vpack.c.b16 %v462, %v462
      %v471 = vpack.c.b16 %v463, %v463
      %v472 = vpack.c.b16 %v464, %v464
      %v473 = vpack.c.b16 %v465, %v465
      %v474 = vpack.c.b16 %v466, %v466
      %v475 = vpack.c.b16 %v467, %v467
      %v476 = vpack.c.b16 %v468, %v468
      %v477 = vpack.c.b16 %v469, %v469
      %v479 = vshrl.u32 %v470, 16
      %v481 = vrot.slane %v479, 7
      %v482 = vshll.u32 %v470, 16
      %v484 = vor.u32 %v481, %v482
      %v485 = vrot.slane %v481, 4
      %v487 = vshrl.u32 %v471, 16
      %v489 = vrot.slane %v487, 7
      %v490 = vshll.u32 %v471, 16
      %v492 = vor.u32 %v489, %v490
      %v493 = vrot.slane %v489, 4
      %v495 = vshrl.u32 %v472, 16
      %v497 = vrot.slane %v495, 7
      %v498 = vshll.u32 %v472, 16
      %v500 = vor.u32 %v497, %v498
      %v501 = vrot.slane %v497, 4
      %v503 = vshrl.u32 %v473, 16
      %v505 = vrot.slane %v503, 7
      %v506 = vshll.u32 %v473, 16
      %v508 = vor.u32 %v505, %v506
      %v509 = vrot.slane %v505, 4
      %v511 = vshrl.u32 %v474, 16
      %v513 = vrot.slane %v511, 7
      %v514 = vshll.u32 %v474, 16
      %v516 = vor.u32 %v513, %v514
      %v517 = vrot.slane %v513, 4
      %v519 = vshrl.u32 %v475, 16
      %v521 = vrot.slane %v519, 7
      %v522 = vshll.u32 %v475, 16
      %v524 = vor.u32 %v521, %v522
      %v525 = vrot.slane %v521, 4
      %v527 = vshrl.u32 %v476, 16
      %v529 = vrot.slane %v527, 7
      %v530 = vshll.u32 %v476, 16
      %v532 = vor.u32 %v529, %v530
      %v533 = vrot.slane %v529, 4
      %v535 = vshrl.u32 %v477, 16
      %v537 = vrot.slane %v535, 7
      %v538 = vshll.u32 %v477, 16
      %v540 = vor.u32 %v537, %v538
      %v541 = vrot.slane %v537, 4
      %s558 = scalar_lea.vmem [#allocation2], 8
      %vm559 = vcmask 1043456
      %vm560 = vsmask.f32 7938
      %vm561 = vmand %vm559, %vm560
      %v562 = vld [vmem:[%s558] sm:$0xf]
      %v563 = vsel %vm561, %v484, %v562
      %564 = vst [vmem:[%s558] sm:$0xf] %v563
      %vm565 = vcmask 1040384
      %vm566 = vsmask.f32 256
      %vm567 = vmand %vm565, %vm566
      %v568 = vld [vmem:[%s558 + $0x4] sm:$0x1]
      %v569 = vsel %vm567, %v485, %v568
      %570 = vst [vmem:[%s558 + $0x4] sm:$0x1] %v569
      %v571 = vld [vmem:[%s558 + $0x8] sm:$0xf]
      %v572 = vsel %vm561, %v492, %v571
      %573 = vst [vmem:[%s558 + $0x8] sm:$0xf] %v572
      %v574 = vld [vmem:[%s558 + $0xc] sm:$0x1]
      %v575 = vsel %vm567, %v493, %v574
      %576 = vst [vmem:[%s558 + $0xc] sm:$0x1] %v575
      %v577 = vld [vmem:[%s558 + $0x10] sm:$0xf]
      %v578 = vsel %vm561, %v500, %v577
      %579 = vst [vmem:[%s558 + $0x10] sm:$0xf] %v578
      %v580 = vld [vmem:[%s558 + $0x14] sm:$0x1]
      %v581 = vsel %vm567, %v501, %v580
      %582 = vst [vmem:[%s558 + $0x14] sm:$0x1] %v581
      %v583 = vld [vmem:[%s558 + $0x18] sm:$0xf]
      %v584 = vsel %vm561, %v508, %v583
      %585 = vst [vmem:[%s558 + $0x18] sm:$0xf] %v584
      %v586 = vld [vmem:[%s558 + $0x1c] sm:$0x1]
      %v587 = vsel %vm567, %v509, %v586
      %588 = vst [vmem:[%s558 + $0x1c] sm:$0x1] %v587
      %v589 = vld [vmem:[%s558 + $0x20] sm:$0xf]
      %v590 = vsel %vm561, %v516, %v589
      %591 = vst [vmem:[%s558 + $0x20] sm:$0xf] %v590
      %v592 = vld [vmem:[%s558 + $0x24] sm:$0x1]
      %v593 = vsel %vm567, %v517, %v592
      %594 = vst [vmem:[%s558 + $0x24] sm:$0x1] %v593
      %v595 = vld [vmem:[%s558 + $0x28] sm:$0xf]
      %v596 = vsel %vm561, %v524, %v595
      %597 = vst [vmem:[%s558 + $0x28] sm:$0xf] %v596
      %v598 = vld [vmem:[%s558 + $0x2c] sm:$0x1]
      %v599 = vsel %vm567, %v525, %v598
      %600 = vst [vmem:[%s558 + $0x2c] sm:$0x1] %v599
      %v601 = vld [vmem:[%s558 + $0x30] sm:$0xf]
      %v602 = vsel %vm561, %v532, %v601
      %603 = vst [vmem:[%s558 + $0x30] sm:$0xf] %v602
      %v604 = vld [vmem:[%s558 + $0x34] sm:$0x1]
      %v605 = vsel %vm567, %v533, %v604
      %606 = vst [vmem:[%s558 + $0x34] sm:$0x1] %v605
      %v607 = vld [vmem:[%s558 + $0x38] sm:$0xf]
      %v608 = vsel %vm561, %v540, %v607
      %609 = vst [vmem:[%s558 + $0x38] sm:$0xf] %v608
      %v610 = vld [vmem:[%s558 + $0x3c] sm:$0x1]
      %v611 = vsel %vm567, %v541, %v610
      %612 = vst [vmem:[%s558 + $0x3c] sm:$0x1] %v611
      %v613 = vld [vmem:[#allocation2] sm:$0xf]
      %v614 = vld [vmem:[#allocation2 + $0x8] sm:$0xf]
      %v615 = vld [vmem:[#allocation2 + $0x10] sm:$0xf]
      %v616 = vld [vmem:[#allocation2 + $0x18] sm:$0xf]
      %v617 = vld [vmem:[#allocation2 + $0x20] sm:$0xf]
      %v618 = vld [vmem:[#allocation2 + $0x28] sm:$0xf]
      %v619 = vld [vmem:[#allocation2 + $0x30] sm:$0xf]
      %v620 = vld [vmem:[#allocation2 + $0x38] sm:$0xf]
      %v621 = vld [vmem:[#allocation2 + $0x4] sm:$0x1]
      %v622 = vld [vmem:[#allocation2 + $0xc] sm:$0x1]
      %v623 = vld [vmem:[#allocation2 + $0x14] sm:$0x1]
      %v624 = vld [vmem:[#allocation2 + $0x1c] sm:$0x1]
      %v625 = vld [vmem:[#allocation2 + $0x24] sm:$0x1]
      %v626 = vld [vmem:[#allocation2 + $0x2c] sm:$0x1]
      %v627 = vld [vmem:[#allocation2 + $0x34] sm:$0x1]
      %v628 = vld [vmem:[#allocation2 + $0x3c] sm:$0x1]
      %v629 = vld [vmem:[#allocation2] sm:$0xe]
      %v630 = vld [vmem:[#allocation2 + $0x8] sm:$0xe]
      %v631 = vld [vmem:[#allocation2 + $0x10] sm:$0xe]
      %v632 = vld [vmem:[#allocation2 + $0x18] sm:$0xe]
      %v633 = vld [vmem:[#allocation2 + $0x20] sm:$0xe]
      %v634 = vld [vmem:[#allocation2 + $0x28] sm:$0xe]
      %v635 = vld [vmem:[#allocation2 + $0x30] sm:$0xe]
      %v636 = vld [vmem:[#allocation2 + $0x38] sm:$0xe]
      %v637 = vld [vmem:[%s558] sm:$0xf]
      %v638 = vld [vmem:[%s558 + $0x8] sm:$0xf]
      %v639 = vld [vmem:[%s558 + $0x10] sm:$0xf]
      %v640 = vld [vmem:[%s558 + $0x18] sm:$0xf]
      %v641 = vld [vmem:[%s558 + $0x20] sm:$0xf]
      %v642 = vld [vmem:[%s558 + $0x28] sm:$0xf]
      %v643 = vld [vmem:[%s558 + $0x30] sm:$0xf]
      %v644 = vld [vmem:[%s558 + $0x38] sm:$0xf]
      %v645 = vld [vmem:[%s558 + $0x4] sm:$0x1]
      %v646 = vld [vmem:[%s558 + $0xc] sm:$0x1]
      %v647 = vld [vmem:[%s558 + $0x14] sm:$0x1]
      %v648 = vld [vmem:[%s558 + $0x1c] sm:$0x1]
      %v649 = vld [vmem:[%s558 + $0x24] sm:$0x1]
      %v650 = vld [vmem:[%s558 + $0x2c] sm:$0x1]
      %v651 = vld [vmem:[%s558 + $0x34] sm:$0x1]
      %v652 = vld [vmem:[%s558 + $0x3c] sm:$0x1]
      %v653 = vld [vmem:[%s558] sm:$0xe]
      %v654 = vld [vmem:[%s558 + $0x8] sm:$0xe]
      %v655 = vld [vmem:[%s558 + $0x10] sm:$0xe]
      %v656 = vld [vmem:[%s558 + $0x18] sm:$0xe]
      %v657 = vld [vmem:[%s558 + $0x20] sm:$0xe]
      %v658 = vld [vmem:[%s558 + $0x28] sm:$0xe]
      %v659 = vld [vmem:[%s558 + $0x30] sm:$0xe]
      %v660 = vld [vmem:[%s558 + $0x38] sm:$0xe]
      %s661 = scalar_lea.vmem [#allocation2], 16
      %v662 = vld [vmem:[%s661] sm:$0xf]
      %v663 = vld [vmem:[%s661 + $0x8] sm:$0xf]
      %v664 = vld [vmem:[%s661 + $0x10] sm:$0xf]
      %v665 = vld [vmem:[%s661 + $0x18] sm:$0xf]
      %v666 = vld [vmem:[%s661 + $0x20] sm:$0xf]
      %v667 = vld [vmem:[%s661 + $0x28] sm:$0xf]
      %v668 = vld [vmem:[%s661 + $0x30] sm:$0xf]
      %v669 = vld [vmem:[%s661 + $0x38] sm:$0xf]
      %v670 = vld [vmem:[%s661 + $0x4] sm:$0x1]
      %v671 = vld [vmem:[%s661 + $0xc] sm:$0x1]
      %v672 = vld [vmem:[%s661 + $0x14] sm:$0x1]
      %v673 = vld [vmem:[%s661 + $0x1c] sm:$0x1]
      %v674 = vld [vmem:[%s661 + $0x24] sm:$0x1]
      %v675 = vld [vmem:[%s661 + $0x2c] sm:$0x1]
      %v676 = vld [vmem:[%s661 + $0x34] sm:$0x1]
      %v677 = vld [vmem:[%s661 + $0x3c] sm:$0x1]
      %v678 = vld [vmem:[%s661] sm:$0xe]
      %v679 = vld [vmem:[%s661 + $0x8] sm:$0xe]
      %v680 = vld [vmem:[%s661 + $0x10] sm:$0xe]
      %v681 = vld [vmem:[%s661 + $0x18] sm:$0xe]
      %v682 = vld [vmem:[%s661 + $0x20] sm:$0xe]
      %v683 = vld [vmem:[%s661 + $0x28] sm:$0xe]
      %v684 = vld [vmem:[%s661 + $0x30] sm:$0xe]
      %v685 = vld [vmem:[%s661 + $0x38] sm:$0xe]
      %v702 = vunpack.c.l.b16 %v613
      %v703 = vunpack.c.l.b16 %v621
      %v704 = vunpack.c.l.b16 %v614
      %v705 = vunpack.c.l.b16 %v622
      %v706 = vunpack.c.l.b16 %v615
      %v707 = vunpack.c.l.b16 %v623
      %v708 = vunpack.c.l.b16 %v616
      %v709 = vunpack.c.l.b16 %v624
      %v710 = vunpack.c.l.b16 %v617
      %v711 = vunpack.c.l.b16 %v625
      %v712 = vunpack.c.l.b16 %v618
      %v713 = vunpack.c.l.b16 %v626
      %v714 = vunpack.c.l.b16 %v619
      %v715 = vunpack.c.l.b16 %v627
      %v716 = vunpack.c.l.b16 %v620
      %v717 = vunpack.c.l.b16 %v628
      %v718 = vpack.c.b16 %v703, %v702
      %v719 = vpack.c.b16 %v705, %v704
      %v720 = vpack.c.b16 %v707, %v706
      %v721 = vpack.c.b16 %v709, %v708
      %v722 = vpack.c.b16 %v711, %v710
      %v723 = vpack.c.b16 %v713, %v712
      %v724 = vpack.c.b16 %v715, %v714
      %v725 = vpack.c.b16 %v717, %v716
      %v727 = vshrl.u32 %v718, 16
      %v729 = vshll.u32 %v718, 16
      %v731 = vrot.slane %v729, 1
      %v732 = vor.u32 %v727, %v731
      %v734 = vshrl.u32 %v719, 16
      %v736 = vshll.u32 %v719, 16
      %v738 = vrot.slane %v736, 1
      %v739 = vor.u32 %v734, %v738
      %v741 = vshrl.u32 %v720, 16
      %v743 = vshll.u32 %v720, 16
      %v745 = vrot.slane %v743, 1
      %v746 = vor.u32 %v741, %v745
      %v748 = vshrl.u32 %v721, 16
      %v750 = vshll.u32 %v721, 16
      %v752 = vrot.slane %v750, 1
      %v753 = vor.u32 %v748, %v752
      %v755 = vshrl.u32 %v722, 16
      %v757 = vshll.u32 %v722, 16
      %v759 = vrot.slane %v757, 1
      %v760 = vor.u32 %v755, %v759
      %v762 = vshrl.u32 %v723, 16
      %v764 = vshll.u32 %v723, 16
      %v766 = vrot.slane %v764, 1
      %v767 = vor.u32 %v762, %v766
      %v769 = vshrl.u32 %v724, 16
      %v771 = vshll.u32 %v724, 16
      %v773 = vrot.slane %v771, 1
      %v774 = vor.u32 %v769, %v773
      %v776 = vshrl.u32 %v725, 16
      %v778 = vshll.u32 %v725, 16
      %v780 = vrot.slane %v778, 1
      %v781 = vor.u32 %v776, %v780
      %v790 = vunpack.c.l.b16 %v629
      %v791 = vunpack.c.l.b16 %v630
      %v792 = vunpack.c.l.b16 %v631
      %v793 = vunpack.c.l.b16 %v632
      %v794 = vunpack.c.l.b16 %v633
      %v795 = vunpack.c.l.b16 %v634
      %v796 = vunpack.c.l.b16 %v635
      %v797 = vunpack.c.l.b16 %v636
      %v798 = vpack.c.b16 %v703, %v790
      %v799 = vpack.c.b16 %v705, %v791
      %v800 = vpack.c.b16 %v707, %v792
      %v801 = vpack.c.b16 %v709, %v793
      %v802 = vpack.c.b16 %v711, %v794
      %v803 = vpack.c.b16 %v713, %v795
      %v804 = vpack.c.b16 %v715, %v796
      %v805 = vpack.c.b16 %v717, %v797
      %v806 = vrot.slane %v798, 1
      %v807 = vrot.slane %v799, 1
      %v808 = vrot.slane %v800, 1
      %v809 = vrot.slane %v801, 1
      %v810 = vrot.slane %v802, 1
      %v811 = vrot.slane %v803, 1
      %v812 = vrot.slane %v804, 1
      %v813 = vrot.slane %v805, 1
      %v830 = vunpack.c.l.b16 %v637
      %v831 = vunpack.c.l.b16 %v645
      %v832 = vunpack.c.l.b16 %v638
      %v833 = vunpack.c.l.b16 %v646
      %v834 = vunpack.c.l.b16 %v639
      %v835 = vunpack.c.l.b16 %v647
      %v836 = vunpack.c.l.b16 %v640
      %v837 = vunpack.c.l.b16 %v648
      %v838 = vunpack.c.l.b16 %v641
      %v839 = vunpack.c.l.b16 %v649
      %v840 = vunpack.c.l.b16 %v642
      %v841 = vunpack.c.l.b16 %v650
      %v842 = vunpack.c.l.b16 %v643
      %v843 = vunpack.c.l.b16 %v651
      %v844 = vunpack.c.l.b16 %v644
      %v845 = vunpack.c.l.b16 %v652
      %v846 = vpack.c.b16 %v831, %v830
      %v847 = vpack.c.b16 %v833, %v832
      %v848 = vpack.c.b16 %v835, %v834
      %v849 = vpack.c.b16 %v837, %v836
      %v850 = vpack.c.b16 %v839, %v838
      %v851 = vpack.c.b16 %v841, %v840
      %v852 = vpack.c.b16 %v843, %v842
      %v853 = vpack.c.b16 %v845, %v844
      %v855 = vshrl.u32 %v846, 16
      %v857 = vshll.u32 %v846, 16
      %v859 = vrot.slane %v857, 1
      %v860 = vor.u32 %v855, %v859
      %v862 = vshrl.u32 %v847, 16
      %v864 = vshll.u32 %v847, 16
      %v866 = vrot.slane %v864, 1
      %v867 = vor.u32 %v862, %v866
      %v869 = vshrl.u32 %v848, 16
      %v871 = vshll.u32 %v848, 16
      %v873 = vrot.slane %v871, 1
      %v874 = vor.u32 %v869, %v873
      %v876 = vshrl.u32 %v849, 16
      %v878 = vshll.u32 %v849, 16
      %v880 = vrot.slane %v878, 1
      %v881 = vor.u32 %v876, %v880
      %v883 = vshrl.u32 %v850, 16
      %v885 = vshll.u32 %v850, 16
      %v887 = vrot.slane %v885, 1
      %v888 = vor.u32 %v883, %v887
      %v890 = vshrl.u32 %v851, 16
      %v892 = vshll.u32 %v851, 16
      %v894 = vrot.slane %v892, 1
      %v895 = vor.u32 %v890, %v894
      %v897 = vshrl.u32 %v852, 16
      %v899 = vshll.u32 %v852, 16
      %v901 = vrot.slane %v899, 1
      %v902 = vor.u32 %v897, %v901
      %v904 = vshrl.u32 %v853, 16
      %v906 = vshll.u32 %v853, 16
      %v908 = vrot.slane %v906, 1
      %v909 = vor.u32 %v904, %v908
      %v918 = vunpack.c.l.b16 %v653
      %v919 = vunpack.c.l.b16 %v654
      %v920 = vunpack.c.l.b16 %v655
      %v921 = vunpack.c.l.b16 %v656
      %v922 = vunpack.c.l.b16 %v657
      %v923 = vunpack.c.l.b16 %v658
      %v924 = vunpack.c.l.b16 %v659
      %v925 = vunpack.c.l.b16 %v660
      %v926 = vpack.c.b16 %v831, %v918
      %v927 = vpack.c.b16 %v833, %v919
      %v928 = vpack.c.b16 %v835, %v920
      %v929 = vpack.c.b16 %v837, %v921
      %v930 = vpack.c.b16 %v839, %v922
      %v931 = vpack.c.b16 %v841, %v923
      %v932 = vpack.c.b16 %v843, %v924
      %v933 = vpack.c.b16 %v845, %v925
      %v934 = vrot.slane %v926, 1
      %v935 = vrot.slane %v927, 1
      %v936 = vrot.slane %v928, 1
      %v937 = vrot.slane %v929, 1
      %v938 = vrot.slane %v930, 1
      %v939 = vrot.slane %v931, 1
      %v940 = vrot.slane %v932, 1
      %v941 = vrot.slane %v933, 1
      %v958 = vunpack.c.l.b16 %v662
      %v959 = vunpack.c.l.b16 %v670
      %v960 = vunpack.c.l.b16 %v663
      %v961 = vunpack.c.l.b16 %v671
      %v962 = vunpack.c.l.b16 %v664
      %v963 = vunpack.c.l.b16 %v672
      %v964 = vunpack.c.l.b16 %v665
      %v965 = vunpack.c.l.b16 %v673
      %v966 = vunpack.c.l.b16 %v666
      %v967 = vunpack.c.l.b16 %v674
      %v968 = vunpack.c.l.b16 %v667
      %v969 = vunpack.c.l.b16 %v675
      %v970 = vunpack.c.l.b16 %v668
      %v971 = vunpack.c.l.b16 %v676
      %v972 = vunpack.c.l.b16 %v669
      %v973 = vunpack.c.l.b16 %v677
      %v974 = vpack.c.b16 %v959, %v958
      %v975 = vpack.c.b16 %v961, %v960
      %v976 = vpack.c.b16 %v963, %v962
      %v977 = vpack.c.b16 %v965, %v964
      %v978 = vpack.c.b16 %v967, %v966
      %v979 = vpack.c.b16 %v969, %v968
      %v980 = vpack.c.b16 %v971, %v970
      %v981 = vpack.c.b16 %v973, %v972
      %v983 = vshrl.u32 %v974, 16
      %v985 = vshll.u32 %v974, 16
      %v987 = vrot.slane %v985, 1
      %v988 = vor.u32 %v983, %v987
      %v990 = vshrl.u32 %v975, 16
      %v992 = vshll.u32 %v975, 16
      %v994 = vrot.slane %v992, 1
      %v995 = vor.u32 %v990, %v994
      %v997 = vshrl.u32 %v976, 16
      %v999 = vshll.u32 %v976, 16
      %v1001 = vrot.slane %v999, 1
      %v1002 = vor.u32 %v997, %v1001
      %v1004 = vshrl.u32 %v977, 16
      %v1006 = vshll.u32 %v977, 16
      %v1008 = vrot.slane %v1006, 1
      %v1009 = vor.u32 %v1004, %v1008
      %v1011 = vshrl.u32 %v978, 16
      %v1013 = vshll.u32 %v978, 16
      %v1015 = vrot.slane %v1013, 1
      %v1016 = vor.u32 %v1011, %v1015
      %v1018 = vshrl.u32 %v979, 16
      %v1020 = vshll.u32 %v979, 16
      %v1022 = vrot.slane %v1020, 1
      %v1023 = vor.u32 %v1018, %v1022
      %v1025 = vshrl.u32 %v980, 16
      %v1027 = vshll.u32 %v980, 16
      %v1029 = vrot.slane %v1027, 1
      %v1030 = vor.u32 %v1025, %v1029
      %v1032 = vshrl.u32 %v981, 16
      %v1034 = vshll.u32 %v981, 16
      %v1036 = vrot.slane %v1034, 1
      %v1037 = vor.u32 %v1032, %v1036
      %v1046 = vunpack.c.l.b16 %v678
      %v1047 = vunpack.c.l.b16 %v679
      %v1048 = vunpack.c.l.b16 %v680
      %v1049 = vunpack.c.l.b16 %v681
      %v1050 = vunpack.c.l.b16 %v682
      %v1051 = vunpack.c.l.b16 %v683
      %v1052 = vunpack.c.l.b16 %v684
      %v1053 = vunpack.c.l.b16 %v685
      %v1054 = vpack.c.b16 %v959, %v1046
      %v1055 = vpack.c.b16 %v961, %v1047
      %v1056 = vpack.c.b16 %v963, %v1048
      %v1057 = vpack.c.b16 %v965, %v1049
      %v1058 = vpack.c.b16 %v967, %v1050
      %v1059 = vpack.c.b16 %v969, %v1051
      %v1060 = vpack.c.b16 %v971, %v1052
      %v1061 = vpack.c.b16 %v973, %v1053
      %v1062 = vrot.slane %v1054, 1
      %v1063 = vrot.slane %v1055, 1
      %v1064 = vrot.slane %v1056, 1
      %v1065 = vrot.slane %v1057, 1
      %v1066 = vrot.slane %v1058, 1
      %v1067 = vrot.slane %v1059, 1
      %v1068 = vrot.slane %v1060, 1
      %v1069 = vrot.slane %v1061, 1
      %v1070 = vunpack.c.l.b16 %v732
      %v1071 = vunpack.c.l.b16 %v806
      %v1072 = vunpack.c.l.b16 %v860
      %v1073 = vunpack.c.l.b16 %v934
      %v1074 = vunpack.c.l.b16 %v988
      %v1075 = vunpack.c.l.b16 %v1062
      %v1076 = vunpack.c.l.b16 %v739
      %v1077 = vunpack.c.l.b16 %v807
      %v1078 = vunpack.c.l.b16 %v867
      %v1079 = vunpack.c.l.b16 %v935
      %v1080 = vunpack.c.l.b16 %v995
      %v1081 = vunpack.c.l.b16 %v1063
      %v1082 = vunpack.c.l.b16 %v746
      %v1083 = vunpack.c.l.b16 %v808
      %v1084 = vunpack.c.l.b16 %v874
      %v1085 = vunpack.c.l.b16 %v936
      %v1086 = vunpack.c.l.b16 %v1002
      %v1087 = vunpack.c.l.b16 %v1064
      %v1088 = vunpack.c.l.b16 %v753
      %v1089 = vunpack.c.l.b16 %v809
      %v1090 = vunpack.c.l.b16 %v881
      %v1091 = vunpack.c.l.b16 %v937
      %v1092 = vunpack.c.l.b16 %v1009
      %v1093 = vunpack.c.l.b16 %v1065
      %v1094 = vunpack.c.l.b16 %v760
      %v1095 = vunpack.c.l.b16 %v810
      %v1096 = vunpack.c.l.b16 %v888
      %v1097 = vunpack.c.l.b16 %v938
      %v1098 = vunpack.c.l.b16 %v1016
      %v1099 = vunpack.c.l.b16 %v1066
      %v1100 = vunpack.c.l.b16 %v767
      %v1101 = vunpack.c.l.b16 %v811
      %v1102 = vunpack.c.l.b16 %v895
      %v1103 = vunpack.c.l.b16 %v939
      %v1104 = vunpack.c.l.b16 %v1023
      %v1105 = vunpack.c.l.b16 %v1067
      %v1106 = vunpack.c.l.b16 %v774
      %v1107 = vunpack.c.l.b16 %v812
      %v1108 = vunpack.c.l.b16 %v902
      %v1109 = vunpack.c.l.b16 %v940
      %v1110 = vunpack.c.l.b16 %v1030
      %v1111 = vunpack.c.l.b16 %v1068
      %v1112 = vunpack.c.l.b16 %v781
      %v1113 = vunpack.c.l.b16 %v813
      %v1114 = vunpack.c.l.b16 %v909
      %v1115 = vunpack.c.l.b16 %v941
      %v1116 = vunpack.c.l.b16 %v1037
      %v1117 = vunpack.c.l.b16 %v1069
      %v1118 = vld [vmem:[%s5] sm:$0xf]
      %v1119 = vld [vmem:[%s5 + $0x4] sm:$0xf]
      %v1120 = vld [vmem:[%s5 + $0x8] sm:$0xf]
      %v1121 = vld [vmem:[%s5 + $0xc] sm:$0xf]
      %v1122 = vld [vmem:[%s5 + $0x10] sm:$0xf]
      %v1123 = vld [vmem:[%s5 + $0x14] sm:$0xf]
      %v1124 = vld [vmem:[%s5 + $0x18] sm:$0xf]
      %v1125 = vld [vmem:[%s5 + $0x1c] sm:$0xf]
      %v1126 = vld [vmem:[%s5 + $0x20] sm:$0xf]
      %v1127 = vld [vmem:[%s5 + $0x24] sm:$0xf]
      %v1128 = vld [vmem:[%s5 + $0x28] sm:$0xf]
      %v1129 = vld [vmem:[%s5 + $0x2c] sm:$0xf]
      %v1130 = vld [vmem:[%s5 + $0x30] sm:$0xf]
      %v1131 = vld [vmem:[%s5 + $0x34] sm:$0xf]
      %v1132 = vld [vmem:[%s5 + $0x38] sm:$0xf]
      %v1133 = vld [vmem:[%s5 + $0x3c] sm:$0xf]
      %v1134 = vld [vmem:[%s5 + $0x40] sm:$0xf]
      %v1135 = vld [vmem:[%s5 + $0x44] sm:$0xf]
      %v1136 = vld [vmem:[%s5 + $0x48] sm:$0xf]
      %v1137 = vld [vmem:[%s5 + $0x4c] sm:$0xf]
      %v1138 = vld [vmem:[%s5 + $0x50] sm:$0xf]
      %v1139 = vld [vmem:[%s5 + $0x54] sm:$0xf]
      %v1140 = vld [vmem:[%s5 + $0x58] sm:$0xf]
      %v1141 = vld [vmem:[%s5 + $0x5c] sm:$0xf]
      %v1142 = vld [vmem:[%s5 + $0x60] sm:$0xf]
      %v1143 = vld [vmem:[%s5 + $0x64] sm:$0xf]
      %v1144 = vld [vmem:[%s5 + $0x68] sm:$0xf]
      %v1145 = vld [vmem:[%s5 + $0x6c] sm:$0xf]
      %v1146 = vld [vmem:[%s5 + $0x70] sm:$0xf]
      %v1147 = vld [vmem:[%s5 + $0x74] sm:$0xf]
      %v1148 = vld [vmem:[%s5 + $0x78] sm:$0xf]
      %v1149 = vld [vmem:[%s5 + $0x7c] sm:$0xf]
      %v1150 = vld [vmem:[%s5 + $0x80] sm:$0xf]
      %v1151 = vld [vmem:[%s5 + $0x84] sm:$0xf]
      %v1152 = vld [vmem:[%s5 + $0x88] sm:$0xf]
      %v1153 = vld [vmem:[%s5 + $0x8c] sm:$0xf]
      %v1154 = vld [vmem:[%s5 + $0x90] sm:$0xf]
      %v1155 = vld [vmem:[%s5 + $0x94] sm:$0xf]
      %v1156 = vld [vmem:[%s5 + $0x98] sm:$0xf]
      %v1157 = vld [vmem:[%s5 + $0x9c] sm:$0xf]
      %v1158 = vld [vmem:[%s5 + $0xa0] sm:$0xf]
      %v1159 = vld [vmem:[%s5 + $0xa4] sm:$0xf]
      %v1160 = vld [vmem:[%s5 + $0xa8] sm:$0xf]
      %v1161 = vld [vmem:[%s5 + $0xac] sm:$0xf]
      %v1162 = vld [vmem:[%s5 + $0xb0] sm:$0xf]
      %v1163 = vld [vmem:[%s5 + $0xb4] sm:$0xf]
      %v1164 = vld [vmem:[%s5 + $0xb8] sm:$0xf]
      %v1165 = vld [vmem:[%s5 + $0xbc] sm:$0xf]
      %v1166 = vld [vmem:[%s5 + $0xc0] sm:$0xf]
      %v1167 = vld [vmem:[%s5 + $0xc4] sm:$0xf]
      %v1168 = vld [vmem:[%s5 + $0xc8] sm:$0xf]
      %v1169 = vld [vmem:[%s5 + $0xcc] sm:$0xf]
      %v1170 = vld [vmem:[%s5 + $0xd0] sm:$0xf]
      %v1171 = vld [vmem:[%s5 + $0xd4] sm:$0xf]
      %v1172 = vld [vmem:[%s5 + $0xd8] sm:$0xf]
      %v1173 = vld [vmem:[%s5 + $0xdc] sm:$0xf]
      %v1174 = vld [vmem:[%s5 + $0xe0] sm:$0xf]
      %v1175 = vld [vmem:[%s5 + $0xe4] sm:$0xf]
      %v1176 = vld [vmem:[%s5 + $0xe8] sm:$0xf]
      %v1177 = vld [vmem:[%s5 + $0xec] sm:$0xf]
      %v1178 = vld [vmem:[%s5 + $0xf0] sm:$0xf]
      %v1179 = vld [vmem:[%s5 + $0xf4] sm:$0xf]
      %v1180 = vld [vmem:[%s5 + $0xf8] sm:$0xf]
      %v1181 = vld [vmem:[%s5 + $0xfc] sm:$0xf]
      %v1182 = vld [vmem:[%s5 + $0x100] sm:$0xf]
      %v1183 = vld [vmem:[%s5 + $0x104] sm:$0xf]
      %v1184 = vld [vmem:[%s5 + $0x108] sm:$0xf]
      %v1185 = vld [vmem:[%s5 + $0x10c] sm:$0xf]
      %v1186 = vld [vmem:[%s5 + $0x110] sm:$0xf]
      %v1187 = vld [vmem:[%s5 + $0x114] sm:$0xf]
      %v1188 = vld [vmem:[%s5 + $0x118] sm:$0xf]
      %v1189 = vld [vmem:[%s5 + $0x11c] sm:$0xf]
      %v1190 = vld [vmem:[%s5 + $0x120] sm:$0xf]
      %v1191 = vld [vmem:[%s5 + $0x124] sm:$0xf]
      %v1192 = vld [vmem:[%s5 + $0x128] sm:$0xf]
      %v1193 = vld [vmem:[%s5 + $0x12c] sm:$0xf]
      %v1194 = vld [vmem:[%s5 + $0x130] sm:$0xf]
      %v1195 = vld [vmem:[%s5 + $0x134] sm:$0xf]
      %v1196 = vld [vmem:[%s5 + $0x138] sm:$0xf]
      %v1197 = vld [vmem:[%s5 + $0x13c] sm:$0xf]
      %v1198 = vld [vmem:[%s5 + $0x140] sm:$0xf]
      %v1199 = vld [vmem:[%s5 + $0x144] sm:$0xf]
      %v1200 = vld [vmem:[%s5 + $0x148] sm:$0xf]
      %v1201 = vld [vmem:[%s5 + $0x14c] sm:$0xf]
      %v1202 = vld [vmem:[%s5 + $0x150] sm:$0xf]
      %v1203 = vld [vmem:[%s5 + $0x154] sm:$0xf]
      %v1204 = vld [vmem:[%s5 + $0x158] sm:$0xf]
      %v1205 = vld [vmem:[%s5 + $0x15c] sm:$0xf]
      %v1206 = vld [vmem:[%s5 + $0x160] sm:$0xf]
      %v1207 = vld [vmem:[%s5 + $0x164] sm:$0xf]
      %v1208 = vld [vmem:[%s5 + $0x168] sm:$0xf]
      %v1209 = vld [vmem:[%s5 + $0x16c] sm:$0xf]
      %v1210 = vld [vmem:[%s5 + $0x170] sm:$0xf]
      %v1211 = vld [vmem:[%s5 + $0x174] sm:$0xf]
      %v1212 = vld [vmem:[%s5 + $0x178] sm:$0xf]
      %v1213 = vld [vmem:[%s5 + $0x17c] sm:$0xf]
      %v1214 = vld [vmem:[%s5 + $0x180] sm:$0xf]
      %v1215 = vld [vmem:[%s5 + $0x184] sm:$0xf]
      %v1216 = vld [vmem:[%s5 + $0x188] sm:$0xf]
      %v1217 = vld [vmem:[%s5 + $0x18c] sm:$0xf]
      %v1218 = vld [vmem:[%s5 + $0x190] sm:$0xf]
      %v1219 = vld [vmem:[%s5 + $0x194] sm:$0xf]
      %v1220 = vld [vmem:[%s5 + $0x198] sm:$0xf]
      %v1221 = vld [vmem:[%s5 + $0x19c] sm:$0xf]
      %v1222 = vld [vmem:[%s5 + $0x1a0] sm:$0xf]
      %v1223 = vld [vmem:[%s5 + $0x1a4] sm:$0xf]
      %v1224 = vld [vmem:[%s5 + $0x1a8] sm:$0xf]
      %v1225 = vld [vmem:[%s5 + $0x1ac] sm:$0xf]
      %v1226 = vld [vmem:[%s5 + $0x1b0] sm:$0xf]
      %v1227 = vld [vmem:[%s5 + $0x1b4] sm:$0xf]
      %v1228 = vld [vmem:[%s5 + $0x1b8] sm:$0xf]
      %v1229 = vld [vmem:[%s5 + $0x1bc] sm:$0xf]
      %v1230 = vld [vmem:[%s5 + $0x1c0] sm:$0xf]
      %v1231 = vld [vmem:[%s5 + $0x1c4] sm:$0xf]
      %v1232 = vld [vmem:[%s5 + $0x1c8] sm:$0xf]
      %v1233 = vld [vmem:[%s5 + $0x1cc] sm:$0xf]
      %v1234 = vld [vmem:[%s5 + $0x1d0] sm:$0xf]
      %v1235 = vld [vmem:[%s5 + $0x1d4] sm:$0xf]
      %v1236 = vld [vmem:[%s5 + $0x1d8] sm:$0xf]
      %v1237 = vld [vmem:[%s5 + $0x1dc] sm:$0xf]
      %v1238 = vld [vmem:[%s5 + $0x1e0] sm:$0xf]
      %v1239 = vld [vmem:[%s5 + $0x1e4] sm:$0xf]
      %v1240 = vld [vmem:[%s5 + $0x1e8] sm:$0xf]
      %v1241 = vld [vmem:[%s5 + $0x1ec] sm:$0xf]
      %v1242 = vld [vmem:[%s5 + $0x1f0] sm:$0xf]
      %v1243 = vld [vmem:[%s5 + $0x1f4] sm:$0xf]
      %v1244 = vld [vmem:[%s5 + $0x1f8] sm:$0xf]
      %v1245 = vld [vmem:[%s5 + $0x1fc] sm:$0xf]
      %v1246 = vld [vmem:[%s5 + $0x200] sm:$0xf]
      %v1247 = vld [vmem:[%s5 + $0x204] sm:$0xf]
      %v1248 = vld [vmem:[%s5 + $0x208] sm:$0xf]
      %v1249 = vld [vmem:[%s5 + $0x20c] sm:$0xf]
      %v1250 = vld [vmem:[%s5 + $0x210] sm:$0xf]
      %v1251 = vld [vmem:[%s5 + $0x214] sm:$0xf]
      %v1252 = vld [vmem:[%s5 + $0x218] sm:$0xf]
      %v1253 = vld [vmem:[%s5 + $0x21c] sm:$0xf]
      %v1254 = vld [vmem:[%s5 + $0x220] sm:$0xf]
      %v1255 = vld [vmem:[%s5 + $0x224] sm:$0xf]
      %v1256 = vld [vmem:[%s5 + $0x228] sm:$0xf]
      %v1257 = vld [vmem:[%s5 + $0x22c] sm:$0xf]
      %v1258 = vld [vmem:[%s5 + $0x230] sm:$0xf]
      %v1259 = vld [vmem:[%s5 + $0x234] sm:$0xf]
      %v1260 = vld [vmem:[%s5 + $0x238] sm:$0xf]
      %v1261 = vld [vmem:[%s5 + $0x23c] sm:$0xf]
      %v1262 = vld [vmem:[%s6] sm:$0x1]
      %v1264 = vlaneseq
      %v1265 = vshrl.u32 %v1264, 7
      %v1266 = vsub.s32 0, %v1265
      %v1267 = vrot.slane %v1262, %v1266
      %v1269 = vpack.c.b16 %v704, %v702
      %v1270 = vpack.c.b16 %v1076, %v1070
      %v1271 = vpack.c.b16 %v1077, %v1071
      %v1272 = vpack.c.b16 %v832, %v830
      %v1273 = vpack.c.b16 %v1078, %v1072
      %v1274 = vpack.c.b16 %v1079, %v1073
      %v1275 = vpack.c.b16 %v960, %v958
      %v1276 = vpack.c.b16 %v1080, %v1074
      %v1277 = vpack.c.b16 %v1081, %v1075
      %v1278 = vpack.c.b16 %v708, %v706
      %v1279 = vpack.c.b16 %v1088, %v1082
      %v1280 = vpack.c.b16 %v1089, %v1083
      %v1281 = vpack.c.b16 %v836, %v834
      %v1282 = vpack.c.b16 %v1090, %v1084
      %v1283 = vpack.c.b16 %v1091, %v1085
      %v1284 = vpack.c.b16 %v964, %v962
      %v1285 = vpack.c.b16 %v1092, %v1086
      %v1286 = vpack.c.b16 %v1093, %v1087
      %v1287 = vpack.c.b16 %v712, %v710
      %v1288 = vpack.c.b16 %v1100, %v1094
      %v1289 = vpack.c.b16 %v1101, %v1095
      %v1290 = vpack.c.b16 %v840, %v838
      %v1291 = vpack.c.b16 %v1102, %v1096
      %v1292 = vpack.c.b16 %v1103, %v1097
      %v1293 = vpack.c.b16 %v968, %v966
      %v1294 = vpack.c.b16 %v1104, %v1098
      %v1295 = vpack.c.b16 %v1105, %v1099
      %v1296 = vpack.c.b16 %v716, %v714
      %v1297 = vpack.c.b16 %v1112, %v1106
      %v1298 = vpack.c.b16 %v1113, %v1107
      %v1299 = vpack.c.b16 %v844, %v842
      %v1300 = vpack.c.b16 %v1114, %v1108
      %v1301 = vpack.c.b16 %v1115, %v1109
      %v1302 = vpack.c.b16 %v972, %v970
      %v1303 = vpack.c.b16 %v1116, %v1110
      %v1304 = vpack.c.b16 %v1117, %v1111
      %v1485 = vunpack.c.l.b16 %v1118
      %v1486 = vunpack.c.l.b16 %v1119
      %v1487 = vunpack.c.l.b16 %v1120
      %v1488 = vunpack.c.l.b16 %v1121
      %v1489 = vunpack.c.l.b16 %v1122
      %v1490 = vunpack.c.l.b16 %v1123
      %v1491 = vunpack.c.l.b16 %v1124
      %v1492 = vunpack.c.l.b16 %v1125
      %v1493 = vunpack.c.l.b16 %v1126
      %v1494 = vunpack.c.l.b16 %v1127
      %v1495 = vunpack.c.l.b16 %v1128
      %v1496 = vunpack.c.l.b16 %v1129
      %v1497 = vunpack.c.l.b16 %v1130
      %v1498 = vunpack.c.l.b16 %v1131
      %v1499 = vunpack.c.l.b16 %v1132
      %v1500 = vunpack.c.l.b16 %v1133
      %v1501 = vunpack.c.l.b16 %v1134
      %v1502 = vunpack.c.l.b16 %v1135
      %v1503 = vunpack.c.l.b16 %v1136
      %v1504 = vunpack.c.l.b16 %v1137
      %v1505 = vunpack.c.l.b16 %v1138
      %v1506 = vunpack.c.l.b16 %v1139
      %v1507 = vunpack.c.l.b16 %v1140
      %v1508 = vunpack.c.l.b16 %v1141
      %v1509 = vunpack.c.l.b16 %v1142
      %v1510 = vunpack.c.l.b16 %v1143
      %v1511 = vunpack.c.l.b16 %v1144
      %v1512 = vunpack.c.l.b16 %v1145
      %v1513 = vunpack.c.l.b16 %v1146
      %v1514 = vunpack.c.l.b16 %v1147
      %v1515 = vunpack.c.l.b16 %v1148
      %v1516 = vunpack.c.l.b16 %v1149
      %v1517 = vunpack.c.l.b16 %v1150
      %v1518 = vunpack.c.l.b16 %v1151
      %v1519 = vunpack.c.l.b16 %v1152
      %v1520 = vunpack.c.l.b16 %v1153
      %v1521 = vunpack.c.l.b16 %v1154
      %v1522 = vunpack.c.l.b16 %v1155
      %v1523 = vunpack.c.l.b16 %v1156
      %v1524 = vunpack.c.l.b16 %v1157
      %v1525 = vunpack.c.l.b16 %v1158
      %v1526 = vunpack.c.l.b16 %v1159
      %v1527 = vunpack.c.l.b16 %v1160
      %v1528 = vunpack.c.l.b16 %v1161
      %v1529 = vunpack.c.l.b16 %v1162
      %v1530 = vunpack.c.l.b16 %v1163
      %v1531 = vunpack.c.l.b16 %v1164
      %v1532 = vunpack.c.l.b16 %v1165
      %v1533 = vunpack.c.l.b16 %v1166
      %v1534 = vunpack.c.l.b16 %v1167
      %v1535 = vunpack.c.l.b16 %v1168
      %v1536 = vunpack.c.l.b16 %v1169
      %v1537 = vunpack.c.l.b16 %v1170
      %v1538 = vunpack.c.l.b16 %v1171
      %v1539 = vunpack.c.l.b16 %v1172
      %v1540 = vunpack.c.l.b16 %v1173
      %v1541 = vunpack.c.l.b16 %v1174
      %v1542 = vunpack.c.l.b16 %v1175
      %v1543 = vunpack.c.l.b16 %v1176
      %v1544 = vunpack.c.l.b16 %v1177
      %v1545 = vunpack.c.l.b16 %v1178
      %v1546 = vunpack.c.l.b16 %v1179
      %v1547 = vunpack.c.l.b16 %v1180
      %v1548 = vunpack.c.l.b16 %v1181
      %v1549 = vunpack.c.l.b16 %v1182
      %v1550 = vunpack.c.l.b16 %v1183
      %v1551 = vunpack.c.l.b16 %v1184
      %v1552 = vunpack.c.l.b16 %v1185
      %v1553 = vunpack.c.l.b16 %v1186
      %v1554 = vunpack.c.l.b16 %v1187
      %v1555 = vunpack.c.l.b16 %v1188
      %v1556 = vunpack.c.l.b16 %v1189
      %v1557 = vunpack.c.l.b16 %v1190
      %v1558 = vunpack.c.l.b16 %v1191
      %v1559 = vunpack.c.l.b16 %v1192
      %v1560 = vunpack.c.l.b16 %v1193
      %v1561 = vunpack.c.l.b16 %v1194
      %v1562 = vunpack.c.l.b16 %v1195
      %v1563 = vunpack.c.l.b16 %v1196
      %v1564 = vunpack.c.l.b16 %v1197
      %v1565 = vunpack.c.l.b16 %v1198
      %v1566 = vunpack.c.l.b16 %v1199
      %v1567 = vunpack.c.l.b16 %v1200
      %v1568 = vunpack.c.l.b16 %v1201
      %v1569 = vunpack.c.l.b16 %v1202
      %v1570 = vunpack.c.l.b16 %v1203
      %v1571 = vunpack.c.l.b16 %v1204
      %v1572 = vunpack.c.l.b16 %v1205
      %v1573 = vunpack.c.l.b16 %v1206
      %v1574 = vunpack.c.l.b16 %v1207
      %v1575 = vunpack.c.l.b16 %v1208
      %v1576 = vunpack.c.l.b16 %v1209
      %v1577 = vunpack.c.l.b16 %v1210
      %v1578 = vunpack.c.l.b16 %v1211
      %v1579 = vunpack.c.l.b16 %v1212
      %v1580 = vunpack.c.l.b16 %v1213
      %v1581 = vunpack.c.l.b16 %v1214
      %v1582 = vunpack.c.l.b16 %v1215
      %v1583 = vunpack.c.l.b16 %v1216
      %v1584 = vunpack.c.l.b16 %v1217
      %v1585 = vunpack.c.l.b16 %v1218
      %v1586 = vunpack.c.l.b16 %v1219
      %v1587 = vunpack.c.l.b16 %v1220
      %v1588 = vunpack.c.l.b16 %v1221
      %v1589 = vunpack.c.l.b16 %v1222
      %v1590 = vunpack.c.l.b16 %v1223
      %v1591 = vunpack.c.l.b16 %v1224
      %v1592 = vunpack.c.l.b16 %v1225
      %v1593 = vunpack.c.l.b16 %v1226
      %v1594 = vunpack.c.l.b16 %v1227
      %v1595 = vunpack.c.l.b16 %v1228
      %v1596 = vunpack.c.l.b16 %v1229
      %v1597 = vunpack.c.l.b16 %v1230
      %v1598 = vunpack.c.l.b16 %v1231
      %v1599 = vunpack.c.l.b16 %v1232
      %v1600 = vunpack.c.l.b16 %v1233
      %v1601 = vunpack.c.l.b16 %v1234
      %v1602 = vunpack.c.l.b16 %v1235
      %v1603 = vunpack.c.l.b16 %v1236
      %v1604 = vunpack.c.l.b16 %v1237
      %v1605 = vunpack.c.l.b16 %v1238
      %v1606 = vunpack.c.l.b16 %v1239
      %v1607 = vunpack.c.l.b16 %v1240
      %v1608 = vunpack.c.l.b16 %v1241
      %v1609 = vunpack.c.l.b16 %v1242
      %v1610 = vunpack.c.l.b16 %v1243
      %v1611 = vunpack.c.l.b16 %v1244
      %v1612 = vunpack.c.l.b16 %v1245
      %v1613 = vunpack.c.l.b16 %v1246
      %v1614 = vunpack.c.l.b16 %v1247
      %v1615 = vunpack.c.l.b16 %v1248
      %v1616 = vunpack.c.l.b16 %v1249
      %v1617 = vunpack.c.l.b16 %v1250
      %v1618 = vunpack.c.l.b16 %v1251
      %v1619 = vunpack.c.l.b16 %v1252
      %v1620 = vunpack.c.l.b16 %v1253
      %v1621 = vunpack.c.l.b16 %v1254
      %v1622 = vunpack.c.l.b16 %v1255
      %v1623 = vunpack.c.l.b16 %v1256
      %v1624 = vunpack.c.l.b16 %v1257
      %v1625 = vunpack.c.l.b16 %v1258
      %v1626 = vunpack.c.l.b16 %v1259
      %v1627 = vunpack.c.l.b16 %v1260
      %v1628 = vunpack.c.l.b16 %v1261
      %v1629 = vpack.c.b16 %v1486, %v1485
      %v1630 = vpack.c.b16 %v1488, %v1487
      %v1631 = vpack.c.b16 %v1490, %v1489
      %v1632 = vpack.c.b16 %v1492, %v1491
      %v1633 = vpack.c.b16 %v1494, %v1493
      %v1634 = vpack.c.b16 %v1496, %v1495
      %v1635 = vpack.c.b16 %v1498, %v1497
      %v1636 = vpack.c.b16 %v1500, %v1499
      %v1637 = vpack.c.b16 %v1502, %v1501
      %v1638 = vpack.c.b16 %v1504, %v1503
      %v1639 = vpack.c.b16 %v1506, %v1505
      %v1640 = vpack.c.b16 %v1508, %v1507
      %v1641 = vpack.c.b16 %v1510, %v1509
      %v1642 = vpack.c.b16 %v1512, %v1511
      %v1643 = vpack.c.b16 %v1514, %v1513
      %v1644 = vpack.c.b16 %v1516, %v1515
      %v1645 = vpack.c.b16 %v1518, %v1517
      %v1646 = vpack.c.b16 %v1520, %v1519
      %v1647 = vpack.c.b16 %v1522, %v1521
      %v1648 = vpack.c.b16 %v1524, %v1523
      %v1649 = vpack.c.b16 %v1526, %v1525
      %v1650 = vpack.c.b16 %v1528, %v1527
      %v1651 = vpack.c.b16 %v1530, %v1529
      %v1652 = vpack.c.b16 %v1532, %v1531
      %v1653 = vpack.c.b16 %v1534, %v1533
      %v1654 = vpack.c.b16 %v1536, %v1535
      %v1655 = vpack.c.b16 %v1538, %v1537
      %v1656 = vpack.c.b16 %v1540, %v1539
      %v1657 = vpack.c.b16 %v1542, %v1541
      %v1658 = vpack.c.b16 %v1544, %v1543
      %v1659 = vpack.c.b16 %v1546, %v1545
      %v1660 = vpack.c.b16 %v1548, %v1547
      %v1661 = vpack.c.b16 %v1550, %v1549
      %v1662 = vpack.c.b16 %v1552, %v1551
      %v1663 = vpack.c.b16 %v1554, %v1553
      %v1664 = vpack.c.b16 %v1556, %v1555
      %v1665 = vpack.c.b16 %v1558, %v1557
      %v1666 = vpack.c.b16 %v1560, %v1559
      %v1667 = vpack.c.b16 %v1562, %v1561
      %v1668 = vpack.c.b16 %v1564, %v1563
      %v1669 = vpack.c.b16 %v1566, %v1565
      %v1670 = vpack.c.b16 %v1568, %v1567
      %v1671 = vpack.c.b16 %v1570, %v1569
      %v1672 = vpack.c.b16 %v1572, %v1571
      %v1673 = vpack.c.b16 %v1574, %v1573
      %v1674 = vpack.c.b16 %v1576, %v1575
      %v1675 = vpack.c.b16 %v1578, %v1577
      %v1676 = vpack.c.b16 %v1580, %v1579
      %v1677 = vpack.c.b16 %v1582, %v1581
      %v1678 = vpack.c.b16 %v1584, %v1583
      %v1679 = vpack.c.b16 %v1586, %v1585
      %v1680 = vpack.c.b16 %v1588, %v1587
      %v1681 = vpack.c.b16 %v1590, %v1589
      %v1682 = vpack.c.b16 %v1592, %v1591
      %v1683 = vpack.c.b16 %v1594, %v1593
      %v1684 = vpack.c.b16 %v1596, %v1595
      %v1685 = vpack.c.b16 %v1598, %v1597
      %v1686 = vpack.c.b16 %v1600, %v1599
      %v1687 = vpack.c.b16 %v1602, %v1601
      %v1688 = vpack.c.b16 %v1604, %v1603
      %v1689 = vpack.c.b16 %v1606, %v1605
      %v1690 = vpack.c.b16 %v1608, %v1607
      %v1691 = vpack.c.b16 %v1610, %v1609
      %v1692 = vpack.c.b16 %v1612, %v1611
      %v1693 = vpack.c.b16 %v1614, %v1613
      %v1694 = vpack.c.b16 %v1616, %v1615
      %v1695 = vpack.c.b16 %v1618, %v1617
      %v1696 = vpack.c.b16 %v1620, %v1619
      %v1697 = vpack.c.b16 %v1622, %v1621
      %v1698 = vpack.c.b16 %v1624, %v1623
      %v1699 = vpack.c.b16 %v1626, %v1625
      %v1700 = vpack.c.b16 %v1628, %v1627
      %1773 = vmatprep.subr.bf16.mxu0 0
      %1774 = vmatpush1.bf16.msra.mxu0 %v1629
      %1775 = vmatprep.subr.bf16.mxu0 0
      %1776 = vmatpush1.bf16.msra.mxu0 %v1630
      %1777 = vmatprep.subr.bf16.mxu0 0
      %1778 = vmatpush1.bf16.msra.mxu0 %v1631
      %1779 = vmatprep.subr.bf16.mxu0 0
      %1780 = vmatpush1.bf16.msra.mxu0 %v1632
      %1781 = vmatprep.subr.bf16.mxu0 0
      %1782 = vmatpush1.bf16.msra.mxu0 %v1633
      %1783 = vmatprep.subr.bf16.mxu0 0
      %1784 = vmatpush1.bf16.msra.mxu0 %v1634
      %1785 = vmatprep.subr.bf16.mxu0 0
      %1786 = vmatpush1.bf16.msra.mxu0 %v1635
      %1787 = vmatprep.subr.bf16.mxu0 0
      %1788 = vmatpush1.bf16.msra.mxu0 %v1636
      %1789 = vmatprep.subr.bf16.mxu0 0
      %1790 = vmatpush1.bf16.msra.mxu0 %v1637
      %1791 = vmatprep.subr.bf16.mxu0 0
      %1792 = vmatpush1.bf16.msra.mxu0 %v1638
      %1793 = vmatprep.subr.bf16.mxu0 0
      %1794 = vmatpush1.bf16.msra.mxu0 %v1639
      %1795 = vmatprep.subr.bf16.mxu0 0
      %1796 = vmatpush1.bf16.msra.mxu0 %v1640
      %1797 = vmatprep.subr.bf16.mxu0 0
      %1798 = vmatpush1.bf16.msra.mxu0 %v1641
      %1799 = vmatprep.subr.bf16.mxu0 0
      %1800 = vmatpush1.bf16.msra.mxu0 %v1642
      %1801 = vmatprep.subr.bf16.mxu0 0
      %1802 = vmatpush1.bf16.msra.mxu0 %v1643
      %1803 = vmatprep.subr.bf16.mxu0 0
      %1804 = vmatpush1.bf16.msra.mxu0 %v1644
      %1805 = vmatprep.mubr.bf16.mxu0 %v1270
      %1806 = vmatmul.mubr.bf16.gmra.mrb[0].mxu0 %v1269
      %v1807 = vpop.f32.mrb[0].mxu0
      %v1808 = vadd.f32 %v1267, %v1807
      %v1809 = vpop.f32.mrb[0].mxu0
      %v1810 = vpop.f32.mrb[0].mxu0
      %v1811 = vadd.f32 %v1267, %v1810
      %v1812 = vpop.f32.mrb[0].mxu0
      %1813 = vmatprep.mubr.bf16.mxu0 %v1279
      %1814 = vmatmul.mubr.bf16.gmra.mrb[0].mxu0 %v1278
      %v1815 = vpop.f32.mrb[0].mxu0
      %v1816 = vadd.f32 %v1267, %v1815
      %v1817 = vpop.f32.mrb[0].mxu0
      %v1818 = vpop.f32.mrb[0].mxu0
      %v1819 = vadd.f32 %v1267, %v1818
      %v1820 = vpop.f32.mrb[0].mxu0
      %1821 = vmatprep.mubr.bf16.mxu0 %v1288
      %1822 = vmatmul.mubr.bf16.gmra.mrb[0].mxu0 %v1287
      %v1823 = vpop.f32.mrb[0].mxu0
      %v1824 = vadd.f32 %v1267, %v1823
      %v1825 = vpop.f32.mrb[0].mxu0
      %v1826 = vpop.f32.mrb[0].mxu0
      %v1827 = vadd.f32 %v1267, %v1826
      %v1828 = vpop.f32.mrb[0].mxu0
      %1829 = vmatprep.mubr.bf16.mxu0 %v1297
      %1830 = vmatmul.mubr.bf16.gmra.mrb[0].mxu0 %v1296
      %v1831 = vpop.f32.mrb[0].mxu0
      %v1832 = vadd.f32 %v1267, %v1831
      %v1833 = vpop.f32.mrb[0].mxu0
      %v1834 = vpop.f32.mrb[0].mxu0
      %v1835 = vadd.f32 %v1267, %v1834
      %v1836 = vpop.f32.mrb[0].mxu0
      %1837 = vdwg.mxu0
      %1838 = vmatprep.subr.bf16.mxu0 0
      %1839 = vmatpush1.bf16.msra.mxu0 %v1645
      %1840 = vmatprep.subr.bf16.mxu0 0
      %1841 = vmatpush1.bf16.msra.mxu0 %v1646
      %1842 = vmatprep.subr.bf16.mxu0 0
      %1843 = vmatpush1.bf16.msra.mxu0 %v1647
      %1844 = vmatprep.subr.bf16.mxu0 0
      %1845 = vmatpush1.bf16.msra.mxu0 %v1648
      %1846 = vmatprep.subr.bf16.mxu0 0
      %1847 = vmatpush1.bf16.msra.mxu0 %v1649
      %1848 = vmatprep.subr.bf16.mxu0 0
      %1849 = vmatpush1.bf16.msra.mxu0 %v1650
      %1850 = vmatprep.subr.bf16.mxu0 0
      %1851 = vmatpush1.bf16.msra.mxu0 %v1651
      %1852 = vmatprep.subr.bf16.mxu0 0
      %1853 = vmatpush1.bf16.msra.mxu0 %v1652
      %1854 = vmatprep.subr.bf16.mxu0 0
      %1855 = vmatpush1.bf16.msra.mxu0 %v1653
      %1856 = vmatprep.subr.bf16.mxu0 0
      %1857 = vmatpush1.bf16.msra.mxu0 %v1654
      %1858 = vmatprep.subr.bf16.mxu0 0
      %1859 = vmatpush1.bf16.msra.mxu0 %v1655
      %1860 = vmatprep.subr.bf16.mxu0 0
      %1861 = vmatpush1.bf16.msra.mxu0 %v1656
      %1862 = vmatprep.subr.bf16.mxu0 0
      %1863 = vmatpush1.bf16.msra.mxu0 %v1657
      %1864 = vmatprep.subr.bf16.mxu0 0
      %1865 = vmatpush1.bf16.msra.mxu0 %v1658
      %1866 = vmatprep.subr.bf16.mxu0 0
      %1867 = vmatpush1.bf16.msra.mxu0 %v1659
      %1868 = vmatprep.subr.bf16.mxu0 0
      %1869 = vmatpush1.bf16.msra.mxu0 %v1660
      %1870 = vmatprep.mubr.bf16.mxu0 %v1272
      %1871 = vmatmul.mubr.bf16.gmra.mrb[0].mxu0 %v1271
      %v1872 = vpop.f32.mrb[0].mxu0
      %v1873 = vadd.f32 %v1808, %v1872
      %v1874 = vpop.f32.mrb[0].mxu0
      %v1875 = vpop.f32.mrb[0].mxu0
      %v1876 = vadd.f32 %v1811, %v1875
      %v1877 = vpop.f32.mrb[0].mxu0
      %1878 = vmatprep.mubr.bf16.mxu0 %v1281
      %1879 = vmatmul.mubr.bf16.gmra.mrb[0].mxu0 %v1280
      %v1880 = vpop.f32.mrb[0].mxu0
      %v1881 = vadd.f32 %v1816, %v1880
      %v1882 = vpop.f32.mrb[0].mxu0
      %v1883 = vpop.f32.mrb[0].mxu0
      %v1884 = vadd.f32 %v1819, %v1883
      %v1885 = vpop.f32.mrb[0].mxu0
      %1886 = vmatprep.mubr.bf16.mxu0 %v1290
      %1887 = vmatmul.mubr.bf16.gmra.mrb[0].mxu0 %v1289
      %v1888 = vpop.f32.mrb[0].mxu0
      %v1889 = vadd.f32 %v1824, %v1888
      %v1890 = vpop.f32.mrb[0].mxu0
      %v1891 = vpop.f32.mrb[0].mxu0
      %v1892 = vadd.f32 %v1827, %v1891
      %v1893 = vpop.f32.mrb[0].mxu0
      %1894 = vmatprep.mubr.bf16.mxu0 %v1299
      %1895 = vmatmul.mubr.bf16.gmra.mrb[0].mxu0 %v1298
      %v1896 = vpop.f32.mrb[0].mxu0
      %v1897 = vadd.f32 %v1832, %v1896
      %v1898 = vpop.f32.mrb[0].mxu0
      %v1899 = vpop.f32.mrb[0].mxu0
      %v1900 = vadd.f32 %v1835, %v1899
      %v1901 = vpop.f32.mrb[0].mxu0
      %1902 = vdwg.mxu0
      %1903 = vmatprep.subr.bf16.mxu0 0
      %1904 = vmatpush1.bf16.msra.mxu0 %v1661
      %1905 = vmatprep.subr.bf16.mxu0 0
      %1906 = vmatpush1.bf16.msra.mxu0 %v1662
      %1907 = vmatprep.subr.bf16.mxu0 0
      %1908 = vmatpush1.bf16.msra.mxu0 %v1663
      %1909 = vmatprep.subr.bf16.mxu0 0
      %1910 = vmatpush1.bf16.msra.mxu0 %v1664
      %1911 = vmatprep.subr.bf16.mxu0 0
      %1912 = vmatpush1.bf16.msra.mxu0 %v1665
      %1913 = vmatprep.subr.bf16.mxu0 0
      %1914 = vmatpush1.bf16.msra.mxu0 %v1666
      %1915 = vmatprep.subr.bf16.mxu0 0
      %1916 = vmatpush1.bf16.msra.mxu0 %v1667
      %1917 = vmatprep.subr.bf16.mxu0 0
      %1918 = vmatpush1.bf16.msra.mxu0 %v1668
      %1919 = vmatprep.subr.bf16.mxu0 0
      %1920 = vmatpush1.bf16.msra.mxu0 %v1669
      %1921 = vmatprep.subr.bf16.mxu0 0
      %1922 = vmatpush1.bf16.msra.mxu0 %v1670
      %1923 = vmatprep.subr.bf16.mxu0 0
      %1924 = vmatpush1.bf16.msra.mxu0 %v1671
      %1925 = vmatprep.subr.bf16.mxu0 0
      %1926 = vmatpush1.bf16.msra.mxu0 %v1672
      %1927 = vmatprep.subr.bf16.mxu0 0
      %1928 = vmatpush1.bf16.msra.mxu0 %v1673
      %1929 = vmatprep.subr.bf16.mxu0 0
      %1930 = vmatpush1.bf16.msra.mxu0 %v1674
      %1931 = vmatprep.subr.bf16.mxu0 0
      %1932 = vmatpush1.bf16.msra.mxu0 %v1675
      %1933 = vmatprep.subr.bf16.mxu0 0
      %1934 = vmatpush1.bf16.msra.mxu0 %v1676
      %1935 = vmatprep.mubr.bf16.mxu0 %v1274
      %1936 = vmatmul.mubr.bf16.gmra.mrb[0].mxu0 %v1273
      %v1937 = vpop.f32.mrb[0].mxu0
      %v1938 = vadd.f32 %v1873, %v1937
      %v1939 = vpop.f32.mrb[0].mxu0
      %v1940 = vpop.f32.mrb[0].mxu0
      %v1941 = vadd.f32 %v1876, %v1940
      %v1942 = vpop.f32.mrb[0].mxu0
      %1943 = vmatprep.mubr.bf16.mxu0 %v1283
      %1944 = vmatmul.mubr.bf16.gmra.mrb[0].mxu0 %v1282
      %v1945 = vpop.f32.mrb[0].mxu0
      %v1946 = vadd.f32 %v1881, %v1945
      %v1947 = vpop.f32.mrb[0].mxu0
      %v1948 = vpop.f32.mrb[0].mxu0
      %v1949 = vadd.f32 %v1884, %v1948
      %v1950 = vpop.f32.mrb[0].mxu0
      %1951 = vmatprep.mubr.bf16.mxu0 %v1292
      %1952 = vmatmul.mubr.bf16.gmra.mrb[0].mxu0 %v1291
      %v1953 = vpop.f32.mrb[0].mxu0
      %v1954 = vadd.f32 %v1889, %v1953
      %v1955 = vpop.f32.mrb[0].mxu0
      %v1956 = vpop.f32.mrb[0].mxu0
      %v1957 = vadd.f32 %v1892, %v1956
      %v1958 = vpop.f32.mrb[0].mxu0
      %1959 = vmatprep.mubr.bf16.mxu0 %v1301
      %1960 = vmatmul.mubr.bf16.gmra.mrb[0].mxu0 %v1300
      %v1961 = vpop.f32.mrb[0].mxu0
      %v1962 = vadd.f32 %v1897, %v1961
      %v1963 = vpop.f32.mrb[0].mxu0
      %v1964 = vpop.f32.mrb[0].mxu0
      %v1965 = vadd.f32 %v1900, %v1964
      %v1966 = vpop.f32.mrb[0].mxu0
      %1967 = vdwg.mxu0
      %1968 = vmatprep.subr.bf16.mxu0 0
      %1969 = vmatpush1.bf16.msra.mxu0 %v1677
      %1970 = vmatprep.subr.bf16.mxu0 0
      %1971 = vmatpush1.bf16.msra.mxu0 %v1678
      %1972 = vmatprep.subr.bf16.mxu0 0
      %1973 = vmatpush1.bf16.msra.mxu0 %v1679
      %1974 = vmatprep.subr.bf16.mxu0 0
      %1975 = vmatpush1.bf16.msra.mxu0 %v1680
      %1976 = vmatprep.subr.bf16.mxu0 0
      %1977 = vmatpush1.bf16.msra.mxu0 %v1681
      %1978 = vmatprep.subr.bf16.mxu0 0
      %1979 = vmatpush1.bf16.msra.mxu0 %v1682
      %1980 = vmatprep.subr.bf16.mxu0 0
      %1981 = vmatpush1.bf16.msra.mxu0 %v1683
      %1982 = vmatprep.subr.bf16.mxu0 0
      %1983 = vmatpush1.bf16.msra.mxu0 %v1684
      %1984 = vmatprep.subr.bf16.mxu0 0
      %1985 = vmatpush1.bf16.msra.mxu0 %v1685
      %1986 = vmatprep.subr.bf16.mxu0 0
      %1987 = vmatpush1.bf16.msra.mxu0 %v1686
      %1988 = vmatprep.subr.bf16.mxu0 0
      %1989 = vmatpush1.bf16.msra.mxu0 %v1687
      %1990 = vmatprep.subr.bf16.mxu0 0
      %1991 = vmatpush1.bf16.msra.mxu0 %v1688
      %1992 = vmatprep.subr.bf16.mxu0 0
      %1993 = vmatpush1.bf16.msra.mxu0 %v1689
      %1994 = vmatprep.subr.bf16.mxu0 0
      %1995 = vmatpush1.bf16.msra.mxu0 %v1690
      %1996 = vmatprep.subr.bf16.mxu0 0
      %1997 = vmatpush1.bf16.msra.mxu0 %v1691
      %1998 = vmatprep.subr.bf16.mxu0 0
      %1999 = vmatpush1.bf16.msra.mxu0 %v1692
      %2000 = vmatprep.mubr.bf16.mxu0 %v1276
      %2001 = vmatmul.mubr.bf16.gmra.mrb[0].mxu0 %v1275
      %v2002 = vpop.f32.mrb[0].mxu0
      %v2003 = vadd.f32 %v1938, %v2002
      %v2004 = vpop.f32.mrb[0].mxu0
      %v2005 = vpop.f32.mrb[0].mxu0
      %v2006 = vadd.f32 %v1941, %v2005
      %v2007 = vpop.f32.mrb[0].mxu0
      %2008 = vmatprep.mubr.bf16.mxu0 %v1285
      %2009 = vmatmul.mubr.bf16.gmra.mrb[0].mxu0 %v1284
      %v2010 = vpop.f32.mrb[0].mxu0
      %v2011 = vadd.f32 %v1946, %v2010
      %v2012 = vpop.f32.mrb[0].mxu0
      %v2013 = vpop.f32.mrb[0].mxu0
      %v2014 = vadd.f32 %v1949, %v2013
      %v2015 = vpop.f32.mrb[0].mxu0
      %2016 = vmatprep.mubr.bf16.mxu0 %v1294
      %2017 = vmatmul.mubr.bf16.gmra.mrb[0].mxu0 %v1293
      %v2018 = vpop.f32.mrb[0].mxu0
      %v2019 = vadd.f32 %v1954, %v2018
      %v2020 = vpop.f32.mrb[0].mxu0
      %v2021 = vpop.f32.mrb[0].mxu0
      %v2022 = vadd.f32 %v1957, %v2021
      %v2023 = vpop.f32.mrb[0].mxu0
      %2024 = vmatprep.mubr.bf16.mxu0 %v1303
      %2025 = vmatmul.mubr.bf16.gmra.mrb[0].mxu0 %v1302
      %v2026 = vpop.f32.mrb[0].mxu0
      %v2027 = vadd.f32 %v1962, %v2026
      %v2028 = vpop.f32.mrb[0].mxu0
      %v2029 = vpop.f32.mrb[0].mxu0
      %v2030 = vadd.f32 %v1965, %v2029
      %v2031 = vpop.f32.mrb[0].mxu0
      %2032 = vdwg.mxu0
      %2033 = vmatprep.subr.bf16.mxu0 0
      %2034 = vmatpush1.bf16.msra.mxu0 %v1693
      %2035 = vmatprep.subr.bf16.mxu0 0
      %2036 = vmatpush1.bf16.msra.mxu0 %v1694
      %2037 = vmatprep.subr.bf16.mxu0 0
      %2038 = vmatpush1.bf16.msra.mxu0 %v1695
      %2039 = vmatprep.subr.bf16.mxu0 0
      %2040 = vmatpush1.bf16.msra.mxu0 %v1696
      %2041 = vmatprep.subr.bf16.mxu0 0
      %2042 = vmatpush1.bf16.msra.mxu0 %v1697
      %2043 = vmatprep.subr.bf16.mxu0 0
      %2044 = vmatpush1.bf16.msra.mxu0 %v1698
      %2045 = vmatprep.subr.bf16.mxu0 0
      %2046 = vmatpush1.bf16.msra.mxu0 %v1699
      %2047 = vmatprep.subr.bf16.mxu0 0
      %2048 = vmatpush1.bf16.msra.mxu0 %v1700
      %2049 = vmatprep.subr.bf16.mxu0 0
      %2050 = vmatpush1.bf16.msra.mxu0 0
      %2051 = vmatprep.subr.bf16.mxu0 0
      %2052 = vmatpush1.bf16.msra.mxu0 0
      %2053 = vmatprep.subr.bf16.mxu0 0
      %2054 = vmatpush1.bf16.msra.mxu0 0
      %2055 = vmatprep.subr.bf16.mxu0 0
      %2056 = vmatpush1.bf16.msra.mxu0 0
      %2057 = vmatprep.subr.bf16.mxu0 0
      %2058 = vmatpush1.bf16.msra.mxu0 0
      %2059 = vmatprep.subr.bf16.mxu0 0
      %2060 = vmatpush1.bf16.msra.mxu0 0
      %2061 = vmatprep.subr.bf16.mxu0 0
      %2062 = vmatpush1.bf16.msra.mxu0 0
      %2063 = vmatprep.subr.bf16.mxu0 0
      %2064 = vmatpush1.bf16.msra.mxu0 0
      %2065 = vmatprep.mubr.bf16.mxu0 0
      %2066 = vmatmul.mubr.bf16.gmra.mrb[0].mxu0 %v1277
      %v2067 = vpop.f32.mrb[0].mxu0
      %v2068 = vadd.f32 %v2003, %v2067
      %v2069 = vpop.f32.mrb[0].mxu0
      %v2070 = vpop.f32.mrb[0].mxu0
      %v2071 = vadd.f32 %v2006, %v2070
      %v2072 = vpop.f32.mrb[0].mxu0
      %2073 = vmatprep.mubr.bf16.mxu0 0
      %2074 = vmatmul.mubr.bf16.gmra.mrb[0].mxu0 %v1286
      %v2075 = vpop.f32.mrb[0].mxu0
      %v2076 = vadd.f32 %v2011, %v2075
      %v2077 = vpop.f32.mrb[0].mxu0
      %v2078 = vpop.f32.mrb[0].mxu0
      %v2079 = vadd.f32 %v2014, %v2078
      %v2080 = vpop.f32.mrb[0].mxu0
      %2081 = vmatprep.mubr.bf16.mxu0 0
      %2082 = vmatmul.mubr.bf16.gmra.mrb[0].mxu0 %v1295
      %v2083 = vpop.f32.mrb[0].mxu0
      %v2084 = vadd.f32 %v2019, %v2083
      %v2085 = vpop.f32.mrb[0].mxu0
      %v2086 = vpop.f32.mrb[0].mxu0
      %v2087 = vadd.f32 %v2022, %v2086
      %v2088 = vpop.f32.mrb[0].mxu0
      %2089 = vmatprep.mubr.bf16.mxu0 0
      %2090 = vmatmul.mubr.bf16.gmra.mrb[0].mxu0 %v1304
      %v2091 = vpop.f32.mrb[0].mxu0
      %v2092 = vadd.f32 %v2027, %v2091
      %v2093 = vpop.f32.mrb[0].mxu0
      %v2094 = vpop.f32.mrb[0].mxu0
      %v2095 = vadd.f32 %v2030, %v2094
      %v2096 = vpop.f32.mrb[0].mxu0
      %2097 = vdwg.mxu0
      %v2098 = vpack.c.bf16 %v2068, %v2068
      %v2099 = vpack.c.bf16 %v2071, %v2071
      %v2100 = vpack.c.bf16 %v2076, %v2076
      %v2101 = vpack.c.bf16 %v2079, %v2079
      %v2102 = vpack.c.bf16 %v2084, %v2084
      %v2103 = vpack.c.bf16 %v2087, %v2087
      %v2104 = vpack.c.bf16 %v2092, %v2092
      %v2105 = vpack.c.bf16 %v2095, %v2095
      %2106 = vst [vmem:[%s343] sm:$0xf] %v2098
      %2107 = vst [vmem:[%s343 + $0x4] sm:$0xf] %v2099
      %2108 = vst [vmem:[%s343 + $0x8] sm:$0xf] %v2100
      %2109 = vst [vmem:[%s343 + $0xc] sm:$0xf] %v2101
      %2110 = vst [vmem:[%s343 + $0x10] sm:$0xf] %v2102
      %2111 = vst [vmem:[%s343 + $0x14] sm:$0xf] %v2103
      %2112 = vst [vmem:[%s343 + $0x18] sm:$0xf] %v2104
      %2113 = vst [vmem:[%s343 + $0x1c] sm:$0xf] %v2105
      %v2114 = vadd.f32 %v2068, %v2071
      %v2115 = vadd.f32 %v2114, %v2076
      %v2116 = vadd.f32 %v2115, %v2079
      %v2117 = vadd.f32 %v2116, %v2084
      %v2118 = vadd.f32 %v2117, %v2087
      %v2119 = vadd.f32 %v2118, %v2092
      %v2120 = vadd.f32 %v2119, %v2095
      %v2121 = vrot.slane %v2120, 4
      %v2122 = vadd.f32 %v2120, %v2121
      %v2123 = vrot.slane %v2122, 2
      %v2124 = vadd.f32 %v2122, %v2123
      %v2125 = vrot.slane %v2124, 1
      %v2126 = vadd.f32 %v2124, %v2125
      %2127 = vst [vmem:[%s346] sm:$0x1] %v2126
      %v2128 = vmul.f32 %v2068, %v2068
      %v2129 = vmul.f32 %v2071, %v2071
      %v2130 = vmul.f32 %v2076, %v2076
      %v2131 = vmul.f32 %v2079, %v2079
      %v2132 = vmul.f32 %v2084, %v2084
      %v2133 = vmul.f32 %v2087, %v2087
      %v2134 = vmul.f32 %v2092, %v2092
      %v2135 = vmul.f32 %v2095, %v2095
      %v2136 = vadd.f32 %v2128, %v2129
      %v2137 = vadd.f32 %v2136, %v2130
      %v2138 = vadd.f32 %v2137, %v2131
      %v2139 = vadd.f32 %v2138, %v2132
      %v2140 = vadd.f32 %v2139, %v2133
      %v2141 = vadd.f32 %v2140, %v2134
      %v2142 = vadd.f32 %v2141, %v2135
      %v2143 = vrot.slane %v2142, 4
      %v2144 = vadd.f32 %v2142, %v2143
      %v2145 = vrot.slane %v2144, 2
      %v2146 = vadd.f32 %v2144, %v2145
      %v2147 = vrot.slane %v2146, 1
      %v2148 = vadd.f32 %v2146, %v2147
      %2149 = vst [vmem:[%s349] sm:$0x1] %v2148
      %p2150 = scmp.lt.s32.totalorder %s21, 1
      %s2151 = scalar_select %p2150, %s21, 1
      %s2152 = smul.addr %s2151, 8
      %s2153 = smul.addr %s2152, 4
      %s2154 = scalar_lea.vmem %s7, %s2153
      %p2155 = scmp.lt.s32.totalorder %s21, 1
      %s2156 = scalar_select %p2155, %s21, 1
      %s2157 = scalar_lea.vmem %s8, %s2156
      %p2158 = scmp.lt.s32.totalorder %s21, 1
      %s2159 = scalar_select %p2158, %s21, 1
      %s2160 = scalar_lea.vmem %s9, %s2159
      // Predicated region
      $region49: #{decoder_forward.12} parent=47 // pred_check
        %p2161 = pneg %p191
      $region50: #{decoder_forward.12} parent=47 // pred_check_branch
        %2163 = sbr.rel (%p2161) target = $region52
      $region51: #{decoder_forward.12} parent=47 // pred_region
        _
      $region52: #{decoder_forward.12} parent=47 // pred_fallthru
        _
      // Predicated region
      $region53: #{decoder_forward.12} parent=47 // pred_check
        %p2164 = pneg %p217
      $region54: #{decoder_forward.12} parent=47 // pred_check_branch
        %2166 = sbr.rel (%p2164) target = $region56
      $region55: #{decoder_forward.12} parent=47 // pred_region
        _
      $region56: #{decoder_forward.12} parent=47 // pred_fallthru
        _
      // Predicated region
      $region57: #{decoder_forward.12} parent=47 // pred_check
        %p2167 = pneg %p243
      $region58: #{decoder_forward.12} parent=47 // pred_check_branch
        %2169 = sbr.rel (%p2167) target = $region60
      $region59: #{decoder_forward.12} parent=47 // pred_region
        _
      $region60: #{decoder_forward.12} parent=47 // pred_fallthru
        _
    $region48: #{decoder_forward.12} parent=5 // pred_fallthru
      _
    %p2170 = scmp.le.s32.totalorder 2, %s16
    // Predicated region
    $region61: #{decoder_forward.12} parent=5 // pred_check
      %p2171 = pneg %p2170
    $region62: #{decoder_forward.12} parent=5 // pred_check_branch
      %2173 = sbr.rel (%p2171) target = $region64
    $region63: #{decoder_forward.12} parent=5 // pred_region
      %s2174 = ssub.s32 %s16, 2
      // Predicated region
      $region65: #{decoder_forward.12} parent=63 // pred_check
        %p2175 = pneg %p197
      $region66: #{decoder_forward.12} parent=63 // pred_check_branch
        %2177 = sbr.rel (%p2175) target = $region68
      $region67: #{decoder_forward.12} parent=63 // pred_region
        %p2178 = scmp.lt.s32.totalorder %s22, 1
        %s2179 = scalar_select %p2178, %s22, 1
        %s2180 = smul.addr %s2179, 8
        %s2181 = smul.addr %s2180, 4
        %s2182 = scalar_lea.vmem %s7, %s2181
      $region68: #{decoder_forward.12} parent=63 // pred_fallthru
        _
      // Predicated region
      $region69: #{decoder_forward.12} parent=63 // pred_check
        %p2183 = pneg %p223
      $region70: #{decoder_forward.12} parent=63 // pred_check_branch
        %2185 = sbr.rel (%p2183) target = $region72
      $region71: #{decoder_forward.12} parent=63 // pred_region
        %p2186 = scmp.lt.s32.totalorder %s22, 1
        %s2187 = scalar_select %p2186, %s22, 1
        %s2188 = scalar_lea.vmem %s8, %s2187
      $region72: #{decoder_forward.12} parent=63 // pred_fallthru
        _
      // Predicated region
      $region73: #{decoder_forward.12} parent=63 // pred_check
        %p2189 = pneg %p249
      $region74: #{decoder_forward.12} parent=63 // pred_check_branch
        %2191 = sbr.rel (%p2189) target = $region76
      $region75: #{decoder_forward.12} parent=63 // pred_region
        %p2192 = scmp.lt.s32.totalorder %s22, 1
        %s2193 = scalar_select %p2192, %s22, 1
        %s2194 = scalar_lea.vmem %s9, %s2193
      $region76: #{decoder_forward.12} parent=63 // pred_fallthru
        _
    $region64: #{decoder_forward.12} parent=5 // pred_fallthru
      _
  $region6: #{decoder_forward.12} parent=0 // loop_footer
    %s20 = sadd.s32 1, %s16
  $region7: #{decoder_forward.12} parent=0 // loop_footer_branch
    %15 = sbr.rel target = $region3
  $region8: #{decoder_forward.12} parent=0 // loop_exit
    _

</llo_original>
